<compile_context>
chip_gen: v6e
topology: v6e:2x2x1
jax: 0.10.0
libtpu: 0.0.40
codegen_flags: <defaults>
</compile_context>

<pallas_src>
import jax
import jax.numpy as jnp
from jax.experimental import pallas as pl
from jax.experimental.pallas import tpu as pltpu


# ----------------------------------------------------------------------------
# Pallas kernels
# ----------------------------------------------------------------------------
def conv_pool_kernel(p_ref, w_ref, b_ref, o_ref):
    """Fused conv-as-matmul + 2x2 maxpool + bias + ReLU, lane-dense output.

    p_ref: (4, TR, GK) bf16 -- 4 pool sub-positions, TR lane-dense rows; each
                               row packs g consecutive pool windows' patches
                               (GK = g * kkc_pad)
    w_ref: (GK, 128)   bf16 -- block-diagonal weight: g copies of (kkc, cout)
    b_ref: (1, 128)    f32  -- per-channel bias tiled g times along lanes
    o_ref: (TR, 128)   bf16 -- lane-dense output (g positions x cout per row)
    """
    tr = p_ref.shape[1]
    gk = p_ref.shape[2]
    # Single MXU matmul for all 4 pool sub-positions.  TR is a multiple of 16,
    # so the (4, TR, GK) -> (4*TR, GK) merge is a free bf16 sublane relabel.
    p = p_ref[...].reshape(4 * tr, gk)
    y = jnp.dot(p, w_ref[...], preferred_element_type=jnp.float32)
    # 2x2 max-pool: elementwise max of the 4 sublane-aligned slabs.
    m = jnp.maximum(jnp.maximum(y[0 * tr:1 * tr], y[1 * tr:2 * tr]),
                    jnp.maximum(y[2 * tr:3 * tr], y[3 * tr:4 * tr]))
    # Bias + ReLU hoisted out of the pool (valid: bias constant per channel
    # across the 2x2 window, ReLU monotone).
    o_ref[...] = jnp.maximum(m + b_ref[...], 0.0).astype(o_ref.dtype)


def fc_fused_kernel(x_ref, w1_ref, b1_ref, w2_ref, b2_ref, o_ref):
    """Fused fc1+fc2: out = (x @ W1 + b1) @ W2 + b2.

    Grid axis j tiles fc1's output columns (== fc2's contraction rows); each
    step folds its hidden tile straight into the resident output block
    (out BlockSpec is constant across the reduction axis), so the hidden
    activation never leaves VMEM and there is no separate accumulator scratch.
    """
    j = pl.program_id(0)

    @pl.when(j == 0)
    def _():
        o_ref[...] = jnp.zeros_like(o_ref)

    # x is already bf16 (conv output dtype); accumulate in f32.
    h = jnp.dot(x_ref[...], w1_ref[...],
                preferred_element_type=jnp.float32) + b1_ref[...]
    o_ref[...] += jnp.dot(h.astype(jnp.bfloat16), w2_ref[...],
                          preferred_element_type=jnp.float32)

    @pl.when(j == pl.num_programs(0) - 1)
    def _():
        o_ref[...] += b2_ref[...]


# ----------------------------------------------------------------------------
# Pallas wrappers
# ----------------------------------------------------------------------------
def conv_pool(patches_g, w_bd, bias128, *, tr):
    """patches_g: [4, rows, GK] bf16 -> lane-dense output [rows, 128] bf16."""
    _, rows, gk = patches_g.shape
    assert rows % tr == 0
    return pl.pallas_call(
        conv_pool_kernel,
        out_shape=jax.ShapeDtypeStruct((rows, 128), jnp.bfloat16),
        grid=(rows // tr,),
        in_specs=[
            pl.BlockSpec((4, tr, gk), lambda i: (0, i, 0)),
            pl.BlockSpec((gk, 128), lambda i: (0, 0)),
            pl.BlockSpec((1, 128), lambda i: (0, 0)),
        ],
        out_specs=pl.BlockSpec((tr, 128), lambda i: (i, 0)),
        compiler_params=pltpu.CompilerParams(
            dimension_semantics=("parallel",)),
    )(patches_g, w_bd, bias128)


def fc_fused(x, w1, b1, w2, b2, *, tn1=512):
    """x:[B,K] bf16, w1:[K,N1p] bf16, b1:[1,N1p] f32, w2:[N1p,128] bf16,
    b2:[1,128] f32.  Returns [B, 128] f32 (logits in the first 10 columns).

    TODO(synk): at real batch (M >= 128) add a leading "parallel" grid axis
    over M so v7x can split this call across its two TensorCores; at B=2 the
    call is a pure fw1 weight stream and M-tiling buys nothing.
    """
    m, k = x.shape
    n1p = w1.shape[1]
    return pl.pallas_call(
        fc_fused_kernel,
        out_shape=jax.ShapeDtypeStruct((m, 128), jnp.float32),
        grid=(n1p // tn1,),
        in_specs=[
            pl.BlockSpec((m, k), lambda j: (0, 0)),
            pl.BlockSpec((k, tn1), lambda j: (0, j)),
            pl.BlockSpec((1, tn1), lambda j: (0, j)),
            pl.BlockSpec((tn1, 128), lambda j: (j, 0)),
            pl.BlockSpec((1, 128), lambda j: (0, 0)),
        ],
        out_specs=pl.BlockSpec((m, 128), lambda j: (0, 0)),
        compiler_params=pltpu.CompilerParams(
            dimension_semantics=("arbitrary",)),   # reduction axis: resident out
    )(x, w1, b1, w2, b2)


# ----------------------------------------------------------------------------
# JAX glue: im2col with pool-window grouping
# ----------------------------------------------------------------------------
def im2col_pool_groups(x_nhwc, k=5, pad=2):
    """x_nhwc: [B,H,W,C] -> patches [4, B*(H//2)*(W//2), k*k*C].

    Row order of dim 1 is (b, ho, wo); dim 0 is the 2x2 pool sub-position.
    Patch columns are flattened in (kh, kw, cin) order.
    """
    b, h, w, c = x_nhwc.shape
    xp = jnp.pad(x_nhwc, ((0, 0), (pad, pad), (pad, pad), (0, 0)))
    cols = []
    for kh in range(k):
        for kw in range(k):
            cols.append(xp[:, kh:kh + h, kw:kw + w, :])
    patches = jnp.concatenate(cols, axis=-1)                  # [B, H, W, k*k*C]
    ho, wo = h // 2, w // 2
    patches = patches.reshape(b, ho, 2, wo, 2, k * k * c)
    patches = patches.transpose(2, 4, 0, 1, 3, 5)             # [2,2,B,Ho,Wo,KKC]
    return patches.reshape(4, b * ho * wo, k * k * c)


def conv_pool_block(x_nhwc, w_bd, bias128, cout, *, k=5, pad=2, tr=16,
                    kkc_pad=None):
    """NHWC feature map -> fused conv(k, pad) + ReLU + maxpool(2) -> NHWC bf16.

    TODO(synk): patches are still XLA-materialized im2col (~25x the feature
    map for conv2); a direct in-kernel conv over shifted windows would cut
    that HBM traffic once batch grows, but is deferred for lowering simplicity.
    """
    b, h, w, c = x_nhwc.shape
    ho, wo = h // 2, w // 2
    g = 128 // cout
    kkc = k * k * c
    if kkc_pad is None:
        kkc_pad = kkc
    assert 128 % cout == 0 and tr % 16 == 0 and kkc_pad >= kkc
    n = b * ho * wo
    n_pad = pl.cdiv(n, tr * g) * (tr * g)

    patches = im2col_pool_groups(x_nhwc.astype(jnp.bfloat16), k=k, pad=pad)
    patches = jnp.pad(patches, ((0, 0), (0, n_pad - n), (0, kkc_pad - kkc)))
    # Free row-major regroup: g consecutive pool windows per LHS row so the
    # kernel's matmul output is already 128 lanes wide.
    patches = patches.reshape(4, n_pad // g, g * kkc_pad)

    out = conv_pool(patches, w_bd, bias128, tr=tr)            # [n_pad//g, 128]
    # Identical memory layout as (n_pad, cout); padded rows hold relu(bias)
    # garbage and MUST stay sliced off here.
    out = out.reshape(n_pad, cout)[:n]
    return out.reshape(b, ho, wo, cout)


# ----------------------------------------------------------------------------
# Parameters (raw torch layout) and one-time packing for the kernels
# ----------------------------------------------------------------------------
def init_params(key):
    ks = jax.random.split(key, 8)
    s = 0.05
    w1 = jax.random.normal(ks[0], (32, 1, 5, 5), jnp.float32) * s        # conv1 OIHW
    b1 = jax.random.normal(ks[1], (32,), jnp.float32) * 0.01
    w2 = jax.random.normal(ks[2], (64, 32, 5, 5), jnp.float32) * s       # conv2 OIHW
    b2 = jax.random.normal(ks[3], (64,), jnp.float32) * 0.01
    fw1 = jax.random.normal(ks[4], (7 * 7 * 64, 1000), jnp.float32) * s  # fc1 (W.T)
    fb1 = jax.random.normal(ks[5], (1000,), jnp.float32) * 0.01
    fw2 = jax.random.normal(ks[6], (1000, 10), jnp.float32) * s          # fc2 (W.T)
    fb2 = jax.random.normal(ks[7], (10,), jnp.float32) * 0.01
    return dict(w1=w1, b1=b1, w2=w2, b2=b2, fw1=fw1, fb1=fb1, fw2=fw2, fb2=fb2)


def _flatten_conv_weight(w_oihw):
    """OIHW -> (kh*kw*cin, cout), matching the im2col (kh, kw, cin) order."""
    cout, cin, kh, kw = w_oihw.shape
    return jnp.transpose(w_oihw, (2, 3, 1, 0)).reshape(kh * kw * cin, cout)


def _block_diag_conv_weight(w_oihw, kkc_pad=None):
    """OIHW conv weight -> bf16 block-diagonal (g*kkc_pad, 128), g = 128//cout.

    Zero rows kkc..kkc_pad per group are the lane-alignment padding; they must
    stay zero (they multiply the zero-padded patch columns)."""
    cout = w_oihw.shape[0]
    g = 128 // cout
    w_flat = _flatten_conv_weight(w_oihw)
    kkc = w_flat.shape[0]
    if kkc_pad is None:
        kkc_pad = kkc
    w_bd = jnp.zeros((g * kkc_pad, 128), w_flat.dtype)
    for i in range(g):
        w_bd = w_bd.at[i * kkc_pad:i * kkc_pad + kkc,
                       i * cout:(i + 1) * cout].set(w_flat)
    return w_bd.astype(jnp.bfloat16)


def _tile_bias(bias):
    return jnp.tile(bias, 128 // bias.shape[0]).reshape(1, 128).astype(jnp.float32)


def prepare_params(p):
    """One-time (outside jit) packing: bf16 block-diag conv weights (conv1's
    kkc padded 25->32 so its patch rows are full 128 lanes), lane-tiled f32
    biases, and pre-padded bf16 FC weights.  All padding is ZERO (load-bearing
    for the 1000->1024 / 10->128 pads and the out[:, :10] slice)."""
    n1p, n2p = 1024, 128
    return dict(
        w1_bd=_block_diag_conv_weight(p["w1"], kkc_pad=32),
        b1_t=_tile_bias(p["b1"]),
        w2_bd=_block_diag_conv_weight(p["w2"]),
        b2_t=_tile_bias(p["b2"]),
        fw1=jnp.pad(p["fw1"], ((0, 0), (0, n1p - p["fw1"].shape[1]))
                    ).astype(jnp.bfloat16),
        fb1=jnp.pad(p["fb1"], (0, n1p - p["fb1"].shape[0])).reshape(1, n1p),
        fw2=jnp.pad(p["fw2"], ((0, n1p - p["fw2"].shape[0]),
                               (0, n2p - p["fw2"].shape[1]))).astype(jnp.bfloat16),
        fb2=jnp.pad(p["fb2"], (0, n2p - p["fb2"].shape[0])).reshape(1, n2p),
    )


# ----------------------------------------------------------------------------
# Forward pass
# ----------------------------------------------------------------------------
@jax.jit
def convnet_forward(x_nchw, prep):
    b = x_nchw.shape[0]

    # conv1 block: Conv2d(1->32, k=5, p=2) + ReLU + MaxPool(2)   [B,14,14,32]
    x = jnp.transpose(x_nchw, (0, 2, 3, 1))                    # NCHW -> NHWC
    y1 = conv_pool_block(x, prep["w1_bd"], prep["b1_t"], cout=32,
                         tr=16, kkc_pad=32)

    # conv2 block: Conv2d(32->64, k=5, p=2) + ReLU + MaxPool(2)  [B,7,7,64]
    y2 = conv_pool_block(y1, prep["w2_bd"], prep["b2_t"], cout=64, tr=16)

    # Flatten in torch NCHW order: x.reshape(B, -1) over [B, 64, 7, 7] (bf16).
    flat = jnp.transpose(y2, (0, 3, 1, 2)).reshape(b, 7 * 7 * 64)

    # TODO(synk): nn.Dropout() is identity at inference; the training-mode RNG
    # mask is not reproduced here.
    out = fc_fused(flat, prep["fw1"], prep["fb1"], prep["fw2"], prep["fb2"])
    return out[:, :10]


# ----------------------------------------------------------------------------
# Pure-JAX reference (f32, raw params) for correctness check
# ----------------------------------------------------------------------------
def reference_forward(x_nchw, params):
    def conv(x, w, bias):
        y = jax.lax.conv_general_dilated(
            x, w, (1, 1), ((2, 2), (2, 2)),
            dimension_numbers=("NCHW", "OIHW", "NCHW"))
        return y + bias[None, :, None, None]

    def pool(x):
        return jax.lax.reduce_window(
            x, -jnp.inf, jax.lax.max, (1, 1, 2, 2), (1, 1, 2, 2), "VALID")

    y = pool(jnp.maximum(conv(x_nchw, params["w1"], params["b1"]), 0.0))
    y = pool(jnp.maximum(conv(y, params["w2"], params["b2"]), 0.0))
    y = y.reshape(y.shape[0], -1)
    y = y @ params["fw1"] + params["fb1"]
    return y @ params["fw2"] + params["fb2"]


if __name__ == "__main__":
    key = jax.random.PRNGKey(0)
    k_x, k_p = jax.random.split(key)
    # MNIST-shaped input (spatial size fixed at 28 by the module's fc1).
    x = jax.random.uniform(k_x, (2, 1, 28, 28), dtype=jnp.float32)
    params = init_params(k_p)
    prep = prepare_params(params)

    logits = convnet_forward(x, prep)
    logits = jax.block_until_ready(logits)
    assert logits.shape == (2, 10), logits.shape

    ref = reference_forward(x, params)
    # bf16 weights/activations through both conv blocks and both FC layers
    # (f32 accumulation) give ~1e-2-level error vs the f32 reference.
    if not jnp.allclose(logits, ref, rtol=4e-2, atol=4e-2):
        raise AssertionError(
            f"mismatch vs reference: max abs err {jnp.max(jnp.abs(logits - ref))}")

    print("KERNEL_OK")
</pallas_src>

<mosaic_0001>
module attributes {stable_mosaic.version = 11 : i64} {
  func.func @conv_pool_kernel(%arg0: i32, %arg1: memref<4x16x128xbf16, #tpu.memory_space<vmem>>, %arg2: memref<128x128xbf16, #tpu.memory_space<vmem>>, %arg3: memref<1x128xf32, #tpu.memory_space<vmem>>, %arg4: memref<16x128xbf16, #tpu.memory_space<vmem>>) attributes {dimension_semantics = [#tpu.dimension_semantics<parallel>], iteration_bounds = array<i64: 7>, scalar_prefetch = 0 : i64, scratch_operands = 0 : i64, tpu.core_type = #tpu.core_type<tc>, window_params = [{transform_indices = @transform_0, window_bounds = array<i64: 4, 16, 128>}, {pipeline_mode = #tpu.pipeline_mode<synchronous>, transform_indices = @transform_1, window_bounds = array<i64: 128, 128>}, {pipeline_mode = #tpu.pipeline_mode<synchronous>, transform_indices = @transform_2, window_bounds = array<i64: 1, 128>}, {transform_indices = @transform_3, window_bounds = array<i64: 16, 128>}]} {
    %c0 = arith.constant 0 : index
    %c0_0 = arith.constant 0 : index
    %c0_1 = arith.constant 0 : index
    %0 = vector.load %arg1[%c0, %c0_0, %c0_1] : memref<4x16x128xbf16, #tpu.memory_space<vmem>>, vector<4x16x128xbf16>
    %1 = vector.shape_cast %0 : vector<4x16x128xbf16> to vector<64x128xbf16>
    %c0_2 = arith.constant 0 : index
    %c0_3 = arith.constant 0 : index
    %2 = vector.load %arg2[%c0_2, %c0_3] : memref<128x128xbf16, #tpu.memory_space<vmem>>, vector<128x128xbf16>
    %cst = arith.constant dense<0.000000e+00> : vector<64x128xf32>
    %3 = tpu.matmul %1, %2, %cst {dimension_numbers = #tpu.dot_dimension_numbers<[1], [0], [0], [1], [0, 0, 1, 1], [], []>} : vector<64x128xbf16>, vector<128x128xbf16>, vector<64x128xf32> -> vector<64x128xf32>
    %4 = vector.extract_strided_slice %3 {offsets = [0, 0], sizes = [16, 128], strides = [1, 1]} : vector<64x128xf32> to vector<16x128xf32>
    %5 = vector.extract_strided_slice %3 {offsets = [16, 0], sizes = [16, 128], strides = [1, 1]} : vector<64x128xf32> to vector<16x128xf32>
    %6 = arith.maximumf %4, %5 : vector<16x128xf32>
    %7 = vector.extract_strided_slice %3 {offsets = [32, 0], sizes = [16, 128], strides = [1, 1]} : vector<64x128xf32> to vector<16x128xf32>
    %8 = vector.extract_strided_slice %3 {offsets = [48, 0], sizes = [16, 128], strides = [1, 1]} : vector<64x128xf32> to vector<16x128xf32>
    %9 = arith.maximumf %7, %8 : vector<16x128xf32>
    %10 = arith.maximumf %6, %9 : vector<16x128xf32>
    %c0_4 = arith.constant 0 : index
    %c0_5 = arith.constant 0 : index
    %11 = vector.load %arg3[%c0_4, %c0_5] : memref<1x128xf32, #tpu.memory_space<vmem>>, vector<1x128xf32>
    %12 = vector.broadcast %11 : vector<1x128xf32> to vector<16x128xf32>
    %13 = arith.addf %10, %12 : vector<16x128xf32>
    %cst_6 = arith.constant 0.000000e+00 : f32
    %14 = vector.broadcast %cst_6 : f32 to vector<16x128xf32>
    %15 = arith.maximumf %13, %14 : vector<16x128xf32>
    %16 = arith.truncf %15 : vector<16x128xf32> to vector<16x128xbf16>
    %c0_7 = arith.constant 0 : index
    %c0_8 = arith.constant 0 : index
    %17 = vector.load %arg4[%c0_7, %c0_8] : memref<16x128xbf16, #tpu.memory_space<vmem>>, vector<16x128xbf16>
    tpu.vector_store %arg4[%c0_7, %c0_8], %16 {strides = array<i32>} : memref<16x128xbf16, #tpu.memory_space<vmem>>, vector<16x128xbf16>,
    return
  }
  func.func @transform_0(%arg0: i32) -> (i32, i32, i32) {
    %c0_i32 = arith.constant 0 : i32
    %c0_i32_0 = arith.constant 0 : i32
    %c0_i32_1 = arith.constant 0 : i32
    return %c0_i32, %arg0, %c0_i32_0 : i32, i32, i32
  }
  func.func @transform_1(%arg0: i32) -> (i32, i32) {
    %c0_i32 = arith.constant 0 : i32
    %c0_i32_0 = arith.constant 0 : i32
    %c0_i32_1 = arith.constant 0 : i32
    return %c0_i32, %c0_i32_0 : i32, i32
  }
  func.func @transform_2(%arg0: i32) -> (i32, i32) {
    %c0_i32 = arith.constant 0 : i32
    %c0_i32_0 = arith.constant 0 : i32
    %c0_i32_1 = arith.constant 0 : i32
    return %c0_i32, %c0_i32_0 : i32, i32
  }
  func.func @transform_3(%arg0: i32) -> (i32, i32) {
    %c0_i32 = arith.constant 0 : i32
    %c0_i32_0 = arith.constant 0 : i32
    return %arg0, %c0_i32 : i32, i32
  }
}

module attributes {stable_mosaic.version = 11 : i64} {
  func.func @conv_pool_kernel(%arg0: i32, %arg1: memref<4x16x1600xbf16, #tpu.memory_space<vmem>>, %arg2: memref<1600x128xbf16, #tpu.memory_space<vmem>>, %arg3: memref<1x128xf32, #tpu.memory_space<vmem>>, %arg4: memref<16x128xbf16, #tpu.memory_space<vmem>>) attributes {dimension_semantics = [#tpu.dimension_semantics<parallel>], iteration_bounds = array<i64: 4>, scalar_prefetch = 0 : i64, scratch_operands = 0 : i64, tpu.core_type = #tpu.core_type<tc>, window_params = [{transform_indices = @transform_0, window_bounds = array<i64: 4, 16, 1600>}, {pipeline_mode = #tpu.pipeline_mode<synchronous>, transform_indices = @transform_1, window_bounds = array<i64: 1600, 128>}, {pipeline_mode = #tpu.pipeline_mode<synchronous>, transform_indices = @transform_2, window_bounds = array<i64: 1, 128>}, {transform_indices = @transform_3, window_bounds = array<i64: 16, 128>}]} {
    %c0 = arith.constant 0 : index
    %c0_0 = arith.constant 0 : index
    %c0_1 = arith.constant 0 : index
    %0 = vector.load %arg1[%c0, %c0_0, %c0_1] : memref<4x16x1600xbf16, #tpu.memory_space<vmem>>, vector<4x16x1600xbf16>
    %1 = vector.shape_cast %0 : vector<4x16x1600xbf16> to vector<64x1600xbf16>
    %c0_2 = arith.constant 0 : index
    %c0_3 = arith.constant 0 : index
    %2 = vector.load %arg2[%c0_2, %c0_3] : memref<1600x128xbf16, #tpu.memory_space<vmem>>, vector<1600x128xbf16>
    %cst = arith.constant dense<0.000000e+00> : vector<64x128xf32>
    %3 = tpu.matmul %1, %2, %cst {dimension_numbers = #tpu.dot_dimension_numbers<[1], [0], [0], [1], [0, 0, 1, 1], [], []>} : vector<64x1600xbf16>, vector<1600x128xbf16>, vector<64x128xf32> -> vector<64x128xf32>
    %4 = vector.extract_strided_slice %3 {offsets = [0, 0], sizes = [16, 128], strides = [1, 1]} : vector<64x128xf32> to vector<16x128xf32>
    %5 = vector.extract_strided_slice %3 {offsets = [16, 0], sizes = [16, 128], strides = [1, 1]} : vector<64x128xf32> to vector<16x128xf32>
    %6 = arith.maximumf %4, %5 : vector<16x128xf32>
    %7 = vector.extract_strided_slice %3 {offsets = [32, 0], sizes = [16, 128], strides = [1, 1]} : vector<64x128xf32> to vector<16x128xf32>
    %8 = vector.extract_strided_slice %3 {offsets = [48, 0], sizes = [16, 128], strides = [1, 1]} : vector<64x128xf32> to vector<16x128xf32>
    %9 = arith.maximumf %7, %8 : vector<16x128xf32>
    %10 = arith.maximumf %6, %9 : vector<16x128xf32>
    %c0_4 = arith.constant 0 : index
    %c0_5 = arith.constant 0 : index
    %11 = vector.load %arg3[%c0_4, %c0_5] : memref<1x128xf32, #tpu.memory_space<vmem>>, vector<1x128xf32>
    %12 = vector.broadcast %11 : vector<1x128xf32> to vector<16x128xf32>
    %13 = arith.addf %10, %12 : vector<16x128xf32>
    %cst_6 = arith.constant 0.000000e+00 : f32
    %14 = vector.broadcast %cst_6 : f32 to vector<16x128xf32>
    %15 = arith.maximumf %13, %14 : vector<16x128xf32>
    %16 = arith.truncf %15 : vector<16x128xf32> to vector<16x128xbf16>
    %c0_7 = arith.constant 0 : index
    %c0_8 = arith.constant 0 : index
    %17 = vector.load %arg4[%c0_7, %c0_8] : memref<16x128xbf16, #tpu.memory_space<vmem>>, vector<16x128xbf16>
    tpu.vector_store %arg4[%c0_7, %c0_8], %16 {strides = array<i32>} : memref<16x128xbf16, #tpu.memory_space<vmem>>, vector<16x128xbf16>,
    return
  }
  func.func @transform_0(%arg0: i32) -> (i32, i32, i32) {
    %c0_i32 = arith.constant 0 : i32
    %c0_i32_0 = arith.constant 0 : i32
    %c0_i32_1 = arith.constant 0 : i32
    return %c0_i32, %arg0, %c0_i32_0 : i32, i32, i32
  }
  func.func @transform_1(%arg0: i32) -> (i32, i32) {
    %c0_i32 = arith.constant 0 : i32
    %c0_i32_0 = arith.constant 0 : i32
    %c0_i32_1 = arith.constant 0 : i32
    return %c0_i32, %c0_i32_0 : i32, i32
  }
  func.func @transform_2(%arg0: i32) -> (i32, i32) {
    %c0_i32 = arith.constant 0 : i32
    %c0_i32_0 = arith.constant 0 : i32
    %c0_i32_1 = arith.constant 0 : i32
    return %c0_i32, %c0_i32_0 : i32, i32
  }
  func.func @transform_3(%arg0: i32) -> (i32, i32) {
    %c0_i32 = arith.constant 0 : i32
    %c0_i32_0 = arith.constant 0 : i32
    return %arg0, %c0_i32 : i32, i32
  }
}

module attributes {stable_mosaic.version = 11 : i64} {
  func.func @fc_fused_kernel(%arg0: i32, %arg1: memref<2x3136xbf16, #tpu.memory_space<vmem>>, %arg2: memref<3136x512xbf16, #tpu.memory_space<vmem>>, %arg3: memref<1x512xf32, #tpu.memory_space<vmem>>, %arg4: memref<512x128xbf16, #tpu.memory_space<vmem>>, %arg5: memref<1x128xf32, #tpu.memory_space<vmem>>, %arg6: memref<2x128xf32, #tpu.memory_space<vmem>>) attributes {dimension_semantics = [#tpu.dimension_semantics<arbitrary>], iteration_bounds = array<i64: 2>, scalar_prefetch = 0 : i64, scratch_operands = 0 : i64, tpu.core_type = #tpu.core_type<tc>, window_params = [{pipeline_mode = #tpu.pipeline_mode<synchronous>, transform_indices = @transform_0, window_bounds = array<i64: 2, 3136>}, {transform_indices = @transform_1, window_bounds = array<i64: 3136, 512>}, {transform_indices = @transform_2, window_bounds = array<i64: 1, 512>}, {transform_indices = @transform_3, window_bounds = array<i64: 512, 128>}, {pipeline_mode = #tpu.pipeline_mode<synchronous>, transform_indices = @transform_4, window_bounds = array<i64: 1, 128>}, {pipeline_mode = #tpu.pipeline_mode<synchronous>, transform_indices = @transform_5, window_bounds = array<i64: 2, 128>}]} {
    %c0_i32 = arith.constant 0 : i32
    %0 = arith.cmpi eq, %arg0, %c0_i32 : i32
    %1 = arith.extui %0 : i1 to i32
    %c0_i32_0 = arith.constant 0 : i32
    %2 = arith.cmpi ne, %1, %c0_i32_0 : i32
    scf.if %2 {
      %cst_14 = arith.constant 0.000000e+00 : f32
      %18 = vector.broadcast %cst_14 : f32 to vector<2x128xf32>
      %c0_15 = arith.constant 0 : index
      %c0_16 = arith.constant 0 : index
      %19 = vector.load %arg6[%c0_15, %c0_16] : memref<2x128xf32, #tpu.memory_space<vmem>>, vector<2x128xf32>
      tpu.vector_store %arg6[%c0_15, %c0_16], %18 {strides = array<i32>} : memref<2x128xf32, #tpu.memory_space<vmem>>, vector<2x128xf32>,
    } else {
    }
    %c0 = arith.constant 0 : index
    %c0_1 = arith.constant 0 : index
    %3 = vector.load %arg1[%c0, %c0_1] : memref<2x3136xbf16, #tpu.memory_space<vmem>>, vector<2x3136xbf16>
    %c0_2 = arith.constant 0 : index
    %c0_3 = arith.constant 0 : index
    %4 = vector.load %arg2[%c0_2, %c0_3] : memref<3136x512xbf16, #tpu.memory_space<vmem>>, vector<3136x512xbf16>
    %cst = arith.constant dense<0.000000e+00> : vector<2x512xf32>
    %5 = tpu.matmul %3, %4, %cst {dimension_numbers = #tpu.dot_dimension_numbers<[1], [0], [0], [1], [0, 0, 1, 1], [], []>} : vector<2x3136xbf16>, vector<3136x512xbf16>, vector<2x512xf32> -> vector<2x512xf32>
    %c0_4 = arith.constant 0 : index
    %c0_5 = arith.constant 0 : index
    %6 = vector.load %arg3[%c0_4, %c0_5] : memref<1x512xf32, #tpu.memory_space<vmem>>, vector<1x512xf32>
    %7 = vector.broadcast %6 : vector<1x512xf32> to vector<2x512xf32>
    %8 = arith.addf %5, %7 : vector<2x512xf32>
    %c0_6 = arith.constant 0 : index
    %c0_7 = arith.constant 0 : index
    %9 = vector.load %arg6[%c0_6, %c0_7] : memref<2x128xf32, #tpu.memory_space<vmem>>, vector<2x128xf32>
    %10 = arith.truncf %8 : vector<2x512xf32> to vector<2x512xbf16>
    %c0_8 = arith.constant 0 : index
    %c0_9 = arith.constant 0 : index
    %11 = vector.load %arg4[%c0_8, %c0_9] : memref<512x128xbf16, #tpu.memory_space<vmem>>, vector<512x128xbf16>
    %cst_10 = arith.constant dense<0.000000e+00> : vector<2x128xf32>
    %12 = tpu.matmul %10, %11, %cst_10 {dimension_numbers = #tpu.dot_dimension_numbers<[1], [0], [0], [1], [0, 0, 1, 1], [], []>} : vector<2x512xbf16>, vector<512x128xbf16>, vector<2x128xf32> -> vector<2x128xf32>
    %13 = arith.addf %9, %12 : vector<2x128xf32>
    %c0_11 = arith.constant 0 : index
    %c0_12 = arith.constant 0 : index
    %14 = vector.load %arg6[%c0_11, %c0_12] : memref<2x128xf32, #tpu.memory_space<vmem>>, vector<2x128xf32>
    tpu.vector_store %arg6[%c0_11, %c0_12], %13 {strides = array<i32>} : memref<2x128xf32, #tpu.memory_space<vmem>>, vector<2x128xf32>,
    %c1_i32 = arith.constant 1 : i32
    %15 = arith.cmpi eq, %arg0, %c1_i32 : i32
    %16 = arith.extui %15 : i1 to i32
    %c0_i32_13 = arith.constant 0 : i32
    %17 = arith.cmpi ne, %16, %c0_i32_13 : i32
    scf.if %17 {
      %c0_14 = arith.constant 0 : index
      %c0_15 = arith.constant 0 : index
      %18 = vector.load %arg6[%c0_14, %c0_15] : memref<2x128xf32, #tpu.memory_space<vmem>>, vector<2x128xf32>
      %c0_16 = arith.constant 0 : index
      %c0_17 = arith.constant 0 : index
      %19 = vector.load %arg5[%c0_16, %c0_17] : memref<1x128xf32, #tpu.memory_space<vmem>>, vector<1x128xf32>
      %20 = vector.broadcast %19 : vector<1x128xf32> to vector<2x128xf32>
      %21 = arith.addf %18, %20 : vector<2x128xf32>
      %c0_18 = arith.constant 0 : index
      %c0_19 = arith.constant 0 : index
      %22 = vector.load %arg6[%c0_18, %c0_19] : memref<2x128xf32, #tpu.memory_space<vmem>>, vector<2x128xf32>
      tpu.vector_store %arg6[%c0_18, %c0_19], %21 {strides = array<i32>} : memref<2x128xf32, #tpu.memory_space<vmem>>, vector<2x128xf32>,
    } else {
    }
    return
  }
  func.func @transform_0(%arg0: i32) -> (i32, i32) {
    %c0_i32 = arith.constant 0 : i32
    %c0_i32_0 = arith.constant 0 : i32
    %c0_i32_1 = arith.constant 0 : i32
    return %c0_i32, %c0_i32_0 : i32, i32
  }
  func.func @transform_1(%arg0: i32) -> (i32, i32) {
    %c0_i32 = arith.constant 0 : i32
    %c0_i32_0 = arith.constant 0 : i32
    return %c0_i32, %arg0 : i32, i32
  }
  func.func @transform_2(%arg0: i32) -> (i32, i32) {
    %c0_i32 = arith.constant 0 : i32
    %c0_i32_0 = arith.constant 0 : i32
    return %c0_i32, %arg0 : i32, i32
  }
  func.func @transform_3(%arg0: i32) -> (i32, i32) {
    %c0_i32 = arith.constant 0 : i32
    %c0_i32_0 = arith.constant 0 : i32
    return %arg0, %c0_i32 : i32, i32
  }
  func.func @transform_4(%arg0: i32) -> (i32, i32) {
    %c0_i32 = arith.constant 0 : i32
    %c0_i32_0 = arith.constant 0 : i32
    %c0_i32_1 = arith.constant 0 : i32
    return %c0_i32, %c0_i32_0 : i32, i32
  }
  func.func @transform_5(%arg0: i32) -> (i32, i32) {
    %c0_i32 = arith.constant 0 : i32
    %c0_i32_0 = arith.constant 0 : i32
    %c0_i32_1 = arith.constant 0 : i32
    return %c0_i32, %c0_i32_0 : i32, i32
  }
}

</mosaic_0001>

<llo_original>
// kernel: convnet_forward.3
$region0: #{convnet_forward.3}
  #allocation0 [shape = 'u32[]', space=smem, size = 0x4, offset = 0x4, fixed_abs, tag = 'smem constant byte address 0x4 - core index']
  #allocation1 [shape = 'u32[144,128]{1,0:T(1,128)}', space=vmem, size = 0x12000, scoped, tag = 'internal scratch']
  %s0 = inlined_call_operand.vmem [shape: bf16[4,112,128], index: 0, kind: input, shape index: {}]
  %s1 = inlined_call_operand.vmem [shape: bf16[128,128], index: 1, kind: input, shape index: {}]
  %s2 = inlined_call_operand.vmem [shape: f32[1,128], index: 2, kind: input, shape index: {}]
  %s3 = inlined_call_operand.vmem [shape: bf16[112,128], index: 3, kind: output, shape index: {}]
  %s4 = sld [smem:[#allocation0]]
  $region86: #{convnet_forward.3} parent=0
    _
  %s6 = ssub.s32 1, %s4
  %s7 = scalar_select 0, %s6, %s4
  $region1: #{convnet_forward.3} parent=0
    #allocation2 [shape = 'u8[32768]{0}', space=vmem, size = 0x8000, scoped, tag = 'input window, operand 0']
    loop: start=0, step=1, limit=9
    $region2: #{convnet_forward.3} parent=1 // loop_pre_header
      _
    $region3: #{convnet_forward.3} parent=1 // loop_header
      %s9 = sphi 0, %s13
      %p10 = scmp.ge.s32.totalorder %s9, 9
      %s19 = sphi 0, %s21
      %s22 = sphi 0, %s19
      %s23 = sphi 0, %s22
      %s39 = sphi 0, %s23
      %s43 = sphi 0, %s43
      %s45 = sphi 0, %s43
      %s46 = sphi 0, %s45
      %s60 = sphi 0, %s46
      %s64 = sphi 0, %s64
      %s66 = sphi 0, %s64
      %s67 = sphi 0, %s66
      %s81 = sphi 0, %s67
      %s87 = sphi 0, %s89
      %s90 = sphi 0, %s87
      %s91 = sphi 0, %s90
      %s107 = sphi 0, %s91
    $region4: #{convnet_forward.3} parent=1 // loop_header_branch
      %12 = sbr.rel (%p10) target = $region8
    $region5: #{convnet_forward.3} parent=1 // loop_body
      %s14 = ssub.s32 %s9, 1
      %s15 = ssub.s32 %s9, 2
      %s16 = sadd.s32 %s9, 1
      %s17 = ssub.s32 %s9, %s16
      %p18 = scmp.eq.s32.totalorder %s17, 0
      %s20 = sadd.s32 %s19, 1
      %s21 = scalar_select %p18, %s19, %s20
      %p24 = pneg %p18
      %p25 = scmp.eq.s32.totalorder %s9, 6
      %p26 = por %p24, %p25
      %p27 = scmp.ne.s32.totalorder %s19, %s22
      %p28 = scmp.eq.s32.totalorder %s9, 0
      %p29 = por %p27, %p28
      %p30 = scmp.ne.s32.totalorder %s19, %s22
      %p31 = scmp.eq.s32.totalorder %s14, 6
      %p32 = por %p30, %p31
      %p33 = scmp.ne.s32.totalorder %s22, %s23
      %p34 = scmp.eq.s32.totalorder %s14, 0
      %p35 = por %p33, %p34
      %p36 = scmp.ne.s32.totalorder %s22, %s23
      %p37 = scmp.eq.s32.totalorder %s15, 6
      %p38 = por %p36, %p37
      %p40 = scmp.ne.s32.totalorder %s23, %s39
      %p41 = scmp.eq.s32.totalorder %s15, 0
      %p42 = por %p40, %p41
      %s44 = sadd.s32 %s43, 1
      %p47 = scmp.eq.s32.totalorder %s9, 6
      %p48 = scmp.ne.s32.totalorder %s43, %s45
      %p49 = scmp.eq.s32.totalorder %s9, 0
      %p50 = por %p48, %p49
      %p51 = scmp.ne.s32.totalorder %s43, %s45
      %p52 = scmp.eq.s32.totalorder %s14, 6
      %p53 = por %p51, %p52
      %p54 = scmp.ne.s32.totalorder %s45, %s46
      %p55 = scmp.eq.s32.totalorder %s14, 0
      %p56 = por %p54, %p55
      %p57 = scmp.ne.s32.totalorder %s45, %s46
      %p58 = scmp.eq.s32.totalorder %s15, 6
      %p59 = por %p57, %p58
      %p61 = scmp.ne.s32.totalorder %s46, %s60
      %p62 = scmp.eq.s32.totalorder %s15, 0
      %p63 = por %p61, %p62
      %s65 = sadd.s32 %s64, 1
      %p68 = scmp.eq.s32.totalorder %s9, 6
      %p69 = scmp.ne.s32.totalorder %s64, %s66
      %p70 = scmp.eq.s32.totalorder %s9, 0
      %p71 = por %p69, %p70
      %p72 = scmp.ne.s32.totalorder %s64, %s66
      %p73 = scmp.eq.s32.totalorder %s14, 6
      %p74 = por %p72, %p73
      %p75 = scmp.ne.s32.totalorder %s66, %s67
      %p76 = scmp.eq.s32.totalorder %s14, 0
      %p77 = por %p75, %p76
      %p78 = scmp.ne.s32.totalorder %s66, %s67
      %p79 = scmp.eq.s32.totalorder %s15, 6
      %p80 = por %p78, %p79
      %p82 = scmp.ne.s32.totalorder %s67, %s81
      %p83 = scmp.eq.s32.totalorder %s15, 0
      %p84 = por %p82, %p83
      %s85 = ssub.s32 %s9, %s16
      %p86 = scmp.eq.s32.totalorder %s85, 0
      %s88 = sadd.s32 %s87, 1
      %s89 = scalar_select %p86, %s87, %s88
      %p92 = pneg %p86
      %p93 = scmp.eq.s32.totalorder %s9, 6
      %p94 = por %p92, %p93
      %p95 = scmp.ne.s32.totalorder %s87, %s90
      %p96 = scmp.eq.s32.totalorder %s9, 0
      %p97 = por %p95, %p96
      %p98 = scmp.ne.s32.totalorder %s87, %s90
      %p99 = scmp.eq.s32.totalorder %s14, 6
      %p100 = por %p98, %p99
      %p101 = scmp.ne.s32.totalorder %s90, %s91
      %p102 = scmp.eq.s32.totalorder %s14, 0
      %p103 = por %p101, %p102
      %p104 = scmp.ne.s32.totalorder %s90, %s91
      %p105 = scmp.eq.s32.totalorder %s15, 6
      %p106 = por %p104, %p105
      %p108 = scmp.ne.s32.totalorder %s91, %s107
      %p109 = scmp.eq.s32.totalorder %s15, 0
      %p110 = por %p108, %p109
      %p111 = scmp.le.s32.totalorder 1, %s9
      %p112 = scmp.lt.s32.totalorder %s9, 8
      %p113 = pnand %p111, %p112
      %p114 = pneg %p113
      // Predicated region
      $region9: #{convnet_forward.3} parent=5 // pred_check
        _
      $region10: #{convnet_forward.3} parent=5 // pred_check_branch
        %116 = sbr.rel (%p113) target = $region12
      $region11: #{convnet_forward.3} parent=5 // pred_region
        %s117 = ssub.s32 %s9, 1
        // Predicated region
        $region13: #{convnet_forward.3} parent=11 // pred_check
          %p118 = pneg %p56
        $region14: #{convnet_forward.3} parent=11 // pred_check_branch
          %120 = sbr.rel (%p118) target = $region16
        $region15: #{convnet_forward.3} parent=11 // pred_region
          _
        $region16: #{convnet_forward.3} parent=11 // pred_fallthru
          _
        // Predicated region
        $region17: #{convnet_forward.3} parent=11 // pred_check
          %p121 = pneg %p77
        $region18: #{convnet_forward.3} parent=11 // pred_check_branch
          %123 = sbr.rel (%p121) target = $region20
        $region19: #{convnet_forward.3} parent=11 // pred_region
          _
        $region20: #{convnet_forward.3} parent=11 // pred_fallthru
          _
      $region12: #{convnet_forward.3} parent=5 // pred_fallthru
        _
      %p124 = scmp.lt.s32.totalorder %s9, 7
      // Predicated region
      $region21: #{convnet_forward.3} parent=5 // pred_check
        %p125 = pneg %p124
      $region22: #{convnet_forward.3} parent=5 // pred_check_branch
        %127 = sbr.rel (%p125) target = $region24
      $region23: #{convnet_forward.3} parent=5 // pred_region
        // Predicated region
        $region25: #{convnet_forward.3} parent=23 // pred_check
          %p128 = pneg %p29
        $region26: #{convnet_forward.3} parent=23 // pred_check_branch
          %130 = sbr.rel (%p128) target = $region28
        $region27: #{convnet_forward.3} parent=23 // pred_region
          %s131 = sand.u32 %s19, 1
          %s132 = sand.u32 %s19, 1
          %s133 = smul.addr %s132, 32
          %s134 = scalar_lea.vmem [#allocation2], %s133
          %s135 = smul.u32 2, %s9
          %s136 = smul.addr %s135, 4
          %s137 = scalar_lea.vmem %s0, %s136
          // Predicated region
          $region29: #{convnet_forward.3} parent=27 // pred_check
            _
          $region30: #{convnet_forward.3} parent=27 // pred_check_branch
            %139 = sbr.rel (0) target = $region32
          $region31: #{convnet_forward.3} parent=27 // pred_region
            // Predicated region
            $region33: #{convnet_forward.3} parent=31 // pred_check
              _
            $region34: #{convnet_forward.3} parent=31 // pred_check_branch
              %141 = sbr.rel target = $region36
            $region35: #{convnet_forward.3} parent=31 // pred_region
              // Predicated region
              $region48: #{convnet_forward.3} parent=35 // pred_check
                _
              $region49: #{convnet_forward.3} parent=35 // pred_check_branch
                %171 = sbr.rel (0) target = $region51
              $region50: #{convnet_forward.3} parent=35 // pred_region
                loop: start=0, step=1, limit=1
                $region52: #{convnet_forward.3} parent=50 // loop_pre_header
                  _
                $region53: #{convnet_forward.3} parent=50 // loop_header
                  %s173 = sphi 0, %s177
                  %p174 = scmp.ge.s32.totalorder %s173, 1
                  %s178 = sphi %s137, %s137
                  %s179 = sphi %s134, %s134
                $region54: #{convnet_forward.3} parent=50 // loop_header_branch
                  %176 = sbr.rel (%p174) target = $region58
                $region55: #{convnet_forward.3} parent=50 // loop_body
                  _
                $region56: #{convnet_forward.3} parent=50 // loop_footer
                  %s177 = sadd.s32 1, %s173
                $region57: #{convnet_forward.3} parent=50 // loop_footer_branch
                  %172 = sbr.rel target = $region53
                $region58: #{convnet_forward.3} parent=50 // loop_exit
                  _
                %s181 = ssub.s32 16, 1
                loop: start=0, step=1, limit=1
                $region59: #{convnet_forward.3} parent=50 // loop_pre_header
                  _
                $region60: #{convnet_forward.3} parent=50 // loop_header
                  %s183 = sphi 0, %s187
                  %p184 = scmp.ge.s32.totalorder %s183, 1
                  %s188 = sphi %s137, %s137
                  %s189 = sphi %s134, %s134
                $region61: #{convnet_forward.3} parent=50 // loop_header_branch
                  %186 = sbr.rel (%p184) target = $region65
                $region62: #{convnet_forward.3} parent=50 // loop_body
                  %v190 = vld [vmem:[%s188] sm:%s181]
                  %191 = vst [vmem:[%s189] sm:%s181] %v190
                  %v192 = vld [vmem:[%s188 + $0x4] sm:%s181]
                  %193 = vst [vmem:[%s189 + $0x4] sm:%s181] %v192
                  %v194 = vld [vmem:[%s188 + $0x38] sm:%s181]
                  %195 = vst [vmem:[%s189 + $0x8] sm:%s181] %v194
                  %v196 = vld [vmem:[%s188 + $0x3c] sm:%s181]
                  %197 = vst [vmem:[%s189 + $0xc] sm:%s181] %v196
                  %v198 = vld [vmem:[%s188 + $0x70] sm:%s181]
                  %199 = vst [vmem:[%s189 + $0x10] sm:%s181] %v198
                  %v200 = vld [vmem:[%s188 + $0x74] sm:%s181]
                  %201 = vst [vmem:[%s189 + $0x14] sm:%s181] %v200
                  %v202 = vld [vmem:[%s188 + $0xa8] sm:%s181]
                  %203 = vst [vmem:[%s189 + $0x18] sm:%s181] %v202
                  %v204 = vld [vmem:[%s188 + $0xac] sm:%s181]
                  %205 = vst [vmem:[%s189 + $0x1c] sm:%s181] %v204
                $region63: #{convnet_forward.3} parent=50 // loop_footer
                  %s187 = sadd.s32 1, %s183
                $region64: #{convnet_forward.3} parent=50 // loop_footer_branch
                  %182 = sbr.rel target = $region60
                $region65: #{convnet_forward.3} parent=50 // loop_exit
                  _
              $region51: #{convnet_forward.3} parent=35 // pred_fallthru
                _
            $region36: #{convnet_forward.3} parent=31 // pred_fallthru
              _
            // Predicated region
            $region37: #{convnet_forward.3} parent=31 // pred_check
              _
            $region38: #{convnet_forward.3} parent=31 // pred_check_branch
              %143 = sbr.rel (0) target = $region40
            $region39: #{convnet_forward.3} parent=31 // pred_region
              %s145 = ssub.s32 16, 1
              loop: start=0, step=1, limit=1
              $region41: #{convnet_forward.3} parent=39 // loop_pre_header
                _
              $region42: #{convnet_forward.3} parent=39 // loop_header
                %s147 = sphi 0, %s151
                %p148 = scmp.ge.s32.totalorder %s147, 1
                %s152 = sphi %s137, %s137
                %s153 = sphi %s134, %s134
              $region43: #{convnet_forward.3} parent=39 // loop_header_branch
                %150 = sbr.rel (%p148) target = $region47
              $region44: #{convnet_forward.3} parent=39 // loop_body
                %v154 = vld [vmem:[%s152] sm:%s145]
                %155 = vst [vmem:[%s153] sm:%s145] %v154
                %v156 = vld [vmem:[%s152 + $0x4] sm:%s145]
                %157 = vst [vmem:[%s153 + $0x4] sm:%s145] %v156
                %v158 = vld [vmem:[%s152 + $0x38] sm:%s145]
                %159 = vst [vmem:[%s153 + $0x8] sm:%s145] %v158
                %v160 = vld [vmem:[%s152 + $0x3c] sm:%s145]
                %161 = vst [vmem:[%s153 + $0xc] sm:%s145] %v160
                %v162 = vld [vmem:[%s152 + $0x70] sm:%s145]
                %163 = vst [vmem:[%s153 + $0x10] sm:%s145] %v162
                %v164 = vld [vmem:[%s152 + $0x74] sm:%s145]
                %165 = vst [vmem:[%s153 + $0x14] sm:%s145] %v164
                %v166 = vld [vmem:[%s152 + $0xa8] sm:%s145]
                %167 = vst [vmem:[%s153 + $0x18] sm:%s145] %v166
                %v168 = vld [vmem:[%s152 + $0xac] sm:%s145]
                %169 = vst [vmem:[%s153 + $0x1c] sm:%s145] %v168
              $region45: #{convnet_forward.3} parent=39 // loop_footer
                %s151 = sadd.s32 1, %s147
              $region46: #{convnet_forward.3} parent=39 // loop_footer_branch
                %146 = sbr.rel target = $region42
              $region47: #{convnet_forward.3} parent=39 // loop_exit
                _
            $region40: #{convnet_forward.3} parent=31 // pred_fallthru
              _
          $region32: #{convnet_forward.3} parent=27 // pred_fallthru
            _
          %206 = vnop
        $region28: #{convnet_forward.3} parent=23 // pred_fallthru
          _
      $region24: #{convnet_forward.3} parent=5 // pred_fallthru
        _
      %p207 = scmp.le.s32.totalorder 1, %s9
      %p208 = scmp.lt.s32.totalorder %s9, 8
      %p209 = pnand %p207, %p208
      %p210 = pneg %p209
      // Predicated region
      $region66: #{convnet_forward.3} parent=5 // pred_check
        _
      $region67: #{convnet_forward.3} parent=5 // pred_check_branch
        %212 = sbr.rel (%p209) target = $region69
      $region68: #{convnet_forward.3} parent=5 // pred_region
        %s213 = ssub.s32 %s9, 1
        %s214 = sand.u32 %s22, 1
        %s215 = sand.u32 %s22, 1
        %s216 = smul.addr %s215, 32
        %s217 = scalar_lea.vmem [#allocation2], %s216
        // Predicated region
        $region70: #{convnet_forward.3} parent=68 // pred_check
          %p218 = pneg %p35
        $region71: #{convnet_forward.3} parent=68 // pred_check_branch
          %220 = sbr.rel (%p218) target = $region73
        $region72: #{convnet_forward.3} parent=68 // pred_region
          _
        $region73: #{convnet_forward.3} parent=68 // pred_fallthru
          _
        %s221 = sand.u32 %s22, 1
        %s222 = sand.u32 %s22, 1
        %s223 = smul.addr %s222, 32
        %s224 = scalar_lea.vmem [#allocation2], %s223
        %p225 = pneg %p35
        %p226 = pneg %p32
        %p227 = pneg %p56
        %p228 = pneg %p53
        %p229 = pneg %p77
        %p230 = pneg %p74
        %p231 = pneg %p103
        %p232 = pneg %p100
        %s233 = smul.u32 2, %s14
        %p234 = scmp.lt.s32.totalorder %s233, 13
        %s235 = scalar_select %p234, %s233, 13
        %s236 = smul.addr %s235, 4
        %s237 = scalar_lea.vmem %s3, %s236
        %s238 = smul.u32 2, %s14
        %s239 = smul.u32 2, %s14
        %p240 = scmp.lt.s32.totalorder %s239, 13
        %s241 = scalar_select %p240, %s239, 13
        %s242 = smul.addr %s241, 4
        %s243 = scalar_lea.vmem %s3, %s242
        %s244 = smul.u32 2, %s14
        %v246 = vld [vmem:[%s217] sm:$0xf]
        %v247 = vld [vmem:[%s217 + $0x4] sm:$0xf]
        %v248 = vld [vmem:[%s217 + $0x8] sm:$0xf]
        %v249 = vld [vmem:[%s217 + $0xc] sm:$0xf]
        %v250 = vld [vmem:[%s217 + $0x10] sm:$0xf]
        %v251 = vld [vmem:[%s217 + $0x14] sm:$0xf]
        %v252 = vld [vmem:[%s217 + $0x18] sm:$0xf]
        %v253 = vld [vmem:[%s217 + $0x1c] sm:$0xf]
        %v254 = vld [vmem:[%s1] sm:$0xf]
        %v255 = vld [vmem:[%s1 + $0x4] sm:$0xf]
        %v256 = vld [vmem:[%s1 + $0x8] sm:$0xf]
        %v257 = vld [vmem:[%s1 + $0xc] sm:$0xf]
        %v258 = vld [vmem:[%s1 + $0x10] sm:$0xf]
        %v259 = vld [vmem:[%s1 + $0x14] sm:$0xf]
        %v260 = vld [vmem:[%s1 + $0x18] sm:$0xf]
        %v261 = vld [vmem:[%s1 + $0x1c] sm:$0xf]
        %v262 = vld [vmem:[%s1 + $0x20] sm:$0xf]
        %v263 = vld [vmem:[%s1 + $0x24] sm:$0xf]
        %v264 = vld [vmem:[%s1 + $0x28] sm:$0xf]
        %v265 = vld [vmem:[%s1 + $0x2c] sm:$0xf]
        %v266 = vld [vmem:[%s1 + $0x30] sm:$0xf]
        %v267 = vld [vmem:[%s1 + $0x34] sm:$0xf]
        %v268 = vld [vmem:[%s1 + $0x38] sm:$0xf]
        %v269 = vld [vmem:[%s1 + $0x3c] sm:$0xf]
        %v278 = vunpack.c.l.b16 %v246
        %v279 = vunpack.c.l.b16 %v247
        %v280 = vunpack.c.l.b16 %v248
        %v281 = vunpack.c.l.b16 %v249
        %v282 = vunpack.c.l.b16 %v250
        %v283 = vunpack.c.l.b16 %v251
        %v284 = vunpack.c.l.b16 %v252
        %v285 = vunpack.c.l.b16 %v253
        %v286 = vpack.c.b16 %v279, %v278
        %v287 = vpack.c.b16 %v281, %v280
        %v288 = vpack.c.b16 %v283, %v282
        %v289 = vpack.c.b16 %v285, %v284
        %v310 = vunpack.c.l.b16 %v254
        %v311 = vunpack.c.l.b16 %v255
        %v312 = vunpack.c.l.b16 %v256
        %v313 = vunpack.c.l.b16 %v257
        %v314 = vunpack.c.l.b16 %v258
        %v315 = vunpack.c.l.b16 %v259
        %v316 = vunpack.c.l.b16 %v260
        %v317 = vunpack.c.l.b16 %v261
        %v318 = vunpack.c.l.b16 %v262
        %v319 = vunpack.c.l.b16 %v263
        %v320 = vunpack.c.l.b16 %v264
        %v321 = vunpack.c.l.b16 %v265
        %v322 = vunpack.c.l.b16 %v266
        %v323 = vunpack.c.l.b16 %v267
        %v324 = vunpack.c.l.b16 %v268
        %v325 = vunpack.c.l.b16 %v269
        %v326 = vpack.c.b16 %v311, %v310
        %v327 = vpack.c.b16 %v313, %v312
        %v328 = vpack.c.b16 %v315, %v314
        %v329 = vpack.c.b16 %v317, %v316
        %v330 = vpack.c.b16 %v319, %v318
        %v331 = vpack.c.b16 %v321, %v320
        %v332 = vpack.c.b16 %v323, %v322
        %v333 = vpack.c.b16 %v325, %v324
        %342 = vmatprep.subr.bf16.mxu0 0
        %343 = vmatpush1.bf16.msra.mxu0 %v333
        %344 = vmatprep.subr.bf16.mxu0 0
        %345 = vmatpush1.bf16.msra.mxu0 %v332
        %346 = vmatprep.subr.bf16.mxu0 0
        %347 = vmatpush1.bf16.msra.mxu0 %v331
        %348 = vmatprep.subr.bf16.mxu0 0
        %349 = vmatpush1.bf16.msra.mxu0 %v330
        %350 = vmatprep.subr.bf16.mxu0 0
        %351 = vmatpush1.bf16.msra.mxu0 %v329
        %352 = vmatprep.subr.bf16.mxu0 0
        %353 = vmatpush1.bf16.msra.mxu0 %v328
        %354 = vmatprep.subr.bf16.mxu0 0
        %355 = vmatpush1.bf16.msra.mxu0 %v327
        %356 = vmatprep.subr.bf16.mxu0 0
        %357 = vmatpush1.bf16.msra.mxu0 %v326
        %358 = vmatprep.subr.bf16.mxu0 0
        %359 = vmatpush2.bf16.msra.mxu0 0
        %360 = vmatprep.subr.bf16.mxu0 0
        %361 = vmatpush2.bf16.msra.mxu0 0
        %362 = vmatprep.subr.bf16.mxu0 0
        %363 = vmatpush2.bf16.msra.mxu0 0
        %364 = vmatprep.subr.bf16.mxu0 0
        %365 = vmatpush2.bf16.msra.mxu0 0
        %366 = vmatprep.subr.bf16.mxu0 0
        %367 = vmatpush2.bf16.msra.mxu0 0
        %368 = vmatprep.subr.bf16.mxu0 0
        %369 = vmatpush2.bf16.msra.mxu0 0
        %370 = vmatprep.subr.bf16.mxu0 0
        %371 = vmatpush2.bf16.msra.mxu0 0
        %372 = vmatprep.subr.bf16.mxu0 0
        %373 = vmatpush2.bf16.msra.mxu0 0
        %374 = vmatprep.mubr.bf16.mxu0 0
        %375 = vmatmul.mubr.bf16.gmra.mxu0 %v286
        %v376 = vpop.f32.mrf.mxu0
        %v377 = vadd.f32 0.0, %v376
        %v378 = vpop.f32.mrf.mxu0
        %v379 = vpop.f32.mrf.mxu0
        %v380 = vadd.f32 0.0, %v379
        %v381 = vpop.f32.mrf.mxu0
        %382 = vmatprep.mubr.bf16.mxu0 0
        %383 = vmatmul.mubr.bf16.gmra.mxu0 %v287
        %v384 = vpop.f32.mrf.mxu0
        %v385 = vadd.f32 0.0, %v384
        %v386 = vpop.f32.mrf.mxu0
        %v387 = vpop.f32.mrf.mxu0
        %v388 = vadd.f32 0.0, %v387
        %v389 = vpop.f32.mrf.mxu0
        %390 = vmatprep.mubr.bf16.mxu0 0
        %391 = vmatmul.mubr.bf16.gmra.mxu0 %v288
        %v392 = vpop.f32.mrf.mxu0
        %v393 = vadd.f32 0.0, %v392
        %v394 = vpop.f32.mrf.mxu0
        %v395 = vpop.f32.mrf.mxu0
        %v396 = vadd.f32 0.0, %v395
        %v397 = vpop.f32.mrf.mxu0
        %398 = vmatprep.mubr.bf16.mxu0 0
        %399 = vmatmul.mubr.bf16.gmra.mxu0 %v289
        %v400 = vpop.f32.mrf.mxu0
        %v401 = vadd.f32 0.0, %v400
        %v402 = vpop.f32.mrf.mxu0
        %v403 = vpop.f32.mrf.mxu0
        %v404 = vadd.f32 0.0, %v403
        %v405 = vpop.f32.mrf.mxu0
        %406 = vdwg.mxu0
        %v407 = vmax.f32 %v377, %v385
        %v408 = vmax.f32 %v380, %v388
        %v409 = vmax.f32 %v393, %v401
        %v410 = vmax.f32 %v396, %v404
        %v411 = vmax.f32 %v407, %v409
        %v412 = vmax.f32 %v408, %v410
        %v413 = vld [vmem:[%s2] sm:$0x1]
        %v415 = vlaneseq
        %v416 = vshrl.u32 %v415, 7
        %v417 = vsub.s32 0, %v416
        %v418 = vrot.slane %v413, %v417
        %v420 = vadd.f32 %v411, %v418
        %v421 = vadd.f32 %v412, %v418
        %v422 = vmax.f32 %v420, 0.0
        %v423 = vmax.f32 %v421, 0.0
        %v424 = vpack.c.bf16 %v423, %v422
        %v426 = vunpack.c.l.b16 %v424
        %v427 = vunpack.c.h.b16 %v424
        %v428 = vpack.c.b16 %v426, %v426
        %v429 = vpack.c.b16 %v427, %v427
        %432 = vst [vmem:[%s243] sm:$0xf] %v428
        %433 = vst [vmem:[%s243 + $0x4] sm:$0xf] %v429
        %s434 = smul.u32 2, %s14
        %p435 = scmp.lt.s32.totalorder %s434, 13
        %s436 = scalar_select %p435, %s434, 13
        %s437 = smul.addr %s436, 4
        %s438 = scalar_lea.vmem %s3, %s437
        // Predicated region
        $region74: #{convnet_forward.3} parent=68 // pred_check
          %p439 = pneg %p100
        $region75: #{convnet_forward.3} parent=68 // pred_check_branch
          %441 = sbr.rel (%p439) target = $region77
        $region76: #{convnet_forward.3} parent=68 // pred_region
          %s442 = smul.u32 2, %s14
        $region77: #{convnet_forward.3} parent=68 // pred_fallthru
          _
      $region69: #{convnet_forward.3} parent=5 // pred_fallthru
        _
      %p443 = scmp.le.s32.totalorder 2, %s9
      // Predicated region
      $region78: #{convnet_forward.3} parent=5 // pred_check
        %p444 = pneg %p443
      $region79: #{convnet_forward.3} parent=5 // pred_check_branch
        %446 = sbr.rel (%p444) target = $region81
      $region80: #{convnet_forward.3} parent=5 // pred_region
        %s447 = ssub.s32 %s9, 2
        // Predicated region
        $region82: #{convnet_forward.3} parent=80 // pred_check
          %p448 = pneg %p106
        $region83: #{convnet_forward.3} parent=80 // pred_check_branch
          %450 = sbr.rel (%p448) target = $region85
        $region84: #{convnet_forward.3} parent=80 // pred_region
          %s451 = smul.u32 2, %s15
          %p452 = scmp.lt.s32.totalorder %s451, 13
          %s453 = scalar_select %p452, %s451, 13
          %s454 = smul.addr %s453, 4
          %s455 = scalar_lea.vmem %s3, %s454
        $region85: #{convnet_forward.3} parent=80 // pred_fallthru
          _
      $region81: #{convnet_forward.3} parent=5 // pred_fallthru
        _
    $region6: #{convnet_forward.3} parent=1 // loop_footer
      %s13 = sadd.s32 1, %s9
    $region7: #{convnet_forward.3} parent=1 // loop_footer_branch
      %8 = sbr.rel target = $region3
    $region8: #{convnet_forward.3} parent=1 // loop_exit
      _

// kernel: convnet_forward.4
$region0: #{convnet_forward.4}
  #allocation0 [shape = 'u32[]', space=smem, size = 0x4, offset = 0x4, fixed_abs, tag = 'smem constant byte address 0x4 - core index']
  #allocation1 [shape = 'u32[144,128]{1,0:T(1,128)}', space=vmem, size = 0x12000, scoped, tag = 'internal scratch']
  %s0 = inlined_call_operand.vmem [shape: bf16[4,64,1600], index: 0, kind: input, shape index: {}]
  %s1 = inlined_call_operand.vmem [shape: bf16[1600,128], index: 1, kind: input, shape index: {}]
  %s2 = inlined_call_operand.vmem [shape: f32[1,128], index: 2, kind: input, shape index: {}]
  %s3 = inlined_call_operand.vmem [shape: bf16[64,128], index: 3, kind: output, shape index: {}]
  %s4 = sld [smem:[#allocation0]]
  $region71: #{convnet_forward.4} parent=0
    _
  %s6 = ssub.s32 1, %s4
  %s7 = scalar_select 0, %s6, %s4
  $region1: #{convnet_forward.4} parent=0
    #allocation2 [shape = 'u8[425984]{0}', space=vmem, size = 0x68000, scoped, tag = 'input window, operand 0']
    loop: start=0, step=1, limit=6
    $region2: #{convnet_forward.4} parent=1 // loop_pre_header
      _
    $region3: #{convnet_forward.4} parent=1 // loop_header
      %s9 = sphi 0, %s13
      %p10 = scmp.ge.s32.totalorder %s9, 6
      %s19 = sphi 0, %s21
      %s22 = sphi 0, %s19
      %s23 = sphi 0, %s22
      %s39 = sphi 0, %s23
      %s43 = sphi 0, %s43
      %s45 = sphi 0, %s43
      %s46 = sphi 0, %s45
      %s60 = sphi 0, %s46
      %s64 = sphi 0, %s64
      %s66 = sphi 0, %s64
      %s67 = sphi 0, %s66
      %s81 = sphi 0, %s67
      %s87 = sphi 0, %s89
      %s90 = sphi 0, %s87
      %s91 = sphi 0, %s90
      %s107 = sphi 0, %s91
    $region4: #{convnet_forward.4} parent=1 // loop_header_branch
      %12 = sbr.rel (%p10) target = $region8
    $region5: #{convnet_forward.4} parent=1 // loop_body
      %s14 = ssub.s32 %s9, 1
      %s15 = ssub.s32 %s9, 2
      %s16 = sadd.s32 %s9, 1
      %s17 = ssub.s32 %s9, %s16
      %p18 = scmp.eq.s32.totalorder %s17, 0
      %s20 = sadd.s32 %s19, 1
      %s21 = scalar_select %p18, %s19, %s20
      %p24 = pneg %p18
      %p25 = scmp.eq.s32.totalorder %s9, 3
      %p26 = por %p24, %p25
      %p27 = scmp.ne.s32.totalorder %s19, %s22
      %p28 = scmp.eq.s32.totalorder %s9, 0
      %p29 = por %p27, %p28
      %p30 = scmp.ne.s32.totalorder %s19, %s22
      %p31 = scmp.eq.s32.totalorder %s14, 3
      %p32 = por %p30, %p31
      %p33 = scmp.ne.s32.totalorder %s22, %s23
      %p34 = scmp.eq.s32.totalorder %s14, 0
      %p35 = por %p33, %p34
      %p36 = scmp.ne.s32.totalorder %s22, %s23
      %p37 = scmp.eq.s32.totalorder %s15, 3
      %p38 = por %p36, %p37
      %p40 = scmp.ne.s32.totalorder %s23, %s39
      %p41 = scmp.eq.s32.totalorder %s15, 0
      %p42 = por %p40, %p41
      %s44 = sadd.s32 %s43, 1
      %p47 = scmp.eq.s32.totalorder %s9, 3
      %p48 = scmp.ne.s32.totalorder %s43, %s45
      %p49 = scmp.eq.s32.totalorder %s9, 0
      %p50 = por %p48, %p49
      %p51 = scmp.ne.s32.totalorder %s43, %s45
      %p52 = scmp.eq.s32.totalorder %s14, 3
      %p53 = por %p51, %p52
      %p54 = scmp.ne.s32.totalorder %s45, %s46
      %p55 = scmp.eq.s32.totalorder %s14, 0
      %p56 = por %p54, %p55
      %p57 = scmp.ne.s32.totalorder %s45, %s46
      %p58 = scmp.eq.s32.totalorder %s15, 3
      %p59 = por %p57, %p58
      %p61 = scmp.ne.s32.totalorder %s46, %s60
      %p62 = scmp.eq.s32.totalorder %s15, 0
      %p63 = por %p61, %p62
      %s65 = sadd.s32 %s64, 1
      %p68 = scmp.eq.s32.totalorder %s9, 3
      %p69 = scmp.ne.s32.totalorder %s64, %s66
      %p70 = scmp.eq.s32.totalorder %s9, 0
      %p71 = por %p69, %p70
      %p72 = scmp.ne.s32.totalorder %s64, %s66
      %p73 = scmp.eq.s32.totalorder %s14, 3
      %p74 = por %p72, %p73
      %p75 = scmp.ne.s32.totalorder %s66, %s67
      %p76 = scmp.eq.s32.totalorder %s14, 0
      %p77 = por %p75, %p76
      %p78 = scmp.ne.s32.totalorder %s66, %s67
      %p79 = scmp.eq.s32.totalorder %s15, 3
      %p80 = por %p78, %p79
      %p82 = scmp.ne.s32.totalorder %s67, %s81
      %p83 = scmp.eq.s32.totalorder %s15, 0
      %p84 = por %p82, %p83
      %s85 = ssub.s32 %s9, %s16
      %p86 = scmp.eq.s32.totalorder %s85, 0
      %s88 = sadd.s32 %s87, 1
      %s89 = scalar_select %p86, %s87, %s88
      %p92 = pneg %p86
      %p93 = scmp.eq.s32.totalorder %s9, 3
      %p94 = por %p92, %p93
      %p95 = scmp.ne.s32.totalorder %s87, %s90
      %p96 = scmp.eq.s32.totalorder %s9, 0
      %p97 = por %p95, %p96
      %p98 = scmp.ne.s32.totalorder %s87, %s90
      %p99 = scmp.eq.s32.totalorder %s14, 3
      %p100 = por %p98, %p99
      %p101 = scmp.ne.s32.totalorder %s90, %s91
      %p102 = scmp.eq.s32.totalorder %s14, 0
      %p103 = por %p101, %p102
      %p104 = scmp.ne.s32.totalorder %s90, %s91
      %p105 = scmp.eq.s32.totalorder %s15, 3
      %p106 = por %p104, %p105
      %p108 = scmp.ne.s32.totalorder %s91, %s107
      %p109 = scmp.eq.s32.totalorder %s15, 0
      %p110 = por %p108, %p109
      %p111 = scmp.le.s32.totalorder 1, %s9
      %p112 = scmp.lt.s32.totalorder %s9, 5
      %p113 = pnand %p111, %p112
      %p114 = pneg %p113
      // Predicated region
      $region9: #{convnet_forward.4} parent=5 // pred_check
        _
      $region10: #{convnet_forward.4} parent=5 // pred_check_branch
        %116 = sbr.rel (%p113) target = $region12
      $region11: #{convnet_forward.4} parent=5 // pred_region
        %s117 = ssub.s32 %s9, 1
        // Predicated region
        $region13: #{convnet_forward.4} parent=11 // pred_check
          %p118 = pneg %p56
        $region14: #{convnet_forward.4} parent=11 // pred_check_branch
          %120 = sbr.rel (%p118) target = $region16
        $region15: #{convnet_forward.4} parent=11 // pred_region
          _
        $region16: #{convnet_forward.4} parent=11 // pred_fallthru
          _
        // Predicated region
        $region17: #{convnet_forward.4} parent=11 // pred_check
          %p121 = pneg %p77
        $region18: #{convnet_forward.4} parent=11 // pred_check_branch
          %123 = sbr.rel (%p121) target = $region20
        $region19: #{convnet_forward.4} parent=11 // pred_region
          _
        $region20: #{convnet_forward.4} parent=11 // pred_fallthru
          _
      $region12: #{convnet_forward.4} parent=5 // pred_fallthru
        _
      %p124 = scmp.lt.s32.totalorder %s9, 4
      // Predicated region
      $region21: #{convnet_forward.4} parent=5 // pred_check
        %p125 = pneg %p124
      $region22: #{convnet_forward.4} parent=5 // pred_check_branch
        %127 = sbr.rel (%p125) target = $region24
      $region23: #{convnet_forward.4} parent=5 // pred_region
        // Predicated region
        $region25: #{convnet_forward.4} parent=23 // pred_check
          %p128 = pneg %p29
        $region26: #{convnet_forward.4} parent=23 // pred_check_branch
          %130 = sbr.rel (%p128) target = $region28
        $region27: #{convnet_forward.4} parent=23 // pred_region
          %s131 = sand.u32 %s19, 1
          %s132 = sand.u32 %s19, 1
          %s133 = smul.addr %s132, 416
          %s134 = scalar_lea.vmem [#allocation2], %s133
          %s135 = smul.u32 2, %s9
          %s136 = smul.addr %s135, 13
          %s137 = smul.addr %s136, 4
          %s138 = scalar_lea.vmem %s0, %s137
          // Predicated region
          $region29: #{convnet_forward.4} parent=27 // pred_check
            _
          $region30: #{convnet_forward.4} parent=27 // pred_check_branch
            %140 = sbr.rel (0) target = $region32
          $region31: #{convnet_forward.4} parent=27 // pred_region
            // Predicated region
            $region33: #{convnet_forward.4} parent=31 // pred_check
              _
            $region34: #{convnet_forward.4} parent=31 // pred_check_branch
              %142 = sbr.rel (0) target = $region36
            $region35: #{convnet_forward.4} parent=31 // pred_region
              %s143 = scalar_lea.vmem %s138, 48
              %s144 = scalar_lea.vmem %s134, 48 [#allocation2]
              loop: start=0, step=1, limit=1
              $region37: #{convnet_forward.4} parent=35 // loop_pre_header
                _
              $region38: #{convnet_forward.4} parent=35 // loop_header
                %s146 = sphi 0, %s150
                %p147 = scmp.ge.s32.totalorder %s146, 1
                %s151 = sphi %s138, %s138
                %s152 = sphi %s134, %s134
              $region39: #{convnet_forward.4} parent=35 // loop_header_branch
                %149 = sbr.rel (%p147) target = $region43
              $region40: #{convnet_forward.4} parent=35 // loop_body
                %v153 = vld [vmem:[%s151] sm:$0xff]
                %154 = vst [vmem:[%s152] sm:$0xff] %v153
                %v155 = vld [vmem:[%s151 + $0x8] sm:$0xff]
                %156 = vst [vmem:[%s152 + $0x8] sm:$0xff] %v155
                %v157 = vld [vmem:[%s151 + $0x10] sm:$0xff]
                %158 = vst [vmem:[%s152 + $0x10] sm:$0xff] %v157
                %v159 = vld [vmem:[%s151 + $0x18] sm:$0xff]
                %160 = vst [vmem:[%s152 + $0x18] sm:$0xff] %v159
                %v161 = vld [vmem:[%s151 + $0x20] sm:$0xff]
                %162 = vst [vmem:[%s152 + $0x20] sm:$0xff] %v161
                %v163 = vld [vmem:[%s151 + $0x28] sm:$0xff]
                %164 = vst [vmem:[%s152 + $0x28] sm:$0xff] %v163
                %v165 = vld [vmem:[%s151 + $0x34] sm:$0xff]
                %166 = vst [vmem:[%s152 + $0x34] sm:$0xff] %v165
                %v167 = vld [vmem:[%s151 + $0x3c] sm:$0xff]
                %168 = vst [vmem:[%s152 + $0x3c] sm:$0xff] %v167
                %v169 = vld [vmem:[%s151 + $0x44] sm:$0xff]
                %170 = vst [vmem:[%s152 + $0x44] sm:$0xff] %v169
                %v171 = vld [vmem:[%s151 + $0x4c] sm:$0xff]
                %172 = vst [vmem:[%s152 + $0x4c] sm:$0xff] %v171
                %v173 = vld [vmem:[%s151 + $0x54] sm:$0xff]
                %174 = vst [vmem:[%s152 + $0x54] sm:$0xff] %v173
                %v175 = vld [vmem:[%s151 + $0x5c] sm:$0xff]
                %176 = vst [vmem:[%s152 + $0x5c] sm:$0xff] %v175
                %v177 = vld [vmem:[%s151 + $0x1a0] sm:$0xff]
                %178 = vst [vmem:[%s152 + $0x68] sm:$0xff] %v177
                %v179 = vld [vmem:[%s151 + $0x1a8] sm:$0xff]
                %180 = vst [vmem:[%s152 + $0x70] sm:$0xff] %v179
                %v181 = vld [vmem:[%s151 + $0x1b0] sm:$0xff]
                %182 = vst [vmem:[%s152 + $0x78] sm:$0xff] %v181
                %v183 = vld [vmem:[%s151 + $0x1b8] sm:$0xff]
                %184 = vst [vmem:[%s152 + $0x80] sm:$0xff] %v183
                %v185 = vld [vmem:[%s151 + $0x1c0] sm:$0xff]
                %186 = vst [vmem:[%s152 + $0x88] sm:$0xff] %v185
                %v187 = vld [vmem:[%s151 + $0x1c8] sm:$0xff]
                %188 = vst [vmem:[%s152 + $0x90] sm:$0xff] %v187
                %v189 = vld [vmem:[%s151 + $0x1d4] sm:$0xff]
                %190 = vst [vmem:[%s152 + $0x9c] sm:$0xff] %v189
                %v191 = vld [vmem:[%s151 + $0x1dc] sm:$0xff]
                %192 = vst [vmem:[%s152 + $0xa4] sm:$0xff] %v191
                %v193 = vld [vmem:[%s151 + $0x1e4] sm:$0xff]
                %194 = vst [vmem:[%s152 + $0xac] sm:$0xff] %v193
                %v195 = vld [vmem:[%s151 + $0x1ec] sm:$0xff]
                %196 = vst [vmem:[%s152 + $0xb4] sm:$0xff] %v195
                %v197 = vld [vmem:[%s151 + $0x1f4] sm:$0xff]
                %198 = vst [vmem:[%s152 + $0xbc] sm:$0xff] %v197
                %v199 = vld [vmem:[%s151 + $0x1fc] sm:$0xff]
                %200 = vst [vmem:[%s152 + $0xc4] sm:$0xff] %v199
                %v201 = vld [vmem:[%s151 + $0x340] sm:$0xff]
                %202 = vst [vmem:[%s152 + $0xd0] sm:$0xff] %v201
                %v203 = vld [vmem:[%s151 + $0x348] sm:$0xff]
                %204 = vst [vmem:[%s152 + $0xd8] sm:$0xff] %v203
                %v205 = vld [vmem:[%s151 + $0x350] sm:$0xff]
                %206 = vst [vmem:[%s152 + $0xe0] sm:$0xff] %v205
                %v207 = vld [vmem:[%s151 + $0x358] sm:$0xff]
                %208 = vst [vmem:[%s152 + $0xe8] sm:$0xff] %v207
                %v209 = vld [vmem:[%s151 + $0x360] sm:$0xff]
                %210 = vst [vmem:[%s152 + $0xf0] sm:$0xff] %v209
                %v211 = vld [vmem:[%s151 + $0x368] sm:$0xff]
                %212 = vst [vmem:[%s152 + $0xf8] sm:$0xff] %v211
                %v213 = vld [vmem:[%s151 + $0x374] sm:$0xff]
                %214 = vst [vmem:[%s152 + $0x104] sm:$0xff] %v213
                %v215 = vld [vmem:[%s151 + $0x37c] sm:$0xff]
                %216 = vst [vmem:[%s152 + $0x10c] sm:$0xff] %v215
                %v217 = vld [vmem:[%s151 + $0x384] sm:$0xff]
                %218 = vst [vmem:[%s152 + $0x114] sm:$0xff] %v217
                %v219 = vld [vmem:[%s151 + $0x38c] sm:$0xff]
                %220 = vst [vmem:[%s152 + $0x11c] sm:$0xff] %v219
                %v221 = vld [vmem:[%s151 + $0x394] sm:$0xff]
                %222 = vst [vmem:[%s152 + $0x124] sm:$0xff] %v221
                %v223 = vld [vmem:[%s151 + $0x39c] sm:$0xff]
                %224 = vst [vmem:[%s152 + $0x12c] sm:$0xff] %v223
                %v225 = vld [vmem:[%s151 + $0x4e0] sm:$0xff]
                %226 = vst [vmem:[%s152 + $0x138] sm:$0xff] %v225
                %v227 = vld [vmem:[%s151 + $0x4e8] sm:$0xff]
                %228 = vst [vmem:[%s152 + $0x140] sm:$0xff] %v227
                %v229 = vld [vmem:[%s151 + $0x4f0] sm:$0xff]
                %230 = vst [vmem:[%s152 + $0x148] sm:$0xff] %v229
                %v231 = vld [vmem:[%s151 + $0x4f8] sm:$0xff]
                %232 = vst [vmem:[%s152 + $0x150] sm:$0xff] %v231
                %v233 = vld [vmem:[%s151 + $0x500] sm:$0xff]
                %234 = vst [vmem:[%s152 + $0x158] sm:$0xff] %v233
                %v235 = vld [vmem:[%s151 + $0x508] sm:$0xff]
                %236 = vst [vmem:[%s152 + $0x160] sm:$0xff] %v235
                %v237 = vld [vmem:[%s151 + $0x514] sm:$0xff]
                %238 = vst [vmem:[%s152 + $0x16c] sm:$0xff] %v237
                %v239 = vld [vmem:[%s151 + $0x51c] sm:$0xff]
                %240 = vst [vmem:[%s152 + $0x174] sm:$0xff] %v239
                %v241 = vld [vmem:[%s151 + $0x524] sm:$0xff]
                %242 = vst [vmem:[%s152 + $0x17c] sm:$0xff] %v241
                %v243 = vld [vmem:[%s151 + $0x52c] sm:$0xff]
                %244 = vst [vmem:[%s152 + $0x184] sm:$0xff] %v243
                %v245 = vld [vmem:[%s151 + $0x534] sm:$0xff]
                %246 = vst [vmem:[%s152 + $0x18c] sm:$0xff] %v245
                %v247 = vld [vmem:[%s151 + $0x53c] sm:$0xff]
                %248 = vst [vmem:[%s152 + $0x194] sm:$0xff] %v247
              $region41: #{convnet_forward.4} parent=35 // loop_footer
                %s150 = sadd.s32 1, %s146
              $region42: #{convnet_forward.4} parent=35 // loop_footer_branch
                %145 = sbr.rel target = $region38
              $region43: #{convnet_forward.4} parent=35 // loop_exit
                _
              %s250 = ssub.s32 16, 1
              loop: start=0, step=1, limit=1
              $region44: #{convnet_forward.4} parent=35 // loop_pre_header
                _
              $region45: #{convnet_forward.4} parent=35 // loop_header
                %s252 = sphi 0, %s256
                %p253 = scmp.ge.s32.totalorder %s252, 1
                %s257 = sphi %s143, %s143
                %s258 = sphi %s144, %s144
              $region46: #{convnet_forward.4} parent=35 // loop_header_branch
                %255 = sbr.rel (%p253) target = $region50
              $region47: #{convnet_forward.4} parent=35 // loop_body
                %v259 = vld [vmem:[%s257] sm:%s250]
                %260 = vst [vmem:[%s258] sm:%s250] %v259
                %v261 = vld [vmem:[%s257 + $0x34] sm:%s250]
                %262 = vst [vmem:[%s258 + $0x34] sm:%s250] %v261
                %v263 = vld [vmem:[%s257 + $0x1a0] sm:%s250]
                %264 = vst [vmem:[%s258 + $0x68] sm:%s250] %v263
                %v265 = vld [vmem:[%s257 + $0x1d4] sm:%s250]
                %266 = vst [vmem:[%s258 + $0x9c] sm:%s250] %v265
                %v267 = vld [vmem:[%s257 + $0x340] sm:%s250]
                %268 = vst [vmem:[%s258 + $0xd0] sm:%s250] %v267
                %v269 = vld [vmem:[%s257 + $0x374] sm:%s250]
                %270 = vst [vmem:[%s258 + $0x104] sm:%s250] %v269
                %v271 = vld [vmem:[%s257 + $0x4e0] sm:%s250]
                %272 = vst [vmem:[%s258 + $0x138] sm:%s250] %v271
                %v273 = vld [vmem:[%s257 + $0x514] sm:%s250]
                %274 = vst [vmem:[%s258 + $0x16c] sm:%s250] %v273
              $region48: #{convnet_forward.4} parent=35 // loop_footer
                %s256 = sadd.s32 1, %s252
              $region49: #{convnet_forward.4} parent=35 // loop_footer_branch
                %251 = sbr.rel target = $region45
              $region50: #{convnet_forward.4} parent=35 // loop_exit
                _
            $region36: #{convnet_forward.4} parent=31 // pred_fallthru
              _
          $region32: #{convnet_forward.4} parent=27 // pred_fallthru
            _
          %275 = vnop
        $region28: #{convnet_forward.4} parent=23 // pred_fallthru
          _
      $region24: #{convnet_forward.4} parent=5 // pred_fallthru
        _
      %p276 = scmp.le.s32.totalorder 1, %s9
      %p277 = scmp.lt.s32.totalorder %s9, 5
      %p278 = pnand %p276, %p277
      %p279 = pneg %p278
      // Predicated region
      $region51: #{convnet_forward.4} parent=5 // pred_check
        _
      $region52: #{convnet_forward.4} parent=5 // pred_check_branch
        %281 = sbr.rel (%p278) target = $region54
      $region53: #{convnet_forward.4} parent=5 // pred_region
        %s282 = ssub.s32 %s9, 1
        %s283 = sand.u32 %s22, 1
        %s284 = sand.u32 %s22, 1
        %s285 = smul.addr %s284, 416
        %s286 = scalar_lea.vmem [#allocation2], %s285
        // Predicated region
        $region55: #{convnet_forward.4} parent=53 // pred_check
          %p287 = pneg %p35
        $region56: #{convnet_forward.4} parent=53 // pred_check_branch
          %289 = sbr.rel (%p287) target = $region58
        $region57: #{convnet_forward.4} parent=53 // pred_region
          _
        $region58: #{convnet_forward.4} parent=53 // pred_fallthru
          _
        %s290 = sand.u32 %s22, 1
        %s291 = sand.u32 %s22, 1
        %s292 = smul.addr %s291, 416
        %s293 = scalar_lea.vmem [#allocation2], %s292
        %p294 = pneg %p35
        %p295 = pneg %p32
        %p296 = pneg %p56
        %p297 = pneg %p53
        %p298 = pneg %p77
        %p299 = pneg %p74
        %p300 = pneg %p103
        %p301 = pneg %p100
        %s302 = smul.u32 2, %s14
        %p303 = scmp.lt.s32.totalorder %s302, 7
        %s304 = scalar_select %p303, %s302, 7
        %s305 = smul.addr %s304, 4
        %s306 = scalar_lea.vmem %s3, %s305
        %s307 = smul.u32 2, %s14
        %s308 = smul.u32 2, %s14
        %p309 = scmp.lt.s32.totalorder %s308, 7
        %s310 = scalar_select %p309, %s308, 7
        %s311 = smul.addr %s310, 4
        %s312 = scalar_lea.vmem %s3, %s311
        %s313 = smul.u32 2, %s14
        %v315 = vld [vmem:[%s286] sm:$0xff]
        %v316 = vld [vmem:[%s286 + $0x8] sm:$0xff]
        %v317 = vld [vmem:[%s286 + $0x10] sm:$0xff]
        %v318 = vld [vmem:[%s286 + $0x18] sm:$0xff]
        %v319 = vld [vmem:[%s286 + $0x20] sm:$0xff]
        %v320 = vld [vmem:[%s286 + $0x28] sm:$0xff]
        %v321 = vld [vmem:[%s286 + $0x30] sm:$0xf]
        %v322 = vld [vmem:[%s286 + $0x34] sm:$0xff]
        %v323 = vld [vmem:[%s286 + $0x3c] sm:$0xff]
        %v324 = vld [vmem:[%s286 + $0x44] sm:$0xff]
        %v325 = vld [vmem:[%s286 + $0x4c] sm:$0xff]
        %v326 = vld [vmem:[%s286 + $0x54] sm:$0xff]
        %v327 = vld [vmem:[%s286 + $0x5c] sm:$0xff]
        %v328 = vld [vmem:[%s286 + $0x64] sm:$0xf]
        %v329 = vld [vmem:[%s286 + $0x68] sm:$0xff]
        %v330 = vld [vmem:[%s286 + $0x70] sm:$0xff]
        %v331 = vld [vmem:[%s286 + $0x78] sm:$0xff]
        %v332 = vld [vmem:[%s286 + $0x80] sm:$0xff]
        %v333 = vld [vmem:[%s286 + $0x88] sm:$0xff]
        %v334 = vld [vmem:[%s286 + $0x90] sm:$0xff]
        %v335 = vld [vmem:[%s286 + $0x98] sm:$0xf]
        %v336 = vld [vmem:[%s286 + $0x9c] sm:$0xff]
        %v337 = vld [vmem:[%s286 + $0xa4] sm:$0xff]
        %v338 = vld [vmem:[%s286 + $0xac] sm:$0xff]
        %v339 = vld [vmem:[%s286 + $0xb4] sm:$0xff]
        %v340 = vld [vmem:[%s286 + $0xbc] sm:$0xff]
        %v341 = vld [vmem:[%s286 + $0xc4] sm:$0xff]
        %v342 = vld [vmem:[%s286 + $0xcc] sm:$0xf]
        %v343 = vld [vmem:[%s286 + $0xd0] sm:$0xff]
        %v344 = vld [vmem:[%s286 + $0xd8] sm:$0xff]
        %v345 = vld [vmem:[%s286 + $0xe0] sm:$0xff]
        %v346 = vld [vmem:[%s286 + $0xe8] sm:$0xff]
        %v347 = vld [vmem:[%s286 + $0xf0] sm:$0xff]
        %v348 = vld [vmem:[%s286 + $0xf8] sm:$0xff]
        %v349 = vld [vmem:[%s286 + $0x100] sm:$0xf]
        %v350 = vld [vmem:[%s286 + $0x104] sm:$0xff]
        %v351 = vld [vmem:[%s286 + $0x10c] sm:$0xff]
        %v352 = vld [vmem:[%s286 + $0x114] sm:$0xff]
        %v353 = vld [vmem:[%s286 + $0x11c] sm:$0xff]
        %v354 = vld [vmem:[%s286 + $0x124] sm:$0xff]
        %v355 = vld [vmem:[%s286 + $0x12c] sm:$0xff]
        %v356 = vld [vmem:[%s286 + $0x134] sm:$0xf]
        %v357 = vld [vmem:[%s286 + $0x138] sm:$0xff]
        %v358 = vld [vmem:[%s286 + $0x140] sm:$0xff]
        %v359 = vld [vmem:[%s286 + $0x148] sm:$0xff]
        %v360 = vld [vmem:[%s286 + $0x150] sm:$0xff]
        %v361 = vld [vmem:[%s286 + $0x158] sm:$0xff]
        %v362 = vld [vmem:[%s286 + $0x160] sm:$0xff]
        %v363 = vld [vmem:[%s286 + $0x168] sm:$0xf]
        %v364 = vld [vmem:[%s286 + $0x16c] sm:$0xff]
        %v365 = vld [vmem:[%s286 + $0x174] sm:$0xff]
        %v366 = vld [vmem:[%s286 + $0x17c] sm:$0xff]
        %v367 = vld [vmem:[%s286 + $0x184] sm:$0xff]
        %v368 = vld [vmem:[%s286 + $0x18c] sm:$0xff]
        %v369 = vld [vmem:[%s286 + $0x194] sm:$0xff]
        %v370 = vld [vmem:[%s286 + $0x19c] sm:$0xf]
        %v371 = vld [vmem:[%s1] sm:$0xf]
        %v372 = vld [vmem:[%s1 + $0x4] sm:$0xf]
        %v373 = vld [vmem:[%s1 + $0x8] sm:$0xf]
        %v374 = vld [vmem:[%s1 + $0xc] sm:$0xf]
        %v375 = vld [vmem:[%s1 + $0x10] sm:$0xf]
        %v376 = vld [vmem:[%s1 + $0x14] sm:$0xf]
        %v377 = vld [vmem:[%s1 + $0x18] sm:$0xf]
        %v378 = vld [vmem:[%s1 + $0x1c] sm:$0xf]
        %v379 = vld [vmem:[%s1 + $0x20] sm:$0xf]
        %v380 = vld [vmem:[%s1 + $0x24] sm:$0xf]
        %v381 = vld [vmem:[%s1 + $0x28] sm:$0xf]
        %v382 = vld [vmem:[%s1 + $0x2c] sm:$0xf]
        %v383 = vld [vmem:[%s1 + $0x30] sm:$0xf]
        %v384 = vld [vmem:[%s1 + $0x34] sm:$0xf]
        %v385 = vld [vmem:[%s1 + $0x38] sm:$0xf]
        %v386 = vld [vmem:[%s1 + $0x3c] sm:$0xf]
        %v387 = vld [vmem:[%s1 + $0x40] sm:$0xf]
        %v388 = vld [vmem:[%s1 + $0x44] sm:$0xf]
        %v389 = vld [vmem:[%s1 + $0x48] sm:$0xf]
        %v390 = vld [vmem:[%s1 + $0x4c] sm:$0xf]
        %v391 = vld [vmem:[%s1 + $0x50] sm:$0xf]
        %v392 = vld [vmem:[%s1 + $0x54] sm:$0xf]
        %v393 = vld [vmem:[%s1 + $0x58] sm:$0xf]
        %v394 = vld [vmem:[%s1 + $0x5c] sm:$0xf]
        %v395 = vld [vmem:[%s1 + $0x60] sm:$0xf]
        %v396 = vld [vmem:[%s1 + $0x64] sm:$0xf]
        %v397 = vld [vmem:[%s1 + $0x68] sm:$0xf]
        %v398 = vld [vmem:[%s1 + $0x6c] sm:$0xf]
        %v399 = vld [vmem:[%s1 + $0x70] sm:$0xf]
        %v400 = vld [vmem:[%s1 + $0x74] sm:$0xf]
        %v401 = vld [vmem:[%s1 + $0x78] sm:$0xf]
        %v402 = vld [vmem:[%s1 + $0x7c] sm:$0xf]
        %v403 = vld [vmem:[%s1 + $0x80] sm:$0xf]
        %v404 = vld [vmem:[%s1 + $0x84] sm:$0xf]
        %v405 = vld [vmem:[%s1 + $0x88] sm:$0xf]
        %v406 = vld [vmem:[%s1 + $0x8c] sm:$0xf]
        %v407 = vld [vmem:[%s1 + $0x90] sm:$0xf]
        %v408 = vld [vmem:[%s1 + $0x94] sm:$0xf]
        %v409 = vld [vmem:[%s1 + $0x98] sm:$0xf]
        %v410 = vld [vmem:[%s1 + $0x9c] sm:$0xf]
        %v411 = vld [vmem:[%s1 + $0xa0] sm:$0xf]
        %v412 = vld [vmem:[%s1 + $0xa4] sm:$0xf]
        %v413 = vld [vmem:[%s1 + $0xa8] sm:$0xf]
        %v414 = vld [vmem:[%s1 + $0xac] sm:$0xf]
        %v415 = vld [vmem:[%s1 + $0xb0] sm:$0xf]
        %v416 = vld [vmem:[%s1 + $0xb4] sm:$0xf]
        %v417 = vld [vmem:[%s1 + $0xb8] sm:$0xf]
        %v418 = vld [vmem:[%s1 + $0xbc] sm:$0xf]
        %v419 = vld [vmem:[%s1 + $0xc0] sm:$0xf]
        %v420 = vld [vmem:[%s1 + $0xc4] sm:$0xf]
        %v421 = vld [vmem:[%s1 + $0xc8] sm:$0xf]
        %v422 = vld [vmem:[%s1 + $0xcc] sm:$0xf]
        %v423 = vld [vmem:[%s1 + $0xd0] sm:$0xf]
        %v424 = vld [vmem:[%s1 + $0xd4] sm:$0xf]
        %v425 = vld [vmem:[%s1 + $0xd8] sm:$0xf]
        %v426 = vld [vmem:[%s1 + $0xdc] sm:$0xf]
        %v427 = vld [vmem:[%s1 + $0xe0] sm:$0xf]
        %v428 = vld [vmem:[%s1 + $0xe4] sm:$0xf]
        %v429 = vld [vmem:[%s1 + $0xe8] sm:$0xf]
        %v430 = vld [vmem:[%s1 + $0xec] sm:$0xf]
        %v431 = vld [vmem:[%s1 + $0xf0] sm:$0xf]
        %v432 = vld [vmem:[%s1 + $0xf4] sm:$0xf]
        %v433 = vld [vmem:[%s1 + $0xf8] sm:$0xf]
        %v434 = vld [vmem:[%s1 + $0xfc] sm:$0xf]
        %v435 = vld [vmem:[%s1 + $0x100] sm:$0xf]
        %v436 = vld [vmem:[%s1 + $0x104] sm:$0xf]
        %v437 = vld [vmem:[%s1 + $0x108] sm:$0xf]
        %v438 = vld [vmem:[%s1 + $0x10c] sm:$0xf]
        %v439 = vld [vmem:[%s1 + $0x110] sm:$0xf]
        %v440 = vld [vmem:[%s1 + $0x114] sm:$0xf]
        %v441 = vld [vmem:[%s1 + $0x118] sm:$0xf]
        %v442 = vld [vmem:[%s1 + $0x11c] sm:$0xf]
        %v443 = vld [vmem:[%s1 + $0x120] sm:$0xf]
        %v444 = vld [vmem:[%s1 + $0x124] sm:$0xf]
        %v445 = vld [vmem:[%s1 + $0x128] sm:$0xf]
        %v446 = vld [vmem:[%s1 + $0x12c] sm:$0xf]
        %v447 = vld [vmem:[%s1 + $0x130] sm:$0xf]
        %v448 = vld [vmem:[%s1 + $0x134] sm:$0xf]
        %v449 = vld [vmem:[%s1 + $0x138] sm:$0xf]
        %v450 = vld [vmem:[%s1 + $0x13c] sm:$0xf]
        %v451 = vld [vmem:[%s1 + $0x140] sm:$0xf]
        %v452 = vld [vmem:[%s1 + $0x144] sm:$0xf]
        %v453 = vld [vmem:[%s1 + $0x148] sm:$0xf]
        %v454 = vld [vmem:[%s1 + $0x14c] sm:$0xf]
        %v455 = vld [vmem:[%s1 + $0x150] sm:$0xf]
        %v456 = vld [vmem:[%s1 + $0x154] sm:$0xf]
        %v457 = vld [vmem:[%s1 + $0x158] sm:$0xf]
        %v458 = vld [vmem:[%s1 + $0x15c] sm:$0xf]
        %v459 = vld [vmem:[%s1 + $0x160] sm:$0xf]
        %v460 = vld [vmem:[%s1 + $0x164] sm:$0xf]
        %v461 = vld [vmem:[%s1 + $0x168] sm:$0xf]
        %v462 = vld [vmem:[%s1 + $0x16c] sm:$0xf]
        %v463 = vld [vmem:[%s1 + $0x170] sm:$0xf]
        %v464 = vld [vmem:[%s1 + $0x174] sm:$0xf]
        %v465 = vld [vmem:[%s1 + $0x178] sm:$0xf]
        %v466 = vld [vmem:[%s1 + $0x17c] sm:$0xf]
        %v467 = vld [vmem:[%s1 + $0x180] sm:$0xf]
        %v468 = vld [vmem:[%s1 + $0x184] sm:$0xf]
        %v469 = vld [vmem:[%s1 + $0x188] sm:$0xf]
        %v470 = vld [vmem:[%s1 + $0x18c] sm:$0xf]
        %v471 = vld [vmem:[%s1 + $0x190] sm:$0xf]
        %v472 = vld [vmem:[%s1 + $0x194] sm:$0xf]
        %v473 = vld [vmem:[%s1 + $0x198] sm:$0xf]
        %v474 = vld [vmem:[%s1 + $0x19c] sm:$0xf]
        %v475 = vld [vmem:[%s1 + $0x1a0] sm:$0xf]
        %v476 = vld [vmem:[%s1 + $0x1a4] sm:$0xf]
        %v477 = vld [vmem:[%s1 + $0x1a8] sm:$0xf]
        %v478 = vld [vmem:[%s1 + $0x1ac] sm:$0xf]
        %v479 = vld [vmem:[%s1 + $0x1b0] sm:$0xf]
        %v480 = vld [vmem:[%s1 + $0x1b4] sm:$0xf]
        %v481 = vld [vmem:[%s1 + $0x1b8] sm:$0xf]
        %v482 = vld [vmem:[%s1 + $0x1bc] sm:$0xf]
        %v483 = vld [vmem:[%s1 + $0x1c0] sm:$0xf]
        %v484 = vld [vmem:[%s1 + $0x1c4] sm:$0xf]
        %v485 = vld [vmem:[%s1 + $0x1c8] sm:$0xf]
        %v486 = vld [vmem:[%s1 + $0x1cc] sm:$0xf]
        %v487 = vld [vmem:[%s1 + $0x1d0] sm:$0xf]
        %v488 = vld [vmem:[%s1 + $0x1d4] sm:$0xf]
        %v489 = vld [vmem:[%s1 + $0x1d8] sm:$0xf]
        %v490 = vld [vmem:[%s1 + $0x1dc] sm:$0xf]
        %v491 = vld [vmem:[%s1 + $0x1e0] sm:$0xf]
        %v492 = vld [vmem:[%s1 + $0x1e4] sm:$0xf]
        %v493 = vld [vmem:[%s1 + $0x1e8] sm:$0xf]
        %v494 = vld [vmem:[%s1 + $0x1ec] sm:$0xf]
        %v495 = vld [vmem:[%s1 + $0x1f0] sm:$0xf]
        %v496 = vld [vmem:[%s1 + $0x1f4] sm:$0xf]
        %v497 = vld [vmem:[%s1 + $0x1f8] sm:$0xf]
        %v498 = vld [vmem:[%s1 + $0x1fc] sm:$0xf]
        %v499 = vld [vmem:[%s1 + $0x200] sm:$0xf]
        %v500 = vld [vmem:[%s1 + $0x204] sm:$0xf]
        %v501 = vld [vmem:[%s1 + $0x208] sm:$0xf]
        %v502 = vld [vmem:[%s1 + $0x20c] sm:$0xf]
        %v503 = vld [vmem:[%s1 + $0x210] sm:$0xf]
        %v504 = vld [vmem:[%s1 + $0x214] sm:$0xf]
        %v505 = vld [vmem:[%s1 + $0x218] sm:$0xf]
        %v506 = vld [vmem:[%s1 + $0x21c] sm:$0xf]
        %v507 = vld [vmem:[%s1 + $0x220] sm:$0xf]
        %v508 = vld [vmem:[%s1 + $0x224] sm:$0xf]
        %v509 = vld [vmem:[%s1 + $0x228] sm:$0xf]
        %v510 = vld [vmem:[%s1 + $0x22c] sm:$0xf]
        %v511 = vld [vmem:[%s1 + $0x230] sm:$0xf]
        %v512 = vld [vmem:[%s1 + $0x234] sm:$0xf]
        %v513 = vld [vmem:[%s1 + $0x238] sm:$0xf]
        %v514 = vld [vmem:[%s1 + $0x23c] sm:$0xf]
        %v515 = vld [vmem:[%s1 + $0x240] sm:$0xf]
        %v516 = vld [vmem:[%s1 + $0x244] sm:$0xf]
        %v517 = vld [vmem:[%s1 + $0x248] sm:$0xf]
        %v518 = vld [vmem:[%s1 + $0x24c] sm:$0xf]
        %v519 = vld [vmem:[%s1 + $0x250] sm:$0xf]
        %v520 = vld [vmem:[%s1 + $0x254] sm:$0xf]
        %v521 = vld [vmem:[%s1 + $0x258] sm:$0xf]
        %v522 = vld [vmem:[%s1 + $0x25c] sm:$0xf]
        %v523 = vld [vmem:[%s1 + $0x260] sm:$0xf]
        %v524 = vld [vmem:[%s1 + $0x264] sm:$0xf]
        %v525 = vld [vmem:[%s1 + $0x268] sm:$0xf]
        %v526 = vld [vmem:[%s1 + $0x26c] sm:$0xf]
        %v527 = vld [vmem:[%s1 + $0x270] sm:$0xf]
        %v528 = vld [vmem:[%s1 + $0x274] sm:$0xf]
        %v529 = vld [vmem:[%s1 + $0x278] sm:$0xf]
        %v530 = vld [vmem:[%s1 + $0x27c] sm:$0xf]
        %v531 = vld [vmem:[%s1 + $0x280] sm:$0xf]
        %v532 = vld [vmem:[%s1 + $0x284] sm:$0xf]
        %v533 = vld [vmem:[%s1 + $0x288] sm:$0xf]
        %v534 = vld [vmem:[%s1 + $0x28c] sm:$0xf]
        %v535 = vld [vmem:[%s1 + $0x290] sm:$0xf]
        %v536 = vld [vmem:[%s1 + $0x294] sm:$0xf]
        %v537 = vld [vmem:[%s1 + $0x298] sm:$0xf]
        %v538 = vld [vmem:[%s1 + $0x29c] sm:$0xf]
        %v539 = vld [vmem:[%s1 + $0x2a0] sm:$0xf]
        %v540 = vld [vmem:[%s1 + $0x2a4] sm:$0xf]
        %v541 = vld [vmem:[%s1 + $0x2a8] sm:$0xf]
        %v542 = vld [vmem:[%s1 + $0x2ac] sm:$0xf]
        %v543 = vld [vmem:[%s1 + $0x2b0] sm:$0xf]
        %v544 = vld [vmem:[%s1 + $0x2b4] sm:$0xf]
        %v545 = vld [vmem:[%s1 + $0x2b8] sm:$0xf]
        %v546 = vld [vmem:[%s1 + $0x2bc] sm:$0xf]
        %v547 = vld [vmem:[%s1 + $0x2c0] sm:$0xf]
        %v548 = vld [vmem:[%s1 + $0x2c4] sm:$0xf]
        %v549 = vld [vmem:[%s1 + $0x2c8] sm:$0xf]
        %v550 = vld [vmem:[%s1 + $0x2cc] sm:$0xf]
        %v551 = vld [vmem:[%s1 + $0x2d0] sm:$0xf]
        %v552 = vld [vmem:[%s1 + $0x2d4] sm:$0xf]
        %v553 = vld [vmem:[%s1 + $0x2d8] sm:$0xf]
        %v554 = vld [vmem:[%s1 + $0x2dc] sm:$0xf]
        %v555 = vld [vmem:[%s1 + $0x2e0] sm:$0xf]
        %v556 = vld [vmem:[%s1 + $0x2e4] sm:$0xf]
        %v557 = vld [vmem:[%s1 + $0x2e8] sm:$0xf]
        %v558 = vld [vmem:[%s1 + $0x2ec] sm:$0xf]
        %v559 = vld [vmem:[%s1 + $0x2f0] sm:$0xf]
        %v560 = vld [vmem:[%s1 + $0x2f4] sm:$0xf]
        %v561 = vld [vmem:[%s1 + $0x2f8] sm:$0xf]
        %v562 = vld [vmem:[%s1 + $0x2fc] sm:$0xf]
        %v563 = vld [vmem:[%s1 + $0x300] sm:$0xf]
        %v564 = vld [vmem:[%s1 + $0x304] sm:$0xf]
        %v565 = vld [vmem:[%s1 + $0x308] sm:$0xf]
        %v566 = vld [vmem:[%s1 + $0x30c] sm:$0xf]
        %v567 = vld [vmem:[%s1 + $0x310] sm:$0xf]
        %v568 = vld [vmem:[%s1 + $0x314] sm:$0xf]
        %v569 = vld [vmem:[%s1 + $0x318] sm:$0xf]
        %v570 = vld [vmem:[%s1 + $0x31c] sm:$0xf]
        %v627 = vunpack.c.l.b16 %v315
        %v628 = vunpack.c.h.b16 %v315
        %v629 = vunpack.c.l.b16 %v316
        %v630 = vunpack.c.h.b16 %v316
        %v631 = vunpack.c.l.b16 %v317
        %v632 = vunpack.c.h.b16 %v317
        %v633 = vunpack.c.l.b16 %v318
        %v634 = vunpack.c.h.b16 %v318
        %v635 = vunpack.c.l.b16 %v319
        %v636 = vunpack.c.h.b16 %v319
        %v637 = vunpack.c.l.b16 %v320
        %v638 = vunpack.c.h.b16 %v320
        %v639 = vunpack.c.l.b16 %v321
        %v640 = vunpack.c.l.b16 %v322
        %v641 = vunpack.c.h.b16 %v322
        %v642 = vunpack.c.l.b16 %v323
        %v643 = vunpack.c.h.b16 %v323
        %v644 = vunpack.c.l.b16 %v324
        %v645 = vunpack.c.h.b16 %v324
        %v646 = vunpack.c.l.b16 %v325
        %v647 = vunpack.c.h.b16 %v325
        %v648 = vunpack.c.l.b16 %v326
        %v649 = vunpack.c.h.b16 %v326
        %v650 = vunpack.c.l.b16 %v327
        %v651 = vunpack.c.h.b16 %v327
        %v652 = vunpack.c.l.b16 %v328
        %v653 = vunpack.c.l.b16 %v329
        %v654 = vunpack.c.h.b16 %v329
        %v655 = vunpack.c.l.b16 %v330
        %v656 = vunpack.c.h.b16 %v330
        %v657 = vunpack.c.l.b16 %v331
        %v658 = vunpack.c.h.b16 %v331
        %v659 = vunpack.c.l.b16 %v332
        %v660 = vunpack.c.h.b16 %v332
        %v661 = vunpack.c.l.b16 %v333
        %v662 = vunpack.c.h.b16 %v333
        %v663 = vunpack.c.l.b16 %v334
        %v664 = vunpack.c.h.b16 %v334
        %v665 = vunpack.c.l.b16 %v335
        %v666 = vunpack.c.l.b16 %v336
        %v667 = vunpack.c.h.b16 %v336
        %v668 = vunpack.c.l.b16 %v337
        %v669 = vunpack.c.h.b16 %v337
        %v670 = vunpack.c.l.b16 %v338
        %v671 = vunpack.c.h.b16 %v338
        %v672 = vunpack.c.l.b16 %v339
        %v673 = vunpack.c.h.b16 %v339
        %v674 = vunpack.c.l.b16 %v340
        %v675 = vunpack.c.h.b16 %v340
        %v676 = vunpack.c.l.b16 %v341
        %v677 = vunpack.c.h.b16 %v341
        %v678 = vunpack.c.l.b16 %v342
        %v679 = vunpack.c.l.b16 %v343
        %v680 = vunpack.c.h.b16 %v343
        %v681 = vunpack.c.l.b16 %v344
        %v682 = vunpack.c.h.b16 %v344
        %v683 = vunpack.c.l.b16 %v345
        %v684 = vunpack.c.h.b16 %v345
        %v685 = vunpack.c.l.b16 %v346
        %v686 = vunpack.c.h.b16 %v346
        %v687 = vunpack.c.l.b16 %v347
        %v688 = vunpack.c.h.b16 %v347
        %v689 = vunpack.c.l.b16 %v348
        %v690 = vunpack.c.h.b16 %v348
        %v691 = vunpack.c.l.b16 %v349
        %v692 = vunpack.c.l.b16 %v350
        %v693 = vunpack.c.h.b16 %v350
        %v694 = vunpack.c.l.b16 %v351
        %v695 = vunpack.c.h.b16 %v351
        %v696 = vunpack.c.l.b16 %v352
        %v697 = vunpack.c.h.b16 %v352
        %v698 = vunpack.c.l.b16 %v353
        %v699 = vunpack.c.h.b16 %v353
        %v700 = vunpack.c.l.b16 %v354
        %v701 = vunpack.c.h.b16 %v354
        %v702 = vunpack.c.l.b16 %v355
        %v703 = vunpack.c.h.b16 %v355
        %v704 = vunpack.c.l.b16 %v356
        %v705 = vunpack.c.l.b16 %v357
        %v706 = vunpack.c.h.b16 %v357
        %v707 = vunpack.c.l.b16 %v358
        %v708 = vunpack.c.h.b16 %v358
        %v709 = vunpack.c.l.b16 %v359
        %v710 = vunpack.c.h.b16 %v359
        %v711 = vunpack.c.l.b16 %v360
        %v712 = vunpack.c.h.b16 %v360
        %v713 = vunpack.c.l.b16 %v361
        %v714 = vunpack.c.h.b16 %v361
        %v715 = vunpack.c.l.b16 %v362
        %v716 = vunpack.c.h.b16 %v362
        %v717 = vunpack.c.l.b16 %v363
        %v718 = vunpack.c.l.b16 %v364
        %v719 = vunpack.c.h.b16 %v364
        %v720 = vunpack.c.l.b16 %v365
        %v721 = vunpack.c.h.b16 %v365
        %v722 = vunpack.c.l.b16 %v366
        %v723 = vunpack.c.h.b16 %v366
        %v724 = vunpack.c.l.b16 %v367
        %v725 = vunpack.c.h.b16 %v367
        %v726 = vunpack.c.l.b16 %v368
        %v727 = vunpack.c.h.b16 %v368
        %v728 = vunpack.c.l.b16 %v369
        %v729 = vunpack.c.h.b16 %v369
        %v730 = vunpack.c.l.b16 %v370
        %v731 = vpack.c.b16 %v640, %v627
        %v732 = vpack.c.b16 %v641, %v628
        %v733 = vpack.c.b16 %v642, %v629
        %v734 = vpack.c.b16 %v643, %v630
        %v735 = vpack.c.b16 %v644, %v631
        %v736 = vpack.c.b16 %v645, %v632
        %v737 = vpack.c.b16 %v646, %v633
        %v738 = vpack.c.b16 %v647, %v634
        %v739 = vpack.c.b16 %v648, %v635
        %v740 = vpack.c.b16 %v649, %v636
        %v741 = vpack.c.b16 %v650, %v637
        %v742 = vpack.c.b16 %v651, %v638
        %v743 = vpack.c.b16 %v652, %v639
        %v744 = vpack.c.b16 %v666, %v653
        %v745 = vpack.c.b16 %v667, %v654
        %v746 = vpack.c.b16 %v668, %v655
        %v747 = vpack.c.b16 %v669, %v656
        %v748 = vpack.c.b16 %v670, %v657
        %v749 = vpack.c.b16 %v671, %v658
        %v750 = vpack.c.b16 %v672, %v659
        %v751 = vpack.c.b16 %v673, %v660
        %v752 = vpack.c.b16 %v674, %v661
        %v753 = vpack.c.b16 %v675, %v662
        %v754 = vpack.c.b16 %v676, %v663
        %v755 = vpack.c.b16 %v677, %v664
        %v756 = vpack.c.b16 %v678, %v665
        %v757 = vpack.c.b16 %v692, %v679
        %v758 = vpack.c.b16 %v693, %v680
        %v759 = vpack.c.b16 %v694, %v681
        %v760 = vpack.c.b16 %v695, %v682
        %v761 = vpack.c.b16 %v696, %v683
        %v762 = vpack.c.b16 %v697, %v684
        %v763 = vpack.c.b16 %v698, %v685
        %v764 = vpack.c.b16 %v699, %v686
        %v765 = vpack.c.b16 %v700, %v687
        %v766 = vpack.c.b16 %v701, %v688
        %v767 = vpack.c.b16 %v702, %v689
        %v768 = vpack.c.b16 %v703, %v690
        %v769 = vpack.c.b16 %v704, %v691
        %v770 = vpack.c.b16 %v718, %v705
        %v771 = vpack.c.b16 %v719, %v706
        %v772 = vpack.c.b16 %v720, %v707
        %v773 = vpack.c.b16 %v721, %v708
        %v774 = vpack.c.b16 %v722, %v709
        %v775 = vpack.c.b16 %v723, %v710
        %v776 = vpack.c.b16 %v724, %v711
        %v777 = vpack.c.b16 %v725, %v712
        %v778 = vpack.c.b16 %v726, %v713
        %v779 = vpack.c.b16 %v727, %v714
        %v780 = vpack.c.b16 %v728, %v715
        %v781 = vpack.c.b16 %v729, %v716
        %v782 = vpack.c.b16 %v730, %v717
        %v1031 = vunpack.c.l.b16 %v371
        %v1032 = vunpack.c.l.b16 %v372
        %v1033 = vunpack.c.l.b16 %v373
        %v1034 = vunpack.c.l.b16 %v374
        %v1035 = vunpack.c.l.b16 %v375
        %v1036 = vunpack.c.l.b16 %v376
        %v1037 = vunpack.c.l.b16 %v377
        %v1038 = vunpack.c.l.b16 %v378
        %v1039 = vunpack.c.l.b16 %v379
        %v1040 = vunpack.c.l.b16 %v380
        %v1041 = vunpack.c.l.b16 %v381
        %v1042 = vunpack.c.l.b16 %v382
        %v1043 = vunpack.c.l.b16 %v383
        %v1044 = vunpack.c.l.b16 %v384
        %v1045 = vunpack.c.l.b16 %v385
        %v1046 = vunpack.c.l.b16 %v386
        %v1047 = vunpack.c.l.b16 %v387
        %v1048 = vunpack.c.l.b16 %v388
        %v1049 = vunpack.c.l.b16 %v389
        %v1050 = vunpack.c.l.b16 %v390
        %v1051 = vunpack.c.l.b16 %v391
        %v1052 = vunpack.c.l.b16 %v392
        %v1053 = vunpack.c.l.b16 %v393
        %v1054 = vunpack.c.l.b16 %v394
        %v1055 = vunpack.c.l.b16 %v395
        %v1056 = vunpack.c.l.b16 %v396
        %v1057 = vunpack.c.l.b16 %v397
        %v1058 = vunpack.c.l.b16 %v398
        %v1059 = vunpack.c.l.b16 %v399
        %v1060 = vunpack.c.l.b16 %v400
        %v1061 = vunpack.c.l.b16 %v401
        %v1062 = vunpack.c.l.b16 %v402
        %v1063 = vunpack.c.l.b16 %v403
        %v1064 = vunpack.c.l.b16 %v404
        %v1065 = vunpack.c.l.b16 %v405
        %v1066 = vunpack.c.l.b16 %v406
        %v1067 = vunpack.c.l.b16 %v407
        %v1068 = vunpack.c.l.b16 %v408
        %v1069 = vunpack.c.l.b16 %v409
        %v1070 = vunpack.c.l.b16 %v410
        %v1071 = vunpack.c.l.b16 %v411
        %v1072 = vunpack.c.l.b16 %v412
        %v1073 = vunpack.c.l.b16 %v413
        %v1074 = vunpack.c.l.b16 %v414
        %v1075 = vunpack.c.l.b16 %v415
        %v1076 = vunpack.c.l.b16 %v416
        %v1077 = vunpack.c.l.b16 %v417
        %v1078 = vunpack.c.l.b16 %v418
        %v1079 = vunpack.c.l.b16 %v419
        %v1080 = vunpack.c.l.b16 %v420
        %v1081 = vunpack.c.l.b16 %v421
        %v1082 = vunpack.c.l.b16 %v422
        %v1083 = vunpack.c.l.b16 %v423
        %v1084 = vunpack.c.l.b16 %v424
        %v1085 = vunpack.c.l.b16 %v425
        %v1086 = vunpack.c.l.b16 %v426
        %v1087 = vunpack.c.l.b16 %v427
        %v1088 = vunpack.c.l.b16 %v428
        %v1089 = vunpack.c.l.b16 %v429
        %v1090 = vunpack.c.l.b16 %v430
        %v1091 = vunpack.c.l.b16 %v431
        %v1092 = vunpack.c.l.b16 %v432
        %v1093 = vunpack.c.l.b16 %v433
        %v1094 = vunpack.c.l.b16 %v434
        %v1095 = vunpack.c.l.b16 %v435
        %v1096 = vunpack.c.l.b16 %v436
        %v1097 = vunpack.c.l.b16 %v437
        %v1098 = vunpack.c.l.b16 %v438
        %v1099 = vunpack.c.l.b16 %v439
        %v1100 = vunpack.c.l.b16 %v440
        %v1101 = vunpack.c.l.b16 %v441
        %v1102 = vunpack.c.l.b16 %v442
        %v1103 = vunpack.c.l.b16 %v443
        %v1104 = vunpack.c.l.b16 %v444
        %v1105 = vunpack.c.l.b16 %v445
        %v1106 = vunpack.c.l.b16 %v446
        %v1107 = vunpack.c.l.b16 %v447
        %v1108 = vunpack.c.l.b16 %v448
        %v1109 = vunpack.c.l.b16 %v449
        %v1110 = vunpack.c.l.b16 %v450
        %v1111 = vunpack.c.l.b16 %v451
        %v1112 = vunpack.c.l.b16 %v452
        %v1113 = vunpack.c.l.b16 %v453
        %v1114 = vunpack.c.l.b16 %v454
        %v1115 = vunpack.c.l.b16 %v455
        %v1116 = vunpack.c.l.b16 %v456
        %v1117 = vunpack.c.l.b16 %v457
        %v1118 = vunpack.c.l.b16 %v458
        %v1119 = vunpack.c.l.b16 %v459
        %v1120 = vunpack.c.l.b16 %v460
        %v1121 = vunpack.c.l.b16 %v461
        %v1122 = vunpack.c.l.b16 %v462
        %v1123 = vunpack.c.l.b16 %v463
        %v1124 = vunpack.c.l.b16 %v464
        %v1125 = vunpack.c.l.b16 %v465
        %v1126 = vunpack.c.l.b16 %v466
        %v1127 = vunpack.c.l.b16 %v467
        %v1128 = vunpack.c.l.b16 %v468
        %v1129 = vunpack.c.l.b16 %v469
        %v1130 = vunpack.c.l.b16 %v470
        %v1131 = vunpack.c.l.b16 %v471
        %v1132 = vunpack.c.l.b16 %v472
        %v1133 = vunpack.c.l.b16 %v473
        %v1134 = vunpack.c.l.b16 %v474
        %v1135 = vunpack.c.l.b16 %v475
        %v1136 = vunpack.c.l.b16 %v476
        %v1137 = vunpack.c.l.b16 %v477
        %v1138 = vunpack.c.l.b16 %v478
        %v1139 = vunpack.c.l.b16 %v479
        %v1140 = vunpack.c.l.b16 %v480
        %v1141 = vunpack.c.l.b16 %v481
        %v1142 = vunpack.c.l.b16 %v482
        %v1143 = vunpack.c.l.b16 %v483
        %v1144 = vunpack.c.l.b16 %v484
        %v1145 = vunpack.c.l.b16 %v485
        %v1146 = vunpack.c.l.b16 %v486
        %v1147 = vunpack.c.l.b16 %v487
        %v1148 = vunpack.c.l.b16 %v488
        %v1149 = vunpack.c.l.b16 %v489
        %v1150 = vunpack.c.l.b16 %v490
        %v1151 = vunpack.c.l.b16 %v491
        %v1152 = vunpack.c.l.b16 %v492
        %v1153 = vunpack.c.l.b16 %v493
        %v1154 = vunpack.c.l.b16 %v494
        %v1155 = vunpack.c.l.b16 %v495
        %v1156 = vunpack.c.l.b16 %v496
        %v1157 = vunpack.c.l.b16 %v497
        %v1158 = vunpack.c.l.b16 %v498
        %v1159 = vunpack.c.l.b16 %v499
        %v1160 = vunpack.c.l.b16 %v500
        %v1161 = vunpack.c.l.b16 %v501
        %v1162 = vunpack.c.l.b16 %v502
        %v1163 = vunpack.c.l.b16 %v503
        %v1164 = vunpack.c.l.b16 %v504
        %v1165 = vunpack.c.l.b16 %v505
        %v1166 = vunpack.c.l.b16 %v506
        %v1167 = vunpack.c.l.b16 %v507
        %v1168 = vunpack.c.l.b16 %v508
        %v1169 = vunpack.c.l.b16 %v509
        %v1170 = vunpack.c.l.b16 %v510
        %v1171 = vunpack.c.l.b16 %v511
        %v1172 = vunpack.c.l.b16 %v512
        %v1173 = vunpack.c.l.b16 %v513
        %v1174 = vunpack.c.l.b16 %v514
        %v1175 = vunpack.c.l.b16 %v515
        %v1176 = vunpack.c.l.b16 %v516
        %v1177 = vunpack.c.l.b16 %v517
        %v1178 = vunpack.c.l.b16 %v518
        %v1179 = vunpack.c.l.b16 %v519
        %v1180 = vunpack.c.l.b16 %v520
        %v1181 = vunpack.c.l.b16 %v521
        %v1182 = vunpack.c.l.b16 %v522
        %v1183 = vunpack.c.l.b16 %v523
        %v1184 = vunpack.c.l.b16 %v524
        %v1185 = vunpack.c.l.b16 %v525
        %v1186 = vunpack.c.l.b16 %v526
        %v1187 = vunpack.c.l.b16 %v527
        %v1188 = vunpack.c.l.b16 %v528
        %v1189 = vunpack.c.l.b16 %v529
        %v1190 = vunpack.c.l.b16 %v530
        %v1191 = vunpack.c.l.b16 %v531
        %v1192 = vunpack.c.l.b16 %v532
        %v1193 = vunpack.c.l.b16 %v533
        %v1194 = vunpack.c.l.b16 %v534
        %v1195 = vunpack.c.l.b16 %v535
        %v1196 = vunpack.c.l.b16 %v536
        %v1197 = vunpack.c.l.b16 %v537
        %v1198 = vunpack.c.l.b16 %v538
        %v1199 = vunpack.c.l.b16 %v539
        %v1200 = vunpack.c.l.b16 %v540
        %v1201 = vunpack.c.l.b16 %v541
        %v1202 = vunpack.c.l.b16 %v542
        %v1203 = vunpack.c.l.b16 %v543
        %v1204 = vunpack.c.l.b16 %v544
        %v1205 = vunpack.c.l.b16 %v545
        %v1206 = vunpack.c.l.b16 %v546
        %v1207 = vunpack.c.l.b16 %v547
        %v1208 = vunpack.c.l.b16 %v548
        %v1209 = vunpack.c.l.b16 %v549
        %v1210 = vunpack.c.l.b16 %v550
        %v1211 = vunpack.c.l.b16 %v551
        %v1212 = vunpack.c.l.b16 %v552
        %v1213 = vunpack.c.l.b16 %v553
        %v1214 = vunpack.c.l.b16 %v554
        %v1215 = vunpack.c.l.b16 %v555
        %v1216 = vunpack.c.l.b16 %v556
        %v1217 = vunpack.c.l.b16 %v557
        %v1218 = vunpack.c.l.b16 %v558
        %v1219 = vunpack.c.l.b16 %v559
        %v1220 = vunpack.c.l.b16 %v560
        %v1221 = vunpack.c.l.b16 %v561
        %v1222 = vunpack.c.l.b16 %v562
        %v1223 = vunpack.c.l.b16 %v563
        %v1224 = vunpack.c.l.b16 %v564
        %v1225 = vunpack.c.l.b16 %v565
        %v1226 = vunpack.c.l.b16 %v566
        %v1227 = vunpack.c.l.b16 %v567
        %v1228 = vunpack.c.l.b16 %v568
        %v1229 = vunpack.c.l.b16 %v569
        %v1230 = vunpack.c.l.b16 %v570
        %v1231 = vpack.c.b16 %v1032, %v1031
        %v1232 = vpack.c.b16 %v1034, %v1033
        %v1233 = vpack.c.b16 %v1036, %v1035
        %v1234 = vpack.c.b16 %v1038, %v1037
        %v1235 = vpack.c.b16 %v1040, %v1039
        %v1236 = vpack.c.b16 %v1042, %v1041
        %v1237 = vpack.c.b16 %v1044, %v1043
        %v1238 = vpack.c.b16 %v1046, %v1045
        %v1239 = vpack.c.b16 %v1048, %v1047
        %v1240 = vpack.c.b16 %v1050, %v1049
        %v1241 = vpack.c.b16 %v1052, %v1051
        %v1242 = vpack.c.b16 %v1054, %v1053
        %v1243 = vpack.c.b16 %v1056, %v1055
        %v1244 = vpack.c.b16 %v1058, %v1057
        %v1245 = vpack.c.b16 %v1060, %v1059
        %v1246 = vpack.c.b16 %v1062, %v1061
        %v1247 = vpack.c.b16 %v1064, %v1063
        %v1248 = vpack.c.b16 %v1066, %v1065
        %v1249 = vpack.c.b16 %v1068, %v1067
        %v1250 = vpack.c.b16 %v1070, %v1069
        %v1251 = vpack.c.b16 %v1072, %v1071
        %v1252 = vpack.c.b16 %v1074, %v1073
        %v1253 = vpack.c.b16 %v1076, %v1075
        %v1254 = vpack.c.b16 %v1078, %v1077
        %v1255 = vpack.c.b16 %v1080, %v1079
        %v1256 = vpack.c.b16 %v1082, %v1081
        %v1257 = vpack.c.b16 %v1084, %v1083
        %v1258 = vpack.c.b16 %v1086, %v1085
        %v1259 = vpack.c.b16 %v1088, %v1087
        %v1260 = vpack.c.b16 %v1090, %v1089
        %v1261 = vpack.c.b16 %v1092, %v1091
        %v1262 = vpack.c.b16 %v1094, %v1093
        %v1263 = vpack.c.b16 %v1096, %v1095
        %v1264 = vpack.c.b16 %v1098, %v1097
        %v1265 = vpack.c.b16 %v1100, %v1099
        %v1266 = vpack.c.b16 %v1102, %v1101
        %v1267 = vpack.c.b16 %v1104, %v1103
        %v1268 = vpack.c.b16 %v1106, %v1105
        %v1269 = vpack.c.b16 %v1108, %v1107
        %v1270 = vpack.c.b16 %v1110, %v1109
        %v1271 = vpack.c.b16 %v1112, %v1111
        %v1272 = vpack.c.b16 %v1114, %v1113
        %v1273 = vpack.c.b16 %v1116, %v1115
        %v1274 = vpack.c.b16 %v1118, %v1117
        %v1275 = vpack.c.b16 %v1120, %v1119
        %v1276 = vpack.c.b16 %v1122, %v1121
        %v1277 = vpack.c.b16 %v1124, %v1123
        %v1278 = vpack.c.b16 %v1126, %v1125
        %v1279 = vpack.c.b16 %v1128, %v1127
        %v1280 = vpack.c.b16 %v1130, %v1129
        %v1281 = vpack.c.b16 %v1132, %v1131
        %v1282 = vpack.c.b16 %v1134, %v1133
        %v1283 = vpack.c.b16 %v1136, %v1135
        %v1284 = vpack.c.b16 %v1138, %v1137
        %v1285 = vpack.c.b16 %v1140, %v1139
        %v1286 = vpack.c.b16 %v1142, %v1141
        %v1287 = vpack.c.b16 %v1144, %v1143
        %v1288 = vpack.c.b16 %v1146, %v1145
        %v1289 = vpack.c.b16 %v1148, %v1147
        %v1290 = vpack.c.b16 %v1150, %v1149
        %v1291 = vpack.c.b16 %v1152, %v1151
        %v1292 = vpack.c.b16 %v1154, %v1153
        %v1293 = vpack.c.b16 %v1156, %v1155
        %v1294 = vpack.c.b16 %v1158, %v1157
        %v1295 = vpack.c.b16 %v1160, %v1159
        %v1296 = vpack.c.b16 %v1162, %v1161
        %v1297 = vpack.c.b16 %v1164, %v1163
        %v1298 = vpack.c.b16 %v1166, %v1165
        %v1299 = vpack.c.b16 %v1168, %v1167
        %v1300 = vpack.c.b16 %v1170, %v1169
        %v1301 = vpack.c.b16 %v1172, %v1171
        %v1302 = vpack.c.b16 %v1174, %v1173
        %v1303 = vpack.c.b16 %v1176, %v1175
        %v1304 = vpack.c.b16 %v1178, %v1177
        %v1305 = vpack.c.b16 %v1180, %v1179
        %v1306 = vpack.c.b16 %v1182, %v1181
        %v1307 = vpack.c.b16 %v1184, %v1183
        %v1308 = vpack.c.b16 %v1186, %v1185
        %v1309 = vpack.c.b16 %v1188, %v1187
        %v1310 = vpack.c.b16 %v1190, %v1189
        %v1311 = vpack.c.b16 %v1192, %v1191
        %v1312 = vpack.c.b16 %v1194, %v1193
        %v1313 = vpack.c.b16 %v1196, %v1195
        %v1314 = vpack.c.b16 %v1198, %v1197
        %v1315 = vpack.c.b16 %v1200, %v1199
        %v1316 = vpack.c.b16 %v1202, %v1201
        %v1317 = vpack.c.b16 %v1204, %v1203
        %v1318 = vpack.c.b16 %v1206, %v1205
        %v1319 = vpack.c.b16 %v1208, %v1207
        %v1320 = vpack.c.b16 %v1210, %v1209
        %v1321 = vpack.c.b16 %v1212, %v1211
        %v1322 = vpack.c.b16 %v1214, %v1213
        %v1323 = vpack.c.b16 %v1216, %v1215
        %v1324 = vpack.c.b16 %v1218, %v1217
        %v1325 = vpack.c.b16 %v1220, %v1219
        %v1326 = vpack.c.b16 %v1222, %v1221
        %v1327 = vpack.c.b16 %v1224, %v1223
        %v1328 = vpack.c.b16 %v1226, %v1225
        %v1329 = vpack.c.b16 %v1228, %v1227
        %v1330 = vpack.c.b16 %v1230, %v1229
        %vm1431 = vcmask 523264
        %v1433 = vsel %vm1431, %v743, 0
        %v1436 = vsel %vm1431, %v756, 0
        %v1439 = vsel %vm1431, %v769, 0
        %v1442 = vsel %vm1431, %v782, 0
        %1444 = vmatprep.subr.bf16.mxu0 0
        %1445 = vmatpush1.bf16.msra.mxu0 %v1238
        %1446 = vmatprep.subr.bf16.mxu0 0
        %1447 = vmatpush1.bf16.msra.mxu0 %v1237
        %1448 = vmatprep.subr.bf16.mxu0 0
        %1449 = vmatpush1.bf16.msra.mxu0 %v1236
        %1450 = vmatprep.subr.bf16.mxu0 0
        %1451 = vmatpush1.bf16.msra.mxu0 %v1235
        %1452 = vmatprep.subr.bf16.mxu0 0
        %1453 = vmatpush1.bf16.msra.mxu0 %v1234
        %1454 = vmatprep.subr.bf16.mxu0 0
        %1455 = vmatpush1.bf16.msra.mxu0 %v1233
        %1456 = vmatprep.subr.bf16.mxu0 0
        %1457 = vmatpush1.bf16.msra.mxu0 %v1232
        %1458 = vmatprep.subr.bf16.mxu0 0
        %1459 = vmatpush1.bf16.msra.mxu0 %v1231
        %1460 = vmatprep.subr.bf16.mxu0 0
        %1461 = vmatpush2.bf16.msra.mxu0 %v1246
        %1462 = vmatprep.subr.bf16.mxu0 0
        %1463 = vmatpush2.bf16.msra.mxu0 %v1245
        %1464 = vmatprep.subr.bf16.mxu0 0
        %1465 = vmatpush2.bf16.msra.mxu0 %v1244
        %1466 = vmatprep.subr.bf16.mxu0 0
        %1467 = vmatpush2.bf16.msra.mxu0 %v1243
        %1468 = vmatprep.subr.bf16.mxu0 0
        %1469 = vmatpush2.bf16.msra.mxu0 %v1242
        %1470 = vmatprep.subr.bf16.mxu0 0
        %1471 = vmatpush2.bf16.msra.mxu0 %v1241
        %1472 = vmatprep.subr.bf16.mxu0 0
        %1473 = vmatpush2.bf16.msra.mxu0 %v1240
        %1474 = vmatprep.subr.bf16.mxu0 0
        %1475 = vmatpush2.bf16.msra.mxu0 %v1239
        %1476 = vmatprep.mubr.bf16.mxu0 %v732
        %1477 = vmatmul.mubr.bf16.gmra.mxu0 %v731
        %v1478 = vpop.f32.mrf.mxu0
        %v1479 = vadd.f32 0.0, %v1478
        %v1480 = vpop.f32.mrf.mxu0
        %v1481 = vpop.f32.mrf.mxu0
        %v1482 = vadd.f32 0.0, %v1481
        %v1483 = vpop.f32.mrf.mxu0
        %1484 = vmatprep.mubr.bf16.mxu0 %v745
        %1485 = vmatmul.mubr.bf16.gmra.mxu0 %v744
        %v1486 = vpop.f32.mrf.mxu0
        %v1487 = vadd.f32 0.0, %v1486
        %v1488 = vpop.f32.mrf.mxu0
        %v1489 = vpop.f32.mrf.mxu0
        %v1490 = vadd.f32 0.0, %v1489
        %v1491 = vpop.f32.mrf.mxu0
        %1492 = vmatprep.mubr.bf16.mxu0 %v758
        %1493 = vmatmul.mubr.bf16.gmra.mxu0 %v757
        %v1494 = vpop.f32.mrf.mxu0
        %v1495 = vadd.f32 0.0, %v1494
        %v1496 = vpop.f32.mrf.mxu0
        %v1497 = vpop.f32.mrf.mxu0
        %v1498 = vadd.f32 0.0, %v1497
        %v1499 = vpop.f32.mrf.mxu0
        %1500 = vmatprep.mubr.bf16.mxu0 %v771
        %1501 = vmatmul.mubr.bf16.gmra.mxu0 %v770
        %v1502 = vpop.f32.mrf.mxu0
        %v1503 = vadd.f32 0.0, %v1502
        %v1504 = vpop.f32.mrf.mxu0
        %v1505 = vpop.f32.mrf.mxu0
        %v1506 = vadd.f32 0.0, %v1505
        %v1507 = vpop.f32.mrf.mxu0
        %1508 = vdwg.mxu0
        %1509 = vmatprep.subr.bf16.mxu0 0
        %1510 = vmatpush1.bf16.msra.mxu0 %v1254
        %1511 = vmatprep.subr.bf16.mxu0 0
        %1512 = vmatpush1.bf16.msra.mxu0 %v1253
        %1513 = vmatprep.subr.bf16.mxu0 0
        %1514 = vmatpush1.bf16.msra.mxu0 %v1252
        %1515 = vmatprep.subr.bf16.mxu0 0
        %1516 = vmatpush1.bf16.msra.mxu0 %v1251
        %1517 = vmatprep.subr.bf16.mxu0 0
        %1518 = vmatpush1.bf16.msra.mxu0 %v1250
        %1519 = vmatprep.subr.bf16.mxu0 0
        %1520 = vmatpush1.bf16.msra.mxu0 %v1249
        %1521 = vmatprep.subr.bf16.mxu0 0
        %1522 = vmatpush1.bf16.msra.mxu0 %v1248
        %1523 = vmatprep.subr.bf16.mxu0 0
        %1524 = vmatpush1.bf16.msra.mxu0 %v1247
        %1525 = vmatprep.subr.bf16.mxu0 0
        %1526 = vmatpush2.bf16.msra.mxu0 %v1262
        %1527 = vmatprep.subr.bf16.mxu0 0
        %1528 = vmatpush2.bf16.msra.mxu0 %v1261
        %1529 = vmatprep.subr.bf16.mxu0 0
        %1530 = vmatpush2.bf16.msra.mxu0 %v1260
        %1531 = vmatprep.subr.bf16.mxu0 0
        %1532 = vmatpush2.bf16.msra.mxu0 %v1259
        %1533 = vmatprep.subr.bf16.mxu0 0
        %1534 = vmatpush2.bf16.msra.mxu0 %v1258
        %1535 = vmatprep.subr.bf16.mxu0 0
        %1536 = vmatpush2.bf16.msra.mxu0 %v1257
        %1537 = vmatprep.subr.bf16.mxu0 0
        %1538 = vmatpush2.bf16.msra.mxu0 %v1256
        %1539 = vmatprep.subr.bf16.mxu0 0
        %1540 = vmatpush2.bf16.msra.mxu0 %v1255
        %1541 = vmatprep.mubr.bf16.mxu0 %v734
        %1542 = vmatmul.mubr.bf16.gmra.mxu0 %v733
        %v1543 = vpop.f32.mrf.mxu0
        %v1544 = vadd.f32 %v1479, %v1543
        %v1545 = vpop.f32.mrf.mxu0
        %v1546 = vpop.f32.mrf.mxu0
        %v1547 = vadd.f32 %v1482, %v1546
        %v1548 = vpop.f32.mrf.mxu0
        %1549 = vmatprep.mubr.bf16.mxu0 %v747
        %1550 = vmatmul.mubr.bf16.gmra.mxu0 %v746
        %v1551 = vpop.f32.mrf.mxu0
        %v1552 = vadd.f32 %v1487, %v1551
        %v1553 = vpop.f32.mrf.mxu0
        %v1554 = vpop.f32.mrf.mxu0
        %v1555 = vadd.f32 %v1490, %v1554
        %v1556 = vpop.f32.mrf.mxu0
        %1557 = vmatprep.mubr.bf16.mxu0 %v760
        %1558 = vmatmul.mubr.bf16.gmra.mxu0 %v759
        %v1559 = vpop.f32.mrf.mxu0
        %v1560 = vadd.f32 %v1495, %v1559
        %v1561 = vpop.f32.mrf.mxu0
        %v1562 = vpop.f32.mrf.mxu0
        %v1563 = vadd.f32 %v1498, %v1562
        %v1564 = vpop.f32.mrf.mxu0
        %1565 = vmatprep.mubr.bf16.mxu0 %v773
        %1566 = vmatmul.mubr.bf16.gmra.mxu0 %v772
        %v1567 = vpop.f32.mrf.mxu0
        %v1568 = vadd.f32 %v1503, %v1567
        %v1569 = vpop.f32.mrf.mxu0
        %v1570 = vpop.f32.mrf.mxu0
        %v1571 = vadd.f32 %v1506, %v1570
        %v1572 = vpop.f32.mrf.mxu0
        %1573 = vdwg.mxu0
        %1574 = vmatprep.subr.bf16.mxu0 0
        %1575 = vmatpush1.bf16.msra.mxu0 %v1270
        %1576 = vmatprep.subr.bf16.mxu0 0
        %1577 = vmatpush1.bf16.msra.mxu0 %v1269
        %1578 = vmatprep.subr.bf16.mxu0 0
        %1579 = vmatpush1.bf16.msra.mxu0 %v1268
        %1580 = vmatprep.subr.bf16.mxu0 0
        %1581 = vmatpush1.bf16.msra.mxu0 %v1267
        %1582 = vmatprep.subr.bf16.mxu0 0
        %1583 = vmatpush1.bf16.msra.mxu0 %v1266
        %1584 = vmatprep.subr.bf16.mxu0 0
        %1585 = vmatpush1.bf16.msra.mxu0 %v1265
        %1586 = vmatprep.subr.bf16.mxu0 0
        %1587 = vmatpush1.bf16.msra.mxu0 %v1264
        %1588 = vmatprep.subr.bf16.mxu0 0
        %1589 = vmatpush1.bf16.msra.mxu0 %v1263
        %1590 = vmatprep.subr.bf16.mxu0 0
        %1591 = vmatpush2.bf16.msra.mxu0 %v1278
        %1592 = vmatprep.subr.bf16.mxu0 0
        %1593 = vmatpush2.bf16.msra.mxu0 %v1277
        %1594 = vmatprep.subr.bf16.mxu0 0
        %1595 = vmatpush2.bf16.msra.mxu0 %v1276
        %1596 = vmatprep.subr.bf16.mxu0 0
        %1597 = vmatpush2.bf16.msra.mxu0 %v1275
        %1598 = vmatprep.subr.bf16.mxu0 0
        %1599 = vmatpush2.bf16.msra.mxu0 %v1274
        %1600 = vmatprep.subr.bf16.mxu0 0
        %1601 = vmatpush2.bf16.msra.mxu0 %v1273
        %1602 = vmatprep.subr.bf16.mxu0 0
        %1603 = vmatpush2.bf16.msra.mxu0 %v1272
        %1604 = vmatprep.subr.bf16.mxu0 0
        %1605 = vmatpush2.bf16.msra.mxu0 %v1271
        %1606 = vmatprep.mubr.bf16.mxu0 %v736
        %1607 = vmatmul.mubr.bf16.gmra.mxu0 %v735
        %v1608 = vpop.f32.mrf.mxu0
        %v1609 = vadd.f32 %v1544, %v1608
        %v1610 = vpop.f32.mrf.mxu0
        %v1611 = vpop.f32.mrf.mxu0
        %v1612 = vadd.f32 %v1547, %v1611
        %v1613 = vpop.f32.mrf.mxu0
        %1614 = vmatprep.mubr.bf16.mxu0 %v749
        %1615 = vmatmul.mubr.bf16.gmra.mxu0 %v748
        %v1616 = vpop.f32.mrf.mxu0
        %v1617 = vadd.f32 %v1552, %v1616
        %v1618 = vpop.f32.mrf.mxu0
        %v1619 = vpop.f32.mrf.mxu0
        %v1620 = vadd.f32 %v1555, %v1619
        %v1621 = vpop.f32.mrf.mxu0
        %1622 = vmatprep.mubr.bf16.mxu0 %v762
        %1623 = vmatmul.mubr.bf16.gmra.mxu0 %v761
        %v1624 = vpop.f32.mrf.mxu0
        %v1625 = vadd.f32 %v1560, %v1624
        %v1626 = vpop.f32.mrf.mxu0
        %v1627 = vpop.f32.mrf.mxu0
        %v1628 = vadd.f32 %v1563, %v1627
        %v1629 = vpop.f32.mrf.mxu0
        %1630 = vmatprep.mubr.bf16.mxu0 %v775
        %1631 = vmatmul.mubr.bf16.gmra.mxu0 %v774
        %v1632 = vpop.f32.mrf.mxu0
        %v1633 = vadd.f32 %v1568, %v1632
        %v1634 = vpop.f32.mrf.mxu0
        %v1635 = vpop.f32.mrf.mxu0
        %v1636 = vadd.f32 %v1571, %v1635
        %v1637 = vpop.f32.mrf.mxu0
        %1638 = vdwg.mxu0
        %1639 = vmatprep.subr.bf16.mxu0 0
        %1640 = vmatpush1.bf16.msra.mxu0 %v1286
        %1641 = vmatprep.subr.bf16.mxu0 0
        %1642 = vmatpush1.bf16.msra.mxu0 %v1285
        %1643 = vmatprep.subr.bf16.mxu0 0
        %1644 = vmatpush1.bf16.msra.mxu0 %v1284
        %1645 = vmatprep.subr.bf16.mxu0 0
        %1646 = vmatpush1.bf16.msra.mxu0 %v1283
        %1647 = vmatprep.subr.bf16.mxu0 0
        %1648 = vmatpush1.bf16.msra.mxu0 %v1282
        %1649 = vmatprep.subr.bf16.mxu0 0
        %1650 = vmatpush1.bf16.msra.mxu0 %v1281
        %1651 = vmatprep.subr.bf16.mxu0 0
        %1652 = vmatpush1.bf16.msra.mxu0 %v1280
        %1653 = vmatprep.subr.bf16.mxu0 0
        %1654 = vmatpush1.bf16.msra.mxu0 %v1279
        %1655 = vmatprep.subr.bf16.mxu0 0
        %1656 = vmatpush2.bf16.msra.mxu0 %v1294
        %1657 = vmatprep.subr.bf16.mxu0 0
        %1658 = vmatpush2.bf16.msra.mxu0 %v1293
        %1659 = vmatprep.subr.bf16.mxu0 0
        %1660 = vmatpush2.bf16.msra.mxu0 %v1292
        %1661 = vmatprep.subr.bf16.mxu0 0
        %1662 = vmatpush2.bf16.msra.mxu0 %v1291
        %1663 = vmatprep.subr.bf16.mxu0 0
        %1664 = vmatpush2.bf16.msra.mxu0 %v1290
        %1665 = vmatprep.subr.bf16.mxu0 0
        %1666 = vmatpush2.bf16.msra.mxu0 %v1289
        %1667 = vmatprep.subr.bf16.mxu0 0
        %1668 = vmatpush2.bf16.msra.mxu0 %v1288
        %1669 = vmatprep.subr.bf16.mxu0 0
        %1670 = vmatpush2.bf16.msra.mxu0 %v1287
        %1671 = vmatprep.mubr.bf16.mxu0 %v738
        %1672 = vmatmul.mubr.bf16.gmra.mxu0 %v737
        %v1673 = vpop.f32.mrf.mxu0
        %v1674 = vadd.f32 %v1609, %v1673
        %v1675 = vpop.f32.mrf.mxu0
        %v1676 = vpop.f32.mrf.mxu0
        %v1677 = vadd.f32 %v1612, %v1676
        %v1678 = vpop.f32.mrf.mxu0
        %1679 = vmatprep.mubr.bf16.mxu0 %v751
        %1680 = vmatmul.mubr.bf16.gmra.mxu0 %v750
        %v1681 = vpop.f32.mrf.mxu0
        %v1682 = vadd.f32 %v1617, %v1681
        %v1683 = vpop.f32.mrf.mxu0
        %v1684 = vpop.f32.mrf.mxu0
        %v1685 = vadd.f32 %v1620, %v1684
        %v1686 = vpop.f32.mrf.mxu0
        %1687 = vmatprep.mubr.bf16.mxu0 %v764
        %1688 = vmatmul.mubr.bf16.gmra.mxu0 %v763
        %v1689 = vpop.f32.mrf.mxu0
        %v1690 = vadd.f32 %v1625, %v1689
        %v1691 = vpop.f32.mrf.mxu0
        %v1692 = vpop.f32.mrf.mxu0
        %v1693 = vadd.f32 %v1628, %v1692
        %v1694 = vpop.f32.mrf.mxu0
        %1695 = vmatprep.mubr.bf16.mxu0 %v777
        %1696 = vmatmul.mubr.bf16.gmra.mxu0 %v776
        %v1697 = vpop.f32.mrf.mxu0
        %v1698 = vadd.f32 %v1633, %v1697
        %v1699 = vpop.f32.mrf.mxu0
        %v1700 = vpop.f32.mrf.mxu0
        %v1701 = vadd.f32 %v1636, %v1700
        %v1702 = vpop.f32.mrf.mxu0
        %1703 = vdwg.mxu0
        %1704 = vmatprep.subr.bf16.mxu0 0
        %1705 = vmatpush1.bf16.msra.mxu0 %v1302
        %1706 = vmatprep.subr.bf16.mxu0 0
        %1707 = vmatpush1.bf16.msra.mxu0 %v1301
        %1708 = vmatprep.subr.bf16.mxu0 0
        %1709 = vmatpush1.bf16.msra.mxu0 %v1300
        %1710 = vmatprep.subr.bf16.mxu0 0
        %1711 = vmatpush1.bf16.msra.mxu0 %v1299
        %1712 = vmatprep.subr.bf16.mxu0 0
        %1713 = vmatpush1.bf16.msra.mxu0 %v1298
        %1714 = vmatprep.subr.bf16.mxu0 0
        %1715 = vmatpush1.bf16.msra.mxu0 %v1297
        %1716 = vmatprep.subr.bf16.mxu0 0
        %1717 = vmatpush1.bf16.msra.mxu0 %v1296
        %1718 = vmatprep.subr.bf16.mxu0 0
        %1719 = vmatpush1.bf16.msra.mxu0 %v1295
        %1720 = vmatprep.subr.bf16.mxu0 0
        %1721 = vmatpush2.bf16.msra.mxu0 %v1310
        %1722 = vmatprep.subr.bf16.mxu0 0
        %1723 = vmatpush2.bf16.msra.mxu0 %v1309
        %1724 = vmatprep.subr.bf16.mxu0 0
        %1725 = vmatpush2.bf16.msra.mxu0 %v1308
        %1726 = vmatprep.subr.bf16.mxu0 0
        %1727 = vmatpush2.bf16.msra.mxu0 %v1307
        %1728 = vmatprep.subr.bf16.mxu0 0
        %1729 = vmatpush2.bf16.msra.mxu0 %v1306
        %1730 = vmatprep.subr.bf16.mxu0 0
        %1731 = vmatpush2.bf16.msra.mxu0 %v1305
        %1732 = vmatprep.subr.bf16.mxu0 0
        %1733 = vmatpush2.bf16.msra.mxu0 %v1304
        %1734 = vmatprep.subr.bf16.mxu0 0
        %1735 = vmatpush2.bf16.msra.mxu0 %v1303
        %1736 = vmatprep.mubr.bf16.mxu0 %v740
        %1737 = vmatmul.mubr.bf16.gmra.mxu0 %v739
        %v1738 = vpop.f32.mrf.mxu0
        %v1739 = vadd.f32 %v1674, %v1738
        %v1740 = vpop.f32.mrf.mxu0
        %v1741 = vpop.f32.mrf.mxu0
        %v1742 = vadd.f32 %v1677, %v1741
        %v1743 = vpop.f32.mrf.mxu0
        %1744 = vmatprep.mubr.bf16.mxu0 %v753
        %1745 = vmatmul.mubr.bf16.gmra.mxu0 %v752
        %v1746 = vpop.f32.mrf.mxu0
        %v1747 = vadd.f32 %v1682, %v1746
        %v1748 = vpop.f32.mrf.mxu0
        %v1749 = vpop.f32.mrf.mxu0
        %v1750 = vadd.f32 %v1685, %v1749
        %v1751 = vpop.f32.mrf.mxu0
        %1752 = vmatprep.mubr.bf16.mxu0 %v766
        %1753 = vmatmul.mubr.bf16.gmra.mxu0 %v765
        %v1754 = vpop.f32.mrf.mxu0
        %v1755 = vadd.f32 %v1690, %v1754
        %v1756 = vpop.f32.mrf.mxu0
        %v1757 = vpop.f32.mrf.mxu0
        %v1758 = vadd.f32 %v1693, %v1757
        %v1759 = vpop.f32.mrf.mxu0
        %1760 = vmatprep.mubr.bf16.mxu0 %v779
        %1761 = vmatmul.mubr.bf16.gmra.mxu0 %v778
        %v1762 = vpop.f32.mrf.mxu0
        %v1763 = vadd.f32 %v1698, %v1762
        %v1764 = vpop.f32.mrf.mxu0
        %v1765 = vpop.f32.mrf.mxu0
        %v1766 = vadd.f32 %v1701, %v1765
        %v1767 = vpop.f32.mrf.mxu0
        %1768 = vdwg.mxu0
        %1769 = vmatprep.subr.bf16.mxu0 0
        %1770 = vmatpush1.bf16.msra.mxu0 %v1318
        %1771 = vmatprep.subr.bf16.mxu0 0
        %1772 = vmatpush1.bf16.msra.mxu0 %v1317
        %1773 = vmatprep.subr.bf16.mxu0 0
        %1774 = vmatpush1.bf16.msra.mxu0 %v1316
        %1775 = vmatprep.subr.bf16.mxu0 0
        %1776 = vmatpush1.bf16.msra.mxu0 %v1315
        %1777 = vmatprep.subr.bf16.mxu0 0
        %1778 = vmatpush1.bf16.msra.mxu0 %v1314
        %1779 = vmatprep.subr.bf16.mxu0 0
        %1780 = vmatpush1.bf16.msra.mxu0 %v1313
        %1781 = vmatprep.subr.bf16.mxu0 0
        %1782 = vmatpush1.bf16.msra.mxu0 %v1312
        %1783 = vmatprep.subr.bf16.mxu0 0
        %1784 = vmatpush1.bf16.msra.mxu0 %v1311
        %1785 = vmatprep.subr.bf16.mxu0 0
        %1786 = vmatpush2.bf16.msra.mxu0 %v1326
        %1787 = vmatprep.subr.bf16.mxu0 0
        %1788 = vmatpush2.bf16.msra.mxu0 %v1325
        %1789 = vmatprep.subr.bf16.mxu0 0
        %1790 = vmatpush2.bf16.msra.mxu0 %v1324
        %1791 = vmatprep.subr.bf16.mxu0 0
        %1792 = vmatpush2.bf16.msra.mxu0 %v1323
        %1793 = vmatprep.subr.bf16.mxu0 0
        %1794 = vmatpush2.bf16.msra.mxu0 %v1322
        %1795 = vmatprep.subr.bf16.mxu0 0
        %1796 = vmatpush2.bf16.msra.mxu0 %v1321
        %1797 = vmatprep.subr.bf16.mxu0 0
        %1798 = vmatpush2.bf16.msra.mxu0 %v1320
        %1799 = vmatprep.subr.bf16.mxu0 0
        %1800 = vmatpush2.bf16.msra.mxu0 %v1319
        %1801 = vmatprep.mubr.bf16.mxu0 %v742
        %1802 = vmatmul.mubr.bf16.gmra.mxu0 %v741
        %v1803 = vpop.f32.mrf.mxu0
        %v1804 = vadd.f32 %v1739, %v1803
        %v1805 = vpop.f32.mrf.mxu0
        %v1806 = vpop.f32.mrf.mxu0
        %v1807 = vadd.f32 %v1742, %v1806
        %v1808 = vpop.f32.mrf.mxu0
        %1809 = vmatprep.mubr.bf16.mxu0 %v755
        %1810 = vmatmul.mubr.bf16.gmra.mxu0 %v754
        %v1811 = vpop.f32.mrf.mxu0
        %v1812 = vadd.f32 %v1747, %v1811
        %v1813 = vpop.f32.mrf.mxu0
        %v1814 = vpop.f32.mrf.mxu0
        %v1815 = vadd.f32 %v1750, %v1814
        %v1816 = vpop.f32.mrf.mxu0
        %1817 = vmatprep.mubr.bf16.mxu0 %v768
        %1818 = vmatmul.mubr.bf16.gmra.mxu0 %v767
        %v1819 = vpop.f32.mrf.mxu0
        %v1820 = vadd.f32 %v1755, %v1819
        %v1821 = vpop.f32.mrf.mxu0
        %v1822 = vpop.f32.mrf.mxu0
        %v1823 = vadd.f32 %v1758, %v1822
        %v1824 = vpop.f32.mrf.mxu0
        %1825 = vmatprep.mubr.bf16.mxu0 %v781
        %1826 = vmatmul.mubr.bf16.gmra.mxu0 %v780
        %v1827 = vpop.f32.mrf.mxu0
        %v1828 = vadd.f32 %v1763, %v1827
        %v1829 = vpop.f32.mrf.mxu0
        %v1830 = vpop.f32.mrf.mxu0
        %v1831 = vadd.f32 %v1766, %v1830
        %v1832 = vpop.f32.mrf.mxu0
        %1833 = vdwg.mxu0
        %1834 = vmatprep.subr.bf16.mxu0 0
        %1835 = vmatpush1.bf16.msra.mxu0 0
        %1836 = vmatprep.subr.bf16.mxu0 0
        %1837 = vmatpush1.bf16.msra.mxu0 0
        %1838 = vmatprep.subr.bf16.mxu0 0
        %1839 = vmatpush1.bf16.msra.mxu0 0
        %1840 = vmatprep.subr.bf16.mxu0 0
        %1841 = vmatpush1.bf16.msra.mxu0 0
        %1842 = vmatprep.subr.bf16.mxu0 0
        %1843 = vmatpush1.bf16.msra.mxu0 %v1330
        %1844 = vmatprep.subr.bf16.mxu0 0
        %1845 = vmatpush1.bf16.msra.mxu0 %v1329
        %1846 = vmatprep.subr.bf16.mxu0 0
        %1847 = vmatpush1.bf16.msra.mxu0 %v1328
        %1848 = vmatprep.subr.bf16.mxu0 0
        %1849 = vmatpush1.bf16.msra.mxu0 %v1327
        %1850 = vmatprep.subr.bf16.mxu0 0
        %1851 = vmatpush2.bf16.msra.mxu0 0
        %1852 = vmatprep.subr.bf16.mxu0 0
        %1853 = vmatpush2.bf16.msra.mxu0 0
        %1854 = vmatprep.subr.bf16.mxu0 0
        %1855 = vmatpush2.bf16.msra.mxu0 0
        %1856 = vmatprep.subr.bf16.mxu0 0
        %1857 = vmatpush2.bf16.msra.mxu0 0
        %1858 = vmatprep.subr.bf16.mxu0 0
        %1859 = vmatpush2.bf16.msra.mxu0 0
        %1860 = vmatprep.subr.bf16.mxu0 0
        %1861 = vmatpush2.bf16.msra.mxu0 0
        %1862 = vmatprep.subr.bf16.mxu0 0
        %1863 = vmatpush2.bf16.msra.mxu0 0
        %1864 = vmatprep.subr.bf16.mxu0 0
        %1865 = vmatpush2.bf16.msra.mxu0 0
        %1866 = vmatprep.mubr.bf16.mxu0 0
        %1867 = vmatmul.mubr.bf16.gmra.mxu0 %v1433
        %v1868 = vpop.f32.mrf.mxu0
        %v1869 = vadd.f32 %v1804, %v1868
        %v1870 = vpop.f32.mrf.mxu0
        %v1871 = vpop.f32.mrf.mxu0
        %v1872 = vadd.f32 %v1807, %v1871
        %v1873 = vpop.f32.mrf.mxu0
        %1874 = vmatprep.mubr.bf16.mxu0 0
        %1875 = vmatmul.mubr.bf16.gmra.mxu0 %v1436
        %v1876 = vpop.f32.mrf.mxu0
        %v1877 = vadd.f32 %v1812, %v1876
        %v1878 = vpop.f32.mrf.mxu0
        %v1879 = vpop.f32.mrf.mxu0
        %v1880 = vadd.f32 %v1815, %v1879
        %v1881 = vpop.f32.mrf.mxu0
        %1882 = vmatprep.mubr.bf16.mxu0 0
        %1883 = vmatmul.mubr.bf16.gmra.mxu0 %v1439
        %v1884 = vpop.f32.mrf.mxu0
        %v1885 = vadd.f32 %v1820, %v1884
        %v1886 = vpop.f32.mrf.mxu0
        %v1887 = vpop.f32.mrf.mxu0
        %v1888 = vadd.f32 %v1823, %v1887
        %v1889 = vpop.f32.mrf.mxu0
        %1890 = vmatprep.mubr.bf16.mxu0 0
        %1891 = vmatmul.mubr.bf16.gmra.mxu0 %v1442
        %v1892 = vpop.f32.mrf.mxu0
        %v1893 = vadd.f32 %v1828, %v1892
        %v1894 = vpop.f32.mrf.mxu0
        %v1895 = vpop.f32.mrf.mxu0
        %v1896 = vadd.f32 %v1831, %v1895
        %v1897 = vpop.f32.mrf.mxu0
        %1898 = vdwg.mxu0
        %v1899 = vmax.f32 %v1869, %v1877
        %v1900 = vmax.f32 %v1872, %v1880
        %v1901 = vmax.f32 %v1885, %v1893
        %v1902 = vmax.f32 %v1888, %v1896
        %v1903 = vmax.f32 %v1899, %v1901
        %v1904 = vmax.f32 %v1900, %v1902
        %v1905 = vld [vmem:[%s2] sm:$0x1]
        %v1907 = vlaneseq
        %v1908 = vshrl.u32 %v1907, 7
        %v1909 = vsub.s32 0, %v1908
        %v1910 = vrot.slane %v1905, %v1909
        %v1912 = vadd.f32 %v1903, %v1910
        %v1913 = vadd.f32 %v1904, %v1910
        %v1914 = vmax.f32 %v1912, 0.0
        %v1915 = vmax.f32 %v1913, 0.0
        %v1916 = vpack.c.bf16 %v1915, %v1914
        %v1918 = vunpack.c.l.b16 %v1916
        %v1919 = vunpack.c.h.b16 %v1916
        %v1920 = vpack.c.b16 %v1918, %v1918
        %v1921 = vpack.c.b16 %v1919, %v1919
        %1924 = vst [vmem:[%s312] sm:$0xf] %v1920
        %1925 = vst [vmem:[%s312 + $0x4] sm:$0xf] %v1921
        %s1926 = smul.u32 2, %s14
        %p1927 = scmp.lt.s32.totalorder %s1926, 7
        %s1928 = scalar_select %p1927, %s1926, 7
        %s1929 = smul.addr %s1928, 4
        %s1930 = scalar_lea.vmem %s3, %s1929
        // Predicated region
        $region59: #{convnet_forward.4} parent=53 // pred_check
          %p1931 = pneg %p100
        $region60: #{convnet_forward.4} parent=53 // pred_check_branch
          %1933 = sbr.rel (%p1931) target = $region62
        $region61: #{convnet_forward.4} parent=53 // pred_region
          %s1934 = smul.u32 2, %s14
        $region62: #{convnet_forward.4} parent=53 // pred_fallthru
          _
      $region54: #{convnet_forward.4} parent=5 // pred_fallthru
        _
      %p1935 = scmp.le.s32.totalorder 2, %s9
      // Predicated region
      $region63: #{convnet_forward.4} parent=5 // pred_check
        %p1936 = pneg %p1935
      $region64: #{convnet_forward.4} parent=5 // pred_check_branch
        %1938 = sbr.rel (%p1936) target = $region66
      $region65: #{convnet_forward.4} parent=5 // pred_region
        %s1939 = ssub.s32 %s9, 2
        // Predicated region
        $region67: #{convnet_forward.4} parent=65 // pred_check
          %p1940 = pneg %p106
        $region68: #{convnet_forward.4} parent=65 // pred_check_branch
          %1942 = sbr.rel (%p1940) target = $region70
        $region69: #{convnet_forward.4} parent=65 // pred_region
          %s1943 = smul.u32 2, %s15
          %p1944 = scmp.lt.s32.totalorder %s1943, 7
          %s1945 = scalar_select %p1944, %s1943, 7
          %s1946 = smul.addr %s1945, 4
          %s1947 = scalar_lea.vmem %s3, %s1946
        $region70: #{convnet_forward.4} parent=65 // pred_fallthru
          _
      $region66: #{convnet_forward.4} parent=5 // pred_fallthru
        _
    $region6: #{convnet_forward.4} parent=1 // loop_footer
      %s13 = sadd.s32 1, %s9
    $region7: #{convnet_forward.4} parent=1 // loop_footer_branch
      %8 = sbr.rel target = $region3
    $region8: #{convnet_forward.4} parent=1 // loop_exit
      _

// kernel: convnet_forward.5
$region0: #{convnet_forward.5}
  #allocation0 [shape = 'u32[]', space=smem, size = 0x4, offset = 0x4, fixed_abs, tag = 'smem constant byte address 0x4 - core index']
  #allocation1 [shape = 'u32[144,128]{1,0:T(1,128)}', space=vmem, size = 0x12000, scoped, tag = 'internal scratch']
  %s0 = inlined_call_operand.vmem [shape: bf16[2,3136], index: 0, kind: input, shape index: {}]
  %s1 = inlined_call_operand.vmem [shape: bf16[3136,1024], index: 1, kind: input, shape index: {}]
  %s2 = inlined_call_operand.vmem [shape: f32[1,1024], index: 2, kind: input, shape index: {}]
  %s3 = inlined_call_operand.vmem [shape: bf16[1024,128], index: 3, kind: input, shape index: {}]
  %s4 = inlined_call_operand.vmem [shape: f32[1,128], index: 4, kind: input, shape index: {}]
  %s5 = inlined_call_operand.hbm [shape: f32[2,128], index: 5, kind: output, shape index: {}]
  %s6 = sld [smem:[#allocation0]]
  $region84: #{convnet_forward.5} parent=0
    _
  %s8 = ssub.s32 1, %s6
  %s9 = scalar_select 0, %s8, %s6
  $region1: #{convnet_forward.5} parent=0
    #allocation2 [shape = 'u8[6422528]{0}', space=vmem, size = 0x620000, scoped, tag = 'input window, operand 1']
    #allocation3 [shape = 'u8[1024]{0}', space=vmem, size = 0x400, scoped, tag = 'output window, operand 0, single buffered']
    #allocation4 [shape = 's32[2]{0}', space=sflag, size = 0x8, scoped, tag = 'scoped memory for convnet_forward.5']
    %10 = vsyncpa [#allocation4], 0
    loop: start=0, step=1, limit=4
    $region2: #{convnet_forward.5} parent=1 // loop_pre_header
      _
    $region3: #{convnet_forward.5} parent=1 // loop_header
      %s12 = sphi 0, %s16
      %p13 = scmp.ge.s32.totalorder %s12, 4
      %s20 = sphi 0, %s20
      %s22 = sphi 0, %s20
      %s23 = sphi 0, %s22
      %s37 = sphi 0, %s23
      %s43 = sphi 0, %s45
      %s46 = sphi 0, %s43
      %s47 = sphi 0, %s46
      %s63 = sphi 0, %s47
      %s69 = sphi 0, %s71
      %s72 = sphi 0, %s69
      %s73 = sphi 0, %s72
      %s89 = sphi 0, %s73
      %s95 = sphi 0, %s97
      %s98 = sphi 0, %s95
      %s99 = sphi 0, %s98
      %s115 = sphi 0, %s99
      %s119 = sphi 0, %s119
      %s121 = sphi 0, %s119
      %s122 = sphi 0, %s121
      %s136 = sphi 0, %s122
      %s140 = sphi 0, %s140
      %s142 = sphi 0, %s140
      %s143 = sphi 0, %s142
      %s157 = sphi 0, %s143
    $region4: #{convnet_forward.5} parent=1 // loop_header_branch
      %15 = sbr.rel (%p13) target = $region8
    $region5: #{convnet_forward.5} parent=1 // loop_body
      %s17 = ssub.s32 %s12, 1
      %s18 = ssub.s32 %s12, 2
      %s19 = sadd.s32 %s12, 1
      %s21 = sadd.s32 %s20, 1
      %p24 = scmp.eq.s32.totalorder %s12, 1
      %p25 = scmp.ne.s32.totalorder %s20, %s22
      %p26 = scmp.eq.s32.totalorder %s12, 0
      %p27 = por %p25, %p26
      %p28 = scmp.ne.s32.totalorder %s20, %s22
      %p29 = scmp.eq.s32.totalorder %s17, 1
      %p30 = por %p28, %p29
      %p31 = scmp.ne.s32.totalorder %s22, %s23
      %p32 = scmp.eq.s32.totalorder %s17, 0
      %p33 = por %p31, %p32
      %p34 = scmp.ne.s32.totalorder %s22, %s23
      %p35 = scmp.eq.s32.totalorder %s18, 1
      %p36 = por %p34, %p35
      %p38 = scmp.ne.s32.totalorder %s23, %s37
      %p39 = scmp.eq.s32.totalorder %s18, 0
      %p40 = por %p38, %p39
      %s41 = ssub.s32 %s12, %s19
      %p42 = scmp.eq.s32.totalorder %s41, 0
      %s44 = sadd.s32 %s43, 1
      %s45 = scalar_select %p42, %s43, %s44
      %p48 = pneg %p42
      %p49 = scmp.eq.s32.totalorder %s12, 1
      %p50 = por %p48, %p49
      %p51 = scmp.ne.s32.totalorder %s43, %s46
      %p52 = scmp.eq.s32.totalorder %s12, 0
      %p53 = por %p51, %p52
      %p54 = scmp.ne.s32.totalorder %s43, %s46
      %p55 = scmp.eq.s32.totalorder %s17, 1
      %p56 = por %p54, %p55
      %p57 = scmp.ne.s32.totalorder %s46, %s47
      %p58 = scmp.eq.s32.totalorder %s17, 0
      %p59 = por %p57, %p58
      %p60 = scmp.ne.s32.totalorder %s46, %s47
      %p61 = scmp.eq.s32.totalorder %s18, 1
      %p62 = por %p60, %p61
      %p64 = scmp.ne.s32.totalorder %s47, %s63
      %p65 = scmp.eq.s32.totalorder %s18, 0
      %p66 = por %p64, %p65
      %s67 = ssub.s32 %s12, %s19
      %p68 = scmp.eq.s32.totalorder %s67, 0
      %s70 = sadd.s32 %s69, 1
      %s71 = scalar_select %p68, %s69, %s70
      %p74 = pneg %p68
      %p75 = scmp.eq.s32.totalorder %s12, 1
      %p76 = por %p74, %p75
      %p77 = scmp.ne.s32.totalorder %s69, %s72
      %p78 = scmp.eq.s32.totalorder %s12, 0
      %p79 = por %p77, %p78
      %p80 = scmp.ne.s32.totalorder %s69, %s72
      %p81 = scmp.eq.s32.totalorder %s17, 1
      %p82 = por %p80, %p81
      %p83 = scmp.ne.s32.totalorder %s72, %s73
      %p84 = scmp.eq.s32.totalorder %s17, 0
      %p85 = por %p83, %p84
      %p86 = scmp.ne.s32.totalorder %s72, %s73
      %p87 = scmp.eq.s32.totalorder %s18, 1
      %p88 = por %p86, %p87
      %p90 = scmp.ne.s32.totalorder %s73, %s89
      %p91 = scmp.eq.s32.totalorder %s18, 0
      %p92 = por %p90, %p91
      %s93 = ssub.s32 %s12, %s19
      %p94 = scmp.eq.s32.totalorder %s93, 0
      %s96 = sadd.s32 %s95, 1
      %s97 = scalar_select %p94, %s95, %s96
      %p100 = pneg %p94
      %p101 = scmp.eq.s32.totalorder %s12, 1
      %p102 = por %p100, %p101
      %p103 = scmp.ne.s32.totalorder %s95, %s98
      %p104 = scmp.eq.s32.totalorder %s12, 0
      %p105 = por %p103, %p104
      %p106 = scmp.ne.s32.totalorder %s95, %s98
      %p107 = scmp.eq.s32.totalorder %s17, 1
      %p108 = por %p106, %p107
      %p109 = scmp.ne.s32.totalorder %s98, %s99
      %p110 = scmp.eq.s32.totalorder %s17, 0
      %p111 = por %p109, %p110
      %p112 = scmp.ne.s32.totalorder %s98, %s99
      %p113 = scmp.eq.s32.totalorder %s18, 1
      %p114 = por %p112, %p113
      %p116 = scmp.ne.s32.totalorder %s99, %s115
      %p117 = scmp.eq.s32.totalorder %s18, 0
      %p118 = por %p116, %p117
      %s120 = sadd.s32 %s119, 1
      %p123 = scmp.eq.s32.totalorder %s12, 1
      %p124 = scmp.ne.s32.totalorder %s119, %s121
      %p125 = scmp.eq.s32.totalorder %s12, 0
      %p126 = por %p124, %p125
      %p127 = scmp.ne.s32.totalorder %s119, %s121
      %p128 = scmp.eq.s32.totalorder %s17, 1
      %p129 = por %p127, %p128
      %p130 = scmp.ne.s32.totalorder %s121, %s122
      %p131 = scmp.eq.s32.totalorder %s17, 0
      %p132 = por %p130, %p131
      %p133 = scmp.ne.s32.totalorder %s121, %s122
      %p134 = scmp.eq.s32.totalorder %s18, 1
      %p135 = por %p133, %p134
      %p137 = scmp.ne.s32.totalorder %s122, %s136
      %p138 = scmp.eq.s32.totalorder %s18, 0
      %p139 = por %p137, %p138
      %s141 = sadd.s32 %s140, 1
      %p144 = scmp.eq.s32.totalorder %s12, 1
      %p145 = scmp.ne.s32.totalorder %s140, %s142
      %p146 = scmp.eq.s32.totalorder %s12, 0
      %p147 = por %p145, %p146
      %p148 = scmp.ne.s32.totalorder %s140, %s142
      %p149 = scmp.eq.s32.totalorder %s17, 1
      %p150 = por %p148, %p149
      %p151 = scmp.ne.s32.totalorder %s142, %s143
      %p152 = scmp.eq.s32.totalorder %s17, 0
      %p153 = por %p151, %p152
      %p154 = scmp.ne.s32.totalorder %s142, %s143
      %p155 = scmp.eq.s32.totalorder %s18, 1
      %p156 = por %p154, %p155
      %p158 = scmp.ne.s32.totalorder %s143, %s157
      %p159 = scmp.eq.s32.totalorder %s18, 0
      %p160 = por %p158, %p159
      %p161 = scmp.le.s32.totalorder 1, %s12
      %p162 = scmp.lt.s32.totalorder %s12, 3
      %p163 = pnand %p161, %p162
      %p164 = pneg %p163
      // Predicated region
      $region9: #{convnet_forward.5} parent=5 // pred_check
        _
      $region10: #{convnet_forward.5} parent=5 // pred_check_branch
        %166 = sbr.rel (%p163) target = $region12
      $region11: #{convnet_forward.5} parent=5 // pred_region
        %s167 = ssub.s32 %s12, 1
        // Predicated region
        $region13: #{convnet_forward.5} parent=11 // pred_check
          %p168 = pneg %p33
        $region14: #{convnet_forward.5} parent=11 // pred_check_branch
          %170 = sbr.rel (%p168) target = $region16
        $region15: #{convnet_forward.5} parent=11 // pred_region
          _
        $region16: #{convnet_forward.5} parent=11 // pred_fallthru
          _
        // Predicated region
        $region17: #{convnet_forward.5} parent=11 // pred_check
          %p171 = pneg %p132
        $region18: #{convnet_forward.5} parent=11 // pred_check_branch
          %173 = sbr.rel (%p171) target = $region20
        $region19: #{convnet_forward.5} parent=11 // pred_region
          _
        $region20: #{convnet_forward.5} parent=11 // pred_fallthru
          _
      $region12: #{convnet_forward.5} parent=5 // pred_fallthru
        _
      %p174 = scmp.lt.s32.totalorder %s12, 2
      // Predicated region
      $region21: #{convnet_forward.5} parent=5 // pred_check
        %p175 = pneg %p174
      $region22: #{convnet_forward.5} parent=5 // pred_check_branch
        %177 = sbr.rel (%p175) target = $region24
      $region23: #{convnet_forward.5} parent=5 // pred_region
        // Predicated region
        $region25: #{convnet_forward.5} parent=23 // pred_check
          %p178 = pneg %p53
        $region26: #{convnet_forward.5} parent=23 // pred_check_branch
          %180 = sbr.rel (%p178) target = $region28
        $region27: #{convnet_forward.5} parent=23 // pred_region
          %s181 = sand.u32 %s43, 1
          %s182 = sand.u32 %s43, 1
          %s183 = smul.addr %s182, 6272
          %s184 = scalar_lea.vmem [#allocation2], %s183
          %s185 = smul.u32 4, %s12
          %s186 = smul.addr %s185, 4
          %s187 = scalar_lea.vmem %s1, %s186
          // Predicated region
          $region29: #{convnet_forward.5} parent=27 // pred_check
            _
          $region30: #{convnet_forward.5} parent=27 // pred_check_branch
            %189 = sbr.rel (0) target = $region32
          $region31: #{convnet_forward.5} parent=27 // pred_region
            // Predicated region
            $region33: #{convnet_forward.5} parent=31 // pred_check
              _
            $region34: #{convnet_forward.5} parent=31 // pred_check_branch
              %191 = sbr.rel (0) target = $region36
            $region35: #{convnet_forward.5} parent=31 // pred_region
              loop: start=0, step=1, limit=1
              $region37: #{convnet_forward.5} parent=35 // loop_pre_header
                _
              $region38: #{convnet_forward.5} parent=35 // loop_header
                %s193 = sphi 0, %s197
                %p194 = scmp.ge.s32.totalorder %s193, 1
                %s198 = sphi %s187, %s187
                %s199 = sphi %s184, %s184
              $region39: #{convnet_forward.5} parent=35 // loop_header_branch
                %196 = sbr.rel (%p194) target = $region43
              $region40: #{convnet_forward.5} parent=35 // loop_body
                %v200 = vld [vmem:[%s198] sm:$0xff]
                %201 = vst [vmem:[%s199] sm:$0xff] %v200
                %v202 = vld [vmem:[%s198 + $0x8] sm:$0xff]
                %203 = vst [vmem:[%s199 + $0x8] sm:$0xff] %v202
                %v204 = vld [vmem:[%s198 + $0x20] sm:$0xff]
                %205 = vst [vmem:[%s199 + $0x10] sm:$0xff] %v204
                %v206 = vld [vmem:[%s198 + $0x28] sm:$0xff]
                %207 = vst [vmem:[%s199 + $0x18] sm:$0xff] %v206
                %v208 = vld [vmem:[%s198 + $0x40] sm:$0xff]
                %209 = vst [vmem:[%s199 + $0x20] sm:$0xff] %v208
                %v210 = vld [vmem:[%s198 + $0x48] sm:$0xff]
                %211 = vst [vmem:[%s199 + $0x28] sm:$0xff] %v210
                %v212 = vld [vmem:[%s198 + $0x60] sm:$0xff]
                %213 = vst [vmem:[%s199 + $0x30] sm:$0xff] %v212
                %v214 = vld [vmem:[%s198 + $0x68] sm:$0xff]
                %215 = vst [vmem:[%s199 + $0x38] sm:$0xff] %v214
                %v216 = vld [vmem:[%s198 + $0x80] sm:$0xff]
                %217 = vst [vmem:[%s199 + $0x40] sm:$0xff] %v216
                %v218 = vld [vmem:[%s198 + $0x88] sm:$0xff]
                %219 = vst [vmem:[%s199 + $0x48] sm:$0xff] %v218
                %v220 = vld [vmem:[%s198 + $0xa0] sm:$0xff]
                %221 = vst [vmem:[%s199 + $0x50] sm:$0xff] %v220
                %v222 = vld [vmem:[%s198 + $0xa8] sm:$0xff]
                %223 = vst [vmem:[%s199 + $0x58] sm:$0xff] %v222
                %v224 = vld [vmem:[%s198 + $0xc0] sm:$0xff]
                %225 = vst [vmem:[%s199 + $0x60] sm:$0xff] %v224
                %v226 = vld [vmem:[%s198 + $0xc8] sm:$0xff]
                %227 = vst [vmem:[%s199 + $0x68] sm:$0xff] %v226
                %v228 = vld [vmem:[%s198 + $0xe0] sm:$0xff]
                %229 = vst [vmem:[%s199 + $0x70] sm:$0xff] %v228
                %v230 = vld [vmem:[%s198 + $0xe8] sm:$0xff]
                %231 = vst [vmem:[%s199 + $0x78] sm:$0xff] %v230
                %v232 = vld [vmem:[%s198 + $0x100] sm:$0xff]
                %233 = vst [vmem:[%s199 + $0x80] sm:$0xff] %v232
                %v234 = vld [vmem:[%s198 + $0x108] sm:$0xff]
                %235 = vst [vmem:[%s199 + $0x88] sm:$0xff] %v234
                %v236 = vld [vmem:[%s198 + $0x120] sm:$0xff]
                %237 = vst [vmem:[%s199 + $0x90] sm:$0xff] %v236
                %v238 = vld [vmem:[%s198 + $0x128] sm:$0xff]
                %239 = vst [vmem:[%s199 + $0x98] sm:$0xff] %v238
                %v240 = vld [vmem:[%s198 + $0x140] sm:$0xff]
                %241 = vst [vmem:[%s199 + $0xa0] sm:$0xff] %v240
                %v242 = vld [vmem:[%s198 + $0x148] sm:$0xff]
                %243 = vst [vmem:[%s199 + $0xa8] sm:$0xff] %v242
                %v244 = vld [vmem:[%s198 + $0x160] sm:$0xff]
                %245 = vst [vmem:[%s199 + $0xb0] sm:$0xff] %v244
                %v246 = vld [vmem:[%s198 + $0x168] sm:$0xff]
                %247 = vst [vmem:[%s199 + $0xb8] sm:$0xff] %v246
                %v248 = vld [vmem:[%s198 + $0x180] sm:$0xff]
                %249 = vst [vmem:[%s199 + $0xc0] sm:$0xff] %v248
                %v250 = vld [vmem:[%s198 + $0x188] sm:$0xff]
                %251 = vst [vmem:[%s199 + $0xc8] sm:$0xff] %v250
                %v252 = vld [vmem:[%s198 + $0x1a0] sm:$0xff]
                %253 = vst [vmem:[%s199 + $0xd0] sm:$0xff] %v252
                %v254 = vld [vmem:[%s198 + $0x1a8] sm:$0xff]
                %255 = vst [vmem:[%s199 + $0xd8] sm:$0xff] %v254
                %v256 = vld [vmem:[%s198 + $0x1c0] sm:$0xff]
                %257 = vst [vmem:[%s199 + $0xe0] sm:$0xff] %v256
                %v258 = vld [vmem:[%s198 + $0x1c8] sm:$0xff]
                %259 = vst [vmem:[%s199 + $0xe8] sm:$0xff] %v258
                %v260 = vld [vmem:[%s198 + $0x1e0] sm:$0xff]
                %261 = vst [vmem:[%s199 + $0xf0] sm:$0xff] %v260
                %v262 = vld [vmem:[%s198 + $0x1e8] sm:$0xff]
                %263 = vst [vmem:[%s199 + $0xf8] sm:$0xff] %v262
                %v264 = vld [vmem:[%s198 + $0x200] sm:$0xff]
                %265 = vst [vmem:[%s199 + $0x100] sm:$0xff] %v264
                %v266 = vld [vmem:[%s198 + $0x208] sm:$0xff]
                %267 = vst [vmem:[%s199 + $0x108] sm:$0xff] %v266
                %v268 = vld [vmem:[%s198 + $0x220] sm:$0xff]
                %269 = vst [vmem:[%s199 + $0x110] sm:$0xff] %v268
                %v270 = vld [vmem:[%s198 + $0x228] sm:$0xff]
                %271 = vst [vmem:[%s199 + $0x118] sm:$0xff] %v270
                %v272 = vld [vmem:[%s198 + $0x240] sm:$0xff]
                %273 = vst [vmem:[%s199 + $0x120] sm:$0xff] %v272
                %v274 = vld [vmem:[%s198 + $0x248] sm:$0xff]
                %275 = vst [vmem:[%s199 + $0x128] sm:$0xff] %v274
                %v276 = vld [vmem:[%s198 + $0x260] sm:$0xff]
                %277 = vst [vmem:[%s199 + $0x130] sm:$0xff] %v276
                %v278 = vld [vmem:[%s198 + $0x268] sm:$0xff]
                %279 = vst [vmem:[%s199 + $0x138] sm:$0xff] %v278
                %v280 = vld [vmem:[%s198 + $0x280] sm:$0xff]
                %281 = vst [vmem:[%s199 + $0x140] sm:$0xff] %v280
                %v282 = vld [vmem:[%s198 + $0x288] sm:$0xff]
                %283 = vst [vmem:[%s199 + $0x148] sm:$0xff] %v282
                %v284 = vld [vmem:[%s198 + $0x2a0] sm:$0xff]
                %285 = vst [vmem:[%s199 + $0x150] sm:$0xff] %v284
                %v286 = vld [vmem:[%s198 + $0x2a8] sm:$0xff]
                %287 = vst [vmem:[%s199 + $0x158] sm:$0xff] %v286
                %v288 = vld [vmem:[%s198 + $0x2c0] sm:$0xff]
                %289 = vst [vmem:[%s199 + $0x160] sm:$0xff] %v288
                %v290 = vld [vmem:[%s198 + $0x2c8] sm:$0xff]
                %291 = vst [vmem:[%s199 + $0x168] sm:$0xff] %v290
                %v292 = vld [vmem:[%s198 + $0x2e0] sm:$0xff]
                %293 = vst [vmem:[%s199 + $0x170] sm:$0xff] %v292
                %v294 = vld [vmem:[%s198 + $0x2e8] sm:$0xff]
                %295 = vst [vmem:[%s199 + $0x178] sm:$0xff] %v294
                %v296 = vld [vmem:[%s198 + $0x300] sm:$0xff]
                %297 = vst [vmem:[%s199 + $0x180] sm:$0xff] %v296
                %v298 = vld [vmem:[%s198 + $0x308] sm:$0xff]
                %299 = vst [vmem:[%s199 + $0x188] sm:$0xff] %v298
                %v300 = vld [vmem:[%s198 + $0x320] sm:$0xff]
                %301 = vst [vmem:[%s199 + $0x190] sm:$0xff] %v300
                %v302 = vld [vmem:[%s198 + $0x328] sm:$0xff]
                %303 = vst [vmem:[%s199 + $0x198] sm:$0xff] %v302
                %v304 = vld [vmem:[%s198 + $0x340] sm:$0xff]
                %305 = vst [vmem:[%s199 + $0x1a0] sm:$0xff] %v304
                %v306 = vld [vmem:[%s198 + $0x348] sm:$0xff]
                %307 = vst [vmem:[%s199 + $0x1a8] sm:$0xff] %v306
                %v308 = vld [vmem:[%s198 + $0x360] sm:$0xff]
                %309 = vst [vmem:[%s199 + $0x1b0] sm:$0xff] %v308
                %v310 = vld [vmem:[%s198 + $0x368] sm:$0xff]
                %311 = vst [vmem:[%s199 + $0x1b8] sm:$0xff] %v310
                %v312 = vld [vmem:[%s198 + $0x380] sm:$0xff]
                %313 = vst [vmem:[%s199 + $0x1c0] sm:$0xff] %v312
                %v314 = vld [vmem:[%s198 + $0x388] sm:$0xff]
                %315 = vst [vmem:[%s199 + $0x1c8] sm:$0xff] %v314
                %v316 = vld [vmem:[%s198 + $0x3a0] sm:$0xff]
                %317 = vst [vmem:[%s199 + $0x1d0] sm:$0xff] %v316
                %v318 = vld [vmem:[%s198 + $0x3a8] sm:$0xff]
                %319 = vst [vmem:[%s199 + $0x1d8] sm:$0xff] %v318
                %v320 = vld [vmem:[%s198 + $0x3c0] sm:$0xff]
                %321 = vst [vmem:[%s199 + $0x1e0] sm:$0xff] %v320
                %v322 = vld [vmem:[%s198 + $0x3c8] sm:$0xff]
                %323 = vst [vmem:[%s199 + $0x1e8] sm:$0xff] %v322
                %v324 = vld [vmem:[%s198 + $0x3e0] sm:$0xff]
                %325 = vst [vmem:[%s199 + $0x1f0] sm:$0xff] %v324
                %v326 = vld [vmem:[%s198 + $0x3e8] sm:$0xff]
                %327 = vst [vmem:[%s199 + $0x1f8] sm:$0xff] %v326
                %v328 = vld [vmem:[%s198 + $0x400] sm:$0xff]
                %329 = vst [vmem:[%s199 + $0x200] sm:$0xff] %v328
                %v330 = vld [vmem:[%s198 + $0x408] sm:$0xff]
                %331 = vst [vmem:[%s199 + $0x208] sm:$0xff] %v330
                %v332 = vld [vmem:[%s198 + $0x420] sm:$0xff]
                %333 = vst [vmem:[%s199 + $0x210] sm:$0xff] %v332
                %v334 = vld [vmem:[%s198 + $0x428] sm:$0xff]
                %335 = vst [vmem:[%s199 + $0x218] sm:$0xff] %v334
                %v336 = vld [vmem:[%s198 + $0x440] sm:$0xff]
                %337 = vst [vmem:[%s199 + $0x220] sm:$0xff] %v336
                %v338 = vld [vmem:[%s198 + $0x448] sm:$0xff]
                %339 = vst [vmem:[%s199 + $0x228] sm:$0xff] %v338
                %v340 = vld [vmem:[%s198 + $0x460] sm:$0xff]
                %341 = vst [vmem:[%s199 + $0x230] sm:$0xff] %v340
                %v342 = vld [vmem:[%s198 + $0x468] sm:$0xff]
                %343 = vst [vmem:[%s199 + $0x238] sm:$0xff] %v342
                %v344 = vld [vmem:[%s198 + $0x480] sm:$0xff]
                %345 = vst [vmem:[%s199 + $0x240] sm:$0xff] %v344
                %v346 = vld [vmem:[%s198 + $0x488] sm:$0xff]
                %347 = vst [vmem:[%s199 + $0x248] sm:$0xff] %v346
                %v348 = vld [vmem:[%s198 + $0x4a0] sm:$0xff]
                %349 = vst [vmem:[%s199 + $0x250] sm:$0xff] %v348
                %v350 = vld [vmem:[%s198 + $0x4a8] sm:$0xff]
                %351 = vst [vmem:[%s199 + $0x258] sm:$0xff] %v350
                %v352 = vld [vmem:[%s198 + $0x4c0] sm:$0xff]
                %353 = vst [vmem:[%s199 + $0x260] sm:$0xff] %v352
                %v354 = vld [vmem:[%s198 + $0x4c8] sm:$0xff]
                %355 = vst [vmem:[%s199 + $0x268] sm:$0xff] %v354
                %v356 = vld [vmem:[%s198 + $0x4e0] sm:$0xff]
                %357 = vst [vmem:[%s199 + $0x270] sm:$0xff] %v356
                %v358 = vld [vmem:[%s198 + $0x4e8] sm:$0xff]
                %359 = vst [vmem:[%s199 + $0x278] sm:$0xff] %v358
                %v360 = vld [vmem:[%s198 + $0x500] sm:$0xff]
                %361 = vst [vmem:[%s199 + $0x280] sm:$0xff] %v360
                %v362 = vld [vmem:[%s198 + $0x508] sm:$0xff]
                %363 = vst [vmem:[%s199 + $0x288] sm:$0xff] %v362
                %v364 = vld [vmem:[%s198 + $0x520] sm:$0xff]
                %365 = vst [vmem:[%s199 + $0x290] sm:$0xff] %v364
                %v366 = vld [vmem:[%s198 + $0x528] sm:$0xff]
                %367 = vst [vmem:[%s199 + $0x298] sm:$0xff] %v366
                %v368 = vld [vmem:[%s198 + $0x540] sm:$0xff]
                %369 = vst [vmem:[%s199 + $0x2a0] sm:$0xff] %v368
                %v370 = vld [vmem:[%s198 + $0x548] sm:$0xff]
                %371 = vst [vmem:[%s199 + $0x2a8] sm:$0xff] %v370
                %v372 = vld [vmem:[%s198 + $0x560] sm:$0xff]
                %373 = vst [vmem:[%s199 + $0x2b0] sm:$0xff] %v372
                %v374 = vld [vmem:[%s198 + $0x568] sm:$0xff]
                %375 = vst [vmem:[%s199 + $0x2b8] sm:$0xff] %v374
                %v376 = vld [vmem:[%s198 + $0x580] sm:$0xff]
                %377 = vst [vmem:[%s199 + $0x2c0] sm:$0xff] %v376
                %v378 = vld [vmem:[%s198 + $0x588] sm:$0xff]
                %379 = vst [vmem:[%s199 + $0x2c8] sm:$0xff] %v378
                %v380 = vld [vmem:[%s198 + $0x5a0] sm:$0xff]
                %381 = vst [vmem:[%s199 + $0x2d0] sm:$0xff] %v380
                %v382 = vld [vmem:[%s198 + $0x5a8] sm:$0xff]
                %383 = vst [vmem:[%s199 + $0x2d8] sm:$0xff] %v382
                %v384 = vld [vmem:[%s198 + $0x5c0] sm:$0xff]
                %385 = vst [vmem:[%s199 + $0x2e0] sm:$0xff] %v384
                %v386 = vld [vmem:[%s198 + $0x5c8] sm:$0xff]
                %387 = vst [vmem:[%s199 + $0x2e8] sm:$0xff] %v386
                %v388 = vld [vmem:[%s198 + $0x5e0] sm:$0xff]
                %389 = vst [vmem:[%s199 + $0x2f0] sm:$0xff] %v388
                %v390 = vld [vmem:[%s198 + $0x5e8] sm:$0xff]
                %391 = vst [vmem:[%s199 + $0x2f8] sm:$0xff] %v390
                %v392 = vld [vmem:[%s198 + $0x600] sm:$0xff]
                %393 = vst [vmem:[%s199 + $0x300] sm:$0xff] %v392
                %v394 = vld [vmem:[%s198 + $0x608] sm:$0xff]
                %395 = vst [vmem:[%s199 + $0x308] sm:$0xff] %v394
                %v396 = vld [vmem:[%s198 + $0x620] sm:$0xff]
                %397 = vst [vmem:[%s199 + $0x310] sm:$0xff] %v396
                %v398 = vld [vmem:[%s198 + $0x628] sm:$0xff]
                %399 = vst [vmem:[%s199 + $0x318] sm:$0xff] %v398
                %v400 = vld [vmem:[%s198 + $0x640] sm:$0xff]
                %401 = vst [vmem:[%s199 + $0x320] sm:$0xff] %v400
                %v402 = vld [vmem:[%s198 + $0x648] sm:$0xff]
                %403 = vst [vmem:[%s199 + $0x328] sm:$0xff] %v402
                %v404 = vld [vmem:[%s198 + $0x660] sm:$0xff]
                %405 = vst [vmem:[%s199 + $0x330] sm:$0xff] %v404
                %v406 = vld [vmem:[%s198 + $0x668] sm:$0xff]
                %407 = vst [vmem:[%s199 + $0x338] sm:$0xff] %v406
                %v408 = vld [vmem:[%s198 + $0x680] sm:$0xff]
                %409 = vst [vmem:[%s199 + $0x340] sm:$0xff] %v408
                %v410 = vld [vmem:[%s198 + $0x688] sm:$0xff]
                %411 = vst [vmem:[%s199 + $0x348] sm:$0xff] %v410
                %v412 = vld [vmem:[%s198 + $0x6a0] sm:$0xff]
                %413 = vst [vmem:[%s199 + $0x350] sm:$0xff] %v412
                %v414 = vld [vmem:[%s198 + $0x6a8] sm:$0xff]
                %415 = vst [vmem:[%s199 + $0x358] sm:$0xff] %v414
                %v416 = vld [vmem:[%s198 + $0x6c0] sm:$0xff]
                %417 = vst [vmem:[%s199 + $0x360] sm:$0xff] %v416
                %v418 = vld [vmem:[%s198 + $0x6c8] sm:$0xff]
                %419 = vst [vmem:[%s199 + $0x368] sm:$0xff] %v418
                %v420 = vld [vmem:[%s198 + $0x6e0] sm:$0xff]
                %421 = vst [vmem:[%s199 + $0x370] sm:$0xff] %v420
                %v422 = vld [vmem:[%s198 + $0x6e8] sm:$0xff]
                %423 = vst [vmem:[%s199 + $0x378] sm:$0xff] %v422
                %v424 = vld [vmem:[%s198 + $0x700] sm:$0xff]
                %425 = vst [vmem:[%s199 + $0x380] sm:$0xff] %v424
                %v426 = vld [vmem:[%s198 + $0x708] sm:$0xff]
                %427 = vst [vmem:[%s199 + $0x388] sm:$0xff] %v426
                %v428 = vld [vmem:[%s198 + $0x720] sm:$0xff]
                %429 = vst [vmem:[%s199 + $0x390] sm:$0xff] %v428
                %v430 = vld [vmem:[%s198 + $0x728] sm:$0xff]
                %431 = vst [vmem:[%s199 + $0x398] sm:$0xff] %v430
                %v432 = vld [vmem:[%s198 + $0x740] sm:$0xff]
                %433 = vst [vmem:[%s199 + $0x3a0] sm:$0xff] %v432
                %v434 = vld [vmem:[%s198 + $0x748] sm:$0xff]
                %435 = vst [vmem:[%s199 + $0x3a8] sm:$0xff] %v434
                %v436 = vld [vmem:[%s198 + $0x760] sm:$0xff]
                %437 = vst [vmem:[%s199 + $0x3b0] sm:$0xff] %v436
                %v438 = vld [vmem:[%s198 + $0x768] sm:$0xff]
                %439 = vst [vmem:[%s199 + $0x3b8] sm:$0xff] %v438
                %v440 = vld [vmem:[%s198 + $0x780] sm:$0xff]
                %441 = vst [vmem:[%s199 + $0x3c0] sm:$0xff] %v440
                %v442 = vld [vmem:[%s198 + $0x788] sm:$0xff]
                %443 = vst [vmem:[%s199 + $0x3c8] sm:$0xff] %v442
                %v444 = vld [vmem:[%s198 + $0x7a0] sm:$0xff]
                %445 = vst [vmem:[%s199 + $0x3d0] sm:$0xff] %v444
                %v446 = vld [vmem:[%s198 + $0x7a8] sm:$0xff]
                %447 = vst [vmem:[%s199 + $0x3d8] sm:$0xff] %v446
                %v448 = vld [vmem:[%s198 + $0x7c0] sm:$0xff]
                %449 = vst [vmem:[%s199 + $0x3e0] sm:$0xff] %v448
                %v450 = vld [vmem:[%s198 + $0x7c8] sm:$0xff]
                %451 = vst [vmem:[%s199 + $0x3e8] sm:$0xff] %v450
                %v452 = vld [vmem:[%s198 + $0x7e0] sm:$0xff]
                %453 = vst [vmem:[%s199 + $0x3f0] sm:$0xff] %v452
                %v454 = vld [vmem:[%s198 + $0x7e8] sm:$0xff]
                %455 = vst [vmem:[%s199 + $0x3f8] sm:$0xff] %v454
                %v456 = vld [vmem:[%s198 + $0x800] sm:$0xff]
                %457 = vst [vmem:[%s199 + $0x400] sm:$0xff] %v456
                %v458 = vld [vmem:[%s198 + $0x808] sm:$0xff]
                %459 = vst [vmem:[%s199 + $0x408] sm:$0xff] %v458
                %v460 = vld [vmem:[%s198 + $0x820] sm:$0xff]
                %461 = vst [vmem:[%s199 + $0x410] sm:$0xff] %v460
                %v462 = vld [vmem:[%s198 + $0x828] sm:$0xff]
                %463 = vst [vmem:[%s199 + $0x418] sm:$0xff] %v462
                %v464 = vld [vmem:[%s198 + $0x840] sm:$0xff]
                %465 = vst [vmem:[%s199 + $0x420] sm:$0xff] %v464
                %v466 = vld [vmem:[%s198 + $0x848] sm:$0xff]
                %467 = vst [vmem:[%s199 + $0x428] sm:$0xff] %v466
                %v468 = vld [vmem:[%s198 + $0x860] sm:$0xff]
                %469 = vst [vmem:[%s199 + $0x430] sm:$0xff] %v468
                %v470 = vld [vmem:[%s198 + $0x868] sm:$0xff]
                %471 = vst [vmem:[%s199 + $0x438] sm:$0xff] %v470
                %v472 = vld [vmem:[%s198 + $0x880] sm:$0xff]
                %473 = vst [vmem:[%s199 + $0x440] sm:$0xff] %v472
                %v474 = vld [vmem:[%s198 + $0x888] sm:$0xff]
                %475 = vst [vmem:[%s199 + $0x448] sm:$0xff] %v474
                %v476 = vld [vmem:[%s198 + $0x8a0] sm:$0xff]
                %477 = vst [vmem:[%s199 + $0x450] sm:$0xff] %v476
                %v478 = vld [vmem:[%s198 + $0x8a8] sm:$0xff]
                %479 = vst [vmem:[%s199 + $0x458] sm:$0xff] %v478
                %v480 = vld [vmem:[%s198 + $0x8c0] sm:$0xff]
                %481 = vst [vmem:[%s199 + $0x460] sm:$0xff] %v480
                %v482 = vld [vmem:[%s198 + $0x8c8] sm:$0xff]
                %483 = vst [vmem:[%s199 + $0x468] sm:$0xff] %v482
                %v484 = vld [vmem:[%s198 + $0x8e0] sm:$0xff]
                %485 = vst [vmem:[%s199 + $0x470] sm:$0xff] %v484
                %v486 = vld [vmem:[%s198 + $0x8e8] sm:$0xff]
                %487 = vst [vmem:[%s199 + $0x478] sm:$0xff] %v486
                %v488 = vld [vmem:[%s198 + $0x900] sm:$0xff]
                %489 = vst [vmem:[%s199 + $0x480] sm:$0xff] %v488
                %v490 = vld [vmem:[%s198 + $0x908] sm:$0xff]
                %491 = vst [vmem:[%s199 + $0x488] sm:$0xff] %v490
                %v492 = vld [vmem:[%s198 + $0x920] sm:$0xff]
                %493 = vst [vmem:[%s199 + $0x490] sm:$0xff] %v492
                %v494 = vld [vmem:[%s198 + $0x928] sm:$0xff]
                %495 = vst [vmem:[%s199 + $0x498] sm:$0xff] %v494
                %v496 = vld [vmem:[%s198 + $0x940] sm:$0xff]
                %497 = vst [vmem:[%s199 + $0x4a0] sm:$0xff] %v496
                %v498 = vld [vmem:[%s198 + $0x948] sm:$0xff]
                %499 = vst [vmem:[%s199 + $0x4a8] sm:$0xff] %v498
                %v500 = vld [vmem:[%s198 + $0x960] sm:$0xff]
                %501 = vst [vmem:[%s199 + $0x4b0] sm:$0xff] %v500
                %v502 = vld [vmem:[%s198 + $0x968] sm:$0xff]
                %503 = vst [vmem:[%s199 + $0x4b8] sm:$0xff] %v502
                %v504 = vld [vmem:[%s198 + $0x980] sm:$0xff]
                %505 = vst [vmem:[%s199 + $0x4c0] sm:$0xff] %v504
                %v506 = vld [vmem:[%s198 + $0x988] sm:$0xff]
                %507 = vst [vmem:[%s199 + $0x4c8] sm:$0xff] %v506
                %v508 = vld [vmem:[%s198 + $0x9a0] sm:$0xff]
                %509 = vst [vmem:[%s199 + $0x4d0] sm:$0xff] %v508
                %v510 = vld [vmem:[%s198 + $0x9a8] sm:$0xff]
                %511 = vst [vmem:[%s199 + $0x4d8] sm:$0xff] %v510
                %v512 = vld [vmem:[%s198 + $0x9c0] sm:$0xff]
                %513 = vst [vmem:[%s199 + $0x4e0] sm:$0xff] %v512
                %v514 = vld [vmem:[%s198 + $0x9c8] sm:$0xff]
                %515 = vst [vmem:[%s199 + $0x4e8] sm:$0xff] %v514
                %v516 = vld [vmem:[%s198 + $0x9e0] sm:$0xff]
                %517 = vst [vmem:[%s199 + $0x4f0] sm:$0xff] %v516
                %v518 = vld [vmem:[%s198 + $0x9e8] sm:$0xff]
                %519 = vst [vmem:[%s199 + $0x4f8] sm:$0xff] %v518
                %v520 = vld [vmem:[%s198 + $0xa00] sm:$0xff]
                %521 = vst [vmem:[%s199 + $0x500] sm:$0xff] %v520
                %v522 = vld [vmem:[%s198 + $0xa08] sm:$0xff]
                %523 = vst [vmem:[%s199 + $0x508] sm:$0xff] %v522
                %v524 = vld [vmem:[%s198 + $0xa20] sm:$0xff]
                %525 = vst [vmem:[%s199 + $0x510] sm:$0xff] %v524
                %v526 = vld [vmem:[%s198 + $0xa28] sm:$0xff]
                %527 = vst [vmem:[%s199 + $0x518] sm:$0xff] %v526
                %v528 = vld [vmem:[%s198 + $0xa40] sm:$0xff]
                %529 = vst [vmem:[%s199 + $0x520] sm:$0xff] %v528
                %v530 = vld [vmem:[%s198 + $0xa48] sm:$0xff]
                %531 = vst [vmem:[%s199 + $0x528] sm:$0xff] %v530
                %v532 = vld [vmem:[%s198 + $0xa60] sm:$0xff]
                %533 = vst [vmem:[%s199 + $0x530] sm:$0xff] %v532
                %v534 = vld [vmem:[%s198 + $0xa68] sm:$0xff]
                %535 = vst [vmem:[%s199 + $0x538] sm:$0xff] %v534
                %v536 = vld [vmem:[%s198 + $0xa80] sm:$0xff]
                %537 = vst [vmem:[%s199 + $0x540] sm:$0xff] %v536
                %v538 = vld [vmem:[%s198 + $0xa88] sm:$0xff]
                %539 = vst [vmem:[%s199 + $0x548] sm:$0xff] %v538
                %v540 = vld [vmem:[%s198 + $0xaa0] sm:$0xff]
                %541 = vst [vmem:[%s199 + $0x550] sm:$0xff] %v540
                %v542 = vld [vmem:[%s198 + $0xaa8] sm:$0xff]
                %543 = vst [vmem:[%s199 + $0x558] sm:$0xff] %v542
                %v544 = vld [vmem:[%s198 + $0xac0] sm:$0xff]
                %545 = vst [vmem:[%s199 + $0x560] sm:$0xff] %v544
                %v546 = vld [vmem:[%s198 + $0xac8] sm:$0xff]
                %547 = vst [vmem:[%s199 + $0x568] sm:$0xff] %v546
                %v548 = vld [vmem:[%s198 + $0xae0] sm:$0xff]
                %549 = vst [vmem:[%s199 + $0x570] sm:$0xff] %v548
                %v550 = vld [vmem:[%s198 + $0xae8] sm:$0xff]
                %551 = vst [vmem:[%s199 + $0x578] sm:$0xff] %v550
                %v552 = vld [vmem:[%s198 + $0xb00] sm:$0xff]
                %553 = vst [vmem:[%s199 + $0x580] sm:$0xff] %v552
                %v554 = vld [vmem:[%s198 + $0xb08] sm:$0xff]
                %555 = vst [vmem:[%s199 + $0x588] sm:$0xff] %v554
                %v556 = vld [vmem:[%s198 + $0xb20] sm:$0xff]
                %557 = vst [vmem:[%s199 + $0x590] sm:$0xff] %v556
                %v558 = vld [vmem:[%s198 + $0xb28] sm:$0xff]
                %559 = vst [vmem:[%s199 + $0x598] sm:$0xff] %v558
                %v560 = vld [vmem:[%s198 + $0xb40] sm:$0xff]
                %561 = vst [vmem:[%s199 + $0x5a0] sm:$0xff] %v560
                %v562 = vld [vmem:[%s198 + $0xb48] sm:$0xff]
                %563 = vst [vmem:[%s199 + $0x5a8] sm:$0xff] %v562
                %v564 = vld [vmem:[%s198 + $0xb60] sm:$0xff]
                %565 = vst [vmem:[%s199 + $0x5b0] sm:$0xff] %v564
                %v566 = vld [vmem:[%s198 + $0xb68] sm:$0xff]
                %567 = vst [vmem:[%s199 + $0x5b8] sm:$0xff] %v566
                %v568 = vld [vmem:[%s198 + $0xb80] sm:$0xff]
                %569 = vst [vmem:[%s199 + $0x5c0] sm:$0xff] %v568
                %v570 = vld [vmem:[%s198 + $0xb88] sm:$0xff]
                %571 = vst [vmem:[%s199 + $0x5c8] sm:$0xff] %v570
                %v572 = vld [vmem:[%s198 + $0xba0] sm:$0xff]
                %573 = vst [vmem:[%s199 + $0x5d0] sm:$0xff] %v572
                %v574 = vld [vmem:[%s198 + $0xba8] sm:$0xff]
                %575 = vst [vmem:[%s199 + $0x5d8] sm:$0xff] %v574
                %v576 = vld [vmem:[%s198 + $0xbc0] sm:$0xff]
                %577 = vst [vmem:[%s199 + $0x5e0] sm:$0xff] %v576
                %v578 = vld [vmem:[%s198 + $0xbc8] sm:$0xff]
                %579 = vst [vmem:[%s199 + $0x5e8] sm:$0xff] %v578
                %v580 = vld [vmem:[%s198 + $0xbe0] sm:$0xff]
                %581 = vst [vmem:[%s199 + $0x5f0] sm:$0xff] %v580
                %v582 = vld [vmem:[%s198 + $0xbe8] sm:$0xff]
                %583 = vst [vmem:[%s199 + $0x5f8] sm:$0xff] %v582
                %v584 = vld [vmem:[%s198 + $0xc00] sm:$0xff]
                %585 = vst [vmem:[%s199 + $0x600] sm:$0xff] %v584
                %v586 = vld [vmem:[%s198 + $0xc08] sm:$0xff]
                %587 = vst [vmem:[%s199 + $0x608] sm:$0xff] %v586
                %v588 = vld [vmem:[%s198 + $0xc20] sm:$0xff]
                %589 = vst [vmem:[%s199 + $0x610] sm:$0xff] %v588
                %v590 = vld [vmem:[%s198 + $0xc28] sm:$0xff]
                %591 = vst [vmem:[%s199 + $0x618] sm:$0xff] %v590
                %v592 = vld [vmem:[%s198 + $0xc40] sm:$0xff]
                %593 = vst [vmem:[%s199 + $0x620] sm:$0xff] %v592
                %v594 = vld [vmem:[%s198 + $0xc48] sm:$0xff]
                %595 = vst [vmem:[%s199 + $0x628] sm:$0xff] %v594
                %v596 = vld [vmem:[%s198 + $0xc60] sm:$0xff]
                %597 = vst [vmem:[%s199 + $0x630] sm:$0xff] %v596
                %v598 = vld [vmem:[%s198 + $0xc68] sm:$0xff]
                %599 = vst [vmem:[%s199 + $0x638] sm:$0xff] %v598
                %v600 = vld [vmem:[%s198 + $0xc80] sm:$0xff]
                %601 = vst [vmem:[%s199 + $0x640] sm:$0xff] %v600
                %v602 = vld [vmem:[%s198 + $0xc88] sm:$0xff]
                %603 = vst [vmem:[%s199 + $0x648] sm:$0xff] %v602
                %v604 = vld [vmem:[%s198 + $0xca0] sm:$0xff]
                %605 = vst [vmem:[%s199 + $0x650] sm:$0xff] %v604
                %v606 = vld [vmem:[%s198 + $0xca8] sm:$0xff]
                %607 = vst [vmem:[%s199 + $0x658] sm:$0xff] %v606
                %v608 = vld [vmem:[%s198 + $0xcc0] sm:$0xff]
                %609 = vst [vmem:[%s199 + $0x660] sm:$0xff] %v608
                %v610 = vld [vmem:[%s198 + $0xcc8] sm:$0xff]
                %611 = vst [vmem:[%s199 + $0x668] sm:$0xff] %v610
                %v612 = vld [vmem:[%s198 + $0xce0] sm:$0xff]
                %613 = vst [vmem:[%s199 + $0x670] sm:$0xff] %v612
                %v614 = vld [vmem:[%s198 + $0xce8] sm:$0xff]
                %615 = vst [vmem:[%s199 + $0x678] sm:$0xff] %v614
                %v616 = vld [vmem:[%s198 + $0xd00] sm:$0xff]
                %617 = vst [vmem:[%s199 + $0x680] sm:$0xff] %v616
                %v618 = vld [vmem:[%s198 + $0xd08] sm:$0xff]
                %619 = vst [vmem:[%s199 + $0x688] sm:$0xff] %v618
                %v620 = vld [vmem:[%s198 + $0xd20] sm:$0xff]
                %621 = vst [vmem:[%s199 + $0x690] sm:$0xff] %v620
                %v622 = vld [vmem:[%s198 + $0xd28] sm:$0xff]
                %623 = vst [vmem:[%s199 + $0x698] sm:$0xff] %v622
                %v624 = vld [vmem:[%s198 + $0xd40] sm:$0xff]
                %625 = vst [vmem:[%s199 + $0x6a0] sm:$0xff] %v624
                %v626 = vld [vmem:[%s198 + $0xd48] sm:$0xff]
                %627 = vst [vmem:[%s199 + $0x6a8] sm:$0xff] %v626
                %v628 = vld [vmem:[%s198 + $0xd60] sm:$0xff]
                %629 = vst [vmem:[%s199 + $0x6b0] sm:$0xff] %v628
                %v630 = vld [vmem:[%s198 + $0xd68] sm:$0xff]
                %631 = vst [vmem:[%s199 + $0x6b8] sm:$0xff] %v630
                %v632 = vld [vmem:[%s198 + $0xd80] sm:$0xff]
                %633 = vst [vmem:[%s199 + $0x6c0] sm:$0xff] %v632
                %v634 = vld [vmem:[%s198 + $0xd88] sm:$0xff]
                %635 = vst [vmem:[%s199 + $0x6c8] sm:$0xff] %v634
                %v636 = vld [vmem:[%s198 + $0xda0] sm:$0xff]
                %637 = vst [vmem:[%s199 + $0x6d0] sm:$0xff] %v636
                %v638 = vld [vmem:[%s198 + $0xda8] sm:$0xff]
                %639 = vst [vmem:[%s199 + $0x6d8] sm:$0xff] %v638
                %v640 = vld [vmem:[%s198 + $0xdc0] sm:$0xff]
                %641 = vst [vmem:[%s199 + $0x6e0] sm:$0xff] %v640
                %v642 = vld [vmem:[%s198 + $0xdc8] sm:$0xff]
                %643 = vst [vmem:[%s199 + $0x6e8] sm:$0xff] %v642
                %v644 = vld [vmem:[%s198 + $0xde0] sm:$0xff]
                %645 = vst [vmem:[%s199 + $0x6f0] sm:$0xff] %v644
                %v646 = vld [vmem:[%s198 + $0xde8] sm:$0xff]
                %647 = vst [vmem:[%s199 + $0x6f8] sm:$0xff] %v646
                %v648 = vld [vmem:[%s198 + $0xe00] sm:$0xff]
                %649 = vst [vmem:[%s199 + $0x700] sm:$0xff] %v648
                %v650 = vld [vmem:[%s198 + $0xe08] sm:$0xff]
                %651 = vst [vmem:[%s199 + $0x708] sm:$0xff] %v650
                %v652 = vld [vmem:[%s198 + $0xe20] sm:$0xff]
                %653 = vst [vmem:[%s199 + $0x710] sm:$0xff] %v652
                %v654 = vld [vmem:[%s198 + $0xe28] sm:$0xff]
                %655 = vst [vmem:[%s199 + $0x718] sm:$0xff] %v654
                %v656 = vld [vmem:[%s198 + $0xe40] sm:$0xff]
                %657 = vst [vmem:[%s199 + $0x720] sm:$0xff] %v656
                %v658 = vld [vmem:[%s198 + $0xe48] sm:$0xff]
                %659 = vst [vmem:[%s199 + $0x728] sm:$0xff] %v658
                %v660 = vld [vmem:[%s198 + $0xe60] sm:$0xff]
                %661 = vst [vmem:[%s199 + $0x730] sm:$0xff] %v660
                %v662 = vld [vmem:[%s198 + $0xe68] sm:$0xff]
                %663 = vst [vmem:[%s199 + $0x738] sm:$0xff] %v662
                %v664 = vld [vmem:[%s198 + $0xe80] sm:$0xff]
                %665 = vst [vmem:[%s199 + $0x740] sm:$0xff] %v664
                %v666 = vld [vmem:[%s198 + $0xe88] sm:$0xff]
                %667 = vst [vmem:[%s199 + $0x748] sm:$0xff] %v666
                %v668 = vld [vmem:[%s198 + $0xea0] sm:$0xff]
                %669 = vst [vmem:[%s199 + $0x750] sm:$0xff] %v668
                %v670 = vld [vmem:[%s198 + $0xea8] sm:$0xff]
                %671 = vst [vmem:[%s199 + $0x758] sm:$0xff] %v670
                %v672 = vld [vmem:[%s198 + $0xec0] sm:$0xff]
                %673 = vst [vmem:[%s199 + $0x760] sm:$0xff] %v672
                %v674 = vld [vmem:[%s198 + $0xec8] sm:$0xff]
                %675 = vst [vmem:[%s199 + $0x768] sm:$0xff] %v674
                %v676 = vld [vmem:[%s198 + $0xee0] sm:$0xff]
                %677 = vst [vmem:[%s199 + $0x770] sm:$0xff] %v676
                %v678 = vld [vmem:[%s198 + $0xee8] sm:$0xff]
                %679 = vst [vmem:[%s199 + $0x778] sm:$0xff] %v678
                %v680 = vld [vmem:[%s198 + $0xf00] sm:$0xff]
                %681 = vst [vmem:[%s199 + $0x780] sm:$0xff] %v680
                %v682 = vld [vmem:[%s198 + $0xf08] sm:$0xff]
                %683 = vst [vmem:[%s199 + $0x788] sm:$0xff] %v682
                %v684 = vld [vmem:[%s198 + $0xf20] sm:$0xff]
                %685 = vst [vmem:[%s199 + $0x790] sm:$0xff] %v684
                %v686 = vld [vmem:[%s198 + $0xf28] sm:$0xff]
                %687 = vst [vmem:[%s199 + $0x798] sm:$0xff] %v686
                %v688 = vld [vmem:[%s198 + $0xf40] sm:$0xff]
                %689 = vst [vmem:[%s199 + $0x7a0] sm:$0xff] %v688
                %v690 = vld [vmem:[%s198 + $0xf48] sm:$0xff]
                %691 = vst [vmem:[%s199 + $0x7a8] sm:$0xff] %v690
                %v692 = vld [vmem:[%s198 + $0xf60] sm:$0xff]
                %693 = vst [vmem:[%s199 + $0x7b0] sm:$0xff] %v692
                %v694 = vld [vmem:[%s198 + $0xf68] sm:$0xff]
                %695 = vst [vmem:[%s199 + $0x7b8] sm:$0xff] %v694
                %v696 = vld [vmem:[%s198 + $0xf80] sm:$0xff]
                %697 = vst [vmem:[%s199 + $0x7c0] sm:$0xff] %v696
                %v698 = vld [vmem:[%s198 + $0xf88] sm:$0xff]
                %699 = vst [vmem:[%s199 + $0x7c8] sm:$0xff] %v698
                %v700 = vld [vmem:[%s198 + $0xfa0] sm:$0xff]
                %701 = vst [vmem:[%s199 + $0x7d0] sm:$0xff] %v700
                %v702 = vld [vmem:[%s198 + $0xfa8] sm:$0xff]
                %703 = vst [vmem:[%s199 + $0x7d8] sm:$0xff] %v702
                %v704 = vld [vmem:[%s198 + $0xfc0] sm:$0xff]
                %705 = vst [vmem:[%s199 + $0x7e0] sm:$0xff] %v704
                %v706 = vld [vmem:[%s198 + $0xfc8] sm:$0xff]
                %707 = vst [vmem:[%s199 + $0x7e8] sm:$0xff] %v706
                %v708 = vld [vmem:[%s198 + $0xfe0] sm:$0xff]
                %709 = vst [vmem:[%s199 + $0x7f0] sm:$0xff] %v708
                %v710 = vld [vmem:[%s198 + $0xfe8] sm:$0xff]
                %711 = vst [vmem:[%s199 + $0x7f8] sm:$0xff] %v710
                %v712 = vld [vmem:[%s198 + $0x1000] sm:$0xff]
                %713 = vst [vmem:[%s199 + $0x800] sm:$0xff] %v712
                %v714 = vld [vmem:[%s198 + $0x1008] sm:$0xff]
                %715 = vst [vmem:[%s199 + $0x808] sm:$0xff] %v714
                %v716 = vld [vmem:[%s198 + $0x1020] sm:$0xff]
                %717 = vst [vmem:[%s199 + $0x810] sm:$0xff] %v716
                %v718 = vld [vmem:[%s198 + $0x1028] sm:$0xff]
                %719 = vst [vmem:[%s199 + $0x818] sm:$0xff] %v718
                %v720 = vld [vmem:[%s198 + $0x1040] sm:$0xff]
                %721 = vst [vmem:[%s199 + $0x820] sm:$0xff] %v720
                %v722 = vld [vmem:[%s198 + $0x1048] sm:$0xff]
                %723 = vst [vmem:[%s199 + $0x828] sm:$0xff] %v722
                %v724 = vld [vmem:[%s198 + $0x1060] sm:$0xff]
                %725 = vst [vmem:[%s199 + $0x830] sm:$0xff] %v724
                %v726 = vld [vmem:[%s198 + $0x1068] sm:$0xff]
                %727 = vst [vmem:[%s199 + $0x838] sm:$0xff] %v726
                %v728 = vld [vmem:[%s198 + $0x1080] sm:$0xff]
                %729 = vst [vmem:[%s199 + $0x840] sm:$0xff] %v728
                %v730 = vld [vmem:[%s198 + $0x1088] sm:$0xff]
                %731 = vst [vmem:[%s199 + $0x848] sm:$0xff] %v730
                %v732 = vld [vmem:[%s198 + $0x10a0] sm:$0xff]
                %733 = vst [vmem:[%s199 + $0x850] sm:$0xff] %v732
                %v734 = vld [vmem:[%s198 + $0x10a8] sm:$0xff]
                %735 = vst [vmem:[%s199 + $0x858] sm:$0xff] %v734
                %v736 = vld [vmem:[%s198 + $0x10c0] sm:$0xff]
                %737 = vst [vmem:[%s199 + $0x860] sm:$0xff] %v736
                %v738 = vld [vmem:[%s198 + $0x10c8] sm:$0xff]
                %739 = vst [vmem:[%s199 + $0x868] sm:$0xff] %v738
                %v740 = vld [vmem:[%s198 + $0x10e0] sm:$0xff]
                %741 = vst [vmem:[%s199 + $0x870] sm:$0xff] %v740
                %v742 = vld [vmem:[%s198 + $0x10e8] sm:$0xff]
                %743 = vst [vmem:[%s199 + $0x878] sm:$0xff] %v742
                %v744 = vld [vmem:[%s198 + $0x1100] sm:$0xff]
                %745 = vst [vmem:[%s199 + $0x880] sm:$0xff] %v744
                %v746 = vld [vmem:[%s198 + $0x1108] sm:$0xff]
                %747 = vst [vmem:[%s199 + $0x888] sm:$0xff] %v746
                %v748 = vld [vmem:[%s198 + $0x1120] sm:$0xff]
                %749 = vst [vmem:[%s199 + $0x890] sm:$0xff] %v748
                %v750 = vld [vmem:[%s198 + $0x1128] sm:$0xff]
                %751 = vst [vmem:[%s199 + $0x898] sm:$0xff] %v750
                %v752 = vld [vmem:[%s198 + $0x1140] sm:$0xff]
                %753 = vst [vmem:[%s199 + $0x8a0] sm:$0xff] %v752
                %v754 = vld [vmem:[%s198 + $0x1148] sm:$0xff]
                %755 = vst [vmem:[%s199 + $0x8a8] sm:$0xff] %v754
                %v756 = vld [vmem:[%s198 + $0x1160] sm:$0xff]
                %757 = vst [vmem:[%s199 + $0x8b0] sm:$0xff] %v756
                %v758 = vld [vmem:[%s198 + $0x1168] sm:$0xff]
                %759 = vst [vmem:[%s199 + $0x8b8] sm:$0xff] %v758
                %v760 = vld [vmem:[%s198 + $0x1180] sm:$0xff]
                %761 = vst [vmem:[%s199 + $0x8c0] sm:$0xff] %v760
                %v762 = vld [vmem:[%s198 + $0x1188] sm:$0xff]
                %763 = vst [vmem:[%s199 + $0x8c8] sm:$0xff] %v762
                %v764 = vld [vmem:[%s198 + $0x11a0] sm:$0xff]
                %765 = vst [vmem:[%s199 + $0x8d0] sm:$0xff] %v764
                %v766 = vld [vmem:[%s198 + $0x11a8] sm:$0xff]
                %767 = vst [vmem:[%s199 + $0x8d8] sm:$0xff] %v766
                %v768 = vld [vmem:[%s198 + $0x11c0] sm:$0xff]
                %769 = vst [vmem:[%s199 + $0x8e0] sm:$0xff] %v768
                %v770 = vld [vmem:[%s198 + $0x11c8] sm:$0xff]
                %771 = vst [vmem:[%s199 + $0x8e8] sm:$0xff] %v770
                %v772 = vld [vmem:[%s198 + $0x11e0] sm:$0xff]
                %773 = vst [vmem:[%s199 + $0x8f0] sm:$0xff] %v772
                %v774 = vld [vmem:[%s198 + $0x11e8] sm:$0xff]
                %775 = vst [vmem:[%s199 + $0x8f8] sm:$0xff] %v774
                %v776 = vld [vmem:[%s198 + $0x1200] sm:$0xff]
                %777 = vst [vmem:[%s199 + $0x900] sm:$0xff] %v776
                %v778 = vld [vmem:[%s198 + $0x1208] sm:$0xff]
                %779 = vst [vmem:[%s199 + $0x908] sm:$0xff] %v778
                %v780 = vld [vmem:[%s198 + $0x1220] sm:$0xff]
                %781 = vst [vmem:[%s199 + $0x910] sm:$0xff] %v780
                %v782 = vld [vmem:[%s198 + $0x1228] sm:$0xff]
                %783 = vst [vmem:[%s199 + $0x918] sm:$0xff] %v782
                %v784 = vld [vmem:[%s198 + $0x1240] sm:$0xff]
                %785 = vst [vmem:[%s199 + $0x920] sm:$0xff] %v784
                %v786 = vld [vmem:[%s198 + $0x1248] sm:$0xff]
                %787 = vst [vmem:[%s199 + $0x928] sm:$0xff] %v786
                %v788 = vld [vmem:[%s198 + $0x1260] sm:$0xff]
                %789 = vst [vmem:[%s199 + $0x930] sm:$0xff] %v788
                %v790 = vld [vmem:[%s198 + $0x1268] sm:$0xff]
                %791 = vst [vmem:[%s199 + $0x938] sm:$0xff] %v790
                %v792 = vld [vmem:[%s198 + $0x1280] sm:$0xff]
                %793 = vst [vmem:[%s199 + $0x940] sm:$0xff] %v792
                %v794 = vld [vmem:[%s198 + $0x1288] sm:$0xff]
                %795 = vst [vmem:[%s199 + $0x948] sm:$0xff] %v794
                %v796 = vld [vmem:[%s198 + $0x12a0] sm:$0xff]
                %797 = vst [vmem:[%s199 + $0x950] sm:$0xff] %v796
                %v798 = vld [vmem:[%s198 + $0x12a8] sm:$0xff]
                %799 = vst [vmem:[%s199 + $0x958] sm:$0xff] %v798
                %v800 = vld [vmem:[%s198 + $0x12c0] sm:$0xff]
                %801 = vst [vmem:[%s199 + $0x960] sm:$0xff] %v800
                %v802 = vld [vmem:[%s198 + $0x12c8] sm:$0xff]
                %803 = vst [vmem:[%s199 + $0x968] sm:$0xff] %v802
                %v804 = vld [vmem:[%s198 + $0x12e0] sm:$0xff]
                %805 = vst [vmem:[%s199 + $0x970] sm:$0xff] %v804
                %v806 = vld [vmem:[%s198 + $0x12e8] sm:$0xff]
                %807 = vst [vmem:[%s199 + $0x978] sm:$0xff] %v806
                %v808 = vld [vmem:[%s198 + $0x1300] sm:$0xff]
                %809 = vst [vmem:[%s199 + $0x980] sm:$0xff] %v808
                %v810 = vld [vmem:[%s198 + $0x1308] sm:$0xff]
                %811 = vst [vmem:[%s199 + $0x988] sm:$0xff] %v810
                %v812 = vld [vmem:[%s198 + $0x1320] sm:$0xff]
                %813 = vst [vmem:[%s199 + $0x990] sm:$0xff] %v812
                %v814 = vld [vmem:[%s198 + $0x1328] sm:$0xff]
                %815 = vst [vmem:[%s199 + $0x998] sm:$0xff] %v814
                %v816 = vld [vmem:[%s198 + $0x1340] sm:$0xff]
                %817 = vst [vmem:[%s199 + $0x9a0] sm:$0xff] %v816
                %v818 = vld [vmem:[%s198 + $0x1348] sm:$0xff]
                %819 = vst [vmem:[%s199 + $0x9a8] sm:$0xff] %v818
                %v820 = vld [vmem:[%s198 + $0x1360] sm:$0xff]
                %821 = vst [vmem:[%s199 + $0x9b0] sm:$0xff] %v820
                %v822 = vld [vmem:[%s198 + $0x1368] sm:$0xff]
                %823 = vst [vmem:[%s199 + $0x9b8] sm:$0xff] %v822
                %v824 = vld [vmem:[%s198 + $0x1380] sm:$0xff]
                %825 = vst [vmem:[%s199 + $0x9c0] sm:$0xff] %v824
                %v826 = vld [vmem:[%s198 + $0x1388] sm:$0xff]
                %827 = vst [vmem:[%s199 + $0x9c8] sm:$0xff] %v826
                %v828 = vld [vmem:[%s198 + $0x13a0] sm:$0xff]
                %829 = vst [vmem:[%s199 + $0x9d0] sm:$0xff] %v828
                %v830 = vld [vmem:[%s198 + $0x13a8] sm:$0xff]
                %831 = vst [vmem:[%s199 + $0x9d8] sm:$0xff] %v830
                %v832 = vld [vmem:[%s198 + $0x13c0] sm:$0xff]
                %833 = vst [vmem:[%s199 + $0x9e0] sm:$0xff] %v832
                %v834 = vld [vmem:[%s198 + $0x13c8] sm:$0xff]
                %835 = vst [vmem:[%s199 + $0x9e8] sm:$0xff] %v834
                %v836 = vld [vmem:[%s198 + $0x13e0] sm:$0xff]
                %837 = vst [vmem:[%s199 + $0x9f0] sm:$0xff] %v836
                %v838 = vld [vmem:[%s198 + $0x13e8] sm:$0xff]
                %839 = vst [vmem:[%s199 + $0x9f8] sm:$0xff] %v838
                %v840 = vld [vmem:[%s198 + $0x1400] sm:$0xff]
                %841 = vst [vmem:[%s199 + $0xa00] sm:$0xff] %v840
                %v842 = vld [vmem:[%s198 + $0x1408] sm:$0xff]
                %843 = vst [vmem:[%s199 + $0xa08] sm:$0xff] %v842
                %v844 = vld [vmem:[%s198 + $0x1420] sm:$0xff]
                %845 = vst [vmem:[%s199 + $0xa10] sm:$0xff] %v844
                %v846 = vld [vmem:[%s198 + $0x1428] sm:$0xff]
                %847 = vst [vmem:[%s199 + $0xa18] sm:$0xff] %v846
                %v848 = vld [vmem:[%s198 + $0x1440] sm:$0xff]
                %849 = vst [vmem:[%s199 + $0xa20] sm:$0xff] %v848
                %v850 = vld [vmem:[%s198 + $0x1448] sm:$0xff]
                %851 = vst [vmem:[%s199 + $0xa28] sm:$0xff] %v850
                %v852 = vld [vmem:[%s198 + $0x1460] sm:$0xff]
                %853 = vst [vmem:[%s199 + $0xa30] sm:$0xff] %v852
                %v854 = vld [vmem:[%s198 + $0x1468] sm:$0xff]
                %855 = vst [vmem:[%s199 + $0xa38] sm:$0xff] %v854
                %v856 = vld [vmem:[%s198 + $0x1480] sm:$0xff]
                %857 = vst [vmem:[%s199 + $0xa40] sm:$0xff] %v856
                %v858 = vld [vmem:[%s198 + $0x1488] sm:$0xff]
                %859 = vst [vmem:[%s199 + $0xa48] sm:$0xff] %v858
                %v860 = vld [vmem:[%s198 + $0x14a0] sm:$0xff]
                %861 = vst [vmem:[%s199 + $0xa50] sm:$0xff] %v860
                %v862 = vld [vmem:[%s198 + $0x14a8] sm:$0xff]
                %863 = vst [vmem:[%s199 + $0xa58] sm:$0xff] %v862
                %v864 = vld [vmem:[%s198 + $0x14c0] sm:$0xff]
                %865 = vst [vmem:[%s199 + $0xa60] sm:$0xff] %v864
                %v866 = vld [vmem:[%s198 + $0x14c8] sm:$0xff]
                %867 = vst [vmem:[%s199 + $0xa68] sm:$0xff] %v866
                %v868 = vld [vmem:[%s198 + $0x14e0] sm:$0xff]
                %869 = vst [vmem:[%s199 + $0xa70] sm:$0xff] %v868
                %v870 = vld [vmem:[%s198 + $0x14e8] sm:$0xff]
                %871 = vst [vmem:[%s199 + $0xa78] sm:$0xff] %v870
                %v872 = vld [vmem:[%s198 + $0x1500] sm:$0xff]
                %873 = vst [vmem:[%s199 + $0xa80] sm:$0xff] %v872
                %v874 = vld [vmem:[%s198 + $0x1508] sm:$0xff]
                %875 = vst [vmem:[%s199 + $0xa88] sm:$0xff] %v874
                %v876 = vld [vmem:[%s198 + $0x1520] sm:$0xff]
                %877 = vst [vmem:[%s199 + $0xa90] sm:$0xff] %v876
                %v878 = vld [vmem:[%s198 + $0x1528] sm:$0xff]
                %879 = vst [vmem:[%s199 + $0xa98] sm:$0xff] %v878
                %v880 = vld [vmem:[%s198 + $0x1540] sm:$0xff]
                %881 = vst [vmem:[%s199 + $0xaa0] sm:$0xff] %v880
                %v882 = vld [vmem:[%s198 + $0x1548] sm:$0xff]
                %883 = vst [vmem:[%s199 + $0xaa8] sm:$0xff] %v882
                %v884 = vld [vmem:[%s198 + $0x1560] sm:$0xff]
                %885 = vst [vmem:[%s199 + $0xab0] sm:$0xff] %v884
                %v886 = vld [vmem:[%s198 + $0x1568] sm:$0xff]
                %887 = vst [vmem:[%s199 + $0xab8] sm:$0xff] %v886
                %v888 = vld [vmem:[%s198 + $0x1580] sm:$0xff]
                %889 = vst [vmem:[%s199 + $0xac0] sm:$0xff] %v888
                %v890 = vld [vmem:[%s198 + $0x1588] sm:$0xff]
                %891 = vst [vmem:[%s199 + $0xac8] sm:$0xff] %v890
                %v892 = vld [vmem:[%s198 + $0x15a0] sm:$0xff]
                %893 = vst [vmem:[%s199 + $0xad0] sm:$0xff] %v892
                %v894 = vld [vmem:[%s198 + $0x15a8] sm:$0xff]
                %895 = vst [vmem:[%s199 + $0xad8] sm:$0xff] %v894
                %v896 = vld [vmem:[%s198 + $0x15c0] sm:$0xff]
                %897 = vst [vmem:[%s199 + $0xae0] sm:$0xff] %v896
                %v898 = vld [vmem:[%s198 + $0x15c8] sm:$0xff]
                %899 = vst [vmem:[%s199 + $0xae8] sm:$0xff] %v898
                %v900 = vld [vmem:[%s198 + $0x15e0] sm:$0xff]
                %901 = vst [vmem:[%s199 + $0xaf0] sm:$0xff] %v900
                %v902 = vld [vmem:[%s198 + $0x15e8] sm:$0xff]
                %903 = vst [vmem:[%s199 + $0xaf8] sm:$0xff] %v902
                %v904 = vld [vmem:[%s198 + $0x1600] sm:$0xff]
                %905 = vst [vmem:[%s199 + $0xb00] sm:$0xff] %v904
                %v906 = vld [vmem:[%s198 + $0x1608] sm:$0xff]
                %907 = vst [vmem:[%s199 + $0xb08] sm:$0xff] %v906
                %v908 = vld [vmem:[%s198 + $0x1620] sm:$0xff]
                %909 = vst [vmem:[%s199 + $0xb10] sm:$0xff] %v908
                %v910 = vld [vmem:[%s198 + $0x1628] sm:$0xff]
                %911 = vst [vmem:[%s199 + $0xb18] sm:$0xff] %v910
                %v912 = vld [vmem:[%s198 + $0x1640] sm:$0xff]
                %913 = vst [vmem:[%s199 + $0xb20] sm:$0xff] %v912
                %v914 = vld [vmem:[%s198 + $0x1648] sm:$0xff]
                %915 = vst [vmem:[%s199 + $0xb28] sm:$0xff] %v914
                %v916 = vld [vmem:[%s198 + $0x1660] sm:$0xff]
                %917 = vst [vmem:[%s199 + $0xb30] sm:$0xff] %v916
                %v918 = vld [vmem:[%s198 + $0x1668] sm:$0xff]
                %919 = vst [vmem:[%s199 + $0xb38] sm:$0xff] %v918
                %v920 = vld [vmem:[%s198 + $0x1680] sm:$0xff]
                %921 = vst [vmem:[%s199 + $0xb40] sm:$0xff] %v920
                %v922 = vld [vmem:[%s198 + $0x1688] sm:$0xff]
                %923 = vst [vmem:[%s199 + $0xb48] sm:$0xff] %v922
                %v924 = vld [vmem:[%s198 + $0x16a0] sm:$0xff]
                %925 = vst [vmem:[%s199 + $0xb50] sm:$0xff] %v924
                %v926 = vld [vmem:[%s198 + $0x16a8] sm:$0xff]
                %927 = vst [vmem:[%s199 + $0xb58] sm:$0xff] %v926
                %v928 = vld [vmem:[%s198 + $0x16c0] sm:$0xff]
                %929 = vst [vmem:[%s199 + $0xb60] sm:$0xff] %v928
                %v930 = vld [vmem:[%s198 + $0x16c8] sm:$0xff]
                %931 = vst [vmem:[%s199 + $0xb68] sm:$0xff] %v930
                %v932 = vld [vmem:[%s198 + $0x16e0] sm:$0xff]
                %933 = vst [vmem:[%s199 + $0xb70] sm:$0xff] %v932
                %v934 = vld [vmem:[%s198 + $0x16e8] sm:$0xff]
                %935 = vst [vmem:[%s199 + $0xb78] sm:$0xff] %v934
                %v936 = vld [vmem:[%s198 + $0x1700] sm:$0xff]
                %937 = vst [vmem:[%s199 + $0xb80] sm:$0xff] %v936
                %v938 = vld [vmem:[%s198 + $0x1708] sm:$0xff]
                %939 = vst [vmem:[%s199 + $0xb88] sm:$0xff] %v938
                %v940 = vld [vmem:[%s198 + $0x1720] sm:$0xff]
                %941 = vst [vmem:[%s199 + $0xb90] sm:$0xff] %v940
                %v942 = vld [vmem:[%s198 + $0x1728] sm:$0xff]
                %943 = vst [vmem:[%s199 + $0xb98] sm:$0xff] %v942
                %v944 = vld [vmem:[%s198 + $0x1740] sm:$0xff]
                %945 = vst [vmem:[%s199 + $0xba0] sm:$0xff] %v944
                %v946 = vld [vmem:[%s198 + $0x1748] sm:$0xff]
                %947 = vst [vmem:[%s199 + $0xba8] sm:$0xff] %v946
                %v948 = vld [vmem:[%s198 + $0x1760] sm:$0xff]
                %949 = vst [vmem:[%s199 + $0xbb0] sm:$0xff] %v948
                %v950 = vld [vmem:[%s198 + $0x1768] sm:$0xff]
                %951 = vst [vmem:[%s199 + $0xbb8] sm:$0xff] %v950
                %v952 = vld [vmem:[%s198 + $0x1780] sm:$0xff]
                %953 = vst [vmem:[%s199 + $0xbc0] sm:$0xff] %v952
                %v954 = vld [vmem:[%s198 + $0x1788] sm:$0xff]
                %955 = vst [vmem:[%s199 + $0xbc8] sm:$0xff] %v954
                %v956 = vld [vmem:[%s198 + $0x17a0] sm:$0xff]
                %957 = vst [vmem:[%s199 + $0xbd0] sm:$0xff] %v956
                %v958 = vld [vmem:[%s198 + $0x17a8] sm:$0xff]
                %959 = vst [vmem:[%s199 + $0xbd8] sm:$0xff] %v958
                %v960 = vld [vmem:[%s198 + $0x17c0] sm:$0xff]
                %961 = vst [vmem:[%s199 + $0xbe0] sm:$0xff] %v960
                %v962 = vld [vmem:[%s198 + $0x17c8] sm:$0xff]
                %963 = vst [vmem:[%s199 + $0xbe8] sm:$0xff] %v962
                %v964 = vld [vmem:[%s198 + $0x17e0] sm:$0xff]
                %965 = vst [vmem:[%s199 + $0xbf0] sm:$0xff] %v964
                %v966 = vld [vmem:[%s198 + $0x17e8] sm:$0xff]
                %967 = vst [vmem:[%s199 + $0xbf8] sm:$0xff] %v966
                %v968 = vld [vmem:[%s198 + $0x1800] sm:$0xff]
                %969 = vst [vmem:[%s199 + $0xc00] sm:$0xff] %v968
                %v970 = vld [vmem:[%s198 + $0x1808] sm:$0xff]
                %971 = vst [vmem:[%s199 + $0xc08] sm:$0xff] %v970
                %v972 = vld [vmem:[%s198 + $0x1820] sm:$0xff]
                %973 = vst [vmem:[%s199 + $0xc10] sm:$0xff] %v972
                %v974 = vld [vmem:[%s198 + $0x1828] sm:$0xff]
                %975 = vst [vmem:[%s199 + $0xc18] sm:$0xff] %v974
                %v976 = vld [vmem:[%s198 + $0x1840] sm:$0xff]
                %977 = vst [vmem:[%s199 + $0xc20] sm:$0xff] %v976
                %v978 = vld [vmem:[%s198 + $0x1848] sm:$0xff]
                %979 = vst [vmem:[%s199 + $0xc28] sm:$0xff] %v978
                %v980 = vld [vmem:[%s198 + $0x1860] sm:$0xff]
                %981 = vst [vmem:[%s199 + $0xc30] sm:$0xff] %v980
                %v982 = vld [vmem:[%s198 + $0x1868] sm:$0xff]
                %983 = vst [vmem:[%s199 + $0xc38] sm:$0xff] %v982
                %v984 = vld [vmem:[%s198 + $0x1880] sm:$0xff]
                %985 = vst [vmem:[%s199 + $0xc40] sm:$0xff] %v984
                %v986 = vld [vmem:[%s198 + $0x1888] sm:$0xff]
                %987 = vst [vmem:[%s199 + $0xc48] sm:$0xff] %v986
                %v988 = vld [vmem:[%s198 + $0x18a0] sm:$0xff]
                %989 = vst [vmem:[%s199 + $0xc50] sm:$0xff] %v988
                %v990 = vld [vmem:[%s198 + $0x18a8] sm:$0xff]
                %991 = vst [vmem:[%s199 + $0xc58] sm:$0xff] %v990
                %v992 = vld [vmem:[%s198 + $0x18c0] sm:$0xff]
                %993 = vst [vmem:[%s199 + $0xc60] sm:$0xff] %v992
                %v994 = vld [vmem:[%s198 + $0x18c8] sm:$0xff]
                %995 = vst [vmem:[%s199 + $0xc68] sm:$0xff] %v994
                %v996 = vld [vmem:[%s198 + $0x18e0] sm:$0xff]
                %997 = vst [vmem:[%s199 + $0xc70] sm:$0xff] %v996
                %v998 = vld [vmem:[%s198 + $0x18e8] sm:$0xff]
                %999 = vst [vmem:[%s199 + $0xc78] sm:$0xff] %v998
                %v1000 = vld [vmem:[%s198 + $0x1900] sm:$0xff]
                %1001 = vst [vmem:[%s199 + $0xc80] sm:$0xff] %v1000
                %v1002 = vld [vmem:[%s198 + $0x1908] sm:$0xff]
                %1003 = vst [vmem:[%s199 + $0xc88] sm:$0xff] %v1002
                %v1004 = vld [vmem:[%s198 + $0x1920] sm:$0xff]
                %1005 = vst [vmem:[%s199 + $0xc90] sm:$0xff] %v1004
                %v1006 = vld [vmem:[%s198 + $0x1928] sm:$0xff]
                %1007 = vst [vmem:[%s199 + $0xc98] sm:$0xff] %v1006
                %v1008 = vld [vmem:[%s198 + $0x1940] sm:$0xff]
                %1009 = vst [vmem:[%s199 + $0xca0] sm:$0xff] %v1008
                %v1010 = vld [vmem:[%s198 + $0x1948] sm:$0xff]
                %1011 = vst [vmem:[%s199 + $0xca8] sm:$0xff] %v1010
                %v1012 = vld [vmem:[%s198 + $0x1960] sm:$0xff]
                %1013 = vst [vmem:[%s199 + $0xcb0] sm:$0xff] %v1012
                %v1014 = vld [vmem:[%s198 + $0x1968] sm:$0xff]
                %1015 = vst [vmem:[%s199 + $0xcb8] sm:$0xff] %v1014
                %v1016 = vld [vmem:[%s198 + $0x1980] sm:$0xff]
                %1017 = vst [vmem:[%s199 + $0xcc0] sm:$0xff] %v1016
                %v1018 = vld [vmem:[%s198 + $0x1988] sm:$0xff]
                %1019 = vst [vmem:[%s199 + $0xcc8] sm:$0xff] %v1018
                %v1020 = vld [vmem:[%s198 + $0x19a0] sm:$0xff]
                %1021 = vst [vmem:[%s199 + $0xcd0] sm:$0xff] %v1020
                %v1022 = vld [vmem:[%s198 + $0x19a8] sm:$0xff]
                %1023 = vst [vmem:[%s199 + $0xcd8] sm:$0xff] %v1022
                %v1024 = vld [vmem:[%s198 + $0x19c0] sm:$0xff]
                %1025 = vst [vmem:[%s199 + $0xce0] sm:$0xff] %v1024
                %v1026 = vld [vmem:[%s198 + $0x19c8] sm:$0xff]
                %1027 = vst [vmem:[%s199 + $0xce8] sm:$0xff] %v1026
                %v1028 = vld [vmem:[%s198 + $0x19e0] sm:$0xff]
                %1029 = vst [vmem:[%s199 + $0xcf0] sm:$0xff] %v1028
                %v1030 = vld [vmem:[%s198 + $0x19e8] sm:$0xff]
                %1031 = vst [vmem:[%s199 + $0xcf8] sm:$0xff] %v1030
                %v1032 = vld [vmem:[%s198 + $0x1a00] sm:$0xff]
                %1033 = vst [vmem:[%s199 + $0xd00] sm:$0xff] %v1032
                %v1034 = vld [vmem:[%s198 + $0x1a08] sm:$0xff]
                %1035 = vst [vmem:[%s199 + $0xd08] sm:$0xff] %v1034
                %v1036 = vld [vmem:[%s198 + $0x1a20] sm:$0xff]
                %1037 = vst [vmem:[%s199 + $0xd10] sm:$0xff] %v1036
                %v1038 = vld [vmem:[%s198 + $0x1a28] sm:$0xff]
                %1039 = vst [vmem:[%s199 + $0xd18] sm:$0xff] %v1038
                %v1040 = vld [vmem:[%s198 + $0x1a40] sm:$0xff]
                %1041 = vst [vmem:[%s199 + $0xd20] sm:$0xff] %v1040
                %v1042 = vld [vmem:[%s198 + $0x1a48] sm:$0xff]
                %1043 = vst [vmem:[%s199 + $0xd28] sm:$0xff] %v1042
                %v1044 = vld [vmem:[%s198 + $0x1a60] sm:$0xff]
                %1045 = vst [vmem:[%s199 + $0xd30] sm:$0xff] %v1044
                %v1046 = vld [vmem:[%s198 + $0x1a68] sm:$0xff]
                %1047 = vst [vmem:[%s199 + $0xd38] sm:$0xff] %v1046
                %v1048 = vld [vmem:[%s198 + $0x1a80] sm:$0xff]
                %1049 = vst [vmem:[%s199 + $0xd40] sm:$0xff] %v1048
                %v1050 = vld [vmem:[%s198 + $0x1a88] sm:$0xff]
                %1051 = vst [vmem:[%s199 + $0xd48] sm:$0xff] %v1050
                %v1052 = vld [vmem:[%s198 + $0x1aa0] sm:$0xff]
                %1053 = vst [vmem:[%s199 + $0xd50] sm:$0xff] %v1052
                %v1054 = vld [vmem:[%s198 + $0x1aa8] sm:$0xff]
                %1055 = vst [vmem:[%s199 + $0xd58] sm:$0xff] %v1054
                %v1056 = vld [vmem:[%s198 + $0x1ac0] sm:$0xff]
                %1057 = vst [vmem:[%s199 + $0xd60] sm:$0xff] %v1056
                %v1058 = vld [vmem:[%s198 + $0x1ac8] sm:$0xff]
                %1059 = vst [vmem:[%s199 + $0xd68] sm:$0xff] %v1058
                %v1060 = vld [vmem:[%s198 + $0x1ae0] sm:$0xff]
                %1061 = vst [vmem:[%s199 + $0xd70] sm:$0xff] %v1060
                %v1062 = vld [vmem:[%s198 + $0x1ae8] sm:$0xff]
                %1063 = vst [vmem:[%s199 + $0xd78] sm:$0xff] %v1062
                %v1064 = vld [vmem:[%s198 + $0x1b00] sm:$0xff]
                %1065 = vst [vmem:[%s199 + $0xd80] sm:$0xff] %v1064
                %v1066 = vld [vmem:[%s198 + $0x1b08] sm:$0xff]
                %1067 = vst [vmem:[%s199 + $0xd88] sm:$0xff] %v1066
                %v1068 = vld [vmem:[%s198 + $0x1b20] sm:$0xff]
                %1069 = vst [vmem:[%s199 + $0xd90] sm:$0xff] %v1068
                %v1070 = vld [vmem:[%s198 + $0x1b28] sm:$0xff]
                %1071 = vst [vmem:[%s199 + $0xd98] sm:$0xff] %v1070
                %v1072 = vld [vmem:[%s198 + $0x1b40] sm:$0xff]
                %1073 = vst [vmem:[%s199 + $0xda0] sm:$0xff] %v1072
                %v1074 = vld [vmem:[%s198 + $0x1b48] sm:$0xff]
                %1075 = vst [vmem:[%s199 + $0xda8] sm:$0xff] %v1074
                %v1076 = vld [vmem:[%s198 + $0x1b60] sm:$0xff]
                %1077 = vst [vmem:[%s199 + $0xdb0] sm:$0xff] %v1076
                %v1078 = vld [vmem:[%s198 + $0x1b68] sm:$0xff]
                %1079 = vst [vmem:[%s199 + $0xdb8] sm:$0xff] %v1078
                %v1080 = vld [vmem:[%s198 + $0x1b80] sm:$0xff]
                %1081 = vst [vmem:[%s199 + $0xdc0] sm:$0xff] %v1080
                %v1082 = vld [vmem:[%s198 + $0x1b88] sm:$0xff]
                %1083 = vst [vmem:[%s199 + $0xdc8] sm:$0xff] %v1082
                %v1084 = vld [vmem:[%s198 + $0x1ba0] sm:$0xff]
                %1085 = vst [vmem:[%s199 + $0xdd0] sm:$0xff] %v1084
                %v1086 = vld [vmem:[%s198 + $0x1ba8] sm:$0xff]
                %1087 = vst [vmem:[%s199 + $0xdd8] sm:$0xff] %v1086
                %v1088 = vld [vmem:[%s198 + $0x1bc0] sm:$0xff]
                %1089 = vst [vmem:[%s199 + $0xde0] sm:$0xff] %v1088
                %v1090 = vld [vmem:[%s198 + $0x1bc8] sm:$0xff]
                %1091 = vst [vmem:[%s199 + $0xde8] sm:$0xff] %v1090
                %v1092 = vld [vmem:[%s198 + $0x1be0] sm:$0xff]
                %1093 = vst [vmem:[%s199 + $0xdf0] sm:$0xff] %v1092
                %v1094 = vld [vmem:[%s198 + $0x1be8] sm:$0xff]
                %1095 = vst [vmem:[%s199 + $0xdf8] sm:$0xff] %v1094
                %v1096 = vld [vmem:[%s198 + $0x1c00] sm:$0xff]
                %1097 = vst [vmem:[%s199 + $0xe00] sm:$0xff] %v1096
                %v1098 = vld [vmem:[%s198 + $0x1c08] sm:$0xff]
                %1099 = vst [vmem:[%s199 + $0xe08] sm:$0xff] %v1098
                %v1100 = vld [vmem:[%s198 + $0x1c20] sm:$0xff]
                %1101 = vst [vmem:[%s199 + $0xe10] sm:$0xff] %v1100
                %v1102 = vld [vmem:[%s198 + $0x1c28] sm:$0xff]
                %1103 = vst [vmem:[%s199 + $0xe18] sm:$0xff] %v1102
                %v1104 = vld [vmem:[%s198 + $0x1c40] sm:$0xff]
                %1105 = vst [vmem:[%s199 + $0xe20] sm:$0xff] %v1104
                %v1106 = vld [vmem:[%s198 + $0x1c48] sm:$0xff]
                %1107 = vst [vmem:[%s199 + $0xe28] sm:$0xff] %v1106
                %v1108 = vld [vmem:[%s198 + $0x1c60] sm:$0xff]
                %1109 = vst [vmem:[%s199 + $0xe30] sm:$0xff] %v1108
                %v1110 = vld [vmem:[%s198 + $0x1c68] sm:$0xff]
                %1111 = vst [vmem:[%s199 + $0xe38] sm:$0xff] %v1110
                %v1112 = vld [vmem:[%s198 + $0x1c80] sm:$0xff]
                %1113 = vst [vmem:[%s199 + $0xe40] sm:$0xff] %v1112
                %v1114 = vld [vmem:[%s198 + $0x1c88] sm:$0xff]
                %1115 = vst [vmem:[%s199 + $0xe48] sm:$0xff] %v1114
                %v1116 = vld [vmem:[%s198 + $0x1ca0] sm:$0xff]
                %1117 = vst [vmem:[%s199 + $0xe50] sm:$0xff] %v1116
                %v1118 = vld [vmem:[%s198 + $0x1ca8] sm:$0xff]
                %1119 = vst [vmem:[%s199 + $0xe58] sm:$0xff] %v1118
                %v1120 = vld [vmem:[%s198 + $0x1cc0] sm:$0xff]
                %1121 = vst [vmem:[%s199 + $0xe60] sm:$0xff] %v1120
                %v1122 = vld [vmem:[%s198 + $0x1cc8] sm:$0xff]
                %1123 = vst [vmem:[%s199 + $0xe68] sm:$0xff] %v1122
                %v1124 = vld [vmem:[%s198 + $0x1ce0] sm:$0xff]
                %1125 = vst [vmem:[%s199 + $0xe70] sm:$0xff] %v1124
                %v1126 = vld [vmem:[%s198 + $0x1ce8] sm:$0xff]
                %1127 = vst [vmem:[%s199 + $0xe78] sm:$0xff] %v1126
                %v1128 = vld [vmem:[%s198 + $0x1d00] sm:$0xff]
                %1129 = vst [vmem:[%s199 + $0xe80] sm:$0xff] %v1128
                %v1130 = vld [vmem:[%s198 + $0x1d08] sm:$0xff]
                %1131 = vst [vmem:[%s199 + $0xe88] sm:$0xff] %v1130
                %v1132 = vld [vmem:[%s198 + $0x1d20] sm:$0xff]
                %1133 = vst [vmem:[%s199 + $0xe90] sm:$0xff] %v1132
                %v1134 = vld [vmem:[%s198 + $0x1d28] sm:$0xff]
                %1135 = vst [vmem:[%s199 + $0xe98] sm:$0xff] %v1134
                %v1136 = vld [vmem:[%s198 + $0x1d40] sm:$0xff]
                %1137 = vst [vmem:[%s199 + $0xea0] sm:$0xff] %v1136
                %v1138 = vld [vmem:[%s198 + $0x1d48] sm:$0xff]
                %1139 = vst [vmem:[%s199 + $0xea8] sm:$0xff] %v1138
                %v1140 = vld [vmem:[%s198 + $0x1d60] sm:$0xff]
                %1141 = vst [vmem:[%s199 + $0xeb0] sm:$0xff] %v1140
                %v1142 = vld [vmem:[%s198 + $0x1d68] sm:$0xff]
                %1143 = vst [vmem:[%s199 + $0xeb8] sm:$0xff] %v1142
                %v1144 = vld [vmem:[%s198 + $0x1d80] sm:$0xff]
                %1145 = vst [vmem:[%s199 + $0xec0] sm:$0xff] %v1144
                %v1146 = vld [vmem:[%s198 + $0x1d88] sm:$0xff]
                %1147 = vst [vmem:[%s199 + $0xec8] sm:$0xff] %v1146
                %v1148 = vld [vmem:[%s198 + $0x1da0] sm:$0xff]
                %1149 = vst [vmem:[%s199 + $0xed0] sm:$0xff] %v1148
                %v1150 = vld [vmem:[%s198 + $0x1da8] sm:$0xff]
                %1151 = vst [vmem:[%s199 + $0xed8] sm:$0xff] %v1150
                %v1152 = vld [vmem:[%s198 + $0x1dc0] sm:$0xff]
                %1153 = vst [vmem:[%s199 + $0xee0] sm:$0xff] %v1152
                %v1154 = vld [vmem:[%s198 + $0x1dc8] sm:$0xff]
                %1155 = vst [vmem:[%s199 + $0xee8] sm:$0xff] %v1154
                %v1156 = vld [vmem:[%s198 + $0x1de0] sm:$0xff]
                %1157 = vst [vmem:[%s199 + $0xef0] sm:$0xff] %v1156
                %v1158 = vld [vmem:[%s198 + $0x1de8] sm:$0xff]
                %1159 = vst [vmem:[%s199 + $0xef8] sm:$0xff] %v1158
                %v1160 = vld [vmem:[%s198 + $0x1e00] sm:$0xff]
                %1161 = vst [vmem:[%s199 + $0xf00] sm:$0xff] %v1160
                %v1162 = vld [vmem:[%s198 + $0x1e08] sm:$0xff]
                %1163 = vst [vmem:[%s199 + $0xf08] sm:$0xff] %v1162
                %v1164 = vld [vmem:[%s198 + $0x1e20] sm:$0xff]
                %1165 = vst [vmem:[%s199 + $0xf10] sm:$0xff] %v1164
                %v1166 = vld [vmem:[%s198 + $0x1e28] sm:$0xff]
                %1167 = vst [vmem:[%s199 + $0xf18] sm:$0xff] %v1166
                %v1168 = vld [vmem:[%s198 + $0x1e40] sm:$0xff]
                %1169 = vst [vmem:[%s199 + $0xf20] sm:$0xff] %v1168
                %v1170 = vld [vmem:[%s198 + $0x1e48] sm:$0xff]
                %1171 = vst [vmem:[%s199 + $0xf28] sm:$0xff] %v1170
                %v1172 = vld [vmem:[%s198 + $0x1e60] sm:$0xff]
                %1173 = vst [vmem:[%s199 + $0xf30] sm:$0xff] %v1172
                %v1174 = vld [vmem:[%s198 + $0x1e68] sm:$0xff]
                %1175 = vst [vmem:[%s199 + $0xf38] sm:$0xff] %v1174
                %v1176 = vld [vmem:[%s198 + $0x1e80] sm:$0xff]
                %1177 = vst [vmem:[%s199 + $0xf40] sm:$0xff] %v1176
                %v1178 = vld [vmem:[%s198 + $0x1e88] sm:$0xff]
                %1179 = vst [vmem:[%s199 + $0xf48] sm:$0xff] %v1178
                %v1180 = vld [vmem:[%s198 + $0x1ea0] sm:$0xff]
                %1181 = vst [vmem:[%s199 + $0xf50] sm:$0xff] %v1180
                %v1182 = vld [vmem:[%s198 + $0x1ea8] sm:$0xff]
                %1183 = vst [vmem:[%s199 + $0xf58] sm:$0xff] %v1182
                %v1184 = vld [vmem:[%s198 + $0x1ec0] sm:$0xff]
                %1185 = vst [vmem:[%s199 + $0xf60] sm:$0xff] %v1184
                %v1186 = vld [vmem:[%s198 + $0x1ec8] sm:$0xff]
                %1187 = vst [vmem:[%s199 + $0xf68] sm:$0xff] %v1186
                %v1188 = vld [vmem:[%s198 + $0x1ee0] sm:$0xff]
                %1189 = vst [vmem:[%s199 + $0xf70] sm:$0xff] %v1188
                %v1190 = vld [vmem:[%s198 + $0x1ee8] sm:$0xff]
                %1191 = vst [vmem:[%s199 + $0xf78] sm:$0xff] %v1190
                %v1192 = vld [vmem:[%s198 + $0x1f00] sm:$0xff]
                %1193 = vst [vmem:[%s199 + $0xf80] sm:$0xff] %v1192
                %v1194 = vld [vmem:[%s198 + $0x1f08] sm:$0xff]
                %1195 = vst [vmem:[%s199 + $0xf88] sm:$0xff] %v1194
                %v1196 = vld [vmem:[%s198 + $0x1f20] sm:$0xff]
                %1197 = vst [vmem:[%s199 + $0xf90] sm:$0xff] %v1196
                %v1198 = vld [vmem:[%s198 + $0x1f28] sm:$0xff]
                %1199 = vst [vmem:[%s199 + $0xf98] sm:$0xff] %v1198
                %v1200 = vld [vmem:[%s198 + $0x1f40] sm:$0xff]
                %1201 = vst [vmem:[%s199 + $0xfa0] sm:$0xff] %v1200
                %v1202 = vld [vmem:[%s198 + $0x1f48] sm:$0xff]
                %1203 = vst [vmem:[%s199 + $0xfa8] sm:$0xff] %v1202
                %v1204 = vld [vmem:[%s198 + $0x1f60] sm:$0xff]
                %1205 = vst [vmem:[%s199 + $0xfb0] sm:$0xff] %v1204
                %v1206 = vld [vmem:[%s198 + $0x1f68] sm:$0xff]
                %1207 = vst [vmem:[%s199 + $0xfb8] sm:$0xff] %v1206
                %v1208 = vld [vmem:[%s198 + $0x1f80] sm:$0xff]
                %1209 = vst [vmem:[%s199 + $0xfc0] sm:$0xff] %v1208
                %v1210 = vld [vmem:[%s198 + $0x1f88] sm:$0xff]
                %1211 = vst [vmem:[%s199 + $0xfc8] sm:$0xff] %v1210
                %v1212 = vld [vmem:[%s198 + $0x1fa0] sm:$0xff]
                %1213 = vst [vmem:[%s199 + $0xfd0] sm:$0xff] %v1212
                %v1214 = vld [vmem:[%s198 + $0x1fa8] sm:$0xff]
                %1215 = vst [vmem:[%s199 + $0xfd8] sm:$0xff] %v1214
                %v1216 = vld [vmem:[%s198 + $0x1fc0] sm:$0xff]
                %1217 = vst [vmem:[%s199 + $0xfe0] sm:$0xff] %v1216
                %v1218 = vld [vmem:[%s198 + $0x1fc8] sm:$0xff]
                %1219 = vst [vmem:[%s199 + $0xfe8] sm:$0xff] %v1218
                %v1220 = vld [vmem:[%s198 + $0x1fe0] sm:$0xff]
                %1221 = vst [vmem:[%s199 + $0xff0] sm:$0xff] %v1220
                %v1222 = vld [vmem:[%s198 + $0x1fe8] sm:$0xff]
                %1223 = vst [vmem:[%s199 + $0xff8] sm:$0xff] %v1222
                %v1224 = vld [vmem:[%s198 + $0x2000] sm:$0xff]
                %1225 = vst [vmem:[%s199 + $0x1000] sm:$0xff] %v1224
                %v1226 = vld [vmem:[%s198 + $0x2008] sm:$0xff]
                %1227 = vst [vmem:[%s199 + $0x1008] sm:$0xff] %v1226
                %v1228 = vld [vmem:[%s198 + $0x2020] sm:$0xff]
                %1229 = vst [vmem:[%s199 + $0x1010] sm:$0xff] %v1228
                %v1230 = vld [vmem:[%s198 + $0x2028] sm:$0xff]
                %1231 = vst [vmem:[%s199 + $0x1018] sm:$0xff] %v1230
                %v1232 = vld [vmem:[%s198 + $0x2040] sm:$0xff]
                %1233 = vst [vmem:[%s199 + $0x1020] sm:$0xff] %v1232
                %v1234 = vld [vmem:[%s198 + $0x2048] sm:$0xff]
                %1235 = vst [vmem:[%s199 + $0x1028] sm:$0xff] %v1234
                %v1236 = vld [vmem:[%s198 + $0x2060] sm:$0xff]
                %1237 = vst [vmem:[%s199 + $0x1030] sm:$0xff] %v1236
                %v1238 = vld [vmem:[%s198 + $0x2068] sm:$0xff]
                %1239 = vst [vmem:[%s199 + $0x1038] sm:$0xff] %v1238
                %v1240 = vld [vmem:[%s198 + $0x2080] sm:$0xff]
                %1241 = vst [vmem:[%s199 + $0x1040] sm:$0xff] %v1240
                %v1242 = vld [vmem:[%s198 + $0x2088] sm:$0xff]
                %1243 = vst [vmem:[%s199 + $0x1048] sm:$0xff] %v1242
                %v1244 = vld [vmem:[%s198 + $0x20a0] sm:$0xff]
                %1245 = vst [vmem:[%s199 + $0x1050] sm:$0xff] %v1244
                %v1246 = vld [vmem:[%s198 + $0x20a8] sm:$0xff]
                %1247 = vst [vmem:[%s199 + $0x1058] sm:$0xff] %v1246
                %v1248 = vld [vmem:[%s198 + $0x20c0] sm:$0xff]
                %1249 = vst [vmem:[%s199 + $0x1060] sm:$0xff] %v1248
                %v1250 = vld [vmem:[%s198 + $0x20c8] sm:$0xff]
                %1251 = vst [vmem:[%s199 + $0x1068] sm:$0xff] %v1250
                %v1252 = vld [vmem:[%s198 + $0x20e0] sm:$0xff]
                %1253 = vst [vmem:[%s199 + $0x1070] sm:$0xff] %v1252
                %v1254 = vld [vmem:[%s198 + $0x20e8] sm:$0xff]
                %1255 = vst [vmem:[%s199 + $0x1078] sm:$0xff] %v1254
                %v1256 = vld [vmem:[%s198 + $0x2100] sm:$0xff]
                %1257 = vst [vmem:[%s199 + $0x1080] sm:$0xff] %v1256
                %v1258 = vld [vmem:[%s198 + $0x2108] sm:$0xff]
                %1259 = vst [vmem:[%s199 + $0x1088] sm:$0xff] %v1258
                %v1260 = vld [vmem:[%s198 + $0x2120] sm:$0xff]
                %1261 = vst [vmem:[%s199 + $0x1090] sm:$0xff] %v1260
                %v1262 = vld [vmem:[%s198 + $0x2128] sm:$0xff]
                %1263 = vst [vmem:[%s199 + $0x1098] sm:$0xff] %v1262
                %v1264 = vld [vmem:[%s198 + $0x2140] sm:$0xff]
                %1265 = vst [vmem:[%s199 + $0x10a0] sm:$0xff] %v1264
                %v1266 = vld [vmem:[%s198 + $0x2148] sm:$0xff]
                %1267 = vst [vmem:[%s199 + $0x10a8] sm:$0xff] %v1266
                %v1268 = vld [vmem:[%s198 + $0x2160] sm:$0xff]
                %1269 = vst [vmem:[%s199 + $0x10b0] sm:$0xff] %v1268
                %v1270 = vld [vmem:[%s198 + $0x2168] sm:$0xff]
                %1271 = vst [vmem:[%s199 + $0x10b8] sm:$0xff] %v1270
                %v1272 = vld [vmem:[%s198 + $0x2180] sm:$0xff]
                %1273 = vst [vmem:[%s199 + $0x10c0] sm:$0xff] %v1272
                %v1274 = vld [vmem:[%s198 + $0x2188] sm:$0xff]
                %1275 = vst [vmem:[%s199 + $0x10c8] sm:$0xff] %v1274
                %v1276 = vld [vmem:[%s198 + $0x21a0] sm:$0xff]
                %1277 = vst [vmem:[%s199 + $0x10d0] sm:$0xff] %v1276
                %v1278 = vld [vmem:[%s198 + $0x21a8] sm:$0xff]
                %1279 = vst [vmem:[%s199 + $0x10d8] sm:$0xff] %v1278
                %v1280 = vld [vmem:[%s198 + $0x21c0] sm:$0xff]
                %1281 = vst [vmem:[%s199 + $0x10e0] sm:$0xff] %v1280
                %v1282 = vld [vmem:[%s198 + $0x21c8] sm:$0xff]
                %1283 = vst [vmem:[%s199 + $0x10e8] sm:$0xff] %v1282
                %v1284 = vld [vmem:[%s198 + $0x21e0] sm:$0xff]
                %1285 = vst [vmem:[%s199 + $0x10f0] sm:$0xff] %v1284
                %v1286 = vld [vmem:[%s198 + $0x21e8] sm:$0xff]
                %1287 = vst [vmem:[%s199 + $0x10f8] sm:$0xff] %v1286
                %v1288 = vld [vmem:[%s198 + $0x2200] sm:$0xff]
                %1289 = vst [vmem:[%s199 + $0x1100] sm:$0xff] %v1288
                %v1290 = vld [vmem:[%s198 + $0x2208] sm:$0xff]
                %1291 = vst [vmem:[%s199 + $0x1108] sm:$0xff] %v1290
                %v1292 = vld [vmem:[%s198 + $0x2220] sm:$0xff]
                %1293 = vst [vmem:[%s199 + $0x1110] sm:$0xff] %v1292
                %v1294 = vld [vmem:[%s198 + $0x2228] sm:$0xff]
                %1295 = vst [vmem:[%s199 + $0x1118] sm:$0xff] %v1294
                %v1296 = vld [vmem:[%s198 + $0x2240] sm:$0xff]
                %1297 = vst [vmem:[%s199 + $0x1120] sm:$0xff] %v1296
                %v1298 = vld [vmem:[%s198 + $0x2248] sm:$0xff]
                %1299 = vst [vmem:[%s199 + $0x1128] sm:$0xff] %v1298
                %v1300 = vld [vmem:[%s198 + $0x2260] sm:$0xff]
                %1301 = vst [vmem:[%s199 + $0x1130] sm:$0xff] %v1300
                %v1302 = vld [vmem:[%s198 + $0x2268] sm:$0xff]
                %1303 = vst [vmem:[%s199 + $0x1138] sm:$0xff] %v1302
                %v1304 = vld [vmem:[%s198 + $0x2280] sm:$0xff]
                %1305 = vst [vmem:[%s199 + $0x1140] sm:$0xff] %v1304
                %v1306 = vld [vmem:[%s198 + $0x2288] sm:$0xff]
                %1307 = vst [vmem:[%s199 + $0x1148] sm:$0xff] %v1306
                %v1308 = vld [vmem:[%s198 + $0x22a0] sm:$0xff]
                %1309 = vst [vmem:[%s199 + $0x1150] sm:$0xff] %v1308
                %v1310 = vld [vmem:[%s198 + $0x22a8] sm:$0xff]
                %1311 = vst [vmem:[%s199 + $0x1158] sm:$0xff] %v1310
                %v1312 = vld [vmem:[%s198 + $0x22c0] sm:$0xff]
                %1313 = vst [vmem:[%s199 + $0x1160] sm:$0xff] %v1312
                %v1314 = vld [vmem:[%s198 + $0x22c8] sm:$0xff]
                %1315 = vst [vmem:[%s199 + $0x1168] sm:$0xff] %v1314
                %v1316 = vld [vmem:[%s198 + $0x22e0] sm:$0xff]
                %1317 = vst [vmem:[%s199 + $0x1170] sm:$0xff] %v1316
                %v1318 = vld [vmem:[%s198 + $0x22e8] sm:$0xff]
                %1319 = vst [vmem:[%s199 + $0x1178] sm:$0xff] %v1318
                %v1320 = vld [vmem:[%s198 + $0x2300] sm:$0xff]
                %1321 = vst [vmem:[%s199 + $0x1180] sm:$0xff] %v1320
                %v1322 = vld [vmem:[%s198 + $0x2308] sm:$0xff]
                %1323 = vst [vmem:[%s199 + $0x1188] sm:$0xff] %v1322
                %v1324 = vld [vmem:[%s198 + $0x2320] sm:$0xff]
                %1325 = vst [vmem:[%s199 + $0x1190] sm:$0xff] %v1324
                %v1326 = vld [vmem:[%s198 + $0x2328] sm:$0xff]
                %1327 = vst [vmem:[%s199 + $0x1198] sm:$0xff] %v1326
                %v1328 = vld [vmem:[%s198 + $0x2340] sm:$0xff]
                %1329 = vst [vmem:[%s199 + $0x11a0] sm:$0xff] %v1328
                %v1330 = vld [vmem:[%s198 + $0x2348] sm:$0xff]
                %1331 = vst [vmem:[%s199 + $0x11a8] sm:$0xff] %v1330
                %v1332 = vld [vmem:[%s198 + $0x2360] sm:$0xff]
                %1333 = vst [vmem:[%s199 + $0x11b0] sm:$0xff] %v1332
                %v1334 = vld [vmem:[%s198 + $0x2368] sm:$0xff]
                %1335 = vst [vmem:[%s199 + $0x11b8] sm:$0xff] %v1334
                %v1336 = vld [vmem:[%s198 + $0x2380] sm:$0xff]
                %1337 = vst [vmem:[%s199 + $0x11c0] sm:$0xff] %v1336
                %v1338 = vld [vmem:[%s198 + $0x2388] sm:$0xff]
                %1339 = vst [vmem:[%s199 + $0x11c8] sm:$0xff] %v1338
                %v1340 = vld [vmem:[%s198 + $0x23a0] sm:$0xff]
                %1341 = vst [vmem:[%s199 + $0x11d0] sm:$0xff] %v1340
                %v1342 = vld [vmem:[%s198 + $0x23a8] sm:$0xff]
                %1343 = vst [vmem:[%s199 + $0x11d8] sm:$0xff] %v1342
                %v1344 = vld [vmem:[%s198 + $0x23c0] sm:$0xff]
                %1345 = vst [vmem:[%s199 + $0x11e0] sm:$0xff] %v1344
                %v1346 = vld [vmem:[%s198 + $0x23c8] sm:$0xff]
                %1347 = vst [vmem:[%s199 + $0x11e8] sm:$0xff] %v1346
                %v1348 = vld [vmem:[%s198 + $0x23e0] sm:$0xff]
                %1349 = vst [vmem:[%s199 + $0x11f0] sm:$0xff] %v1348
                %v1350 = vld [vmem:[%s198 + $0x23e8] sm:$0xff]
                %1351 = vst [vmem:[%s199 + $0x11f8] sm:$0xff] %v1350
                %v1352 = vld [vmem:[%s198 + $0x2400] sm:$0xff]
                %1353 = vst [vmem:[%s199 + $0x1200] sm:$0xff] %v1352
                %v1354 = vld [vmem:[%s198 + $0x2408] sm:$0xff]
                %1355 = vst [vmem:[%s199 + $0x1208] sm:$0xff] %v1354
                %v1356 = vld [vmem:[%s198 + $0x2420] sm:$0xff]
                %1357 = vst [vmem:[%s199 + $0x1210] sm:$0xff] %v1356
                %v1358 = vld [vmem:[%s198 + $0x2428] sm:$0xff]
                %1359 = vst [vmem:[%s199 + $0x1218] sm:$0xff] %v1358
                %v1360 = vld [vmem:[%s198 + $0x2440] sm:$0xff]
                %1361 = vst [vmem:[%s199 + $0x1220] sm:$0xff] %v1360
                %v1362 = vld [vmem:[%s198 + $0x2448] sm:$0xff]
                %1363 = vst [vmem:[%s199 + $0x1228] sm:$0xff] %v1362
                %v1364 = vld [vmem:[%s198 + $0x2460] sm:$0xff]
                %1365 = vst [vmem:[%s199 + $0x1230] sm:$0xff] %v1364
                %v1366 = vld [vmem:[%s198 + $0x2468] sm:$0xff]
                %1367 = vst [vmem:[%s199 + $0x1238] sm:$0xff] %v1366
                %v1368 = vld [vmem:[%s198 + $0x2480] sm:$0xff]
                %1369 = vst [vmem:[%s199 + $0x1240] sm:$0xff] %v1368
                %v1370 = vld [vmem:[%s198 + $0x2488] sm:$0xff]
                %1371 = vst [vmem:[%s199 + $0x1248] sm:$0xff] %v1370
                %v1372 = vld [vmem:[%s198 + $0x24a0] sm:$0xff]
                %1373 = vst [vmem:[%s199 + $0x1250] sm:$0xff] %v1372
                %v1374 = vld [vmem:[%s198 + $0x24a8] sm:$0xff]
                %1375 = vst [vmem:[%s199 + $0x1258] sm:$0xff] %v1374
                %v1376 = vld [vmem:[%s198 + $0x24c0] sm:$0xff]
                %1377 = vst [vmem:[%s199 + $0x1260] sm:$0xff] %v1376
                %v1378 = vld [vmem:[%s198 + $0x24c8] sm:$0xff]
                %1379 = vst [vmem:[%s199 + $0x1268] sm:$0xff] %v1378
                %v1380 = vld [vmem:[%s198 + $0x24e0] sm:$0xff]
                %1381 = vst [vmem:[%s199 + $0x1270] sm:$0xff] %v1380
                %v1382 = vld [vmem:[%s198 + $0x24e8] sm:$0xff]
                %1383 = vst [vmem:[%s199 + $0x1278] sm:$0xff] %v1382
                %v1384 = vld [vmem:[%s198 + $0x2500] sm:$0xff]
                %1385 = vst [vmem:[%s199 + $0x1280] sm:$0xff] %v1384
                %v1386 = vld [vmem:[%s198 + $0x2508] sm:$0xff]
                %1387 = vst [vmem:[%s199 + $0x1288] sm:$0xff] %v1386
                %v1388 = vld [vmem:[%s198 + $0x2520] sm:$0xff]
                %1389 = vst [vmem:[%s199 + $0x1290] sm:$0xff] %v1388
                %v1390 = vld [vmem:[%s198 + $0x2528] sm:$0xff]
                %1391 = vst [vmem:[%s199 + $0x1298] sm:$0xff] %v1390
                %v1392 = vld [vmem:[%s198 + $0x2540] sm:$0xff]
                %1393 = vst [vmem:[%s199 + $0x12a0] sm:$0xff] %v1392
                %v1394 = vld [vmem:[%s198 + $0x2548] sm:$0xff]
                %1395 = vst [vmem:[%s199 + $0x12a8] sm:$0xff] %v1394
                %v1396 = vld [vmem:[%s198 + $0x2560] sm:$0xff]
                %1397 = vst [vmem:[%s199 + $0x12b0] sm:$0xff] %v1396
                %v1398 = vld [vmem:[%s198 + $0x2568] sm:$0xff]
                %1399 = vst [vmem:[%s199 + $0x12b8] sm:$0xff] %v1398
                %v1400 = vld [vmem:[%s198 + $0x2580] sm:$0xff]
                %1401 = vst [vmem:[%s199 + $0x12c0] sm:$0xff] %v1400
                %v1402 = vld [vmem:[%s198 + $0x2588] sm:$0xff]
                %1403 = vst [vmem:[%s199 + $0x12c8] sm:$0xff] %v1402
                %v1404 = vld [vmem:[%s198 + $0x25a0] sm:$0xff]
                %1405 = vst [vmem:[%s199 + $0x12d0] sm:$0xff] %v1404
                %v1406 = vld [vmem:[%s198 + $0x25a8] sm:$0xff]
                %1407 = vst [vmem:[%s199 + $0x12d8] sm:$0xff] %v1406
                %v1408 = vld [vmem:[%s198 + $0x25c0] sm:$0xff]
                %1409 = vst [vmem:[%s199 + $0x12e0] sm:$0xff] %v1408
                %v1410 = vld [vmem:[%s198 + $0x25c8] sm:$0xff]
                %1411 = vst [vmem:[%s199 + $0x12e8] sm:$0xff] %v1410
                %v1412 = vld [vmem:[%s198 + $0x25e0] sm:$0xff]
                %1413 = vst [vmem:[%s199 + $0x12f0] sm:$0xff] %v1412
                %v1414 = vld [vmem:[%s198 + $0x25e8] sm:$0xff]
                %1415 = vst [vmem:[%s199 + $0x12f8] sm:$0xff] %v1414
                %v1416 = vld [vmem:[%s198 + $0x2600] sm:$0xff]
                %1417 = vst [vmem:[%s199 + $0x1300] sm:$0xff] %v1416
                %v1418 = vld [vmem:[%s198 + $0x2608] sm:$0xff]
                %1419 = vst [vmem:[%s199 + $0x1308] sm:$0xff] %v1418
                %v1420 = vld [vmem:[%s198 + $0x2620] sm:$0xff]
                %1421 = vst [vmem:[%s199 + $0x1310] sm:$0xff] %v1420
                %v1422 = vld [vmem:[%s198 + $0x2628] sm:$0xff]
                %1423 = vst [vmem:[%s199 + $0x1318] sm:$0xff] %v1422
                %v1424 = vld [vmem:[%s198 + $0x2640] sm:$0xff]
                %1425 = vst [vmem:[%s199 + $0x1320] sm:$0xff] %v1424
                %v1426 = vld [vmem:[%s198 + $0x2648] sm:$0xff]
                %1427 = vst [vmem:[%s199 + $0x1328] sm:$0xff] %v1426
                %v1428 = vld [vmem:[%s198 + $0x2660] sm:$0xff]
                %1429 = vst [vmem:[%s199 + $0x1330] sm:$0xff] %v1428
                %v1430 = vld [vmem:[%s198 + $0x2668] sm:$0xff]
                %1431 = vst [vmem:[%s199 + $0x1338] sm:$0xff] %v1430
                %v1432 = vld [vmem:[%s198 + $0x2680] sm:$0xff]
                %1433 = vst [vmem:[%s199 + $0x1340] sm:$0xff] %v1432
                %v1434 = vld [vmem:[%s198 + $0x2688] sm:$0xff]
                %1435 = vst [vmem:[%s199 + $0x1348] sm:$0xff] %v1434
                %v1436 = vld [vmem:[%s198 + $0x26a0] sm:$0xff]
                %1437 = vst [vmem:[%s199 + $0x1350] sm:$0xff] %v1436
                %v1438 = vld [vmem:[%s198 + $0x26a8] sm:$0xff]
                %1439 = vst [vmem:[%s199 + $0x1358] sm:$0xff] %v1438
                %v1440 = vld [vmem:[%s198 + $0x26c0] sm:$0xff]
                %1441 = vst [vmem:[%s199 + $0x1360] sm:$0xff] %v1440
                %v1442 = vld [vmem:[%s198 + $0x26c8] sm:$0xff]
                %1443 = vst [vmem:[%s199 + $0x1368] sm:$0xff] %v1442
                %v1444 = vld [vmem:[%s198 + $0x26e0] sm:$0xff]
                %1445 = vst [vmem:[%s199 + $0x1370] sm:$0xff] %v1444
                %v1446 = vld [vmem:[%s198 + $0x26e8] sm:$0xff]
                %1447 = vst [vmem:[%s199 + $0x1378] sm:$0xff] %v1446
                %v1448 = vld [vmem:[%s198 + $0x2700] sm:$0xff]
                %1449 = vst [vmem:[%s199 + $0x1380] sm:$0xff] %v1448
                %v1450 = vld [vmem:[%s198 + $0x2708] sm:$0xff]
                %1451 = vst [vmem:[%s199 + $0x1388] sm:$0xff] %v1450
                %v1452 = vld [vmem:[%s198 + $0x2720] sm:$0xff]
                %1453 = vst [vmem:[%s199 + $0x1390] sm:$0xff] %v1452
                %v1454 = vld [vmem:[%s198 + $0x2728] sm:$0xff]
                %1455 = vst [vmem:[%s199 + $0x1398] sm:$0xff] %v1454
                %v1456 = vld [vmem:[%s198 + $0x2740] sm:$0xff]
                %1457 = vst [vmem:[%s199 + $0x13a0] sm:$0xff] %v1456
                %v1458 = vld [vmem:[%s198 + $0x2748] sm:$0xff]
                %1459 = vst [vmem:[%s199 + $0x13a8] sm:$0xff] %v1458
                %v1460 = vld [vmem:[%s198 + $0x2760] sm:$0xff]
                %1461 = vst [vmem:[%s199 + $0x13b0] sm:$0xff] %v1460
                %v1462 = vld [vmem:[%s198 + $0x2768] sm:$0xff]
                %1463 = vst [vmem:[%s199 + $0x13b8] sm:$0xff] %v1462
                %v1464 = vld [vmem:[%s198 + $0x2780] sm:$0xff]
                %1465 = vst [vmem:[%s199 + $0x13c0] sm:$0xff] %v1464
                %v1466 = vld [vmem:[%s198 + $0x2788] sm:$0xff]
                %1467 = vst [vmem:[%s199 + $0x13c8] sm:$0xff] %v1466
                %v1468 = vld [vmem:[%s198 + $0x27a0] sm:$0xff]
                %1469 = vst [vmem:[%s199 + $0x13d0] sm:$0xff] %v1468
                %v1470 = vld [vmem:[%s198 + $0x27a8] sm:$0xff]
                %1471 = vst [vmem:[%s199 + $0x13d8] sm:$0xff] %v1470
                %v1472 = vld [vmem:[%s198 + $0x27c0] sm:$0xff]
                %1473 = vst [vmem:[%s199 + $0x13e0] sm:$0xff] %v1472
                %v1474 = vld [vmem:[%s198 + $0x27c8] sm:$0xff]
                %1475 = vst [vmem:[%s199 + $0x13e8] sm:$0xff] %v1474
                %v1476 = vld [vmem:[%s198 + $0x27e0] sm:$0xff]
                %1477 = vst [vmem:[%s199 + $0x13f0] sm:$0xff] %v1476
                %v1478 = vld [vmem:[%s198 + $0x27e8] sm:$0xff]
                %1479 = vst [vmem:[%s199 + $0x13f8] sm:$0xff] %v1478
                %v1480 = vld [vmem:[%s198 + $0x2800] sm:$0xff]
                %1481 = vst [vmem:[%s199 + $0x1400] sm:$0xff] %v1480
                %v1482 = vld [vmem:[%s198 + $0x2808] sm:$0xff]
                %1483 = vst [vmem:[%s199 + $0x1408] sm:$0xff] %v1482
                %v1484 = vld [vmem:[%s198 + $0x2820] sm:$0xff]
                %1485 = vst [vmem:[%s199 + $0x1410] sm:$0xff] %v1484
                %v1486 = vld [vmem:[%s198 + $0x2828] sm:$0xff]
                %1487 = vst [vmem:[%s199 + $0x1418] sm:$0xff] %v1486
                %v1488 = vld [vmem:[%s198 + $0x2840] sm:$0xff]
                %1489 = vst [vmem:[%s199 + $0x1420] sm:$0xff] %v1488
                %v1490 = vld [vmem:[%s198 + $0x2848] sm:$0xff]
                %1491 = vst [vmem:[%s199 + $0x1428] sm:$0xff] %v1490
                %v1492 = vld [vmem:[%s198 + $0x2860] sm:$0xff]
                %1493 = vst [vmem:[%s199 + $0x1430] sm:$0xff] %v1492
                %v1494 = vld [vmem:[%s198 + $0x2868] sm:$0xff]
                %1495 = vst [vmem:[%s199 + $0x1438] sm:$0xff] %v1494
                %v1496 = vld [vmem:[%s198 + $0x2880] sm:$0xff]
                %1497 = vst [vmem:[%s199 + $0x1440] sm:$0xff] %v1496
                %v1498 = vld [vmem:[%s198 + $0x2888] sm:$0xff]
                %1499 = vst [vmem:[%s199 + $0x1448] sm:$0xff] %v1498
                %v1500 = vld [vmem:[%s198 + $0x28a0] sm:$0xff]
                %1501 = vst [vmem:[%s199 + $0x1450] sm:$0xff] %v1500
                %v1502 = vld [vmem:[%s198 + $0x28a8] sm:$0xff]
                %1503 = vst [vmem:[%s199 + $0x1458] sm:$0xff] %v1502
                %v1504 = vld [vmem:[%s198 + $0x28c0] sm:$0xff]
                %1505 = vst [vmem:[%s199 + $0x1460] sm:$0xff] %v1504
                %v1506 = vld [vmem:[%s198 + $0x28c8] sm:$0xff]
                %1507 = vst [vmem:[%s199 + $0x1468] sm:$0xff] %v1506
                %v1508 = vld [vmem:[%s198 + $0x28e0] sm:$0xff]
                %1509 = vst [vmem:[%s199 + $0x1470] sm:$0xff] %v1508
                %v1510 = vld [vmem:[%s198 + $0x28e8] sm:$0xff]
                %1511 = vst [vmem:[%s199 + $0x1478] sm:$0xff] %v1510
                %v1512 = vld [vmem:[%s198 + $0x2900] sm:$0xff]
                %1513 = vst [vmem:[%s199 + $0x1480] sm:$0xff] %v1512
                %v1514 = vld [vmem:[%s198 + $0x2908] sm:$0xff]
                %1515 = vst [vmem:[%s199 + $0x1488] sm:$0xff] %v1514
                %v1516 = vld [vmem:[%s198 + $0x2920] sm:$0xff]
                %1517 = vst [vmem:[%s199 + $0x1490] sm:$0xff] %v1516
                %v1518 = vld [vmem:[%s198 + $0x2928] sm:$0xff]
                %1519 = vst [vmem:[%s199 + $0x1498] sm:$0xff] %v1518
                %v1520 = vld [vmem:[%s198 + $0x2940] sm:$0xff]
                %1521 = vst [vmem:[%s199 + $0x14a0] sm:$0xff] %v1520
                %v1522 = vld [vmem:[%s198 + $0x2948] sm:$0xff]
                %1523 = vst [vmem:[%s199 + $0x14a8] sm:$0xff] %v1522
                %v1524 = vld [vmem:[%s198 + $0x2960] sm:$0xff]
                %1525 = vst [vmem:[%s199 + $0x14b0] sm:$0xff] %v1524
                %v1526 = vld [vmem:[%s198 + $0x2968] sm:$0xff]
                %1527 = vst [vmem:[%s199 + $0x14b8] sm:$0xff] %v1526
                %v1528 = vld [vmem:[%s198 + $0x2980] sm:$0xff]
                %1529 = vst [vmem:[%s199 + $0x14c0] sm:$0xff] %v1528
                %v1530 = vld [vmem:[%s198 + $0x2988] sm:$0xff]
                %1531 = vst [vmem:[%s199 + $0x14c8] sm:$0xff] %v1530
                %v1532 = vld [vmem:[%s198 + $0x29a0] sm:$0xff]
                %1533 = vst [vmem:[%s199 + $0x14d0] sm:$0xff] %v1532
                %v1534 = vld [vmem:[%s198 + $0x29a8] sm:$0xff]
                %1535 = vst [vmem:[%s199 + $0x14d8] sm:$0xff] %v1534
                %v1536 = vld [vmem:[%s198 + $0x29c0] sm:$0xff]
                %1537 = vst [vmem:[%s199 + $0x14e0] sm:$0xff] %v1536
                %v1538 = vld [vmem:[%s198 + $0x29c8] sm:$0xff]
                %1539 = vst [vmem:[%s199 + $0x14e8] sm:$0xff] %v1538
                %v1540 = vld [vmem:[%s198 + $0x29e0] sm:$0xff]
                %1541 = vst [vmem:[%s199 + $0x14f0] sm:$0xff] %v1540
                %v1542 = vld [vmem:[%s198 + $0x29e8] sm:$0xff]
                %1543 = vst [vmem:[%s199 + $0x14f8] sm:$0xff] %v1542
                %v1544 = vld [vmem:[%s198 + $0x2a00] sm:$0xff]
                %1545 = vst [vmem:[%s199 + $0x1500] sm:$0xff] %v1544
                %v1546 = vld [vmem:[%s198 + $0x2a08] sm:$0xff]
                %1547 = vst [vmem:[%s199 + $0x1508] sm:$0xff] %v1546
                %v1548 = vld [vmem:[%s198 + $0x2a20] sm:$0xff]
                %1549 = vst [vmem:[%s199 + $0x1510] sm:$0xff] %v1548
                %v1550 = vld [vmem:[%s198 + $0x2a28] sm:$0xff]
                %1551 = vst [vmem:[%s199 + $0x1518] sm:$0xff] %v1550
                %v1552 = vld [vmem:[%s198 + $0x2a40] sm:$0xff]
                %1553 = vst [vmem:[%s199 + $0x1520] sm:$0xff] %v1552
                %v1554 = vld [vmem:[%s198 + $0x2a48] sm:$0xff]
                %1555 = vst [vmem:[%s199 + $0x1528] sm:$0xff] %v1554
                %v1556 = vld [vmem:[%s198 + $0x2a60] sm:$0xff]
                %1557 = vst [vmem:[%s199 + $0x1530] sm:$0xff] %v1556
                %v1558 = vld [vmem:[%s198 + $0x2a68] sm:$0xff]
                %1559 = vst [vmem:[%s199 + $0x1538] sm:$0xff] %v1558
                %v1560 = vld [vmem:[%s198 + $0x2a80] sm:$0xff]
                %1561 = vst [vmem:[%s199 + $0x1540] sm:$0xff] %v1560
                %v1562 = vld [vmem:[%s198 + $0x2a88] sm:$0xff]
                %1563 = vst [vmem:[%s199 + $0x1548] sm:$0xff] %v1562
                %v1564 = vld [vmem:[%s198 + $0x2aa0] sm:$0xff]
                %1565 = vst [vmem:[%s199 + $0x1550] sm:$0xff] %v1564
                %v1566 = vld [vmem:[%s198 + $0x2aa8] sm:$0xff]
                %1567 = vst [vmem:[%s199 + $0x1558] sm:$0xff] %v1566
                %v1568 = vld [vmem:[%s198 + $0x2ac0] sm:$0xff]
                %1569 = vst [vmem:[%s199 + $0x1560] sm:$0xff] %v1568
                %v1570 = vld [vmem:[%s198 + $0x2ac8] sm:$0xff]
                %1571 = vst [vmem:[%s199 + $0x1568] sm:$0xff] %v1570
                %v1572 = vld [vmem:[%s198 + $0x2ae0] sm:$0xff]
                %1573 = vst [vmem:[%s199 + $0x1570] sm:$0xff] %v1572
                %v1574 = vld [vmem:[%s198 + $0x2ae8] sm:$0xff]
                %1575 = vst [vmem:[%s199 + $0x1578] sm:$0xff] %v1574
                %v1576 = vld [vmem:[%s198 + $0x2b00] sm:$0xff]
                %1577 = vst [vmem:[%s199 + $0x1580] sm:$0xff] %v1576
                %v1578 = vld [vmem:[%s198 + $0x2b08] sm:$0xff]
                %1579 = vst [vmem:[%s199 + $0x1588] sm:$0xff] %v1578
                %v1580 = vld [vmem:[%s198 + $0x2b20] sm:$0xff]
                %1581 = vst [vmem:[%s199 + $0x1590] sm:$0xff] %v1580
                %v1582 = vld [vmem:[%s198 + $0x2b28] sm:$0xff]
                %1583 = vst [vmem:[%s199 + $0x1598] sm:$0xff] %v1582
                %v1584 = vld [vmem:[%s198 + $0x2b40] sm:$0xff]
                %1585 = vst [vmem:[%s199 + $0x15a0] sm:$0xff] %v1584
                %v1586 = vld [vmem:[%s198 + $0x2b48] sm:$0xff]
                %1587 = vst [vmem:[%s199 + $0x15a8] sm:$0xff] %v1586
                %v1588 = vld [vmem:[%s198 + $0x2b60] sm:$0xff]
                %1589 = vst [vmem:[%s199 + $0x15b0] sm:$0xff] %v1588
                %v1590 = vld [vmem:[%s198 + $0x2b68] sm:$0xff]
                %1591 = vst [vmem:[%s199 + $0x15b8] sm:$0xff] %v1590
                %v1592 = vld [vmem:[%s198 + $0x2b80] sm:$0xff]
                %1593 = vst [vmem:[%s199 + $0x15c0] sm:$0xff] %v1592
                %v1594 = vld [vmem:[%s198 + $0x2b88] sm:$0xff]
                %1595 = vst [vmem:[%s199 + $0x15c8] sm:$0xff] %v1594
                %v1596 = vld [vmem:[%s198 + $0x2ba0] sm:$0xff]
                %1597 = vst [vmem:[%s199 + $0x15d0] sm:$0xff] %v1596
                %v1598 = vld [vmem:[%s198 + $0x2ba8] sm:$0xff]
                %1599 = vst [vmem:[%s199 + $0x15d8] sm:$0xff] %v1598
                %v1600 = vld [vmem:[%s198 + $0x2bc0] sm:$0xff]
                %1601 = vst [vmem:[%s199 + $0x15e0] sm:$0xff] %v1600
                %v1602 = vld [vmem:[%s198 + $0x2bc8] sm:$0xff]
                %1603 = vst [vmem:[%s199 + $0x15e8] sm:$0xff] %v1602
                %v1604 = vld [vmem:[%s198 + $0x2be0] sm:$0xff]
                %1605 = vst [vmem:[%s199 + $0x15f0] sm:$0xff] %v1604
                %v1606 = vld [vmem:[%s198 + $0x2be8] sm:$0xff]
                %1607 = vst [vmem:[%s199 + $0x15f8] sm:$0xff] %v1606
                %v1608 = vld [vmem:[%s198 + $0x2c00] sm:$0xff]
                %1609 = vst [vmem:[%s199 + $0x1600] sm:$0xff] %v1608
                %v1610 = vld [vmem:[%s198 + $0x2c08] sm:$0xff]
                %1611 = vst [vmem:[%s199 + $0x1608] sm:$0xff] %v1610
                %v1612 = vld [vmem:[%s198 + $0x2c20] sm:$0xff]
                %1613 = vst [vmem:[%s199 + $0x1610] sm:$0xff] %v1612
                %v1614 = vld [vmem:[%s198 + $0x2c28] sm:$0xff]
                %1615 = vst [vmem:[%s199 + $0x1618] sm:$0xff] %v1614
                %v1616 = vld [vmem:[%s198 + $0x2c40] sm:$0xff]
                %1617 = vst [vmem:[%s199 + $0x1620] sm:$0xff] %v1616
                %v1618 = vld [vmem:[%s198 + $0x2c48] sm:$0xff]
                %1619 = vst [vmem:[%s199 + $0x1628] sm:$0xff] %v1618
                %v1620 = vld [vmem:[%s198 + $0x2c60] sm:$0xff]
                %1621 = vst [vmem:[%s199 + $0x1630] sm:$0xff] %v1620
                %v1622 = vld [vmem:[%s198 + $0x2c68] sm:$0xff]
                %1623 = vst [vmem:[%s199 + $0x1638] sm:$0xff] %v1622
                %v1624 = vld [vmem:[%s198 + $0x2c80] sm:$0xff]
                %1625 = vst [vmem:[%s199 + $0x1640] sm:$0xff] %v1624
                %v1626 = vld [vmem:[%s198 + $0x2c88] sm:$0xff]
                %1627 = vst [vmem:[%s199 + $0x1648] sm:$0xff] %v1626
                %v1628 = vld [vmem:[%s198 + $0x2ca0] sm:$0xff]
                %1629 = vst [vmem:[%s199 + $0x1650] sm:$0xff] %v1628
                %v1630 = vld [vmem:[%s198 + $0x2ca8] sm:$0xff]
                %1631 = vst [vmem:[%s199 + $0x1658] sm:$0xff] %v1630
                %v1632 = vld [vmem:[%s198 + $0x2cc0] sm:$0xff]
                %1633 = vst [vmem:[%s199 + $0x1660] sm:$0xff] %v1632
                %v1634 = vld [vmem:[%s198 + $0x2cc8] sm:$0xff]
                %1635 = vst [vmem:[%s199 + $0x1668] sm:$0xff] %v1634
                %v1636 = vld [vmem:[%s198 + $0x2ce0] sm:$0xff]
                %1637 = vst [vmem:[%s199 + $0x1670] sm:$0xff] %v1636
                %v1638 = vld [vmem:[%s198 + $0x2ce8] sm:$0xff]
                %1639 = vst [vmem:[%s199 + $0x1678] sm:$0xff] %v1638
                %v1640 = vld [vmem:[%s198 + $0x2d00] sm:$0xff]
                %1641 = vst [vmem:[%s199 + $0x1680] sm:$0xff] %v1640
                %v1642 = vld [vmem:[%s198 + $0x2d08] sm:$0xff]
                %1643 = vst [vmem:[%s199 + $0x1688] sm:$0xff] %v1642
                %v1644 = vld [vmem:[%s198 + $0x2d20] sm:$0xff]
                %1645 = vst [vmem:[%s199 + $0x1690] sm:$0xff] %v1644
                %v1646 = vld [vmem:[%s198 + $0x2d28] sm:$0xff]
                %1647 = vst [vmem:[%s199 + $0x1698] sm:$0xff] %v1646
                %v1648 = vld [vmem:[%s198 + $0x2d40] sm:$0xff]
                %1649 = vst [vmem:[%s199 + $0x16a0] sm:$0xff] %v1648
                %v1650 = vld [vmem:[%s198 + $0x2d48] sm:$0xff]
                %1651 = vst [vmem:[%s199 + $0x16a8] sm:$0xff] %v1650
                %v1652 = vld [vmem:[%s198 + $0x2d60] sm:$0xff]
                %1653 = vst [vmem:[%s199 + $0x16b0] sm:$0xff] %v1652
                %v1654 = vld [vmem:[%s198 + $0x2d68] sm:$0xff]
                %1655 = vst [vmem:[%s199 + $0x16b8] sm:$0xff] %v1654
                %v1656 = vld [vmem:[%s198 + $0x2d80] sm:$0xff]
                %1657 = vst [vmem:[%s199 + $0x16c0] sm:$0xff] %v1656
                %v1658 = vld [vmem:[%s198 + $0x2d88] sm:$0xff]
                %1659 = vst [vmem:[%s199 + $0x16c8] sm:$0xff] %v1658
                %v1660 = vld [vmem:[%s198 + $0x2da0] sm:$0xff]
                %1661 = vst [vmem:[%s199 + $0x16d0] sm:$0xff] %v1660
                %v1662 = vld [vmem:[%s198 + $0x2da8] sm:$0xff]
                %1663 = vst [vmem:[%s199 + $0x16d8] sm:$0xff] %v1662
                %v1664 = vld [vmem:[%s198 + $0x2dc0] sm:$0xff]
                %1665 = vst [vmem:[%s199 + $0x16e0] sm:$0xff] %v1664
                %v1666 = vld [vmem:[%s198 + $0x2dc8] sm:$0xff]
                %1667 = vst [vmem:[%s199 + $0x16e8] sm:$0xff] %v1666
                %v1668 = vld [vmem:[%s198 + $0x2de0] sm:$0xff]
                %1669 = vst [vmem:[%s199 + $0x16f0] sm:$0xff] %v1668
                %v1670 = vld [vmem:[%s198 + $0x2de8] sm:$0xff]
                %1671 = vst [vmem:[%s199 + $0x16f8] sm:$0xff] %v1670
                %v1672 = vld [vmem:[%s198 + $0x2e00] sm:$0xff]
                %1673 = vst [vmem:[%s199 + $0x1700] sm:$0xff] %v1672
                %v1674 = vld [vmem:[%s198 + $0x2e08] sm:$0xff]
                %1675 = vst [vmem:[%s199 + $0x1708] sm:$0xff] %v1674
                %v1676 = vld [vmem:[%s198 + $0x2e20] sm:$0xff]
                %1677 = vst [vmem:[%s199 + $0x1710] sm:$0xff] %v1676
                %v1678 = vld [vmem:[%s198 + $0x2e28] sm:$0xff]
                %1679 = vst [vmem:[%s199 + $0x1718] sm:$0xff] %v1678
                %v1680 = vld [vmem:[%s198 + $0x2e40] sm:$0xff]
                %1681 = vst [vmem:[%s199 + $0x1720] sm:$0xff] %v1680
                %v1682 = vld [vmem:[%s198 + $0x2e48] sm:$0xff]
                %1683 = vst [vmem:[%s199 + $0x1728] sm:$0xff] %v1682
                %v1684 = vld [vmem:[%s198 + $0x2e60] sm:$0xff]
                %1685 = vst [vmem:[%s199 + $0x1730] sm:$0xff] %v1684
                %v1686 = vld [vmem:[%s198 + $0x2e68] sm:$0xff]
                %1687 = vst [vmem:[%s199 + $0x1738] sm:$0xff] %v1686
                %v1688 = vld [vmem:[%s198 + $0x2e80] sm:$0xff]
                %1689 = vst [vmem:[%s199 + $0x1740] sm:$0xff] %v1688
                %v1690 = vld [vmem:[%s198 + $0x2e88] sm:$0xff]
                %1691 = vst [vmem:[%s199 + $0x1748] sm:$0xff] %v1690
                %v1692 = vld [vmem:[%s198 + $0x2ea0] sm:$0xff]
                %1693 = vst [vmem:[%s199 + $0x1750] sm:$0xff] %v1692
                %v1694 = vld [vmem:[%s198 + $0x2ea8] sm:$0xff]
                %1695 = vst [vmem:[%s199 + $0x1758] sm:$0xff] %v1694
                %v1696 = vld [vmem:[%s198 + $0x2ec0] sm:$0xff]
                %1697 = vst [vmem:[%s199 + $0x1760] sm:$0xff] %v1696
                %v1698 = vld [vmem:[%s198 + $0x2ec8] sm:$0xff]
                %1699 = vst [vmem:[%s199 + $0x1768] sm:$0xff] %v1698
                %v1700 = vld [vmem:[%s198 + $0x2ee0] sm:$0xff]
                %1701 = vst [vmem:[%s199 + $0x1770] sm:$0xff] %v1700
                %v1702 = vld [vmem:[%s198 + $0x2ee8] sm:$0xff]
                %1703 = vst [vmem:[%s199 + $0x1778] sm:$0xff] %v1702
                %v1704 = vld [vmem:[%s198 + $0x2f00] sm:$0xff]
                %1705 = vst [vmem:[%s199 + $0x1780] sm:$0xff] %v1704
                %v1706 = vld [vmem:[%s198 + $0x2f08] sm:$0xff]
                %1707 = vst [vmem:[%s199 + $0x1788] sm:$0xff] %v1706
                %v1708 = vld [vmem:[%s198 + $0x2f20] sm:$0xff]
                %1709 = vst [vmem:[%s199 + $0x1790] sm:$0xff] %v1708
                %v1710 = vld [vmem:[%s198 + $0x2f28] sm:$0xff]
                %1711 = vst [vmem:[%s199 + $0x1798] sm:$0xff] %v1710
                %v1712 = vld [vmem:[%s198 + $0x2f40] sm:$0xff]
                %1713 = vst [vmem:[%s199 + $0x17a0] sm:$0xff] %v1712
                %v1714 = vld [vmem:[%s198 + $0x2f48] sm:$0xff]
                %1715 = vst [vmem:[%s199 + $0x17a8] sm:$0xff] %v1714
                %v1716 = vld [vmem:[%s198 + $0x2f60] sm:$0xff]
                %1717 = vst [vmem:[%s199 + $0x17b0] sm:$0xff] %v1716
                %v1718 = vld [vmem:[%s198 + $0x2f68] sm:$0xff]
                %1719 = vst [vmem:[%s199 + $0x17b8] sm:$0xff] %v1718
                %v1720 = vld [vmem:[%s198 + $0x2f80] sm:$0xff]
                %1721 = vst [vmem:[%s199 + $0x17c0] sm:$0xff] %v1720
                %v1722 = vld [vmem:[%s198 + $0x2f88] sm:$0xff]
                %1723 = vst [vmem:[%s199 + $0x17c8] sm:$0xff] %v1722
                %v1724 = vld [vmem:[%s198 + $0x2fa0] sm:$0xff]
                %1725 = vst [vmem:[%s199 + $0x17d0] sm:$0xff] %v1724
                %v1726 = vld [vmem:[%s198 + $0x2fa8] sm:$0xff]
                %1727 = vst [vmem:[%s199 + $0x17d8] sm:$0xff] %v1726
                %v1728 = vld [vmem:[%s198 + $0x2fc0] sm:$0xff]
                %1729 = vst [vmem:[%s199 + $0x17e0] sm:$0xff] %v1728
                %v1730 = vld [vmem:[%s198 + $0x2fc8] sm:$0xff]
                %1731 = vst [vmem:[%s199 + $0x17e8] sm:$0xff] %v1730
                %v1732 = vld [vmem:[%s198 + $0x2fe0] sm:$0xff]
                %1733 = vst [vmem:[%s199 + $0x17f0] sm:$0xff] %v1732
                %v1734 = vld [vmem:[%s198 + $0x2fe8] sm:$0xff]
                %1735 = vst [vmem:[%s199 + $0x17f8] sm:$0xff] %v1734
                %v1736 = vld [vmem:[%s198 + $0x3000] sm:$0xff]
                %1737 = vst [vmem:[%s199 + $0x1800] sm:$0xff] %v1736
                %v1738 = vld [vmem:[%s198 + $0x3008] sm:$0xff]
                %1739 = vst [vmem:[%s199 + $0x1808] sm:$0xff] %v1738
                %v1740 = vld [vmem:[%s198 + $0x3020] sm:$0xff]
                %1741 = vst [vmem:[%s199 + $0x1810] sm:$0xff] %v1740
                %v1742 = vld [vmem:[%s198 + $0x3028] sm:$0xff]
                %1743 = vst [vmem:[%s199 + $0x1818] sm:$0xff] %v1742
                %v1744 = vld [vmem:[%s198 + $0x3040] sm:$0xff]
                %1745 = vst [vmem:[%s199 + $0x1820] sm:$0xff] %v1744
                %v1746 = vld [vmem:[%s198 + $0x3048] sm:$0xff]
                %1747 = vst [vmem:[%s199 + $0x1828] sm:$0xff] %v1746
                %v1748 = vld [vmem:[%s198 + $0x3060] sm:$0xff]
                %1749 = vst [vmem:[%s199 + $0x1830] sm:$0xff] %v1748
                %v1750 = vld [vmem:[%s198 + $0x3068] sm:$0xff]
                %1751 = vst [vmem:[%s199 + $0x1838] sm:$0xff] %v1750
                %v1752 = vld [vmem:[%s198 + $0x3080] sm:$0xff]
                %1753 = vst [vmem:[%s199 + $0x1840] sm:$0xff] %v1752
                %v1754 = vld [vmem:[%s198 + $0x3088] sm:$0xff]
                %1755 = vst [vmem:[%s199 + $0x1848] sm:$0xff] %v1754
                %v1756 = vld [vmem:[%s198 + $0x30a0] sm:$0xff]
                %1757 = vst [vmem:[%s199 + $0x1850] sm:$0xff] %v1756
                %v1758 = vld [vmem:[%s198 + $0x30a8] sm:$0xff]
                %1759 = vst [vmem:[%s199 + $0x1858] sm:$0xff] %v1758
                %v1760 = vld [vmem:[%s198 + $0x30c0] sm:$0xff]
                %1761 = vst [vmem:[%s199 + $0x1860] sm:$0xff] %v1760
                %v1762 = vld [vmem:[%s198 + $0x30c8] sm:$0xff]
                %1763 = vst [vmem:[%s199 + $0x1868] sm:$0xff] %v1762
                %v1764 = vld [vmem:[%s198 + $0x30e0] sm:$0xff]
                %1765 = vst [vmem:[%s199 + $0x1870] sm:$0xff] %v1764
                %v1766 = vld [vmem:[%s198 + $0x30e8] sm:$0xff]
                %1767 = vst [vmem:[%s199 + $0x1878] sm:$0xff] %v1766
              $region41: #{convnet_forward.5} parent=35 // loop_footer
                %s197 = sadd.s32 1, %s193
              $region42: #{convnet_forward.5} parent=35 // loop_footer_branch
                %192 = sbr.rel target = $region38
              $region43: #{convnet_forward.5} parent=35 // loop_exit
                _
            $region36: #{convnet_forward.5} parent=31 // pred_fallthru
              _
            // Predicated region
            $region44: #{convnet_forward.5} parent=31 // pred_check
              _
            $region45: #{convnet_forward.5} parent=31 // pred_check_branch
              %1769 = sbr.rel target = $region47
            $region46: #{convnet_forward.5} parent=31 // pred_region
              _
            $region47: #{convnet_forward.5} parent=31 // pred_fallthru
              _
          $region32: #{convnet_forward.5} parent=27 // pred_fallthru
            _
          %1770 = vnop
        $region28: #{convnet_forward.5} parent=23 // pred_fallthru
          _
        // Predicated region
        $region48: #{convnet_forward.5} parent=23 // pred_check
          %p1771 = pneg %p79
        $region49: #{convnet_forward.5} parent=23 // pred_check_branch
          %1773 = sbr.rel (%p1771) target = $region51
        $region50: #{convnet_forward.5} parent=23 // pred_region
          %s1774 = smul.u32 4, %s12
          %p1775 = scmp.lt.s32.totalorder %s1774, 7
          %s1776 = scalar_select %p1775, %s1774, 7
          %s1777 = scalar_lea.vmem %s2, %s1776
          %s1778 = smul.u32 4, %s12
        $region51: #{convnet_forward.5} parent=23 // pred_fallthru
          _
        // Predicated region
        $region52: #{convnet_forward.5} parent=23 // pred_check
          %p1779 = pneg %p105
        $region53: #{convnet_forward.5} parent=23 // pred_check_branch
          %1781 = sbr.rel (%p1779) target = $region55
        $region54: #{convnet_forward.5} parent=23 // pred_region
          %s1782 = smul.u32 64, %s12
          %p1783 = scmp.lt.s32.totalorder %s1782, 127
          %s1784 = scalar_select %p1783, %s1782, 127
          %s1785 = smul.addr %s1784, 4
          %s1786 = scalar_lea.vmem %s3, %s1785
          %s1787 = smul.u32 64, %s12
        $region55: #{convnet_forward.5} parent=23 // pred_fallthru
          _
      $region24: #{convnet_forward.5} parent=5 // pred_fallthru
        _
      %p1788 = scmp.le.s32.totalorder 1, %s12
      %p1789 = scmp.lt.s32.totalorder %s12, 3
      %p1790 = pnand %p1788, %p1789
      %p1791 = pneg %p1790
      // Predicated region
      $region56: #{convnet_forward.5} parent=5 // pred_check
        _
      $region57: #{convnet_forward.5} parent=5 // pred_check_branch
        %1793 = sbr.rel (%p1790) target = $region59
      $region58: #{convnet_forward.5} parent=5 // pred_region
        %s1794 = ssub.s32 %s12, 1
        %s1795 = sand.u32 %s46, 1
        %s1796 = sand.u32 %s46, 1
        %s1797 = smul.addr %s1796, 6272
        %s1798 = scalar_lea.vmem [#allocation2], %s1797
        // Predicated region
        $region60: #{convnet_forward.5} parent=58 // pred_check
          %p1799 = pneg %p59
        $region61: #{convnet_forward.5} parent=58 // pred_check_branch
          %1801 = sbr.rel (%p1799) target = $region63
        $region62: #{convnet_forward.5} parent=58 // pred_region
          _
        $region63: #{convnet_forward.5} parent=58 // pred_fallthru
          _
        %p1802 = pneg %p33
        %p1803 = pneg %p30
        %s1804 = sand.u32 %s46, 1
        %s1805 = sand.u32 %s46, 1
        %s1806 = smul.addr %s1805, 6272
        %s1807 = scalar_lea.vmem [#allocation2], %s1806
        %p1808 = pneg %p59
        %p1809 = pneg %p56
        %s1810 = smul.u32 4, %s17
        %p1811 = scmp.lt.s32.totalorder %s1810, 7
        %s1812 = scalar_select %p1811, %s1810, 7
        %s1813 = scalar_lea.vmem %s2, %s1812
        %p1814 = pneg %p85
        %p1815 = pneg %p82
        %s1816 = smul.u32 64, %s17
        %p1817 = scmp.lt.s32.totalorder %s1816, 127
        %s1818 = scalar_select %p1817, %s1816, 127
        %s1819 = smul.addr %s1818, 4
        %s1820 = scalar_lea.vmem %s3, %s1819
        %p1821 = pneg %p111
        %p1822 = pneg %p108
        %p1823 = pneg %p132
        %p1824 = pneg %p129
        %p1825 = pneg %p153
        %p1826 = pneg %p150
        %s1827 = smul.u32 4, %s17
        %s1828 = smul.u32 4, %s17
        %p1829 = scmp.lt.s32.totalorder %s1828, 7
        %s1830 = scalar_select %p1829, %s1828, 7
        %s1831 = scalar_lea.vmem %s2, %s1830
        %s1832 = smul.u32 4, %s17
        %s1833 = smul.u32 64, %s17
        %p1834 = scmp.lt.s32.totalorder %s1833, 127
        %s1835 = scalar_select %p1834, %s1833, 127
        %s1836 = smul.addr %s1835, 4
        %s1837 = scalar_lea.vmem %s3, %s1836
        %s1838 = smul.u32 64, %s17
        %p1840 = scmp.eq.s32.totalorder %s17, 0
        // Predicated region
        $region64: #{convnet_forward.5} parent=58 // pred_check
          %p1841 = pneg %p1840
        $region65: #{convnet_forward.5} parent=58 // pred_check_branch
          %1843 = sbr.rel (%p1841) target = $region67
        $region66: #{convnet_forward.5} parent=58 // pred_region
          %1844 = vst [vmem:[#allocation3] sm:$0x3] 0.0
        $region67: #{convnet_forward.5} parent=58 // pred_fallthru
          _
        %v1845 = vld [vmem:[%s0] sm:$0xff]
        %v1846 = vld [vmem:[%s0 + $0x8] sm:$0xff]
        %v1847 = vld [vmem:[%s0 + $0x10] sm:$0xff]
        %v1848 = vld [vmem:[%s0 + $0x18] sm:$0x1]
        %v1849 = vld [vmem:[%s1798] sm:$0xff]
        %v1850 = vld [vmem:[%s1798 + $0x8] sm:$0xff]
        %v1851 = vld [vmem:[%s1798 + $0x10] sm:$0xff]
        %v1852 = vld [vmem:[%s1798 + $0x18] sm:$0xff]
        %v1853 = vld [vmem:[%s1798 + $0x20] sm:$0xff]
        %v1854 = vld [vmem:[%s1798 + $0x28] sm:$0xff]
        %v1855 = vld [vmem:[%s1798 + $0x30] sm:$0xff]
        %v1856 = vld [vmem:[%s1798 + $0x38] sm:$0xff]
        %v1857 = vld [vmem:[%s1798 + $0x40] sm:$0xff]
        %v1858 = vld [vmem:[%s1798 + $0x48] sm:$0xff]
        %v1859 = vld [vmem:[%s1798 + $0x50] sm:$0xff]
        %v1860 = vld [vmem:[%s1798 + $0x58] sm:$0xff]
        %v1861 = vld [vmem:[%s1798 + $0x60] sm:$0xff]
        %v1862 = vld [vmem:[%s1798 + $0x68] sm:$0xff]
        %v1863 = vld [vmem:[%s1798 + $0x70] sm:$0xff]
        %v1864 = vld [vmem:[%s1798 + $0x78] sm:$0xff]
        %v1865 = vld [vmem:[%s1798 + $0x80] sm:$0xff]
        %v1866 = vld [vmem:[%s1798 + $0x88] sm:$0xff]
        %v1867 = vld [vmem:[%s1798 + $0x90] sm:$0xff]
        %v1868 = vld [vmem:[%s1798 + $0x98] sm:$0xff]
        %v1869 = vld [vmem:[%s1798 + $0xa0] sm:$0xff]
        %v1870 = vld [vmem:[%s1798 + $0xa8] sm:$0xff]
        %v1871 = vld [vmem:[%s1798 + $0xb0] sm:$0xff]
        %v1872 = vld [vmem:[%s1798 + $0xb8] sm:$0xff]
        %v1873 = vld [vmem:[%s1798 + $0xc0] sm:$0xff]
        %v1874 = vld [vmem:[%s1798 + $0xc8] sm:$0xff]
        %v1875 = vld [vmem:[%s1798 + $0xd0] sm:$0xff]
        %v1876 = vld [vmem:[%s1798 + $0xd8] sm:$0xff]
        %v1877 = vld [vmem:[%s1798 + $0xe0] sm:$0xff]
        %v1878 = vld [vmem:[%s1798 + $0xe8] sm:$0xff]
        %v1879 = vld [vmem:[%s1798 + $0xf0] sm:$0xff]
        %v1880 = vld [vmem:[%s1798 + $0xf8] sm:$0xff]
        %v1881 = vld [vmem:[%s1798 + $0x100] sm:$0xff]
        %v1882 = vld [vmem:[%s1798 + $0x108] sm:$0xff]
        %v1883 = vld [vmem:[%s1798 + $0x110] sm:$0xff]
        %v1884 = vld [vmem:[%s1798 + $0x118] sm:$0xff]
        %v1885 = vld [vmem:[%s1798 + $0x120] sm:$0xff]
        %v1886 = vld [vmem:[%s1798 + $0x128] sm:$0xff]
        %v1887 = vld [vmem:[%s1798 + $0x130] sm:$0xff]
        %v1888 = vld [vmem:[%s1798 + $0x138] sm:$0xff]
        %v1889 = vld [vmem:[%s1798 + $0x140] sm:$0xff]
        %v1890 = vld [vmem:[%s1798 + $0x148] sm:$0xff]
        %v1891 = vld [vmem:[%s1798 + $0x150] sm:$0xff]
        %v1892 = vld [vmem:[%s1798 + $0x158] sm:$0xff]
        %v1893 = vld [vmem:[%s1798 + $0x160] sm:$0xff]
        %v1894 = vld [vmem:[%s1798 + $0x168] sm:$0xff]
        %v1895 = vld [vmem:[%s1798 + $0x170] sm:$0xff]
        %v1896 = vld [vmem:[%s1798 + $0x178] sm:$0xff]
        %v1897 = vld [vmem:[%s1798 + $0x180] sm:$0xff]
        %v1898 = vld [vmem:[%s1798 + $0x188] sm:$0xff]
        %v1899 = vld [vmem:[%s1798 + $0x190] sm:$0xff]
        %v1900 = vld [vmem:[%s1798 + $0x198] sm:$0xff]
        %v1901 = vld [vmem:[%s1798 + $0x1a0] sm:$0xff]
        %v1902 = vld [vmem:[%s1798 + $0x1a8] sm:$0xff]
        %v1903 = vld [vmem:[%s1798 + $0x1b0] sm:$0xff]
        %v1904 = vld [vmem:[%s1798 + $0x1b8] sm:$0xff]
        %v1905 = vld [vmem:[%s1798 + $0x1c0] sm:$0xff]
        %v1906 = vld [vmem:[%s1798 + $0x1c8] sm:$0xff]
        %v1907 = vld [vmem:[%s1798 + $0x1d0] sm:$0xff]
        %v1908 = vld [vmem:[%s1798 + $0x1d8] sm:$0xff]
        %v1909 = vld [vmem:[%s1798 + $0x1e0] sm:$0xff]
        %v1910 = vld [vmem:[%s1798 + $0x1e8] sm:$0xff]
        %v1911 = vld [vmem:[%s1798 + $0x1f0] sm:$0xff]
        %v1912 = vld [vmem:[%s1798 + $0x1f8] sm:$0xff]
        %v1913 = vld [vmem:[%s1798 + $0x200] sm:$0xff]
        %v1914 = vld [vmem:[%s1798 + $0x208] sm:$0xff]
        %v1915 = vld [vmem:[%s1798 + $0x210] sm:$0xff]
        %v1916 = vld [vmem:[%s1798 + $0x218] sm:$0xff]
        %v1917 = vld [vmem:[%s1798 + $0x220] sm:$0xff]
        %v1918 = vld [vmem:[%s1798 + $0x228] sm:$0xff]
        %v1919 = vld [vmem:[%s1798 + $0x230] sm:$0xff]
        %v1920 = vld [vmem:[%s1798 + $0x238] sm:$0xff]
        %v1921 = vld [vmem:[%s1798 + $0x240] sm:$0xff]
        %v1922 = vld [vmem:[%s1798 + $0x248] sm:$0xff]
        %v1923 = vld [vmem:[%s1798 + $0x250] sm:$0xff]
        %v1924 = vld [vmem:[%s1798 + $0x258] sm:$0xff]
        %v1925 = vld [vmem:[%s1798 + $0x260] sm:$0xff]
        %v1926 = vld [vmem:[%s1798 + $0x268] sm:$0xff]
        %v1927 = vld [vmem:[%s1798 + $0x270] sm:$0xff]
        %v1928 = vld [vmem:[%s1798 + $0x278] sm:$0xff]
        %v1929 = vld [vmem:[%s1798 + $0x280] sm:$0xff]
        %v1930 = vld [vmem:[%s1798 + $0x288] sm:$0xff]
        %v1931 = vld [vmem:[%s1798 + $0x290] sm:$0xff]
        %v1932 = vld [vmem:[%s1798 + $0x298] sm:$0xff]
        %v1933 = vld [vmem:[%s1798 + $0x2a0] sm:$0xff]
        %v1934 = vld [vmem:[%s1798 + $0x2a8] sm:$0xff]
        %v1935 = vld [vmem:[%s1798 + $0x2b0] sm:$0xff]
        %v1936 = vld [vmem:[%s1798 + $0x2b8] sm:$0xff]
        %v1937 = vld [vmem:[%s1798 + $0x2c0] sm:$0xff]
        %v1938 = vld [vmem:[%s1798 + $0x2c8] sm:$0xff]
        %v1939 = vld [vmem:[%s1798 + $0x2d0] sm:$0xff]
        %v1940 = vld [vmem:[%s1798 + $0x2d8] sm:$0xff]
        %v1941 = vld [vmem:[%s1798 + $0x2e0] sm:$0xff]
        %v1942 = vld [vmem:[%s1798 + $0x2e8] sm:$0xff]
        %v1943 = vld [vmem:[%s1798 + $0x2f0] sm:$0xff]
        %v1944 = vld [vmem:[%s1798 + $0x2f8] sm:$0xff]
        %v1945 = vld [vmem:[%s1798 + $0x300] sm:$0xff]
        %v1946 = vld [vmem:[%s1798 + $0x308] sm:$0xff]
        %v1947 = vld [vmem:[%s1798 + $0x310] sm:$0xff]
        %v1948 = vld [vmem:[%s1798 + $0x318] sm:$0xff]
        %v1949 = vld [vmem:[%s1798 + $0x320] sm:$0xff]
        %v1950 = vld [vmem:[%s1798 + $0x328] sm:$0xff]
        %v1951 = vld [vmem:[%s1798 + $0x330] sm:$0xff]
        %v1952 = vld [vmem:[%s1798 + $0x338] sm:$0xff]
        %v1953 = vld [vmem:[%s1798 + $0x340] sm:$0xff]
        %v1954 = vld [vmem:[%s1798 + $0x348] sm:$0xff]
        %v1955 = vld [vmem:[%s1798 + $0x350] sm:$0xff]
        %v1956 = vld [vmem:[%s1798 + $0x358] sm:$0xff]
        %v1957 = vld [vmem:[%s1798 + $0x360] sm:$0xff]
        %v1958 = vld [vmem:[%s1798 + $0x368] sm:$0xff]
        %v1959 = vld [vmem:[%s1798 + $0x370] sm:$0xff]
        %v1960 = vld [vmem:[%s1798 + $0x378] sm:$0xff]
        %v1961 = vld [vmem:[%s1798 + $0x380] sm:$0xff]
        %v1962 = vld [vmem:[%s1798 + $0x388] sm:$0xff]
        %v1963 = vld [vmem:[%s1798 + $0x390] sm:$0xff]
        %v1964 = vld [vmem:[%s1798 + $0x398] sm:$0xff]
        %v1965 = vld [vmem:[%s1798 + $0x3a0] sm:$0xff]
        %v1966 = vld [vmem:[%s1798 + $0x3a8] sm:$0xff]
        %v1967 = vld [vmem:[%s1798 + $0x3b0] sm:$0xff]
        %v1968 = vld [vmem:[%s1798 + $0x3b8] sm:$0xff]
        %v1969 = vld [vmem:[%s1798 + $0x3c0] sm:$0xff]
        %v1970 = vld [vmem:[%s1798 + $0x3c8] sm:$0xff]
        %v1971 = vld [vmem:[%s1798 + $0x3d0] sm:$0xff]
        %v1972 = vld [vmem:[%s1798 + $0x3d8] sm:$0xff]
        %v1973 = vld [vmem:[%s1798 + $0x3e0] sm:$0xff]
        %v1974 = vld [vmem:[%s1798 + $0x3e8] sm:$0xff]
        %v1975 = vld [vmem:[%s1798 + $0x3f0] sm:$0xff]
        %v1976 = vld [vmem:[%s1798 + $0x3f8] sm:$0xff]
        %v1977 = vld [vmem:[%s1798 + $0x400] sm:$0xff]
        %v1978 = vld [vmem:[%s1798 + $0x408] sm:$0xff]
        %v1979 = vld [vmem:[%s1798 + $0x410] sm:$0xff]
        %v1980 = vld [vmem:[%s1798 + $0x418] sm:$0xff]
        %v1981 = vld [vmem:[%s1798 + $0x420] sm:$0xff]
        %v1982 = vld [vmem:[%s1798 + $0x428] sm:$0xff]
        %v1983 = vld [vmem:[%s1798 + $0x430] sm:$0xff]
        %v1984 = vld [vmem:[%s1798 + $0x438] sm:$0xff]
        %v1985 = vld [vmem:[%s1798 + $0x440] sm:$0xff]
        %v1986 = vld [vmem:[%s1798 + $0x448] sm:$0xff]
        %v1987 = vld [vmem:[%s1798 + $0x450] sm:$0xff]
        %v1988 = vld [vmem:[%s1798 + $0x458] sm:$0xff]
        %v1989 = vld [vmem:[%s1798 + $0x460] sm:$0xff]
        %v1990 = vld [vmem:[%s1798 + $0x468] sm:$0xff]
        %v1991 = vld [vmem:[%s1798 + $0x470] sm:$0xff]
        %v1992 = vld [vmem:[%s1798 + $0x478] sm:$0xff]
        %v1993 = vld [vmem:[%s1798 + $0x480] sm:$0xff]
        %v1994 = vld [vmem:[%s1798 + $0x488] sm:$0xff]
        %v1995 = vld [vmem:[%s1798 + $0x490] sm:$0xff]
        %v1996 = vld [vmem:[%s1798 + $0x498] sm:$0xff]
        %v1997 = vld [vmem:[%s1798 + $0x4a0] sm:$0xff]
        %v1998 = vld [vmem:[%s1798 + $0x4a8] sm:$0xff]
        %v1999 = vld [vmem:[%s1798 + $0x4b0] sm:$0xff]
        %v2000 = vld [vmem:[%s1798 + $0x4b8] sm:$0xff]
        %v2001 = vld [vmem:[%s1798 + $0x4c0] sm:$0xff]
        %v2002 = vld [vmem:[%s1798 + $0x4c8] sm:$0xff]
        %v2003 = vld [vmem:[%s1798 + $0x4d0] sm:$0xff]
        %v2004 = vld [vmem:[%s1798 + $0x4d8] sm:$0xff]
        %v2005 = vld [vmem:[%s1798 + $0x4e0] sm:$0xff]
        %v2006 = vld [vmem:[%s1798 + $0x4e8] sm:$0xff]
        %v2007 = vld [vmem:[%s1798 + $0x4f0] sm:$0xff]
        %v2008 = vld [vmem:[%s1798 + $0x4f8] sm:$0xff]
        %v2009 = vld [vmem:[%s1798 + $0x500] sm:$0xff]
        %v2010 = vld [vmem:[%s1798 + $0x508] sm:$0xff]
        %v2011 = vld [vmem:[%s1798 + $0x510] sm:$0xff]
        %v2012 = vld [vmem:[%s1798 + $0x518] sm:$0xff]
        %v2013 = vld [vmem:[%s1798 + $0x520] sm:$0xff]
        %v2014 = vld [vmem:[%s1798 + $0x528] sm:$0xff]
        %v2015 = vld [vmem:[%s1798 + $0x530] sm:$0xff]
        %v2016 = vld [vmem:[%s1798 + $0x538] sm:$0xff]
        %v2017 = vld [vmem:[%s1798 + $0x540] sm:$0xff]
        %v2018 = vld [vmem:[%s1798 + $0x548] sm:$0xff]
        %v2019 = vld [vmem:[%s1798 + $0x550] sm:$0xff]
        %v2020 = vld [vmem:[%s1798 + $0x558] sm:$0xff]
        %v2021 = vld [vmem:[%s1798 + $0x560] sm:$0xff]
        %v2022 = vld [vmem:[%s1798 + $0x568] sm:$0xff]
        %v2023 = vld [vmem:[%s1798 + $0x570] sm:$0xff]
        %v2024 = vld [vmem:[%s1798 + $0x578] sm:$0xff]
        %v2025 = vld [vmem:[%s1798 + $0x580] sm:$0xff]
        %v2026 = vld [vmem:[%s1798 + $0x588] sm:$0xff]
        %v2027 = vld [vmem:[%s1798 + $0x590] sm:$0xff]
        %v2028 = vld [vmem:[%s1798 + $0x598] sm:$0xff]
        %v2029 = vld [vmem:[%s1798 + $0x5a0] sm:$0xff]
        %v2030 = vld [vmem:[%s1798 + $0x5a8] sm:$0xff]
        %v2031 = vld [vmem:[%s1798 + $0x5b0] sm:$0xff]
        %v2032 = vld [vmem:[%s1798 + $0x5b8] sm:$0xff]
        %v2033 = vld [vmem:[%s1798 + $0x5c0] sm:$0xff]
        %v2034 = vld [vmem:[%s1798 + $0x5c8] sm:$0xff]
        %v2035 = vld [vmem:[%s1798 + $0x5d0] sm:$0xff]
        %v2036 = vld [vmem:[%s1798 + $0x5d8] sm:$0xff]
        %v2037 = vld [vmem:[%s1798 + $0x5e0] sm:$0xff]
        %v2038 = vld [vmem:[%s1798 + $0x5e8] sm:$0xff]
        %v2039 = vld [vmem:[%s1798 + $0x5f0] sm:$0xff]
        %v2040 = vld [vmem:[%s1798 + $0x5f8] sm:$0xff]
        %v2041 = vld [vmem:[%s1798 + $0x600] sm:$0xff]
        %v2042 = vld [vmem:[%s1798 + $0x608] sm:$0xff]
        %v2043 = vld [vmem:[%s1798 + $0x610] sm:$0xff]
        %v2044 = vld [vmem:[%s1798 + $0x618] sm:$0xff]
        %v2045 = vld [vmem:[%s1798 + $0x620] sm:$0xff]
        %v2046 = vld [vmem:[%s1798 + $0x628] sm:$0xff]
        %v2047 = vld [vmem:[%s1798 + $0x630] sm:$0xff]
        %v2048 = vld [vmem:[%s1798 + $0x638] sm:$0xff]
        %v2049 = vld [vmem:[%s1798 + $0x640] sm:$0xff]
        %v2050 = vld [vmem:[%s1798 + $0x648] sm:$0xff]
        %v2051 = vld [vmem:[%s1798 + $0x650] sm:$0xff]
        %v2052 = vld [vmem:[%s1798 + $0x658] sm:$0xff]
        %v2053 = vld [vmem:[%s1798 + $0x660] sm:$0xff]
        %v2054 = vld [vmem:[%s1798 + $0x668] sm:$0xff]
        %v2055 = vld [vmem:[%s1798 + $0x670] sm:$0xff]
        %v2056 = vld [vmem:[%s1798 + $0x678] sm:$0xff]
        %v2057 = vld [vmem:[%s1798 + $0x680] sm:$0xff]
        %v2058 = vld [vmem:[%s1798 + $0x688] sm:$0xff]
        %v2059 = vld [vmem:[%s1798 + $0x690] sm:$0xff]
        %v2060 = vld [vmem:[%s1798 + $0x698] sm:$0xff]
        %v2061 = vld [vmem:[%s1798 + $0x6a0] sm:$0xff]
        %v2062 = vld [vmem:[%s1798 + $0x6a8] sm:$0xff]
        %v2063 = vld [vmem:[%s1798 + $0x6b0] sm:$0xff]
        %v2064 = vld [vmem:[%s1798 + $0x6b8] sm:$0xff]
        %v2065 = vld [vmem:[%s1798 + $0x6c0] sm:$0xff]
        %v2066 = vld [vmem:[%s1798 + $0x6c8] sm:$0xff]
        %v2067 = vld [vmem:[%s1798 + $0x6d0] sm:$0xff]
        %v2068 = vld [vmem:[%s1798 + $0x6d8] sm:$0xff]
        %v2069 = vld [vmem:[%s1798 + $0x6e0] sm:$0xff]
        %v2070 = vld [vmem:[%s1798 + $0x6e8] sm:$0xff]
        %v2071 = vld [vmem:[%s1798 + $0x6f0] sm:$0xff]
        %v2072 = vld [vmem:[%s1798 + $0x6f8] sm:$0xff]
        %v2073 = vld [vmem:[%s1798 + $0x700] sm:$0xff]
        %v2074 = vld [vmem:[%s1798 + $0x708] sm:$0xff]
        %v2075 = vld [vmem:[%s1798 + $0x710] sm:$0xff]
        %v2076 = vld [vmem:[%s1798 + $0x718] sm:$0xff]
        %v2077 = vld [vmem:[%s1798 + $0x720] sm:$0xff]
        %v2078 = vld [vmem:[%s1798 + $0x728] sm:$0xff]
        %v2079 = vld [vmem:[%s1798 + $0x730] sm:$0xff]
        %v2080 = vld [vmem:[%s1798 + $0x738] sm:$0xff]
        %v2081 = vld [vmem:[%s1798 + $0x740] sm:$0xff]
        %v2082 = vld [vmem:[%s1798 + $0x748] sm:$0xff]
        %v2083 = vld [vmem:[%s1798 + $0x750] sm:$0xff]
        %v2084 = vld [vmem:[%s1798 + $0x758] sm:$0xff]
        %v2085 = vld [vmem:[%s1798 + $0x760] sm:$0xff]
        %v2086 = vld [vmem:[%s1798 + $0x768] sm:$0xff]
        %v2087 = vld [vmem:[%s1798 + $0x770] sm:$0xff]
        %v2088 = vld [vmem:[%s1798 + $0x778] sm:$0xff]
        %v2089 = vld [vmem:[%s1798 + $0x780] sm:$0xff]
        %v2090 = vld [vmem:[%s1798 + $0x788] sm:$0xff]
        %v2091 = vld [vmem:[%s1798 + $0x790] sm:$0xff]
        %v2092 = vld [vmem:[%s1798 + $0x798] sm:$0xff]
        %v2093 = vld [vmem:[%s1798 + $0x7a0] sm:$0xff]
        %v2094 = vld [vmem:[%s1798 + $0x7a8] sm:$0xff]
        %v2095 = vld [vmem:[%s1798 + $0x7b0] sm:$0xff]
        %v2096 = vld [vmem:[%s1798 + $0x7b8] sm:$0xff]
        %v2097 = vld [vmem:[%s1798 + $0x7c0] sm:$0xff]
        %v2098 = vld [vmem:[%s1798 + $0x7c8] sm:$0xff]
        %v2099 = vld [vmem:[%s1798 + $0x7d0] sm:$0xff]
        %v2100 = vld [vmem:[%s1798 + $0x7d8] sm:$0xff]
        %v2101 = vld [vmem:[%s1798 + $0x7e0] sm:$0xff]
        %v2102 = vld [vmem:[%s1798 + $0x7e8] sm:$0xff]
        %v2103 = vld [vmem:[%s1798 + $0x7f0] sm:$0xff]
        %v2104 = vld [vmem:[%s1798 + $0x7f8] sm:$0xff]
        %v2105 = vld [vmem:[%s1798 + $0x800] sm:$0xff]
        %v2106 = vld [vmem:[%s1798 + $0x808] sm:$0xff]
        %v2107 = vld [vmem:[%s1798 + $0x810] sm:$0xff]
        %v2108 = vld [vmem:[%s1798 + $0x818] sm:$0xff]
        %v2109 = vld [vmem:[%s1798 + $0x820] sm:$0xff]
        %v2110 = vld [vmem:[%s1798 + $0x828] sm:$0xff]
        %v2111 = vld [vmem:[%s1798 + $0x830] sm:$0xff]
        %v2112 = vld [vmem:[%s1798 + $0x838] sm:$0xff]
        %v2113 = vld [vmem:[%s1798 + $0x840] sm:$0xff]
        %v2114 = vld [vmem:[%s1798 + $0x848] sm:$0xff]
        %v2115 = vld [vmem:[%s1798 + $0x850] sm:$0xff]
        %v2116 = vld [vmem:[%s1798 + $0x858] sm:$0xff]
        %v2117 = vld [vmem:[%s1798 + $0x860] sm:$0xff]
        %v2118 = vld [vmem:[%s1798 + $0x868] sm:$0xff]
        %v2119 = vld [vmem:[%s1798 + $0x870] sm:$0xff]
        %v2120 = vld [vmem:[%s1798 + $0x878] sm:$0xff]
        %v2121 = vld [vmem:[%s1798 + $0x880] sm:$0xff]
        %v2122 = vld [vmem:[%s1798 + $0x888] sm:$0xff]
        %v2123 = vld [vmem:[%s1798 + $0x890] sm:$0xff]
        %v2124 = vld [vmem:[%s1798 + $0x898] sm:$0xff]
        %v2125 = vld [vmem:[%s1798 + $0x8a0] sm:$0xff]
        %v2126 = vld [vmem:[%s1798 + $0x8a8] sm:$0xff]
        %v2127 = vld [vmem:[%s1798 + $0x8b0] sm:$0xff]
        %v2128 = vld [vmem:[%s1798 + $0x8b8] sm:$0xff]
        %v2129 = vld [vmem:[%s1798 + $0x8c0] sm:$0xff]
        %v2130 = vld [vmem:[%s1798 + $0x8c8] sm:$0xff]
        %v2131 = vld [vmem:[%s1798 + $0x8d0] sm:$0xff]
        %v2132 = vld [vmem:[%s1798 + $0x8d8] sm:$0xff]
        %v2133 = vld [vmem:[%s1798 + $0x8e0] sm:$0xff]
        %v2134 = vld [vmem:[%s1798 + $0x8e8] sm:$0xff]
        %v2135 = vld [vmem:[%s1798 + $0x8f0] sm:$0xff]
        %v2136 = vld [vmem:[%s1798 + $0x8f8] sm:$0xff]
        %v2137 = vld [vmem:[%s1798 + $0x900] sm:$0xff]
        %v2138 = vld [vmem:[%s1798 + $0x908] sm:$0xff]
        %v2139 = vld [vmem:[%s1798 + $0x910] sm:$0xff]
        %v2140 = vld [vmem:[%s1798 + $0x918] sm:$0xff]
        %v2141 = vld [vmem:[%s1798 + $0x920] sm:$0xff]
        %v2142 = vld [vmem:[%s1798 + $0x928] sm:$0xff]
        %v2143 = vld [vmem:[%s1798 + $0x930] sm:$0xff]
        %v2144 = vld [vmem:[%s1798 + $0x938] sm:$0xff]
        %v2145 = vld [vmem:[%s1798 + $0x940] sm:$0xff]
        %v2146 = vld [vmem:[%s1798 + $0x948] sm:$0xff]
        %v2147 = vld [vmem:[%s1798 + $0x950] sm:$0xff]
        %v2148 = vld [vmem:[%s1798 + $0x958] sm:$0xff]
        %v2149 = vld [vmem:[%s1798 + $0x960] sm:$0xff]
        %v2150 = vld [vmem:[%s1798 + $0x968] sm:$0xff]
        %v2151 = vld [vmem:[%s1798 + $0x970] sm:$0xff]
        %v2152 = vld [vmem:[%s1798 + $0x978] sm:$0xff]
        %v2153 = vld [vmem:[%s1798 + $0x980] sm:$0xff]
        %v2154 = vld [vmem:[%s1798 + $0x988] sm:$0xff]
        %v2155 = vld [vmem:[%s1798 + $0x990] sm:$0xff]
        %v2156 = vld [vmem:[%s1798 + $0x998] sm:$0xff]
        %v2157 = vld [vmem:[%s1798 + $0x9a0] sm:$0xff]
        %v2158 = vld [vmem:[%s1798 + $0x9a8] sm:$0xff]
        %v2159 = vld [vmem:[%s1798 + $0x9b0] sm:$0xff]
        %v2160 = vld [vmem:[%s1798 + $0x9b8] sm:$0xff]
        %v2161 = vld [vmem:[%s1798 + $0x9c0] sm:$0xff]
        %v2162 = vld [vmem:[%s1798 + $0x9c8] sm:$0xff]
        %v2163 = vld [vmem:[%s1798 + $0x9d0] sm:$0xff]
        %v2164 = vld [vmem:[%s1798 + $0x9d8] sm:$0xff]
        %v2165 = vld [vmem:[%s1798 + $0x9e0] sm:$0xff]
        %v2166 = vld [vmem:[%s1798 + $0x9e8] sm:$0xff]
        %v2167 = vld [vmem:[%s1798 + $0x9f0] sm:$0xff]
        %v2168 = vld [vmem:[%s1798 + $0x9f8] sm:$0xff]
        %v2169 = vld [vmem:[%s1798 + $0xa00] sm:$0xff]
        %v2170 = vld [vmem:[%s1798 + $0xa08] sm:$0xff]
        %v2171 = vld [vmem:[%s1798 + $0xa10] sm:$0xff]
        %v2172 = vld [vmem:[%s1798 + $0xa18] sm:$0xff]
        %v2173 = vld [vmem:[%s1798 + $0xa20] sm:$0xff]
        %v2174 = vld [vmem:[%s1798 + $0xa28] sm:$0xff]
        %v2175 = vld [vmem:[%s1798 + $0xa30] sm:$0xff]
        %v2176 = vld [vmem:[%s1798 + $0xa38] sm:$0xff]
        %v2177 = vld [vmem:[%s1798 + $0xa40] sm:$0xff]
        %v2178 = vld [vmem:[%s1798 + $0xa48] sm:$0xff]
        %v2179 = vld [vmem:[%s1798 + $0xa50] sm:$0xff]
        %v2180 = vld [vmem:[%s1798 + $0xa58] sm:$0xff]
        %v2181 = vld [vmem:[%s1798 + $0xa60] sm:$0xff]
        %v2182 = vld [vmem:[%s1798 + $0xa68] sm:$0xff]
        %v2183 = vld [vmem:[%s1798 + $0xa70] sm:$0xff]
        %v2184 = vld [vmem:[%s1798 + $0xa78] sm:$0xff]
        %v2185 = vld [vmem:[%s1798 + $0xa80] sm:$0xff]
        %v2186 = vld [vmem:[%s1798 + $0xa88] sm:$0xff]
        %v2187 = vld [vmem:[%s1798 + $0xa90] sm:$0xff]
        %v2188 = vld [vmem:[%s1798 + $0xa98] sm:$0xff]
        %v2189 = vld [vmem:[%s1798 + $0xaa0] sm:$0xff]
        %v2190 = vld [vmem:[%s1798 + $0xaa8] sm:$0xff]
        %v2191 = vld [vmem:[%s1798 + $0xab0] sm:$0xff]
        %v2192 = vld [vmem:[%s1798 + $0xab8] sm:$0xff]
        %v2193 = vld [vmem:[%s1798 + $0xac0] sm:$0xff]
        %v2194 = vld [vmem:[%s1798 + $0xac8] sm:$0xff]
        %v2195 = vld [vmem:[%s1798 + $0xad0] sm:$0xff]
        %v2196 = vld [vmem:[%s1798 + $0xad8] sm:$0xff]
        %v2197 = vld [vmem:[%s1798 + $0xae0] sm:$0xff]
        %v2198 = vld [vmem:[%s1798 + $0xae8] sm:$0xff]
        %v2199 = vld [vmem:[%s1798 + $0xaf0] sm:$0xff]
        %v2200 = vld [vmem:[%s1798 + $0xaf8] sm:$0xff]
        %v2201 = vld [vmem:[%s1798 + $0xb00] sm:$0xff]
        %v2202 = vld [vmem:[%s1798 + $0xb08] sm:$0xff]
        %v2203 = vld [vmem:[%s1798 + $0xb10] sm:$0xff]
        %v2204 = vld [vmem:[%s1798 + $0xb18] sm:$0xff]
        %v2205 = vld [vmem:[%s1798 + $0xb20] sm:$0xff]
        %v2206 = vld [vmem:[%s1798 + $0xb28] sm:$0xff]
        %v2207 = vld [vmem:[%s1798 + $0xb30] sm:$0xff]
        %v2208 = vld [vmem:[%s1798 + $0xb38] sm:$0xff]
        %v2209 = vld [vmem:[%s1798 + $0xb40] sm:$0xff]
        %v2210 = vld [vmem:[%s1798 + $0xb48] sm:$0xff]
        %v2211 = vld [vmem:[%s1798 + $0xb50] sm:$0xff]
        %v2212 = vld [vmem:[%s1798 + $0xb58] sm:$0xff]
        %v2213 = vld [vmem:[%s1798 + $0xb60] sm:$0xff]
        %v2214 = vld [vmem:[%s1798 + $0xb68] sm:$0xff]
        %v2215 = vld [vmem:[%s1798 + $0xb70] sm:$0xff]
        %v2216 = vld [vmem:[%s1798 + $0xb78] sm:$0xff]
        %v2217 = vld [vmem:[%s1798 + $0xb80] sm:$0xff]
        %v2218 = vld [vmem:[%s1798 + $0xb88] sm:$0xff]
        %v2219 = vld [vmem:[%s1798 + $0xb90] sm:$0xff]
        %v2220 = vld [vmem:[%s1798 + $0xb98] sm:$0xff]
        %v2221 = vld [vmem:[%s1798 + $0xba0] sm:$0xff]
        %v2222 = vld [vmem:[%s1798 + $0xba8] sm:$0xff]
        %v2223 = vld [vmem:[%s1798 + $0xbb0] sm:$0xff]
        %v2224 = vld [vmem:[%s1798 + $0xbb8] sm:$0xff]
        %v2225 = vld [vmem:[%s1798 + $0xbc0] sm:$0xff]
        %v2226 = vld [vmem:[%s1798 + $0xbc8] sm:$0xff]
        %v2227 = vld [vmem:[%s1798 + $0xbd0] sm:$0xff]
        %v2228 = vld [vmem:[%s1798 + $0xbd8] sm:$0xff]
        %v2229 = vld [vmem:[%s1798 + $0xbe0] sm:$0xff]
        %v2230 = vld [vmem:[%s1798 + $0xbe8] sm:$0xff]
        %v2231 = vld [vmem:[%s1798 + $0xbf0] sm:$0xff]
        %v2232 = vld [vmem:[%s1798 + $0xbf8] sm:$0xff]
        %v2233 = vld [vmem:[%s1798 + $0xc00] sm:$0xff]
        %v2234 = vld [vmem:[%s1798 + $0xc08] sm:$0xff]
        %v2235 = vld [vmem:[%s1798 + $0xc10] sm:$0xff]
        %v2236 = vld [vmem:[%s1798 + $0xc18] sm:$0xff]
        %v2237 = vld [vmem:[%s1798 + $0xc20] sm:$0xff]
        %v2238 = vld [vmem:[%s1798 + $0xc28] sm:$0xff]
        %v2239 = vld [vmem:[%s1798 + $0xc30] sm:$0xff]
        %v2240 = vld [vmem:[%s1798 + $0xc38] sm:$0xff]
        %v2241 = vld [vmem:[%s1798 + $0xc40] sm:$0xff]
        %v2242 = vld [vmem:[%s1798 + $0xc48] sm:$0xff]
        %v2243 = vld [vmem:[%s1798 + $0xc50] sm:$0xff]
        %v2244 = vld [vmem:[%s1798 + $0xc58] sm:$0xff]
        %v2245 = vld [vmem:[%s1798 + $0xc60] sm:$0xff]
        %v2246 = vld [vmem:[%s1798 + $0xc68] sm:$0xff]
        %v2247 = vld [vmem:[%s1798 + $0xc70] sm:$0xff]
        %v2248 = vld [vmem:[%s1798 + $0xc78] sm:$0xff]
        %v2249 = vld [vmem:[%s1798 + $0xc80] sm:$0xff]
        %v2250 = vld [vmem:[%s1798 + $0xc88] sm:$0xff]
        %v2251 = vld [vmem:[%s1798 + $0xc90] sm:$0xff]
        %v2252 = vld [vmem:[%s1798 + $0xc98] sm:$0xff]
        %v2253 = vld [vmem:[%s1798 + $0xca0] sm:$0xff]
        %v2254 = vld [vmem:[%s1798 + $0xca8] sm:$0xff]
        %v2255 = vld [vmem:[%s1798 + $0xcb0] sm:$0xff]
        %v2256 = vld [vmem:[%s1798 + $0xcb8] sm:$0xff]
        %v2257 = vld [vmem:[%s1798 + $0xcc0] sm:$0xff]
        %v2258 = vld [vmem:[%s1798 + $0xcc8] sm:$0xff]
        %v2259 = vld [vmem:[%s1798 + $0xcd0] sm:$0xff]
        %v2260 = vld [vmem:[%s1798 + $0xcd8] sm:$0xff]
        %v2261 = vld [vmem:[%s1798 + $0xce0] sm:$0xff]
        %v2262 = vld [vmem:[%s1798 + $0xce8] sm:$0xff]
        %v2263 = vld [vmem:[%s1798 + $0xcf0] sm:$0xff]
        %v2264 = vld [vmem:[%s1798 + $0xcf8] sm:$0xff]
        %v2265 = vld [vmem:[%s1798 + $0xd00] sm:$0xff]
        %v2266 = vld [vmem:[%s1798 + $0xd08] sm:$0xff]
        %v2267 = vld [vmem:[%s1798 + $0xd10] sm:$0xff]
        %v2268 = vld [vmem:[%s1798 + $0xd18] sm:$0xff]
        %v2269 = vld [vmem:[%s1798 + $0xd20] sm:$0xff]
        %v2270 = vld [vmem:[%s1798 + $0xd28] sm:$0xff]
        %v2271 = vld [vmem:[%s1798 + $0xd30] sm:$0xff]
        %v2272 = vld [vmem:[%s1798 + $0xd38] sm:$0xff]
        %v2273 = vld [vmem:[%s1798 + $0xd40] sm:$0xff]
        %v2274 = vld [vmem:[%s1798 + $0xd48] sm:$0xff]
        %v2275 = vld [vmem:[%s1798 + $0xd50] sm:$0xff]
        %v2276 = vld [vmem:[%s1798 + $0xd58] sm:$0xff]
        %v2277 = vld [vmem:[%s1798 + $0xd60] sm:$0xff]
        %v2278 = vld [vmem:[%s1798 + $0xd68] sm:$0xff]
        %v2279 = vld [vmem:[%s1798 + $0xd70] sm:$0xff]
        %v2280 = vld [vmem:[%s1798 + $0xd78] sm:$0xff]
        %v2281 = vld [vmem:[%s1798 + $0xd80] sm:$0xff]
        %v2282 = vld [vmem:[%s1798 + $0xd88] sm:$0xff]
        %v2283 = vld [vmem:[%s1798 + $0xd90] sm:$0xff]
        %v2284 = vld [vmem:[%s1798 + $0xd98] sm:$0xff]
        %v2285 = vld [vmem:[%s1798 + $0xda0] sm:$0xff]
        %v2286 = vld [vmem:[%s1798 + $0xda8] sm:$0xff]
        %v2287 = vld [vmem:[%s1798 + $0xdb0] sm:$0xff]
        %v2288 = vld [vmem:[%s1798 + $0xdb8] sm:$0xff]
        %v2289 = vld [vmem:[%s1798 + $0xdc0] sm:$0xff]
        %v2290 = vld [vmem:[%s1798 + $0xdc8] sm:$0xff]
        %v2291 = vld [vmem:[%s1798 + $0xdd0] sm:$0xff]
        %v2292 = vld [vmem:[%s1798 + $0xdd8] sm:$0xff]
        %v2293 = vld [vmem:[%s1798 + $0xde0] sm:$0xff]
        %v2294 = vld [vmem:[%s1798 + $0xde8] sm:$0xff]
        %v2295 = vld [vmem:[%s1798 + $0xdf0] sm:$0xff]
        %v2296 = vld [vmem:[%s1798 + $0xdf8] sm:$0xff]
        %v2297 = vld [vmem:[%s1798 + $0xe00] sm:$0xff]
        %v2298 = vld [vmem:[%s1798 + $0xe08] sm:$0xff]
        %v2299 = vld [vmem:[%s1798 + $0xe10] sm:$0xff]
        %v2300 = vld [vmem:[%s1798 + $0xe18] sm:$0xff]
        %v2301 = vld [vmem:[%s1798 + $0xe20] sm:$0xff]
        %v2302 = vld [vmem:[%s1798 + $0xe28] sm:$0xff]
        %v2303 = vld [vmem:[%s1798 + $0xe30] sm:$0xff]
        %v2304 = vld [vmem:[%s1798 + $0xe38] sm:$0xff]
        %v2305 = vld [vmem:[%s1798 + $0xe40] sm:$0xff]
        %v2306 = vld [vmem:[%s1798 + $0xe48] sm:$0xff]
        %v2307 = vld [vmem:[%s1798 + $0xe50] sm:$0xff]
        %v2308 = vld [vmem:[%s1798 + $0xe58] sm:$0xff]
        %v2309 = vld [vmem:[%s1798 + $0xe60] sm:$0xff]
        %v2310 = vld [vmem:[%s1798 + $0xe68] sm:$0xff]
        %v2311 = vld [vmem:[%s1798 + $0xe70] sm:$0xff]
        %v2312 = vld [vmem:[%s1798 + $0xe78] sm:$0xff]
        %v2313 = vld [vmem:[%s1798 + $0xe80] sm:$0xff]
        %v2314 = vld [vmem:[%s1798 + $0xe88] sm:$0xff]
        %v2315 = vld [vmem:[%s1798 + $0xe90] sm:$0xff]
        %v2316 = vld [vmem:[%s1798 + $0xe98] sm:$0xff]
        %v2317 = vld [vmem:[%s1798 + $0xea0] sm:$0xff]
        %v2318 = vld [vmem:[%s1798 + $0xea8] sm:$0xff]
        %v2319 = vld [vmem:[%s1798 + $0xeb0] sm:$0xff]
        %v2320 = vld [vmem:[%s1798 + $0xeb8] sm:$0xff]
        %v2321 = vld [vmem:[%s1798 + $0xec0] sm:$0xff]
        %v2322 = vld [vmem:[%s1798 + $0xec8] sm:$0xff]
        %v2323 = vld [vmem:[%s1798 + $0xed0] sm:$0xff]
        %v2324 = vld [vmem:[%s1798 + $0xed8] sm:$0xff]
        %v2325 = vld [vmem:[%s1798 + $0xee0] sm:$0xff]
        %v2326 = vld [vmem:[%s1798 + $0xee8] sm:$0xff]
        %v2327 = vld [vmem:[%s1798 + $0xef0] sm:$0xff]
        %v2328 = vld [vmem:[%s1798 + $0xef8] sm:$0xff]
        %v2329 = vld [vmem:[%s1798 + $0xf00] sm:$0xff]
        %v2330 = vld [vmem:[%s1798 + $0xf08] sm:$0xff]
        %v2331 = vld [vmem:[%s1798 + $0xf10] sm:$0xff]
        %v2332 = vld [vmem:[%s1798 + $0xf18] sm:$0xff]
        %v2333 = vld [vmem:[%s1798 + $0xf20] sm:$0xff]
        %v2334 = vld [vmem:[%s1798 + $0xf28] sm:$0xff]
        %v2335 = vld [vmem:[%s1798 + $0xf30] sm:$0xff]
        %v2336 = vld [vmem:[%s1798 + $0xf38] sm:$0xff]
        %v2337 = vld [vmem:[%s1798 + $0xf40] sm:$0xff]
        %v2338 = vld [vmem:[%s1798 + $0xf48] sm:$0xff]
        %v2339 = vld [vmem:[%s1798 + $0xf50] sm:$0xff]
        %v2340 = vld [vmem:[%s1798 + $0xf58] sm:$0xff]
        %v2341 = vld [vmem:[%s1798 + $0xf60] sm:$0xff]
        %v2342 = vld [vmem:[%s1798 + $0xf68] sm:$0xff]
        %v2343 = vld [vmem:[%s1798 + $0xf70] sm:$0xff]
        %v2344 = vld [vmem:[%s1798 + $0xf78] sm:$0xff]
        %v2345 = vld [vmem:[%s1798 + $0xf80] sm:$0xff]
        %v2346 = vld [vmem:[%s1798 + $0xf88] sm:$0xff]
        %v2347 = vld [vmem:[%s1798 + $0xf90] sm:$0xff]
        %v2348 = vld [vmem:[%s1798 + $0xf98] sm:$0xff]
        %v2349 = vld [vmem:[%s1798 + $0xfa0] sm:$0xff]
        %v2350 = vld [vmem:[%s1798 + $0xfa8] sm:$0xff]
        %v2351 = vld [vmem:[%s1798 + $0xfb0] sm:$0xff]
        %v2352 = vld [vmem:[%s1798 + $0xfb8] sm:$0xff]
        %v2353 = vld [vmem:[%s1798 + $0xfc0] sm:$0xff]
        %v2354 = vld [vmem:[%s1798 + $0xfc8] sm:$0xff]
        %v2355 = vld [vmem:[%s1798 + $0xfd0] sm:$0xff]
        %v2356 = vld [vmem:[%s1798 + $0xfd8] sm:$0xff]
        %v2357 = vld [vmem:[%s1798 + $0xfe0] sm:$0xff]
        %v2358 = vld [vmem:[%s1798 + $0xfe8] sm:$0xff]
        %v2359 = vld [vmem:[%s1798 + $0xff0] sm:$0xff]
        %v2360 = vld [vmem:[%s1798 + $0xff8] sm:$0xff]
        %v2361 = vld [vmem:[%s1798 + $0x1000] sm:$0xff]
        %v2362 = vld [vmem:[%s1798 + $0x1008] sm:$0xff]
        %v2363 = vld [vmem:[%s1798 + $0x1010] sm:$0xff]
        %v2364 = vld [vmem:[%s1798 + $0x1018] sm:$0xff]
        %v2365 = vld [vmem:[%s1798 + $0x1020] sm:$0xff]
        %v2366 = vld [vmem:[%s1798 + $0x1028] sm:$0xff]
        %v2367 = vld [vmem:[%s1798 + $0x1030] sm:$0xff]
        %v2368 = vld [vmem:[%s1798 + $0x1038] sm:$0xff]
        %v2369 = vld [vmem:[%s1798 + $0x1040] sm:$0xff]
        %v2370 = vld [vmem:[%s1798 + $0x1048] sm:$0xff]
        %v2371 = vld [vmem:[%s1798 + $0x1050] sm:$0xff]
        %v2372 = vld [vmem:[%s1798 + $0x1058] sm:$0xff]
        %v2373 = vld [vmem:[%s1798 + $0x1060] sm:$0xff]
        %v2374 = vld [vmem:[%s1798 + $0x1068] sm:$0xff]
        %v2375 = vld [vmem:[%s1798 + $0x1070] sm:$0xff]
        %v2376 = vld [vmem:[%s1798 + $0x1078] sm:$0xff]
        %v2377 = vld [vmem:[%s1798 + $0x1080] sm:$0xff]
        %v2378 = vld [vmem:[%s1798 + $0x1088] sm:$0xff]
        %v2379 = vld [vmem:[%s1798 + $0x1090] sm:$0xff]
        %v2380 = vld [vmem:[%s1798 + $0x1098] sm:$0xff]
        %v2381 = vld [vmem:[%s1798 + $0x10a0] sm:$0xff]
        %v2382 = vld [vmem:[%s1798 + $0x10a8] sm:$0xff]
        %v2383 = vld [vmem:[%s1798 + $0x10b0] sm:$0xff]
        %v2384 = vld [vmem:[%s1798 + $0x10b8] sm:$0xff]
        %v2385 = vld [vmem:[%s1798 + $0x10c0] sm:$0xff]
        %v2386 = vld [vmem:[%s1798 + $0x10c8] sm:$0xff]
        %v2387 = vld [vmem:[%s1798 + $0x10d0] sm:$0xff]
        %v2388 = vld [vmem:[%s1798 + $0x10d8] sm:$0xff]
        %v2389 = vld [vmem:[%s1798 + $0x10e0] sm:$0xff]
        %v2390 = vld [vmem:[%s1798 + $0x10e8] sm:$0xff]
        %v2391 = vld [vmem:[%s1798 + $0x10f0] sm:$0xff]
        %v2392 = vld [vmem:[%s1798 + $0x10f8] sm:$0xff]
        %v2393 = vld [vmem:[%s1798 + $0x1100] sm:$0xff]
        %v2394 = vld [vmem:[%s1798 + $0x1108] sm:$0xff]
        %v2395 = vld [vmem:[%s1798 + $0x1110] sm:$0xff]
        %v2396 = vld [vmem:[%s1798 + $0x1118] sm:$0xff]
        %v2397 = vld [vmem:[%s1798 + $0x1120] sm:$0xff]
        %v2398 = vld [vmem:[%s1798 + $0x1128] sm:$0xff]
        %v2399 = vld [vmem:[%s1798 + $0x1130] sm:$0xff]
        %v2400 = vld [vmem:[%s1798 + $0x1138] sm:$0xff]
        %v2401 = vld [vmem:[%s1798 + $0x1140] sm:$0xff]
        %v2402 = vld [vmem:[%s1798 + $0x1148] sm:$0xff]
        %v2403 = vld [vmem:[%s1798 + $0x1150] sm:$0xff]
        %v2404 = vld [vmem:[%s1798 + $0x1158] sm:$0xff]
        %v2405 = vld [vmem:[%s1798 + $0x1160] sm:$0xff]
        %v2406 = vld [vmem:[%s1798 + $0x1168] sm:$0xff]
        %v2407 = vld [vmem:[%s1798 + $0x1170] sm:$0xff]
        %v2408 = vld [vmem:[%s1798 + $0x1178] sm:$0xff]
        %v2409 = vld [vmem:[%s1798 + $0x1180] sm:$0xff]
        %v2410 = vld [vmem:[%s1798 + $0x1188] sm:$0xff]
        %v2411 = vld [vmem:[%s1798 + $0x1190] sm:$0xff]
        %v2412 = vld [vmem:[%s1798 + $0x1198] sm:$0xff]
        %v2413 = vld [vmem:[%s1798 + $0x11a0] sm:$0xff]
        %v2414 = vld [vmem:[%s1798 + $0x11a8] sm:$0xff]
        %v2415 = vld [vmem:[%s1798 + $0x11b0] sm:$0xff]
        %v2416 = vld [vmem:[%s1798 + $0x11b8] sm:$0xff]
        %v2417 = vld [vmem:[%s1798 + $0x11c0] sm:$0xff]
        %v2418 = vld [vmem:[%s1798 + $0x11c8] sm:$0xff]
        %v2419 = vld [vmem:[%s1798 + $0x11d0] sm:$0xff]
        %v2420 = vld [vmem:[%s1798 + $0x11d8] sm:$0xff]
        %v2421 = vld [vmem:[%s1798 + $0x11e0] sm:$0xff]
        %v2422 = vld [vmem:[%s1798 + $0x11e8] sm:$0xff]
        %v2423 = vld [vmem:[%s1798 + $0x11f0] sm:$0xff]
        %v2424 = vld [vmem:[%s1798 + $0x11f8] sm:$0xff]
        %v2425 = vld [vmem:[%s1798 + $0x1200] sm:$0xff]
        %v2426 = vld [vmem:[%s1798 + $0x1208] sm:$0xff]
        %v2427 = vld [vmem:[%s1798 + $0x1210] sm:$0xff]
        %v2428 = vld [vmem:[%s1798 + $0x1218] sm:$0xff]
        %v2429 = vld [vmem:[%s1798 + $0x1220] sm:$0xff]
        %v2430 = vld [vmem:[%s1798 + $0x1228] sm:$0xff]
        %v2431 = vld [vmem:[%s1798 + $0x1230] sm:$0xff]
        %v2432 = vld [vmem:[%s1798 + $0x1238] sm:$0xff]
        %v2433 = vld [vmem:[%s1798 + $0x1240] sm:$0xff]
        %v2434 = vld [vmem:[%s1798 + $0x1248] sm:$0xff]
        %v2435 = vld [vmem:[%s1798 + $0x1250] sm:$0xff]
        %v2436 = vld [vmem:[%s1798 + $0x1258] sm:$0xff]
        %v2437 = vld [vmem:[%s1798 + $0x1260] sm:$0xff]
        %v2438 = vld [vmem:[%s1798 + $0x1268] sm:$0xff]
        %v2439 = vld [vmem:[%s1798 + $0x1270] sm:$0xff]
        %v2440 = vld [vmem:[%s1798 + $0x1278] sm:$0xff]
        %v2441 = vld [vmem:[%s1798 + $0x1280] sm:$0xff]
        %v2442 = vld [vmem:[%s1798 + $0x1288] sm:$0xff]
        %v2443 = vld [vmem:[%s1798 + $0x1290] sm:$0xff]
        %v2444 = vld [vmem:[%s1798 + $0x1298] sm:$0xff]
        %v2445 = vld [vmem:[%s1798 + $0x12a0] sm:$0xff]
        %v2446 = vld [vmem:[%s1798 + $0x12a8] sm:$0xff]
        %v2447 = vld [vmem:[%s1798 + $0x12b0] sm:$0xff]
        %v2448 = vld [vmem:[%s1798 + $0x12b8] sm:$0xff]
        %v2449 = vld [vmem:[%s1798 + $0x12c0] sm:$0xff]
        %v2450 = vld [vmem:[%s1798 + $0x12c8] sm:$0xff]
        %v2451 = vld [vmem:[%s1798 + $0x12d0] sm:$0xff]
        %v2452 = vld [vmem:[%s1798 + $0x12d8] sm:$0xff]
        %v2453 = vld [vmem:[%s1798 + $0x12e0] sm:$0xff]
        %v2454 = vld [vmem:[%s1798 + $0x12e8] sm:$0xff]
        %v2455 = vld [vmem:[%s1798 + $0x12f0] sm:$0xff]
        %v2456 = vld [vmem:[%s1798 + $0x12f8] sm:$0xff]
        %v2457 = vld [vmem:[%s1798 + $0x1300] sm:$0xff]
        %v2458 = vld [vmem:[%s1798 + $0x1308] sm:$0xff]
        %v2459 = vld [vmem:[%s1798 + $0x1310] sm:$0xff]
        %v2460 = vld [vmem:[%s1798 + $0x1318] sm:$0xff]
        %v2461 = vld [vmem:[%s1798 + $0x1320] sm:$0xff]
        %v2462 = vld [vmem:[%s1798 + $0x1328] sm:$0xff]
        %v2463 = vld [vmem:[%s1798 + $0x1330] sm:$0xff]
        %v2464 = vld [vmem:[%s1798 + $0x1338] sm:$0xff]
        %v2465 = vld [vmem:[%s1798 + $0x1340] sm:$0xff]
        %v2466 = vld [vmem:[%s1798 + $0x1348] sm:$0xff]
        %v2467 = vld [vmem:[%s1798 + $0x1350] sm:$0xff]
        %v2468 = vld [vmem:[%s1798 + $0x1358] sm:$0xff]
        %v2469 = vld [vmem:[%s1798 + $0x1360] sm:$0xff]
        %v2470 = vld [vmem:[%s1798 + $0x1368] sm:$0xff]
        %v2471 = vld [vmem:[%s1798 + $0x1370] sm:$0xff]
        %v2472 = vld [vmem:[%s1798 + $0x1378] sm:$0xff]
        %v2473 = vld [vmem:[%s1798 + $0x1380] sm:$0xff]
        %v2474 = vld [vmem:[%s1798 + $0x1388] sm:$0xff]
        %v2475 = vld [vmem:[%s1798 + $0x1390] sm:$0xff]
        %v2476 = vld [vmem:[%s1798 + $0x1398] sm:$0xff]
        %v2477 = vld [vmem:[%s1798 + $0x13a0] sm:$0xff]
        %v2478 = vld [vmem:[%s1798 + $0x13a8] sm:$0xff]
        %v2479 = vld [vmem:[%s1798 + $0x13b0] sm:$0xff]
        %v2480 = vld [vmem:[%s1798 + $0x13b8] sm:$0xff]
        %v2481 = vld [vmem:[%s1798 + $0x13c0] sm:$0xff]
        %v2482 = vld [vmem:[%s1798 + $0x13c8] sm:$0xff]
        %v2483 = vld [vmem:[%s1798 + $0x13d0] sm:$0xff]
        %v2484 = vld [vmem:[%s1798 + $0x13d8] sm:$0xff]
        %v2485 = vld [vmem:[%s1798 + $0x13e0] sm:$0xff]
        %v2486 = vld [vmem:[%s1798 + $0x13e8] sm:$0xff]
        %v2487 = vld [vmem:[%s1798 + $0x13f0] sm:$0xff]
        %v2488 = vld [vmem:[%s1798 + $0x13f8] sm:$0xff]
        %v2489 = vld [vmem:[%s1798 + $0x1400] sm:$0xff]
        %v2490 = vld [vmem:[%s1798 + $0x1408] sm:$0xff]
        %v2491 = vld [vmem:[%s1798 + $0x1410] sm:$0xff]
        %v2492 = vld [vmem:[%s1798 + $0x1418] sm:$0xff]
        %v2493 = vld [vmem:[%s1798 + $0x1420] sm:$0xff]
        %v2494 = vld [vmem:[%s1798 + $0x1428] sm:$0xff]
        %v2495 = vld [vmem:[%s1798 + $0x1430] sm:$0xff]
        %v2496 = vld [vmem:[%s1798 + $0x1438] sm:$0xff]
        %v2497 = vld [vmem:[%s1798 + $0x1440] sm:$0xff]
        %v2498 = vld [vmem:[%s1798 + $0x1448] sm:$0xff]
        %v2499 = vld [vmem:[%s1798 + $0x1450] sm:$0xff]
        %v2500 = vld [vmem:[%s1798 + $0x1458] sm:$0xff]
        %v2501 = vld [vmem:[%s1798 + $0x1460] sm:$0xff]
        %v2502 = vld [vmem:[%s1798 + $0x1468] sm:$0xff]
        %v2503 = vld [vmem:[%s1798 + $0x1470] sm:$0xff]
        %v2504 = vld [vmem:[%s1798 + $0x1478] sm:$0xff]
        %v2505 = vld [vmem:[%s1798 + $0x1480] sm:$0xff]
        %v2506 = vld [vmem:[%s1798 + $0x1488] sm:$0xff]
        %v2507 = vld [vmem:[%s1798 + $0x1490] sm:$0xff]
        %v2508 = vld [vmem:[%s1798 + $0x1498] sm:$0xff]
        %v2509 = vld [vmem:[%s1798 + $0x14a0] sm:$0xff]
        %v2510 = vld [vmem:[%s1798 + $0x14a8] sm:$0xff]
        %v2511 = vld [vmem:[%s1798 + $0x14b0] sm:$0xff]
        %v2512 = vld [vmem:[%s1798 + $0x14b8] sm:$0xff]
        %v2513 = vld [vmem:[%s1798 + $0x14c0] sm:$0xff]
        %v2514 = vld [vmem:[%s1798 + $0x14c8] sm:$0xff]
        %v2515 = vld [vmem:[%s1798 + $0x14d0] sm:$0xff]
        %v2516 = vld [vmem:[%s1798 + $0x14d8] sm:$0xff]
        %v2517 = vld [vmem:[%s1798 + $0x14e0] sm:$0xff]
        %v2518 = vld [vmem:[%s1798 + $0x14e8] sm:$0xff]
        %v2519 = vld [vmem:[%s1798 + $0x14f0] sm:$0xff]
        %v2520 = vld [vmem:[%s1798 + $0x14f8] sm:$0xff]
        %v2521 = vld [vmem:[%s1798 + $0x1500] sm:$0xff]
        %v2522 = vld [vmem:[%s1798 + $0x1508] sm:$0xff]
        %v2523 = vld [vmem:[%s1798 + $0x1510] sm:$0xff]
        %v2524 = vld [vmem:[%s1798 + $0x1518] sm:$0xff]
        %v2525 = vld [vmem:[%s1798 + $0x1520] sm:$0xff]
        %v2526 = vld [vmem:[%s1798 + $0x1528] sm:$0xff]
        %v2527 = vld [vmem:[%s1798 + $0x1530] sm:$0xff]
        %v2528 = vld [vmem:[%s1798 + $0x1538] sm:$0xff]
        %v2529 = vld [vmem:[%s1798 + $0x1540] sm:$0xff]
        %v2530 = vld [vmem:[%s1798 + $0x1548] sm:$0xff]
        %v2531 = vld [vmem:[%s1798 + $0x1550] sm:$0xff]
        %v2532 = vld [vmem:[%s1798 + $0x1558] sm:$0xff]
        %v2533 = vld [vmem:[%s1798 + $0x1560] sm:$0xff]
        %v2534 = vld [vmem:[%s1798 + $0x1568] sm:$0xff]
        %v2535 = vld [vmem:[%s1798 + $0x1570] sm:$0xff]
        %v2536 = vld [vmem:[%s1798 + $0x1578] sm:$0xff]
        %v2537 = vld [vmem:[%s1798 + $0x1580] sm:$0xff]
        %v2538 = vld [vmem:[%s1798 + $0x1588] sm:$0xff]
        %v2539 = vld [vmem:[%s1798 + $0x1590] sm:$0xff]
        %v2540 = vld [vmem:[%s1798 + $0x1598] sm:$0xff]
        %v2541 = vld [vmem:[%s1798 + $0x15a0] sm:$0xff]
        %v2542 = vld [vmem:[%s1798 + $0x15a8] sm:$0xff]
        %v2543 = vld [vmem:[%s1798 + $0x15b0] sm:$0xff]
        %v2544 = vld [vmem:[%s1798 + $0x15b8] sm:$0xff]
        %v2545 = vld [vmem:[%s1798 + $0x15c0] sm:$0xff]
        %v2546 = vld [vmem:[%s1798 + $0x15c8] sm:$0xff]
        %v2547 = vld [vmem:[%s1798 + $0x15d0] sm:$0xff]
        %v2548 = vld [vmem:[%s1798 + $0x15d8] sm:$0xff]
        %v2549 = vld [vmem:[%s1798 + $0x15e0] sm:$0xff]
        %v2550 = vld [vmem:[%s1798 + $0x15e8] sm:$0xff]
        %v2551 = vld [vmem:[%s1798 + $0x15f0] sm:$0xff]
        %v2552 = vld [vmem:[%s1798 + $0x15f8] sm:$0xff]
        %v2553 = vld [vmem:[%s1798 + $0x1600] sm:$0xff]
        %v2554 = vld [vmem:[%s1798 + $0x1608] sm:$0xff]
        %v2555 = vld [vmem:[%s1798 + $0x1610] sm:$0xff]
        %v2556 = vld [vmem:[%s1798 + $0x1618] sm:$0xff]
        %v2557 = vld [vmem:[%s1798 + $0x1620] sm:$0xff]
        %v2558 = vld [vmem:[%s1798 + $0x1628] sm:$0xff]
        %v2559 = vld [vmem:[%s1798 + $0x1630] sm:$0xff]
        %v2560 = vld [vmem:[%s1798 + $0x1638] sm:$0xff]
        %v2561 = vld [vmem:[%s1798 + $0x1640] sm:$0xff]
        %v2562 = vld [vmem:[%s1798 + $0x1648] sm:$0xff]
        %v2563 = vld [vmem:[%s1798 + $0x1650] sm:$0xff]
        %v2564 = vld [vmem:[%s1798 + $0x1658] sm:$0xff]
        %v2565 = vld [vmem:[%s1798 + $0x1660] sm:$0xff]
        %v2566 = vld [vmem:[%s1798 + $0x1668] sm:$0xff]
        %v2567 = vld [vmem:[%s1798 + $0x1670] sm:$0xff]
        %v2568 = vld [vmem:[%s1798 + $0x1678] sm:$0xff]
        %v2569 = vld [vmem:[%s1798 + $0x1680] sm:$0xff]
        %v2570 = vld [vmem:[%s1798 + $0x1688] sm:$0xff]
        %v2571 = vld [vmem:[%s1798 + $0x1690] sm:$0xff]
        %v2572 = vld [vmem:[%s1798 + $0x1698] sm:$0xff]
        %v2573 = vld [vmem:[%s1798 + $0x16a0] sm:$0xff]
        %v2574 = vld [vmem:[%s1798 + $0x16a8] sm:$0xff]
        %v2575 = vld [vmem:[%s1798 + $0x16b0] sm:$0xff]
        %v2576 = vld [vmem:[%s1798 + $0x16b8] sm:$0xff]
        %v2577 = vld [vmem:[%s1798 + $0x16c0] sm:$0xff]
        %v2578 = vld [vmem:[%s1798 + $0x16c8] sm:$0xff]
        %v2579 = vld [vmem:[%s1798 + $0x16d0] sm:$0xff]
        %v2580 = vld [vmem:[%s1798 + $0x16d8] sm:$0xff]
        %v2581 = vld [vmem:[%s1798 + $0x16e0] sm:$0xff]
        %v2582 = vld [vmem:[%s1798 + $0x16e8] sm:$0xff]
        %v2583 = vld [vmem:[%s1798 + $0x16f0] sm:$0xff]
        %v2584 = vld [vmem:[%s1798 + $0x16f8] sm:$0xff]
        %v2585 = vld [vmem:[%s1798 + $0x1700] sm:$0xff]
        %v2586 = vld [vmem:[%s1798 + $0x1708] sm:$0xff]
        %v2587 = vld [vmem:[%s1798 + $0x1710] sm:$0xff]
        %v2588 = vld [vmem:[%s1798 + $0x1718] sm:$0xff]
        %v2589 = vld [vmem:[%s1798 + $0x1720] sm:$0xff]
        %v2590 = vld [vmem:[%s1798 + $0x1728] sm:$0xff]
        %v2591 = vld [vmem:[%s1798 + $0x1730] sm:$0xff]
        %v2592 = vld [vmem:[%s1798 + $0x1738] sm:$0xff]
        %v2593 = vld [vmem:[%s1798 + $0x1740] sm:$0xff]
        %v2594 = vld [vmem:[%s1798 + $0x1748] sm:$0xff]
        %v2595 = vld [vmem:[%s1798 + $0x1750] sm:$0xff]
        %v2596 = vld [vmem:[%s1798 + $0x1758] sm:$0xff]
        %v2597 = vld [vmem:[%s1798 + $0x1760] sm:$0xff]
        %v2598 = vld [vmem:[%s1798 + $0x1768] sm:$0xff]
        %v2599 = vld [vmem:[%s1798 + $0x1770] sm:$0xff]
        %v2600 = vld [vmem:[%s1798 + $0x1778] sm:$0xff]
        %v2601 = vld [vmem:[%s1798 + $0x1780] sm:$0xff]
        %v2602 = vld [vmem:[%s1798 + $0x1788] sm:$0xff]
        %v2603 = vld [vmem:[%s1798 + $0x1790] sm:$0xff]
        %v2604 = vld [vmem:[%s1798 + $0x1798] sm:$0xff]
        %v2605 = vld [vmem:[%s1798 + $0x17a0] sm:$0xff]
        %v2606 = vld [vmem:[%s1798 + $0x17a8] sm:$0xff]
        %v2607 = vld [vmem:[%s1798 + $0x17b0] sm:$0xff]
        %v2608 = vld [vmem:[%s1798 + $0x17b8] sm:$0xff]
        %v2609 = vld [vmem:[%s1798 + $0x17c0] sm:$0xff]
        %v2610 = vld [vmem:[%s1798 + $0x17c8] sm:$0xff]
        %v2611 = vld [vmem:[%s1798 + $0x17d0] sm:$0xff]
        %v2612 = vld [vmem:[%s1798 + $0x17d8] sm:$0xff]
        %v2613 = vld [vmem:[%s1798 + $0x17e0] sm:$0xff]
        %v2614 = vld [vmem:[%s1798 + $0x17e8] sm:$0xff]
        %v2615 = vld [vmem:[%s1798 + $0x17f0] sm:$0xff]
        %v2616 = vld [vmem:[%s1798 + $0x17f8] sm:$0xff]
        %v2617 = vld [vmem:[%s1798 + $0x1800] sm:$0xff]
        %v2618 = vld [vmem:[%s1798 + $0x1808] sm:$0xff]
        %v2619 = vld [vmem:[%s1798 + $0x1810] sm:$0xff]
        %v2620 = vld [vmem:[%s1798 + $0x1818] sm:$0xff]
        %v2621 = vld [vmem:[%s1798 + $0x1820] sm:$0xff]
        %v2622 = vld [vmem:[%s1798 + $0x1828] sm:$0xff]
        %v2623 = vld [vmem:[%s1798 + $0x1830] sm:$0xff]
        %v2624 = vld [vmem:[%s1798 + $0x1838] sm:$0xff]
        %v2625 = vld [vmem:[%s1798 + $0x1840] sm:$0xff]
        %v2626 = vld [vmem:[%s1798 + $0x1848] sm:$0xff]
        %v2627 = vld [vmem:[%s1798 + $0x1850] sm:$0xff]
        %v2628 = vld [vmem:[%s1798 + $0x1858] sm:$0xff]
        %v2629 = vld [vmem:[%s1798 + $0x1860] sm:$0xff]
        %v2630 = vld [vmem:[%s1798 + $0x1868] sm:$0xff]
        %v2631 = vld [vmem:[%s1798 + $0x1870] sm:$0xff]
        %v2632 = vld [vmem:[%s1798 + $0x1878] sm:$0xff]
        %v2633 = vld [vmem:[%s1831] sm:$0xf]
        %v2635 = vlaneseq
        %v2636 = vshrl.u32 %v2635, 7
        %v2637 = vsub.s32 0, %v2636
        %v2638 = vrot.slane %v2633, %v2637
        %v2639 = vlaneseq
        %v2640 = vshrl.u32 %v2639, 7
        %v2641 = vsub.s32 1, %v2640
        %v2642 = vrot.slane %v2633, %v2641
        %v2643 = vlaneseq
        %v2644 = vshrl.u32 %v2643, 7
        %v2645 = vsub.s32 2, %v2644
        %v2646 = vrot.slane %v2633, %v2645
        %v2647 = vlaneseq
        %v2648 = vshrl.u32 %v2647, 7
        %v2649 = vsub.s32 3, %v2648
        %v2650 = vrot.slane %v2633, %v2649
        %v2659 = vcombine.high %v1845, %v1845
        %v2661 = vunpack.c.l.s4 1966171168
        %v2662 = vunpack.c.0.s8 %v2661
        %v2663 = vlaneseq
        %v2664 = vshrl.u32 %v2663, 7
        %v2665 = vsub.s32 %v2662, %v2664
        %v2666 = vrot.slane %v1845, %v2665
        %v2668 = vunpack.c.l.s4 1966171168
        %v2669 = vunpack.c.0.s8 %v2668
        %v2670 = vlaneseq
        %v2671 = vshrl.u32 %v2670, 7
        %v2672 = vsub.s32 %v2669, %v2671
        %v2673 = vrot.slane %v2659, %v2672
        %v2674 = vcombine.high %v2666, %v2666
        %v2675 = vcombine.high %v2673, %v2673
        %v2677 = vunpack.c.l.s4 1966171168
        %v2678 = vunpack.c.0.s8 %v2677
        %v2679 = vlaneseq
        %v2680 = vshrl.u32 %v2679, 7
        %v2681 = vsub.s32 %v2678, %v2680
        %v2682 = vrot.slane %v2666, %v2681
        %v2684 = vunpack.c.l.s4 1966171168
        %v2685 = vunpack.c.0.s8 %v2684
        %v2686 = vlaneseq
        %v2687 = vshrl.u32 %v2686, 7
        %v2688 = vsub.s32 %v2685, %v2687
        %v2689 = vrot.slane %v2673, %v2688
        %v2691 = vunpack.c.l.s4 1966171168
        %v2692 = vunpack.c.0.s8 %v2691
        %v2693 = vlaneseq
        %v2694 = vshrl.u32 %v2693, 7
        %v2695 = vsub.s32 %v2692, %v2694
        %v2696 = vrot.slane %v2674, %v2695
        %v2698 = vunpack.c.l.s4 1966171168
        %v2699 = vunpack.c.0.s8 %v2698
        %v2700 = vlaneseq
        %v2701 = vshrl.u32 %v2700, 7
        %v2702 = vsub.s32 %v2699, %v2701
        %v2703 = vrot.slane %v2675, %v2702
        %v2704 = vcombine.high %v2682, %v2682
        %v2705 = vcombine.high %v2689, %v2689
        %v2706 = vcombine.high %v2696, %v2696
        %v2707 = vcombine.high %v2703, %v2703
        %v2708 = vcombine.high %v1846, %v1846
        %v2710 = vunpack.c.l.s4 1966171168
        %v2711 = vunpack.c.0.s8 %v2710
        %v2712 = vlaneseq
        %v2713 = vshrl.u32 %v2712, 7
        %v2714 = vsub.s32 %v2711, %v2713
        %v2715 = vrot.slane %v1846, %v2714
        %v2717 = vunpack.c.l.s4 1966171168
        %v2718 = vunpack.c.0.s8 %v2717
        %v2719 = vlaneseq
        %v2720 = vshrl.u32 %v2719, 7
        %v2721 = vsub.s32 %v2718, %v2720
        %v2722 = vrot.slane %v2708, %v2721
        %v2723 = vcombine.high %v2715, %v2715
        %v2724 = vcombine.high %v2722, %v2722
        %v2726 = vunpack.c.l.s4 1966171168
        %v2727 = vunpack.c.0.s8 %v2726
        %v2728 = vlaneseq
        %v2729 = vshrl.u32 %v2728, 7
        %v2730 = vsub.s32 %v2727, %v2729
        %v2731 = vrot.slane %v2715, %v2730
        %v2733 = vunpack.c.l.s4 1966171168
        %v2734 = vunpack.c.0.s8 %v2733
        %v2735 = vlaneseq
        %v2736 = vshrl.u32 %v2735, 7
        %v2737 = vsub.s32 %v2734, %v2736
        %v2738 = vrot.slane %v2722, %v2737
        %v2740 = vunpack.c.l.s4 1966171168
        %v2741 = vunpack.c.0.s8 %v2740
        %v2742 = vlaneseq
        %v2743 = vshrl.u32 %v2742, 7
        %v2744 = vsub.s32 %v2741, %v2743
        %v2745 = vrot.slane %v2723, %v2744
        %v2747 = vunpack.c.l.s4 1966171168
        %v2748 = vunpack.c.0.s8 %v2747
        %v2749 = vlaneseq
        %v2750 = vshrl.u32 %v2749, 7
        %v2751 = vsub.s32 %v2748, %v2750
        %v2752 = vrot.slane %v2724, %v2751
        %v2753 = vcombine.high %v2731, %v2731
        %v2754 = vcombine.high %v2738, %v2738
        %v2755 = vcombine.high %v2745, %v2745
        %v2756 = vcombine.high %v2752, %v2752
        %v2757 = vcombine.high %v1847, %v1847
        %v2759 = vunpack.c.l.s4 1966171168
        %v2760 = vunpack.c.0.s8 %v2759
        %v2761 = vlaneseq
        %v2762 = vshrl.u32 %v2761, 7
        %v2763 = vsub.s32 %v2760, %v2762
        %v2764 = vrot.slane %v1847, %v2763
        %v2766 = vunpack.c.l.s4 1966171168
        %v2767 = vunpack.c.0.s8 %v2766
        %v2768 = vlaneseq
        %v2769 = vshrl.u32 %v2768, 7
        %v2770 = vsub.s32 %v2767, %v2769
        %v2771 = vrot.slane %v2757, %v2770
        %v2772 = vcombine.high %v2764, %v2764
        %v2773 = vcombine.high %v2771, %v2771
        %v2775 = vunpack.c.l.s4 1966171168
        %v2776 = vunpack.c.0.s8 %v2775
        %v2777 = vlaneseq
        %v2778 = vshrl.u32 %v2777, 7
        %v2779 = vsub.s32 %v2776, %v2778
        %v2780 = vrot.slane %v2764, %v2779
        %v2782 = vunpack.c.l.s4 1966171168
        %v2783 = vunpack.c.0.s8 %v2782
        %v2784 = vlaneseq
        %v2785 = vshrl.u32 %v2784, 7
        %v2786 = vsub.s32 %v2783, %v2785
        %v2787 = vrot.slane %v2771, %v2786
        %v2789 = vunpack.c.l.s4 1966171168
        %v2790 = vunpack.c.0.s8 %v2789
        %v2791 = vlaneseq
        %v2792 = vshrl.u32 %v2791, 7
        %v2793 = vsub.s32 %v2790, %v2792
        %v2794 = vrot.slane %v2772, %v2793
        %v2796 = vunpack.c.l.s4 1966171168
        %v2797 = vunpack.c.0.s8 %v2796
        %v2798 = vlaneseq
        %v2799 = vshrl.u32 %v2798, 7
        %v2800 = vsub.s32 %v2797, %v2799
        %v2801 = vrot.slane %v2773, %v2800
        %v2802 = vcombine.high %v2780, %v2780
        %v2803 = vcombine.high %v2787, %v2787
        %v2804 = vcombine.high %v2794, %v2794
        %v2805 = vcombine.high %v2801, %v2801
        %v2807 = vunpack.c.l.s4 1966171168
        %v2808 = vunpack.c.0.s8 %v2807
        %v2809 = vlaneseq
        %v2810 = vshrl.u32 %v2809, 7
        %v2811 = vsub.s32 %v2808, %v2810
        %v2812 = vrot.slane %v1848, %v2811
        %v2814 = vunpack.c.l.s4 1966171168
        %v2815 = vunpack.c.0.s8 %v2814
        %v2816 = vlaneseq
        %v2817 = vshrl.u32 %v2816, 7
        %v2818 = vsub.s32 %v2815, %v2817
        %v2819 = vrot.slane %v2812, %v2818
        %v3628 = vunpack.c.l.b16 %v1849
        %v3629 = vunpack.c.h.b16 %v1849
        %v3630 = vunpack.c.l.b16 %v1850
        %v3631 = vunpack.c.h.b16 %v1850
        %v3632 = vunpack.c.l.b16 %v1851
        %v3633 = vunpack.c.h.b16 %v1851
        %v3634 = vunpack.c.l.b16 %v1852
        %v3635 = vunpack.c.h.b16 %v1852
        %v3636 = vunpack.c.l.b16 %v1853
        %v3637 = vunpack.c.h.b16 %v1853
        %v3638 = vunpack.c.l.b16 %v1854
        %v3639 = vunpack.c.h.b16 %v1854
        %v3640 = vunpack.c.l.b16 %v1855
        %v3641 = vunpack.c.h.b16 %v1855
        %v3642 = vunpack.c.l.b16 %v1856
        %v3643 = vunpack.c.h.b16 %v1856
        %v3644 = vunpack.c.l.b16 %v1857
        %v3645 = vunpack.c.h.b16 %v1857
        %v3646 = vunpack.c.l.b16 %v1858
        %v3647 = vunpack.c.h.b16 %v1858
        %v3648 = vunpack.c.l.b16 %v1859
        %v3649 = vunpack.c.h.b16 %v1859
        %v3650 = vunpack.c.l.b16 %v1860
        %v3651 = vunpack.c.h.b16 %v1860
        %v3652 = vunpack.c.l.b16 %v1861
        %v3653 = vunpack.c.h.b16 %v1861
        %v3654 = vunpack.c.l.b16 %v1862
        %v3655 = vunpack.c.h.b16 %v1862
        %v3656 = vunpack.c.l.b16 %v1863
        %v3657 = vunpack.c.h.b16 %v1863
        %v3658 = vunpack.c.l.b16 %v1864
        %v3659 = vunpack.c.h.b16 %v1864
        %v3660 = vunpack.c.l.b16 %v1865
        %v3661 = vunpack.c.h.b16 %v1865
        %v3662 = vunpack.c.l.b16 %v1866
        %v3663 = vunpack.c.h.b16 %v1866
        %v3664 = vunpack.c.l.b16 %v1867
        %v3665 = vunpack.c.h.b16 %v1867
        %v3666 = vunpack.c.l.b16 %v1868
        %v3667 = vunpack.c.h.b16 %v1868
        %v3668 = vunpack.c.l.b16 %v1869
        %v3669 = vunpack.c.h.b16 %v1869
        %v3670 = vunpack.c.l.b16 %v1870
        %v3671 = vunpack.c.h.b16 %v1870
        %v3672 = vunpack.c.l.b16 %v1871
        %v3673 = vunpack.c.h.b16 %v1871
        %v3674 = vunpack.c.l.b16 %v1872
        %v3675 = vunpack.c.h.b16 %v1872
        %v3676 = vunpack.c.l.b16 %v1873
        %v3677 = vunpack.c.h.b16 %v1873
        %v3678 = vunpack.c.l.b16 %v1874
        %v3679 = vunpack.c.h.b16 %v1874
        %v3680 = vunpack.c.l.b16 %v1875
        %v3681 = vunpack.c.h.b16 %v1875
        %v3682 = vunpack.c.l.b16 %v1876
        %v3683 = vunpack.c.h.b16 %v1876
        %v3684 = vunpack.c.l.b16 %v1877
        %v3685 = vunpack.c.h.b16 %v1877
        %v3686 = vunpack.c.l.b16 %v1878
        %v3687 = vunpack.c.h.b16 %v1878
        %v3688 = vunpack.c.l.b16 %v1879
        %v3689 = vunpack.c.h.b16 %v1879
        %v3690 = vunpack.c.l.b16 %v1880
        %v3691 = vunpack.c.h.b16 %v1880
        %v3692 = vunpack.c.l.b16 %v1881
        %v3693 = vunpack.c.h.b16 %v1881
        %v3694 = vunpack.c.l.b16 %v1882
        %v3695 = vunpack.c.h.b16 %v1882
        %v3696 = vunpack.c.l.b16 %v1883
        %v3697 = vunpack.c.h.b16 %v1883
        %v3698 = vunpack.c.l.b16 %v1884
        %v3699 = vunpack.c.h.b16 %v1884
        %v3700 = vunpack.c.l.b16 %v1885
        %v3701 = vunpack.c.h.b16 %v1885
        %v3702 = vunpack.c.l.b16 %v1886
        %v3703 = vunpack.c.h.b16 %v1886
        %v3704 = vunpack.c.l.b16 %v1887
        %v3705 = vunpack.c.h.b16 %v1887
        %v3706 = vunpack.c.l.b16 %v1888
        %v3707 = vunpack.c.h.b16 %v1888
        %v3708 = vunpack.c.l.b16 %v1889
        %v3709 = vunpack.c.h.b16 %v1889
        %v3710 = vunpack.c.l.b16 %v1890
        %v3711 = vunpack.c.h.b16 %v1890
        %v3712 = vunpack.c.l.b16 %v1891
        %v3713 = vunpack.c.h.b16 %v1891
        %v3714 = vunpack.c.l.b16 %v1892
        %v3715 = vunpack.c.h.b16 %v1892
        %v3716 = vunpack.c.l.b16 %v1893
        %v3717 = vunpack.c.h.b16 %v1893
        %v3718 = vunpack.c.l.b16 %v1894
        %v3719 = vunpack.c.h.b16 %v1894
        %v3720 = vunpack.c.l.b16 %v1895
        %v3721 = vunpack.c.h.b16 %v1895
        %v3722 = vunpack.c.l.b16 %v1896
        %v3723 = vunpack.c.h.b16 %v1896
        %v3724 = vunpack.c.l.b16 %v1897
        %v3725 = vunpack.c.h.b16 %v1897
        %v3726 = vunpack.c.l.b16 %v1898
        %v3727 = vunpack.c.h.b16 %v1898
        %v3728 = vunpack.c.l.b16 %v1899
        %v3729 = vunpack.c.h.b16 %v1899
        %v3730 = vunpack.c.l.b16 %v1900
        %v3731 = vunpack.c.h.b16 %v1900
        %v3732 = vunpack.c.l.b16 %v1901
        %v3733 = vunpack.c.h.b16 %v1901
        %v3734 = vunpack.c.l.b16 %v1902
        %v3735 = vunpack.c.h.b16 %v1902
        %v3736 = vunpack.c.l.b16 %v1903
        %v3737 = vunpack.c.h.b16 %v1903
        %v3738 = vunpack.c.l.b16 %v1904
        %v3739 = vunpack.c.h.b16 %v1904
        %v3740 = vunpack.c.l.b16 %v1905
        %v3741 = vunpack.c.h.b16 %v1905
        %v3742 = vunpack.c.l.b16 %v1906
        %v3743 = vunpack.c.h.b16 %v1906
        %v3744 = vunpack.c.l.b16 %v1907
        %v3745 = vunpack.c.h.b16 %v1907
        %v3746 = vunpack.c.l.b16 %v1908
        %v3747 = vunpack.c.h.b16 %v1908
        %v3748 = vunpack.c.l.b16 %v1909
        %v3749 = vunpack.c.h.b16 %v1909
        %v3750 = vunpack.c.l.b16 %v1910
        %v3751 = vunpack.c.h.b16 %v1910
        %v3752 = vunpack.c.l.b16 %v1911
        %v3753 = vunpack.c.h.b16 %v1911
        %v3754 = vunpack.c.l.b16 %v1912
        %v3755 = vunpack.c.h.b16 %v1912
        %v3756 = vunpack.c.l.b16 %v1913
        %v3757 = vunpack.c.h.b16 %v1913
        %v3758 = vunpack.c.l.b16 %v1914
        %v3759 = vunpack.c.h.b16 %v1914
        %v3760 = vunpack.c.l.b16 %v1915
        %v3761 = vunpack.c.h.b16 %v1915
        %v3762 = vunpack.c.l.b16 %v1916
        %v3763 = vunpack.c.h.b16 %v1916
        %v3764 = vunpack.c.l.b16 %v1917
        %v3765 = vunpack.c.h.b16 %v1917
        %v3766 = vunpack.c.l.b16 %v1918
        %v3767 = vunpack.c.h.b16 %v1918
        %v3768 = vunpack.c.l.b16 %v1919
        %v3769 = vunpack.c.h.b16 %v1919
        %v3770 = vunpack.c.l.b16 %v1920
        %v3771 = vunpack.c.h.b16 %v1920
        %v3772 = vunpack.c.l.b16 %v1921
        %v3773 = vunpack.c.h.b16 %v1921
        %v3774 = vunpack.c.l.b16 %v1922
        %v3775 = vunpack.c.h.b16 %v1922
        %v3776 = vunpack.c.l.b16 %v1923
        %v3777 = vunpack.c.h.b16 %v1923
        %v3778 = vunpack.c.l.b16 %v1924
        %v3779 = vunpack.c.h.b16 %v1924
        %v3780 = vunpack.c.l.b16 %v1925
        %v3781 = vunpack.c.h.b16 %v1925
        %v3782 = vunpack.c.l.b16 %v1926
        %v3783 = vunpack.c.h.b16 %v1926
        %v3784 = vunpack.c.l.b16 %v1927
        %v3785 = vunpack.c.h.b16 %v1927
        %v3786 = vunpack.c.l.b16 %v1928
        %v3787 = vunpack.c.h.b16 %v1928
        %v3788 = vunpack.c.l.b16 %v1929
        %v3789 = vunpack.c.h.b16 %v1929
        %v3790 = vunpack.c.l.b16 %v1930
        %v3791 = vunpack.c.h.b16 %v1930
        %v3792 = vunpack.c.l.b16 %v1931
        %v3793 = vunpack.c.h.b16 %v1931
        %v3794 = vunpack.c.l.b16 %v1932
        %v3795 = vunpack.c.h.b16 %v1932
        %v3796 = vunpack.c.l.b16 %v1933
        %v3797 = vunpack.c.h.b16 %v1933
        %v3798 = vunpack.c.l.b16 %v1934
        %v3799 = vunpack.c.h.b16 %v1934
        %v3800 = vunpack.c.l.b16 %v1935
        %v3801 = vunpack.c.h.b16 %v1935
        %v3802 = vunpack.c.l.b16 %v1936
        %v3803 = vunpack.c.h.b16 %v1936
        %v3804 = vunpack.c.l.b16 %v1937
        %v3805 = vunpack.c.h.b16 %v1937
        %v3806 = vunpack.c.l.b16 %v1938
        %v3807 = vunpack.c.h.b16 %v1938
        %v3808 = vunpack.c.l.b16 %v1939
        %v3809 = vunpack.c.h.b16 %v1939
        %v3810 = vunpack.c.l.b16 %v1940
        %v3811 = vunpack.c.h.b16 %v1940
        %v3812 = vunpack.c.l.b16 %v1941
        %v3813 = vunpack.c.h.b16 %v1941
        %v3814 = vunpack.c.l.b16 %v1942
        %v3815 = vunpack.c.h.b16 %v1942
        %v3816 = vunpack.c.l.b16 %v1943
        %v3817 = vunpack.c.h.b16 %v1943
        %v3818 = vunpack.c.l.b16 %v1944
        %v3819 = vunpack.c.h.b16 %v1944
        %v3820 = vunpack.c.l.b16 %v1945
        %v3821 = vunpack.c.h.b16 %v1945
        %v3822 = vunpack.c.l.b16 %v1946
        %v3823 = vunpack.c.h.b16 %v1946
        %v3824 = vunpack.c.l.b16 %v1947
        %v3825 = vunpack.c.h.b16 %v1947
        %v3826 = vunpack.c.l.b16 %v1948
        %v3827 = vunpack.c.h.b16 %v1948
        %v3828 = vunpack.c.l.b16 %v1949
        %v3829 = vunpack.c.h.b16 %v1949
        %v3830 = vunpack.c.l.b16 %v1950
        %v3831 = vunpack.c.h.b16 %v1950
        %v3832 = vunpack.c.l.b16 %v1951
        %v3833 = vunpack.c.h.b16 %v1951
        %v3834 = vunpack.c.l.b16 %v1952
        %v3835 = vunpack.c.h.b16 %v1952
        %v3836 = vunpack.c.l.b16 %v1953
        %v3837 = vunpack.c.h.b16 %v1953
        %v3838 = vunpack.c.l.b16 %v1954
        %v3839 = vunpack.c.h.b16 %v1954
        %v3840 = vunpack.c.l.b16 %v1955
        %v3841 = vunpack.c.h.b16 %v1955
        %v3842 = vunpack.c.l.b16 %v1956
        %v3843 = vunpack.c.h.b16 %v1956
        %v3844 = vunpack.c.l.b16 %v1957
        %v3845 = vunpack.c.h.b16 %v1957
        %v3846 = vunpack.c.l.b16 %v1958
        %v3847 = vunpack.c.h.b16 %v1958
        %v3848 = vunpack.c.l.b16 %v1959
        %v3849 = vunpack.c.h.b16 %v1959
        %v3850 = vunpack.c.l.b16 %v1960
        %v3851 = vunpack.c.h.b16 %v1960
        %v3852 = vunpack.c.l.b16 %v1961
        %v3853 = vunpack.c.h.b16 %v1961
        %v3854 = vunpack.c.l.b16 %v1962
        %v3855 = vunpack.c.h.b16 %v1962
        %v3856 = vunpack.c.l.b16 %v1963
        %v3857 = vunpack.c.h.b16 %v1963
        %v3858 = vunpack.c.l.b16 %v1964
        %v3859 = vunpack.c.h.b16 %v1964
        %v3860 = vunpack.c.l.b16 %v1965
        %v3861 = vunpack.c.h.b16 %v1965
        %v3862 = vunpack.c.l.b16 %v1966
        %v3863 = vunpack.c.h.b16 %v1966
        %v3864 = vunpack.c.l.b16 %v1967
        %v3865 = vunpack.c.h.b16 %v1967
        %v3866 = vunpack.c.l.b16 %v1968
        %v3867 = vunpack.c.h.b16 %v1968
        %v3868 = vunpack.c.l.b16 %v1969
        %v3869 = vunpack.c.h.b16 %v1969
        %v3870 = vunpack.c.l.b16 %v1970
        %v3871 = vunpack.c.h.b16 %v1970
        %v3872 = vunpack.c.l.b16 %v1971
        %v3873 = vunpack.c.h.b16 %v1971
        %v3874 = vunpack.c.l.b16 %v1972
        %v3875 = vunpack.c.h.b16 %v1972
        %v3876 = vunpack.c.l.b16 %v1973
        %v3877 = vunpack.c.h.b16 %v1973
        %v3878 = vunpack.c.l.b16 %v1974
        %v3879 = vunpack.c.h.b16 %v1974
        %v3880 = vunpack.c.l.b16 %v1975
        %v3881 = vunpack.c.h.b16 %v1975
        %v3882 = vunpack.c.l.b16 %v1976
        %v3883 = vunpack.c.h.b16 %v1976
        %v3884 = vunpack.c.l.b16 %v1977
        %v3885 = vunpack.c.h.b16 %v1977
        %v3886 = vunpack.c.l.b16 %v1978
        %v3887 = vunpack.c.h.b16 %v1978
        %v3888 = vunpack.c.l.b16 %v1979
        %v3889 = vunpack.c.h.b16 %v1979
        %v3890 = vunpack.c.l.b16 %v1980
        %v3891 = vunpack.c.h.b16 %v1980
        %v3892 = vunpack.c.l.b16 %v1981
        %v3893 = vunpack.c.h.b16 %v1981
        %v3894 = vunpack.c.l.b16 %v1982
        %v3895 = vunpack.c.h.b16 %v1982
        %v3896 = vunpack.c.l.b16 %v1983
        %v3897 = vunpack.c.h.b16 %v1983
        %v3898 = vunpack.c.l.b16 %v1984
        %v3899 = vunpack.c.h.b16 %v1984
        %v3900 = vunpack.c.l.b16 %v1985
        %v3901 = vunpack.c.h.b16 %v1985
        %v3902 = vunpack.c.l.b16 %v1986
        %v3903 = vunpack.c.h.b16 %v1986
        %v3904 = vunpack.c.l.b16 %v1987
        %v3905 = vunpack.c.h.b16 %v1987
        %v3906 = vunpack.c.l.b16 %v1988
        %v3907 = vunpack.c.h.b16 %v1988
        %v3908 = vunpack.c.l.b16 %v1989
        %v3909 = vunpack.c.h.b16 %v1989
        %v3910 = vunpack.c.l.b16 %v1990
        %v3911 = vunpack.c.h.b16 %v1990
        %v3912 = vunpack.c.l.b16 %v1991
        %v3913 = vunpack.c.h.b16 %v1991
        %v3914 = vunpack.c.l.b16 %v1992
        %v3915 = vunpack.c.h.b16 %v1992
        %v3916 = vunpack.c.l.b16 %v1993
        %v3917 = vunpack.c.h.b16 %v1993
        %v3918 = vunpack.c.l.b16 %v1994
        %v3919 = vunpack.c.h.b16 %v1994
        %v3920 = vunpack.c.l.b16 %v1995
        %v3921 = vunpack.c.h.b16 %v1995
        %v3922 = vunpack.c.l.b16 %v1996
        %v3923 = vunpack.c.h.b16 %v1996
        %v3924 = vunpack.c.l.b16 %v1997
        %v3925 = vunpack.c.h.b16 %v1997
        %v3926 = vunpack.c.l.b16 %v1998
        %v3927 = vunpack.c.h.b16 %v1998
        %v3928 = vunpack.c.l.b16 %v1999
        %v3929 = vunpack.c.h.b16 %v1999
        %v3930 = vunpack.c.l.b16 %v2000
        %v3931 = vunpack.c.h.b16 %v2000
        %v3932 = vunpack.c.l.b16 %v2001
        %v3933 = vunpack.c.h.b16 %v2001
        %v3934 = vunpack.c.l.b16 %v2002
        %v3935 = vunpack.c.h.b16 %v2002
        %v3936 = vunpack.c.l.b16 %v2003
        %v3937 = vunpack.c.h.b16 %v2003
        %v3938 = vunpack.c.l.b16 %v2004
        %v3939 = vunpack.c.h.b16 %v2004
        %v3940 = vunpack.c.l.b16 %v2005
        %v3941 = vunpack.c.h.b16 %v2005
        %v3942 = vunpack.c.l.b16 %v2006
        %v3943 = vunpack.c.h.b16 %v2006
        %v3944 = vunpack.c.l.b16 %v2007
        %v3945 = vunpack.c.h.b16 %v2007
        %v3946 = vunpack.c.l.b16 %v2008
        %v3947 = vunpack.c.h.b16 %v2008
        %v3948 = vunpack.c.l.b16 %v2009
        %v3949 = vunpack.c.h.b16 %v2009
        %v3950 = vunpack.c.l.b16 %v2010
        %v3951 = vunpack.c.h.b16 %v2010
        %v3952 = vunpack.c.l.b16 %v2011
        %v3953 = vunpack.c.h.b16 %v2011
        %v3954 = vunpack.c.l.b16 %v2012
        %v3955 = vunpack.c.h.b16 %v2012
        %v3956 = vunpack.c.l.b16 %v2013
        %v3957 = vunpack.c.h.b16 %v2013
        %v3958 = vunpack.c.l.b16 %v2014
        %v3959 = vunpack.c.h.b16 %v2014
        %v3960 = vunpack.c.l.b16 %v2015
        %v3961 = vunpack.c.h.b16 %v2015
        %v3962 = vunpack.c.l.b16 %v2016
        %v3963 = vunpack.c.h.b16 %v2016
        %v3964 = vunpack.c.l.b16 %v2017
        %v3965 = vunpack.c.h.b16 %v2017
        %v3966 = vunpack.c.l.b16 %v2018
        %v3967 = vunpack.c.h.b16 %v2018
        %v3968 = vunpack.c.l.b16 %v2019
        %v3969 = vunpack.c.h.b16 %v2019
        %v3970 = vunpack.c.l.b16 %v2020
        %v3971 = vunpack.c.h.b16 %v2020
        %v3972 = vunpack.c.l.b16 %v2021
        %v3973 = vunpack.c.h.b16 %v2021
        %v3974 = vunpack.c.l.b16 %v2022
        %v3975 = vunpack.c.h.b16 %v2022
        %v3976 = vunpack.c.l.b16 %v2023
        %v3977 = vunpack.c.h.b16 %v2023
        %v3978 = vunpack.c.l.b16 %v2024
        %v3979 = vunpack.c.h.b16 %v2024
        %v3980 = vunpack.c.l.b16 %v2025
        %v3981 = vunpack.c.h.b16 %v2025
        %v3982 = vunpack.c.l.b16 %v2026
        %v3983 = vunpack.c.h.b16 %v2026
        %v3984 = vunpack.c.l.b16 %v2027
        %v3985 = vunpack.c.h.b16 %v2027
        %v3986 = vunpack.c.l.b16 %v2028
        %v3987 = vunpack.c.h.b16 %v2028
        %v3988 = vunpack.c.l.b16 %v2029
        %v3989 = vunpack.c.h.b16 %v2029
        %v3990 = vunpack.c.l.b16 %v2030
        %v3991 = vunpack.c.h.b16 %v2030
        %v3992 = vunpack.c.l.b16 %v2031
        %v3993 = vunpack.c.h.b16 %v2031
        %v3994 = vunpack.c.l.b16 %v2032
        %v3995 = vunpack.c.h.b16 %v2032
        %v3996 = vunpack.c.l.b16 %v2033
        %v3997 = vunpack.c.h.b16 %v2033
        %v3998 = vunpack.c.l.b16 %v2034
        %v3999 = vunpack.c.h.b16 %v2034
        %v4000 = vunpack.c.l.b16 %v2035
        %v4001 = vunpack.c.h.b16 %v2035
        %v4002 = vunpack.c.l.b16 %v2036
        %v4003 = vunpack.c.h.b16 %v2036
        %v4004 = vunpack.c.l.b16 %v2037
        %v4005 = vunpack.c.h.b16 %v2037
        %v4006 = vunpack.c.l.b16 %v2038
        %v4007 = vunpack.c.h.b16 %v2038
        %v4008 = vunpack.c.l.b16 %v2039
        %v4009 = vunpack.c.h.b16 %v2039
        %v4010 = vunpack.c.l.b16 %v2040
        %v4011 = vunpack.c.h.b16 %v2040
        %v4012 = vunpack.c.l.b16 %v2041
        %v4013 = vunpack.c.h.b16 %v2041
        %v4014 = vunpack.c.l.b16 %v2042
        %v4015 = vunpack.c.h.b16 %v2042
        %v4016 = vunpack.c.l.b16 %v2043
        %v4017 = vunpack.c.h.b16 %v2043
        %v4018 = vunpack.c.l.b16 %v2044
        %v4019 = vunpack.c.h.b16 %v2044
        %v4020 = vunpack.c.l.b16 %v2045
        %v4021 = vunpack.c.h.b16 %v2045
        %v4022 = vunpack.c.l.b16 %v2046
        %v4023 = vunpack.c.h.b16 %v2046
        %v4024 = vunpack.c.l.b16 %v2047
        %v4025 = vunpack.c.h.b16 %v2047
        %v4026 = vunpack.c.l.b16 %v2048
        %v4027 = vunpack.c.h.b16 %v2048
        %v4028 = vunpack.c.l.b16 %v2049
        %v4029 = vunpack.c.h.b16 %v2049
        %v4030 = vunpack.c.l.b16 %v2050
        %v4031 = vunpack.c.h.b16 %v2050
        %v4032 = vunpack.c.l.b16 %v2051
        %v4033 = vunpack.c.h.b16 %v2051
        %v4034 = vunpack.c.l.b16 %v2052
        %v4035 = vunpack.c.h.b16 %v2052
        %v4036 = vunpack.c.l.b16 %v2053
        %v4037 = vunpack.c.h.b16 %v2053
        %v4038 = vunpack.c.l.b16 %v2054
        %v4039 = vunpack.c.h.b16 %v2054
        %v4040 = vunpack.c.l.b16 %v2055
        %v4041 = vunpack.c.h.b16 %v2055
        %v4042 = vunpack.c.l.b16 %v2056
        %v4043 = vunpack.c.h.b16 %v2056
        %v4044 = vunpack.c.l.b16 %v2057
        %v4045 = vunpack.c.h.b16 %v2057
        %v4046 = vunpack.c.l.b16 %v2058
        %v4047 = vunpack.c.h.b16 %v2058
        %v4048 = vunpack.c.l.b16 %v2059
        %v4049 = vunpack.c.h.b16 %v2059
        %v4050 = vunpack.c.l.b16 %v2060
        %v4051 = vunpack.c.h.b16 %v2060
        %v4052 = vunpack.c.l.b16 %v2061
        %v4053 = vunpack.c.h.b16 %v2061
        %v4054 = vunpack.c.l.b16 %v2062
        %v4055 = vunpack.c.h.b16 %v2062
        %v4056 = vunpack.c.l.b16 %v2063
        %v4057 = vunpack.c.h.b16 %v2063
        %v4058 = vunpack.c.l.b16 %v2064
        %v4059 = vunpack.c.h.b16 %v2064
        %v4060 = vunpack.c.l.b16 %v2065
        %v4061 = vunpack.c.h.b16 %v2065
        %v4062 = vunpack.c.l.b16 %v2066
        %v4063 = vunpack.c.h.b16 %v2066
        %v4064 = vunpack.c.l.b16 %v2067
        %v4065 = vunpack.c.h.b16 %v2067
        %v4066 = vunpack.c.l.b16 %v2068
        %v4067 = vunpack.c.h.b16 %v2068
        %v4068 = vunpack.c.l.b16 %v2069
        %v4069 = vunpack.c.h.b16 %v2069
        %v4070 = vunpack.c.l.b16 %v2070
        %v4071 = vunpack.c.h.b16 %v2070
        %v4072 = vunpack.c.l.b16 %v2071
        %v4073 = vunpack.c.h.b16 %v2071
        %v4074 = vunpack.c.l.b16 %v2072
        %v4075 = vunpack.c.h.b16 %v2072
        %v4076 = vunpack.c.l.b16 %v2073
        %v4077 = vunpack.c.h.b16 %v2073
        %v4078 = vunpack.c.l.b16 %v2074
        %v4079 = vunpack.c.h.b16 %v2074
        %v4080 = vunpack.c.l.b16 %v2075
        %v4081 = vunpack.c.h.b16 %v2075
        %v4082 = vunpack.c.l.b16 %v2076
        %v4083 = vunpack.c.h.b16 %v2076
        %v4084 = vunpack.c.l.b16 %v2077
        %v4085 = vunpack.c.h.b16 %v2077
        %v4086 = vunpack.c.l.b16 %v2078
        %v4087 = vunpack.c.h.b16 %v2078
        %v4088 = vunpack.c.l.b16 %v2079
        %v4089 = vunpack.c.h.b16 %v2079
        %v4090 = vunpack.c.l.b16 %v2080
        %v4091 = vunpack.c.h.b16 %v2080
        %v4092 = vunpack.c.l.b16 %v2081
        %v4093 = vunpack.c.h.b16 %v2081
        %v4094 = vunpack.c.l.b16 %v2082
        %v4095 = vunpack.c.h.b16 %v2082
        %v4096 = vunpack.c.l.b16 %v2083
        %v4097 = vunpack.c.h.b16 %v2083
        %v4098 = vunpack.c.l.b16 %v2084
        %v4099 = vunpack.c.h.b16 %v2084
        %v4100 = vunpack.c.l.b16 %v2085
        %v4101 = vunpack.c.h.b16 %v2085
        %v4102 = vunpack.c.l.b16 %v2086
        %v4103 = vunpack.c.h.b16 %v2086
        %v4104 = vunpack.c.l.b16 %v2087
        %v4105 = vunpack.c.h.b16 %v2087
        %v4106 = vunpack.c.l.b16 %v2088
        %v4107 = vunpack.c.h.b16 %v2088
        %v4108 = vunpack.c.l.b16 %v2089
        %v4109 = vunpack.c.h.b16 %v2089
        %v4110 = vunpack.c.l.b16 %v2090
        %v4111 = vunpack.c.h.b16 %v2090
        %v4112 = vunpack.c.l.b16 %v2091
        %v4113 = vunpack.c.h.b16 %v2091
        %v4114 = vunpack.c.l.b16 %v2092
        %v4115 = vunpack.c.h.b16 %v2092
        %v4116 = vunpack.c.l.b16 %v2093
        %v4117 = vunpack.c.h.b16 %v2093
        %v4118 = vunpack.c.l.b16 %v2094
        %v4119 = vunpack.c.h.b16 %v2094
        %v4120 = vunpack.c.l.b16 %v2095
        %v4121 = vunpack.c.h.b16 %v2095
        %v4122 = vunpack.c.l.b16 %v2096
        %v4123 = vunpack.c.h.b16 %v2096
        %v4124 = vunpack.c.l.b16 %v2097
        %v4125 = vunpack.c.h.b16 %v2097
        %v4126 = vunpack.c.l.b16 %v2098
        %v4127 = vunpack.c.h.b16 %v2098
        %v4128 = vunpack.c.l.b16 %v2099
        %v4129 = vunpack.c.h.b16 %v2099
        %v4130 = vunpack.c.l.b16 %v2100
        %v4131 = vunpack.c.h.b16 %v2100
        %v4132 = vunpack.c.l.b16 %v2101
        %v4133 = vunpack.c.h.b16 %v2101
        %v4134 = vunpack.c.l.b16 %v2102
        %v4135 = vunpack.c.h.b16 %v2102
        %v4136 = vunpack.c.l.b16 %v2103
        %v4137 = vunpack.c.h.b16 %v2103
        %v4138 = vunpack.c.l.b16 %v2104
        %v4139 = vunpack.c.h.b16 %v2104
        %v4140 = vunpack.c.l.b16 %v2105
        %v4141 = vunpack.c.h.b16 %v2105
        %v4142 = vunpack.c.l.b16 %v2106
        %v4143 = vunpack.c.h.b16 %v2106
        %v4144 = vunpack.c.l.b16 %v2107
        %v4145 = vunpack.c.h.b16 %v2107
        %v4146 = vunpack.c.l.b16 %v2108
        %v4147 = vunpack.c.h.b16 %v2108
        %v4148 = vunpack.c.l.b16 %v2109
        %v4149 = vunpack.c.h.b16 %v2109
        %v4150 = vunpack.c.l.b16 %v2110
        %v4151 = vunpack.c.h.b16 %v2110
        %v4152 = vunpack.c.l.b16 %v2111
        %v4153 = vunpack.c.h.b16 %v2111
        %v4154 = vunpack.c.l.b16 %v2112
        %v4155 = vunpack.c.h.b16 %v2112
        %v4156 = vunpack.c.l.b16 %v2113
        %v4157 = vunpack.c.h.b16 %v2113
        %v4158 = vunpack.c.l.b16 %v2114
        %v4159 = vunpack.c.h.b16 %v2114
        %v4160 = vunpack.c.l.b16 %v2115
        %v4161 = vunpack.c.h.b16 %v2115
        %v4162 = vunpack.c.l.b16 %v2116
        %v4163 = vunpack.c.h.b16 %v2116
        %v4164 = vunpack.c.l.b16 %v2117
        %v4165 = vunpack.c.h.b16 %v2117
        %v4166 = vunpack.c.l.b16 %v2118
        %v4167 = vunpack.c.h.b16 %v2118
        %v4168 = vunpack.c.l.b16 %v2119
        %v4169 = vunpack.c.h.b16 %v2119
        %v4170 = vunpack.c.l.b16 %v2120
        %v4171 = vunpack.c.h.b16 %v2120
        %v4172 = vunpack.c.l.b16 %v2121
        %v4173 = vunpack.c.h.b16 %v2121
        %v4174 = vunpack.c.l.b16 %v2122
        %v4175 = vunpack.c.h.b16 %v2122
        %v4176 = vunpack.c.l.b16 %v2123
        %v4177 = vunpack.c.h.b16 %v2123
        %v4178 = vunpack.c.l.b16 %v2124
        %v4179 = vunpack.c.h.b16 %v2124
        %v4180 = vunpack.c.l.b16 %v2125
        %v4181 = vunpack.c.h.b16 %v2125
        %v4182 = vunpack.c.l.b16 %v2126
        %v4183 = vunpack.c.h.b16 %v2126
        %v4184 = vunpack.c.l.b16 %v2127
        %v4185 = vunpack.c.h.b16 %v2127
        %v4186 = vunpack.c.l.b16 %v2128
        %v4187 = vunpack.c.h.b16 %v2128
        %v4188 = vunpack.c.l.b16 %v2129
        %v4189 = vunpack.c.h.b16 %v2129
        %v4190 = vunpack.c.l.b16 %v2130
        %v4191 = vunpack.c.h.b16 %v2130
        %v4192 = vunpack.c.l.b16 %v2131
        %v4193 = vunpack.c.h.b16 %v2131
        %v4194 = vunpack.c.l.b16 %v2132
        %v4195 = vunpack.c.h.b16 %v2132
        %v4196 = vunpack.c.l.b16 %v2133
        %v4197 = vunpack.c.h.b16 %v2133
        %v4198 = vunpack.c.l.b16 %v2134
        %v4199 = vunpack.c.h.b16 %v2134
        %v4200 = vunpack.c.l.b16 %v2135
        %v4201 = vunpack.c.h.b16 %v2135
        %v4202 = vunpack.c.l.b16 %v2136
        %v4203 = vunpack.c.h.b16 %v2136
        %v4204 = vunpack.c.l.b16 %v2137
        %v4205 = vunpack.c.h.b16 %v2137
        %v4206 = vunpack.c.l.b16 %v2138
        %v4207 = vunpack.c.h.b16 %v2138
        %v4208 = vunpack.c.l.b16 %v2139
        %v4209 = vunpack.c.h.b16 %v2139
        %v4210 = vunpack.c.l.b16 %v2140
        %v4211 = vunpack.c.h.b16 %v2140
        %v4212 = vunpack.c.l.b16 %v2141
        %v4213 = vunpack.c.h.b16 %v2141
        %v4214 = vunpack.c.l.b16 %v2142
        %v4215 = vunpack.c.h.b16 %v2142
        %v4216 = vunpack.c.l.b16 %v2143
        %v4217 = vunpack.c.h.b16 %v2143
        %v4218 = vunpack.c.l.b16 %v2144
        %v4219 = vunpack.c.h.b16 %v2144
        %v4220 = vunpack.c.l.b16 %v2145
        %v4221 = vunpack.c.h.b16 %v2145
        %v4222 = vunpack.c.l.b16 %v2146
        %v4223 = vunpack.c.h.b16 %v2146
        %v4224 = vunpack.c.l.b16 %v2147
        %v4225 = vunpack.c.h.b16 %v2147
        %v4226 = vunpack.c.l.b16 %v2148
        %v4227 = vunpack.c.h.b16 %v2148
        %v4228 = vunpack.c.l.b16 %v2149
        %v4229 = vunpack.c.h.b16 %v2149
        %v4230 = vunpack.c.l.b16 %v2150
        %v4231 = vunpack.c.h.b16 %v2150
        %v4232 = vunpack.c.l.b16 %v2151
        %v4233 = vunpack.c.h.b16 %v2151
        %v4234 = vunpack.c.l.b16 %v2152
        %v4235 = vunpack.c.h.b16 %v2152
        %v4236 = vunpack.c.l.b16 %v2153
        %v4237 = vunpack.c.h.b16 %v2153
        %v4238 = vunpack.c.l.b16 %v2154
        %v4239 = vunpack.c.h.b16 %v2154
        %v4240 = vunpack.c.l.b16 %v2155
        %v4241 = vunpack.c.h.b16 %v2155
        %v4242 = vunpack.c.l.b16 %v2156
        %v4243 = vunpack.c.h.b16 %v2156
        %v4244 = vunpack.c.l.b16 %v2157
        %v4245 = vunpack.c.h.b16 %v2157
        %v4246 = vunpack.c.l.b16 %v2158
        %v4247 = vunpack.c.h.b16 %v2158
        %v4248 = vunpack.c.l.b16 %v2159
        %v4249 = vunpack.c.h.b16 %v2159
        %v4250 = vunpack.c.l.b16 %v2160
        %v4251 = vunpack.c.h.b16 %v2160
        %v4252 = vunpack.c.l.b16 %v2161
        %v4253 = vunpack.c.h.b16 %v2161
        %v4254 = vunpack.c.l.b16 %v2162
        %v4255 = vunpack.c.h.b16 %v2162
        %v4256 = vunpack.c.l.b16 %v2163
        %v4257 = vunpack.c.h.b16 %v2163
        %v4258 = vunpack.c.l.b16 %v2164
        %v4259 = vunpack.c.h.b16 %v2164
        %v4260 = vunpack.c.l.b16 %v2165
        %v4261 = vunpack.c.h.b16 %v2165
        %v4262 = vunpack.c.l.b16 %v2166
        %v4263 = vunpack.c.h.b16 %v2166
        %v4264 = vunpack.c.l.b16 %v2167
        %v4265 = vunpack.c.h.b16 %v2167
        %v4266 = vunpack.c.l.b16 %v2168
        %v4267 = vunpack.c.h.b16 %v2168
        %v4268 = vunpack.c.l.b16 %v2169
        %v4269 = vunpack.c.h.b16 %v2169
        %v4270 = vunpack.c.l.b16 %v2170
        %v4271 = vunpack.c.h.b16 %v2170
        %v4272 = vunpack.c.l.b16 %v2171
        %v4273 = vunpack.c.h.b16 %v2171
        %v4274 = vunpack.c.l.b16 %v2172
        %v4275 = vunpack.c.h.b16 %v2172
        %v4276 = vunpack.c.l.b16 %v2173
        %v4277 = vunpack.c.h.b16 %v2173
        %v4278 = vunpack.c.l.b16 %v2174
        %v4279 = vunpack.c.h.b16 %v2174
        %v4280 = vunpack.c.l.b16 %v2175
        %v4281 = vunpack.c.h.b16 %v2175
        %v4282 = vunpack.c.l.b16 %v2176
        %v4283 = vunpack.c.h.b16 %v2176
        %v4284 = vunpack.c.l.b16 %v2177
        %v4285 = vunpack.c.h.b16 %v2177
        %v4286 = vunpack.c.l.b16 %v2178
        %v4287 = vunpack.c.h.b16 %v2178
        %v4288 = vunpack.c.l.b16 %v2179
        %v4289 = vunpack.c.h.b16 %v2179
        %v4290 = vunpack.c.l.b16 %v2180
        %v4291 = vunpack.c.h.b16 %v2180
        %v4292 = vunpack.c.l.b16 %v2181
        %v4293 = vunpack.c.h.b16 %v2181
        %v4294 = vunpack.c.l.b16 %v2182
        %v4295 = vunpack.c.h.b16 %v2182
        %v4296 = vunpack.c.l.b16 %v2183
        %v4297 = vunpack.c.h.b16 %v2183
        %v4298 = vunpack.c.l.b16 %v2184
        %v4299 = vunpack.c.h.b16 %v2184
        %v4300 = vunpack.c.l.b16 %v2185
        %v4301 = vunpack.c.h.b16 %v2185
        %v4302 = vunpack.c.l.b16 %v2186
        %v4303 = vunpack.c.h.b16 %v2186
        %v4304 = vunpack.c.l.b16 %v2187
        %v4305 = vunpack.c.h.b16 %v2187
        %v4306 = vunpack.c.l.b16 %v2188
        %v4307 = vunpack.c.h.b16 %v2188
        %v4308 = vunpack.c.l.b16 %v2189
        %v4309 = vunpack.c.h.b16 %v2189
        %v4310 = vunpack.c.l.b16 %v2190
        %v4311 = vunpack.c.h.b16 %v2190
        %v4312 = vunpack.c.l.b16 %v2191
        %v4313 = vunpack.c.h.b16 %v2191
        %v4314 = vunpack.c.l.b16 %v2192
        %v4315 = vunpack.c.h.b16 %v2192
        %v4316 = vunpack.c.l.b16 %v2193
        %v4317 = vunpack.c.h.b16 %v2193
        %v4318 = vunpack.c.l.b16 %v2194
        %v4319 = vunpack.c.h.b16 %v2194
        %v4320 = vunpack.c.l.b16 %v2195
        %v4321 = vunpack.c.h.b16 %v2195
        %v4322 = vunpack.c.l.b16 %v2196
        %v4323 = vunpack.c.h.b16 %v2196
        %v4324 = vunpack.c.l.b16 %v2197
        %v4325 = vunpack.c.h.b16 %v2197
        %v4326 = vunpack.c.l.b16 %v2198
        %v4327 = vunpack.c.h.b16 %v2198
        %v4328 = vunpack.c.l.b16 %v2199
        %v4329 = vunpack.c.h.b16 %v2199
        %v4330 = vunpack.c.l.b16 %v2200
        %v4331 = vunpack.c.h.b16 %v2200
        %v4332 = vunpack.c.l.b16 %v2201
        %v4333 = vunpack.c.h.b16 %v2201
        %v4334 = vunpack.c.l.b16 %v2202
        %v4335 = vunpack.c.h.b16 %v2202
        %v4336 = vunpack.c.l.b16 %v2203
        %v4337 = vunpack.c.h.b16 %v2203
        %v4338 = vunpack.c.l.b16 %v2204
        %v4339 = vunpack.c.h.b16 %v2204
        %v4340 = vunpack.c.l.b16 %v2205
        %v4341 = vunpack.c.h.b16 %v2205
        %v4342 = vunpack.c.l.b16 %v2206
        %v4343 = vunpack.c.h.b16 %v2206
        %v4344 = vunpack.c.l.b16 %v2207
        %v4345 = vunpack.c.h.b16 %v2207
        %v4346 = vunpack.c.l.b16 %v2208
        %v4347 = vunpack.c.h.b16 %v2208
        %v4348 = vunpack.c.l.b16 %v2209
        %v4349 = vunpack.c.h.b16 %v2209
        %v4350 = vunpack.c.l.b16 %v2210
        %v4351 = vunpack.c.h.b16 %v2210
        %v4352 = vunpack.c.l.b16 %v2211
        %v4353 = vunpack.c.h.b16 %v2211
        %v4354 = vunpack.c.l.b16 %v2212
        %v4355 = vunpack.c.h.b16 %v2212
        %v4356 = vunpack.c.l.b16 %v2213
        %v4357 = vunpack.c.h.b16 %v2213
        %v4358 = vunpack.c.l.b16 %v2214
        %v4359 = vunpack.c.h.b16 %v2214
        %v4360 = vunpack.c.l.b16 %v2215
        %v4361 = vunpack.c.h.b16 %v2215
        %v4362 = vunpack.c.l.b16 %v2216
        %v4363 = vunpack.c.h.b16 %v2216
        %v4364 = vunpack.c.l.b16 %v2217
        %v4365 = vunpack.c.h.b16 %v2217
        %v4366 = vunpack.c.l.b16 %v2218
        %v4367 = vunpack.c.h.b16 %v2218
        %v4368 = vunpack.c.l.b16 %v2219
        %v4369 = vunpack.c.h.b16 %v2219
        %v4370 = vunpack.c.l.b16 %v2220
        %v4371 = vunpack.c.h.b16 %v2220
        %v4372 = vunpack.c.l.b16 %v2221
        %v4373 = vunpack.c.h.b16 %v2221
        %v4374 = vunpack.c.l.b16 %v2222
        %v4375 = vunpack.c.h.b16 %v2222
        %v4376 = vunpack.c.l.b16 %v2223
        %v4377 = vunpack.c.h.b16 %v2223
        %v4378 = vunpack.c.l.b16 %v2224
        %v4379 = vunpack.c.h.b16 %v2224
        %v4380 = vunpack.c.l.b16 %v2225
        %v4381 = vunpack.c.h.b16 %v2225
        %v4382 = vunpack.c.l.b16 %v2226
        %v4383 = vunpack.c.h.b16 %v2226
        %v4384 = vunpack.c.l.b16 %v2227
        %v4385 = vunpack.c.h.b16 %v2227
        %v4386 = vunpack.c.l.b16 %v2228
        %v4387 = vunpack.c.h.b16 %v2228
        %v4388 = vunpack.c.l.b16 %v2229
        %v4389 = vunpack.c.h.b16 %v2229
        %v4390 = vunpack.c.l.b16 %v2230
        %v4391 = vunpack.c.h.b16 %v2230
        %v4392 = vunpack.c.l.b16 %v2231
        %v4393 = vunpack.c.h.b16 %v2231
        %v4394 = vunpack.c.l.b16 %v2232
        %v4395 = vunpack.c.h.b16 %v2232
        %v4396 = vunpack.c.l.b16 %v2233
        %v4397 = vunpack.c.h.b16 %v2233
        %v4398 = vunpack.c.l.b16 %v2234
        %v4399 = vunpack.c.h.b16 %v2234
        %v4400 = vunpack.c.l.b16 %v2235
        %v4401 = vunpack.c.h.b16 %v2235
        %v4402 = vunpack.c.l.b16 %v2236
        %v4403 = vunpack.c.h.b16 %v2236
        %v4404 = vunpack.c.l.b16 %v2237
        %v4405 = vunpack.c.h.b16 %v2237
        %v4406 = vunpack.c.l.b16 %v2238
        %v4407 = vunpack.c.h.b16 %v2238
        %v4408 = vunpack.c.l.b16 %v2239
        %v4409 = vunpack.c.h.b16 %v2239
        %v4410 = vunpack.c.l.b16 %v2240
        %v4411 = vunpack.c.h.b16 %v2240
        %v4412 = vunpack.c.l.b16 %v2241
        %v4413 = vunpack.c.h.b16 %v2241
        %v4414 = vunpack.c.l.b16 %v2242
        %v4415 = vunpack.c.h.b16 %v2242
        %v4416 = vunpack.c.l.b16 %v2243
        %v4417 = vunpack.c.h.b16 %v2243
        %v4418 = vunpack.c.l.b16 %v2244
        %v4419 = vunpack.c.h.b16 %v2244
        %v4420 = vunpack.c.l.b16 %v2245
        %v4421 = vunpack.c.h.b16 %v2245
        %v4422 = vunpack.c.l.b16 %v2246
        %v4423 = vunpack.c.h.b16 %v2246
        %v4424 = vunpack.c.l.b16 %v2247
        %v4425 = vunpack.c.h.b16 %v2247
        %v4426 = vunpack.c.l.b16 %v2248
        %v4427 = vunpack.c.h.b16 %v2248
        %v4428 = vunpack.c.l.b16 %v2249
        %v4429 = vunpack.c.h.b16 %v2249
        %v4430 = vunpack.c.l.b16 %v2250
        %v4431 = vunpack.c.h.b16 %v2250
        %v4432 = vunpack.c.l.b16 %v2251
        %v4433 = vunpack.c.h.b16 %v2251
        %v4434 = vunpack.c.l.b16 %v2252
        %v4435 = vunpack.c.h.b16 %v2252
        %v4436 = vunpack.c.l.b16 %v2253
        %v4437 = vunpack.c.h.b16 %v2253
        %v4438 = vunpack.c.l.b16 %v2254
        %v4439 = vunpack.c.h.b16 %v2254
        %v4440 = vunpack.c.l.b16 %v2255
        %v4441 = vunpack.c.h.b16 %v2255
        %v4442 = vunpack.c.l.b16 %v2256
        %v4443 = vunpack.c.h.b16 %v2256
        %v4444 = vunpack.c.l.b16 %v2257
        %v4445 = vunpack.c.h.b16 %v2257
        %v4446 = vunpack.c.l.b16 %v2258
        %v4447 = vunpack.c.h.b16 %v2258
        %v4448 = vunpack.c.l.b16 %v2259
        %v4449 = vunpack.c.h.b16 %v2259
        %v4450 = vunpack.c.l.b16 %v2260
        %v4451 = vunpack.c.h.b16 %v2260
        %v4452 = vunpack.c.l.b16 %v2261
        %v4453 = vunpack.c.h.b16 %v2261
        %v4454 = vunpack.c.l.b16 %v2262
        %v4455 = vunpack.c.h.b16 %v2262
        %v4456 = vunpack.c.l.b16 %v2263
        %v4457 = vunpack.c.h.b16 %v2263
        %v4458 = vunpack.c.l.b16 %v2264
        %v4459 = vunpack.c.h.b16 %v2264
        %v4460 = vunpack.c.l.b16 %v2265
        %v4461 = vunpack.c.h.b16 %v2265
        %v4462 = vunpack.c.l.b16 %v2266
        %v4463 = vunpack.c.h.b16 %v2266
        %v4464 = vunpack.c.l.b16 %v2267
        %v4465 = vunpack.c.h.b16 %v2267
        %v4466 = vunpack.c.l.b16 %v2268
        %v4467 = vunpack.c.h.b16 %v2268
        %v4468 = vunpack.c.l.b16 %v2269
        %v4469 = vunpack.c.h.b16 %v2269
        %v4470 = vunpack.c.l.b16 %v2270
        %v4471 = vunpack.c.h.b16 %v2270
        %v4472 = vunpack.c.l.b16 %v2271
        %v4473 = vunpack.c.h.b16 %v2271
        %v4474 = vunpack.c.l.b16 %v2272
        %v4475 = vunpack.c.h.b16 %v2272
        %v4476 = vunpack.c.l.b16 %v2273
        %v4477 = vunpack.c.h.b16 %v2273
        %v4478 = vunpack.c.l.b16 %v2274
        %v4479 = vunpack.c.h.b16 %v2274
        %v4480 = vunpack.c.l.b16 %v2275
        %v4481 = vunpack.c.h.b16 %v2275
        %v4482 = vunpack.c.l.b16 %v2276
        %v4483 = vunpack.c.h.b16 %v2276
        %v4484 = vunpack.c.l.b16 %v2277
        %v4485 = vunpack.c.h.b16 %v2277
        %v4486 = vunpack.c.l.b16 %v2278
        %v4487 = vunpack.c.h.b16 %v2278
        %v4488 = vunpack.c.l.b16 %v2279
        %v4489 = vunpack.c.h.b16 %v2279
        %v4490 = vunpack.c.l.b16 %v2280
        %v4491 = vunpack.c.h.b16 %v2280
        %v4492 = vunpack.c.l.b16 %v2281
        %v4493 = vunpack.c.h.b16 %v2281
        %v4494 = vunpack.c.l.b16 %v2282
        %v4495 = vunpack.c.h.b16 %v2282
        %v4496 = vunpack.c.l.b16 %v2283
        %v4497 = vunpack.c.h.b16 %v2283
        %v4498 = vunpack.c.l.b16 %v2284
        %v4499 = vunpack.c.h.b16 %v2284
        %v4500 = vunpack.c.l.b16 %v2285
        %v4501 = vunpack.c.h.b16 %v2285
        %v4502 = vunpack.c.l.b16 %v2286
        %v4503 = vunpack.c.h.b16 %v2286
        %v4504 = vunpack.c.l.b16 %v2287
        %v4505 = vunpack.c.h.b16 %v2287
        %v4506 = vunpack.c.l.b16 %v2288
        %v4507 = vunpack.c.h.b16 %v2288
        %v4508 = vunpack.c.l.b16 %v2289
        %v4509 = vunpack.c.h.b16 %v2289
        %v4510 = vunpack.c.l.b16 %v2290
        %v4511 = vunpack.c.h.b16 %v2290
        %v4512 = vunpack.c.l.b16 %v2291
        %v4513 = vunpack.c.h.b16 %v2291
        %v4514 = vunpack.c.l.b16 %v2292
        %v4515 = vunpack.c.h.b16 %v2292
        %v4516 = vunpack.c.l.b16 %v2293
        %v4517 = vunpack.c.h.b16 %v2293
        %v4518 = vunpack.c.l.b16 %v2294
        %v4519 = vunpack.c.h.b16 %v2294
        %v4520 = vunpack.c.l.b16 %v2295
        %v4521 = vunpack.c.h.b16 %v2295
        %v4522 = vunpack.c.l.b16 %v2296
        %v4523 = vunpack.c.h.b16 %v2296
        %v4524 = vunpack.c.l.b16 %v2297
        %v4525 = vunpack.c.h.b16 %v2297
        %v4526 = vunpack.c.l.b16 %v2298
        %v4527 = vunpack.c.h.b16 %v2298
        %v4528 = vunpack.c.l.b16 %v2299
        %v4529 = vunpack.c.h.b16 %v2299
        %v4530 = vunpack.c.l.b16 %v2300
        %v4531 = vunpack.c.h.b16 %v2300
        %v4532 = vunpack.c.l.b16 %v2301
        %v4533 = vunpack.c.h.b16 %v2301
        %v4534 = vunpack.c.l.b16 %v2302
        %v4535 = vunpack.c.h.b16 %v2302
        %v4536 = vunpack.c.l.b16 %v2303
        %v4537 = vunpack.c.h.b16 %v2303
        %v4538 = vunpack.c.l.b16 %v2304
        %v4539 = vunpack.c.h.b16 %v2304
        %v4540 = vunpack.c.l.b16 %v2305
        %v4541 = vunpack.c.h.b16 %v2305
        %v4542 = vunpack.c.l.b16 %v2306
        %v4543 = vunpack.c.h.b16 %v2306
        %v4544 = vunpack.c.l.b16 %v2307
        %v4545 = vunpack.c.h.b16 %v2307
        %v4546 = vunpack.c.l.b16 %v2308
        %v4547 = vunpack.c.h.b16 %v2308
        %v4548 = vunpack.c.l.b16 %v2309
        %v4549 = vunpack.c.h.b16 %v2309
        %v4550 = vunpack.c.l.b16 %v2310
        %v4551 = vunpack.c.h.b16 %v2310
        %v4552 = vunpack.c.l.b16 %v2311
        %v4553 = vunpack.c.h.b16 %v2311
        %v4554 = vunpack.c.l.b16 %v2312
        %v4555 = vunpack.c.h.b16 %v2312
        %v4556 = vunpack.c.l.b16 %v2313
        %v4557 = vunpack.c.h.b16 %v2313
        %v4558 = vunpack.c.l.b16 %v2314
        %v4559 = vunpack.c.h.b16 %v2314
        %v4560 = vunpack.c.l.b16 %v2315
        %v4561 = vunpack.c.h.b16 %v2315
        %v4562 = vunpack.c.l.b16 %v2316
        %v4563 = vunpack.c.h.b16 %v2316
        %v4564 = vunpack.c.l.b16 %v2317
        %v4565 = vunpack.c.h.b16 %v2317
        %v4566 = vunpack.c.l.b16 %v2318
        %v4567 = vunpack.c.h.b16 %v2318
        %v4568 = vunpack.c.l.b16 %v2319
        %v4569 = vunpack.c.h.b16 %v2319
        %v4570 = vunpack.c.l.b16 %v2320
        %v4571 = vunpack.c.h.b16 %v2320
        %v4572 = vunpack.c.l.b16 %v2321
        %v4573 = vunpack.c.h.b16 %v2321
        %v4574 = vunpack.c.l.b16 %v2322
        %v4575 = vunpack.c.h.b16 %v2322
        %v4576 = vunpack.c.l.b16 %v2323
        %v4577 = vunpack.c.h.b16 %v2323
        %v4578 = vunpack.c.l.b16 %v2324
        %v4579 = vunpack.c.h.b16 %v2324
        %v4580 = vunpack.c.l.b16 %v2325
        %v4581 = vunpack.c.h.b16 %v2325
        %v4582 = vunpack.c.l.b16 %v2326
        %v4583 = vunpack.c.h.b16 %v2326
        %v4584 = vunpack.c.l.b16 %v2327
        %v4585 = vunpack.c.h.b16 %v2327
        %v4586 = vunpack.c.l.b16 %v2328
        %v4587 = vunpack.c.h.b16 %v2328
        %v4588 = vunpack.c.l.b16 %v2329
        %v4589 = vunpack.c.h.b16 %v2329
        %v4590 = vunpack.c.l.b16 %v2330
        %v4591 = vunpack.c.h.b16 %v2330
        %v4592 = vunpack.c.l.b16 %v2331
        %v4593 = vunpack.c.h.b16 %v2331
        %v4594 = vunpack.c.l.b16 %v2332
        %v4595 = vunpack.c.h.b16 %v2332
        %v4596 = vunpack.c.l.b16 %v2333
        %v4597 = vunpack.c.h.b16 %v2333
        %v4598 = vunpack.c.l.b16 %v2334
        %v4599 = vunpack.c.h.b16 %v2334
        %v4600 = vunpack.c.l.b16 %v2335
        %v4601 = vunpack.c.h.b16 %v2335
        %v4602 = vunpack.c.l.b16 %v2336
        %v4603 = vunpack.c.h.b16 %v2336
        %v4604 = vunpack.c.l.b16 %v2337
        %v4605 = vunpack.c.h.b16 %v2337
        %v4606 = vunpack.c.l.b16 %v2338
        %v4607 = vunpack.c.h.b16 %v2338
        %v4608 = vunpack.c.l.b16 %v2339
        %v4609 = vunpack.c.h.b16 %v2339
        %v4610 = vunpack.c.l.b16 %v2340
        %v4611 = vunpack.c.h.b16 %v2340
        %v4612 = vunpack.c.l.b16 %v2341
        %v4613 = vunpack.c.h.b16 %v2341
        %v4614 = vunpack.c.l.b16 %v2342
        %v4615 = vunpack.c.h.b16 %v2342
        %v4616 = vunpack.c.l.b16 %v2343
        %v4617 = vunpack.c.h.b16 %v2343
        %v4618 = vunpack.c.l.b16 %v2344
        %v4619 = vunpack.c.h.b16 %v2344
        %v4620 = vunpack.c.l.b16 %v2345
        %v4621 = vunpack.c.h.b16 %v2345
        %v4622 = vunpack.c.l.b16 %v2346
        %v4623 = vunpack.c.h.b16 %v2346
        %v4624 = vunpack.c.l.b16 %v2347
        %v4625 = vunpack.c.h.b16 %v2347
        %v4626 = vunpack.c.l.b16 %v2348
        %v4627 = vunpack.c.h.b16 %v2348
        %v4628 = vunpack.c.l.b16 %v2349
        %v4629 = vunpack.c.h.b16 %v2349
        %v4630 = vunpack.c.l.b16 %v2350
        %v4631 = vunpack.c.h.b16 %v2350
        %v4632 = vunpack.c.l.b16 %v2351
        %v4633 = vunpack.c.h.b16 %v2351
        %v4634 = vunpack.c.l.b16 %v2352
        %v4635 = vunpack.c.h.b16 %v2352
        %v4636 = vunpack.c.l.b16 %v2353
        %v4637 = vunpack.c.h.b16 %v2353
        %v4638 = vunpack.c.l.b16 %v2354
        %v4639 = vunpack.c.h.b16 %v2354
        %v4640 = vunpack.c.l.b16 %v2355
        %v4641 = vunpack.c.h.b16 %v2355
        %v4642 = vunpack.c.l.b16 %v2356
        %v4643 = vunpack.c.h.b16 %v2356
        %v4644 = vunpack.c.l.b16 %v2357
        %v4645 = vunpack.c.h.b16 %v2357
        %v4646 = vunpack.c.l.b16 %v2358
        %v4647 = vunpack.c.h.b16 %v2358
        %v4648 = vunpack.c.l.b16 %v2359
        %v4649 = vunpack.c.h.b16 %v2359
        %v4650 = vunpack.c.l.b16 %v2360
        %v4651 = vunpack.c.h.b16 %v2360
        %v4652 = vunpack.c.l.b16 %v2361
        %v4653 = vunpack.c.h.b16 %v2361
        %v4654 = vunpack.c.l.b16 %v2362
        %v4655 = vunpack.c.h.b16 %v2362
        %v4656 = vunpack.c.l.b16 %v2363
        %v4657 = vunpack.c.h.b16 %v2363
        %v4658 = vunpack.c.l.b16 %v2364
        %v4659 = vunpack.c.h.b16 %v2364
        %v4660 = vunpack.c.l.b16 %v2365
        %v4661 = vunpack.c.h.b16 %v2365
        %v4662 = vunpack.c.l.b16 %v2366
        %v4663 = vunpack.c.h.b16 %v2366
        %v4664 = vunpack.c.l.b16 %v2367
        %v4665 = vunpack.c.h.b16 %v2367
        %v4666 = vunpack.c.l.b16 %v2368
        %v4667 = vunpack.c.h.b16 %v2368
        %v4668 = vunpack.c.l.b16 %v2369
        %v4669 = vunpack.c.h.b16 %v2369
        %v4670 = vunpack.c.l.b16 %v2370
        %v4671 = vunpack.c.h.b16 %v2370
        %v4672 = vunpack.c.l.b16 %v2371
        %v4673 = vunpack.c.h.b16 %v2371
        %v4674 = vunpack.c.l.b16 %v2372
        %v4675 = vunpack.c.h.b16 %v2372
        %v4676 = vunpack.c.l.b16 %v2373
        %v4677 = vunpack.c.h.b16 %v2373
        %v4678 = vunpack.c.l.b16 %v2374
        %v4679 = vunpack.c.h.b16 %v2374
        %v4680 = vunpack.c.l.b16 %v2375
        %v4681 = vunpack.c.h.b16 %v2375
        %v4682 = vunpack.c.l.b16 %v2376
        %v4683 = vunpack.c.h.b16 %v2376
        %v4684 = vunpack.c.l.b16 %v2377
        %v4685 = vunpack.c.h.b16 %v2377
        %v4686 = vunpack.c.l.b16 %v2378
        %v4687 = vunpack.c.h.b16 %v2378
        %v4688 = vunpack.c.l.b16 %v2379
        %v4689 = vunpack.c.h.b16 %v2379
        %v4690 = vunpack.c.l.b16 %v2380
        %v4691 = vunpack.c.h.b16 %v2380
        %v4692 = vunpack.c.l.b16 %v2381
        %v4693 = vunpack.c.h.b16 %v2381
        %v4694 = vunpack.c.l.b16 %v2382
        %v4695 = vunpack.c.h.b16 %v2382
        %v4696 = vunpack.c.l.b16 %v2383
        %v4697 = vunpack.c.h.b16 %v2383
        %v4698 = vunpack.c.l.b16 %v2384
        %v4699 = vunpack.c.h.b16 %v2384
        %v4700 = vunpack.c.l.b16 %v2385
        %v4701 = vunpack.c.h.b16 %v2385
        %v4702 = vunpack.c.l.b16 %v2386
        %v4703 = vunpack.c.h.b16 %v2386
        %v4704 = vunpack.c.l.b16 %v2387
        %v4705 = vunpack.c.h.b16 %v2387
        %v4706 = vunpack.c.l.b16 %v2388
        %v4707 = vunpack.c.h.b16 %v2388
        %v4708 = vunpack.c.l.b16 %v2389
        %v4709 = vunpack.c.h.b16 %v2389
        %v4710 = vunpack.c.l.b16 %v2390
        %v4711 = vunpack.c.h.b16 %v2390
        %v4712 = vunpack.c.l.b16 %v2391
        %v4713 = vunpack.c.h.b16 %v2391
        %v4714 = vunpack.c.l.b16 %v2392
        %v4715 = vunpack.c.h.b16 %v2392
        %v4716 = vunpack.c.l.b16 %v2393
        %v4717 = vunpack.c.h.b16 %v2393
        %v4718 = vunpack.c.l.b16 %v2394
        %v4719 = vunpack.c.h.b16 %v2394
        %v4720 = vunpack.c.l.b16 %v2395
        %v4721 = vunpack.c.h.b16 %v2395
        %v4722 = vunpack.c.l.b16 %v2396
        %v4723 = vunpack.c.h.b16 %v2396
        %v4724 = vunpack.c.l.b16 %v2397
        %v4725 = vunpack.c.h.b16 %v2397
        %v4726 = vunpack.c.l.b16 %v2398
        %v4727 = vunpack.c.h.b16 %v2398
        %v4728 = vunpack.c.l.b16 %v2399
        %v4729 = vunpack.c.h.b16 %v2399
        %v4730 = vunpack.c.l.b16 %v2400
        %v4731 = vunpack.c.h.b16 %v2400
        %v4732 = vunpack.c.l.b16 %v2401
        %v4733 = vunpack.c.h.b16 %v2401
        %v4734 = vunpack.c.l.b16 %v2402
        %v4735 = vunpack.c.h.b16 %v2402
        %v4736 = vunpack.c.l.b16 %v2403
        %v4737 = vunpack.c.h.b16 %v2403
        %v4738 = vunpack.c.l.b16 %v2404
        %v4739 = vunpack.c.h.b16 %v2404
        %v4740 = vunpack.c.l.b16 %v2405
        %v4741 = vunpack.c.h.b16 %v2405
        %v4742 = vunpack.c.l.b16 %v2406
        %v4743 = vunpack.c.h.b16 %v2406
        %v4744 = vunpack.c.l.b16 %v2407
        %v4745 = vunpack.c.h.b16 %v2407
        %v4746 = vunpack.c.l.b16 %v2408
        %v4747 = vunpack.c.h.b16 %v2408
        %v4748 = vunpack.c.l.b16 %v2409
        %v4749 = vunpack.c.h.b16 %v2409
        %v4750 = vunpack.c.l.b16 %v2410
        %v4751 = vunpack.c.h.b16 %v2410
        %v4752 = vunpack.c.l.b16 %v2411
        %v4753 = vunpack.c.h.b16 %v2411
        %v4754 = vunpack.c.l.b16 %v2412
        %v4755 = vunpack.c.h.b16 %v2412
        %v4756 = vunpack.c.l.b16 %v2413
        %v4757 = vunpack.c.h.b16 %v2413
        %v4758 = vunpack.c.l.b16 %v2414
        %v4759 = vunpack.c.h.b16 %v2414
        %v4760 = vunpack.c.l.b16 %v2415
        %v4761 = vunpack.c.h.b16 %v2415
        %v4762 = vunpack.c.l.b16 %v2416
        %v4763 = vunpack.c.h.b16 %v2416
        %v4764 = vunpack.c.l.b16 %v2417
        %v4765 = vunpack.c.h.b16 %v2417
        %v4766 = vunpack.c.l.b16 %v2418
        %v4767 = vunpack.c.h.b16 %v2418
        %v4768 = vunpack.c.l.b16 %v2419
        %v4769 = vunpack.c.h.b16 %v2419
        %v4770 = vunpack.c.l.b16 %v2420
        %v4771 = vunpack.c.h.b16 %v2420
        %v4772 = vunpack.c.l.b16 %v2421
        %v4773 = vunpack.c.h.b16 %v2421
        %v4774 = vunpack.c.l.b16 %v2422
        %v4775 = vunpack.c.h.b16 %v2422
        %v4776 = vunpack.c.l.b16 %v2423
        %v4777 = vunpack.c.h.b16 %v2423
        %v4778 = vunpack.c.l.b16 %v2424
        %v4779 = vunpack.c.h.b16 %v2424
        %v4780 = vunpack.c.l.b16 %v2425
        %v4781 = vunpack.c.h.b16 %v2425
        %v4782 = vunpack.c.l.b16 %v2426
        %v4783 = vunpack.c.h.b16 %v2426
        %v4784 = vunpack.c.l.b16 %v2427
        %v4785 = vunpack.c.h.b16 %v2427
        %v4786 = vunpack.c.l.b16 %v2428
        %v4787 = vunpack.c.h.b16 %v2428
        %v4788 = vunpack.c.l.b16 %v2429
        %v4789 = vunpack.c.h.b16 %v2429
        %v4790 = vunpack.c.l.b16 %v2430
        %v4791 = vunpack.c.h.b16 %v2430
        %v4792 = vunpack.c.l.b16 %v2431
        %v4793 = vunpack.c.h.b16 %v2431
        %v4794 = vunpack.c.l.b16 %v2432
        %v4795 = vunpack.c.h.b16 %v2432
        %v4796 = vunpack.c.l.b16 %v2433
        %v4797 = vunpack.c.h.b16 %v2433
        %v4798 = vunpack.c.l.b16 %v2434
        %v4799 = vunpack.c.h.b16 %v2434
        %v4800 = vunpack.c.l.b16 %v2435
        %v4801 = vunpack.c.h.b16 %v2435
        %v4802 = vunpack.c.l.b16 %v2436
        %v4803 = vunpack.c.h.b16 %v2436
        %v4804 = vunpack.c.l.b16 %v2437
        %v4805 = vunpack.c.h.b16 %v2437
        %v4806 = vunpack.c.l.b16 %v2438
        %v4807 = vunpack.c.h.b16 %v2438
        %v4808 = vunpack.c.l.b16 %v2439
        %v4809 = vunpack.c.h.b16 %v2439
        %v4810 = vunpack.c.l.b16 %v2440
        %v4811 = vunpack.c.h.b16 %v2440
        %v4812 = vunpack.c.l.b16 %v2441
        %v4813 = vunpack.c.h.b16 %v2441
        %v4814 = vunpack.c.l.b16 %v2442
        %v4815 = vunpack.c.h.b16 %v2442
        %v4816 = vunpack.c.l.b16 %v2443
        %v4817 = vunpack.c.h.b16 %v2443
        %v4818 = vunpack.c.l.b16 %v2444
        %v4819 = vunpack.c.h.b16 %v2444
        %v4820 = vunpack.c.l.b16 %v2445
        %v4821 = vunpack.c.h.b16 %v2445
        %v4822 = vunpack.c.l.b16 %v2446
        %v4823 = vunpack.c.h.b16 %v2446
        %v4824 = vunpack.c.l.b16 %v2447
        %v4825 = vunpack.c.h.b16 %v2447
        %v4826 = vunpack.c.l.b16 %v2448
        %v4827 = vunpack.c.h.b16 %v2448
        %v4828 = vunpack.c.l.b16 %v2449
        %v4829 = vunpack.c.h.b16 %v2449
        %v4830 = vunpack.c.l.b16 %v2450
        %v4831 = vunpack.c.h.b16 %v2450
        %v4832 = vunpack.c.l.b16 %v2451
        %v4833 = vunpack.c.h.b16 %v2451
        %v4834 = vunpack.c.l.b16 %v2452
        %v4835 = vunpack.c.h.b16 %v2452
        %v4836 = vunpack.c.l.b16 %v2453
        %v4837 = vunpack.c.h.b16 %v2453
        %v4838 = vunpack.c.l.b16 %v2454
        %v4839 = vunpack.c.h.b16 %v2454
        %v4840 = vunpack.c.l.b16 %v2455
        %v4841 = vunpack.c.h.b16 %v2455
        %v4842 = vunpack.c.l.b16 %v2456
        %v4843 = vunpack.c.h.b16 %v2456
        %v4844 = vunpack.c.l.b16 %v2457
        %v4845 = vunpack.c.h.b16 %v2457
        %v4846 = vunpack.c.l.b16 %v2458
        %v4847 = vunpack.c.h.b16 %v2458
        %v4848 = vunpack.c.l.b16 %v2459
        %v4849 = vunpack.c.h.b16 %v2459
        %v4850 = vunpack.c.l.b16 %v2460
        %v4851 = vunpack.c.h.b16 %v2460
        %v4852 = vunpack.c.l.b16 %v2461
        %v4853 = vunpack.c.h.b16 %v2461
        %v4854 = vunpack.c.l.b16 %v2462
        %v4855 = vunpack.c.h.b16 %v2462
        %v4856 = vunpack.c.l.b16 %v2463
        %v4857 = vunpack.c.h.b16 %v2463
        %v4858 = vunpack.c.l.b16 %v2464
        %v4859 = vunpack.c.h.b16 %v2464
        %v4860 = vunpack.c.l.b16 %v2465
        %v4861 = vunpack.c.h.b16 %v2465
        %v4862 = vunpack.c.l.b16 %v2466
        %v4863 = vunpack.c.h.b16 %v2466
        %v4864 = vunpack.c.l.b16 %v2467
        %v4865 = vunpack.c.h.b16 %v2467
        %v4866 = vunpack.c.l.b16 %v2468
        %v4867 = vunpack.c.h.b16 %v2468
        %v4868 = vunpack.c.l.b16 %v2469
        %v4869 = vunpack.c.h.b16 %v2469
        %v4870 = vunpack.c.l.b16 %v2470
        %v4871 = vunpack.c.h.b16 %v2470
        %v4872 = vunpack.c.l.b16 %v2471
        %v4873 = vunpack.c.h.b16 %v2471
        %v4874 = vunpack.c.l.b16 %v2472
        %v4875 = vunpack.c.h.b16 %v2472
        %v4876 = vunpack.c.l.b16 %v2473
        %v4877 = vunpack.c.h.b16 %v2473
        %v4878 = vunpack.c.l.b16 %v2474
        %v4879 = vunpack.c.h.b16 %v2474
        %v4880 = vunpack.c.l.b16 %v2475
        %v4881 = vunpack.c.h.b16 %v2475
        %v4882 = vunpack.c.l.b16 %v2476
        %v4883 = vunpack.c.h.b16 %v2476
        %v4884 = vunpack.c.l.b16 %v2477
        %v4885 = vunpack.c.h.b16 %v2477
        %v4886 = vunpack.c.l.b16 %v2478
        %v4887 = vunpack.c.h.b16 %v2478
        %v4888 = vunpack.c.l.b16 %v2479
        %v4889 = vunpack.c.h.b16 %v2479
        %v4890 = vunpack.c.l.b16 %v2480
        %v4891 = vunpack.c.h.b16 %v2480
        %v4892 = vunpack.c.l.b16 %v2481
        %v4893 = vunpack.c.h.b16 %v2481
        %v4894 = vunpack.c.l.b16 %v2482
        %v4895 = vunpack.c.h.b16 %v2482
        %v4896 = vunpack.c.l.b16 %v2483
        %v4897 = vunpack.c.h.b16 %v2483
        %v4898 = vunpack.c.l.b16 %v2484
        %v4899 = vunpack.c.h.b16 %v2484
        %v4900 = vunpack.c.l.b16 %v2485
        %v4901 = vunpack.c.h.b16 %v2485
        %v4902 = vunpack.c.l.b16 %v2486
        %v4903 = vunpack.c.h.b16 %v2486
        %v4904 = vunpack.c.l.b16 %v2487
        %v4905 = vunpack.c.h.b16 %v2487
        %v4906 = vunpack.c.l.b16 %v2488
        %v4907 = vunpack.c.h.b16 %v2488
        %v4908 = vunpack.c.l.b16 %v2489
        %v4909 = vunpack.c.h.b16 %v2489
        %v4910 = vunpack.c.l.b16 %v2490
        %v4911 = vunpack.c.h.b16 %v2490
        %v4912 = vunpack.c.l.b16 %v2491
        %v4913 = vunpack.c.h.b16 %v2491
        %v4914 = vunpack.c.l.b16 %v2492
        %v4915 = vunpack.c.h.b16 %v2492
        %v4916 = vunpack.c.l.b16 %v2493
        %v4917 = vunpack.c.h.b16 %v2493
        %v4918 = vunpack.c.l.b16 %v2494
        %v4919 = vunpack.c.h.b16 %v2494
        %v4920 = vunpack.c.l.b16 %v2495
        %v4921 = vunpack.c.h.b16 %v2495
        %v4922 = vunpack.c.l.b16 %v2496
        %v4923 = vunpack.c.h.b16 %v2496
        %v4924 = vunpack.c.l.b16 %v2497
        %v4925 = vunpack.c.h.b16 %v2497
        %v4926 = vunpack.c.l.b16 %v2498
        %v4927 = vunpack.c.h.b16 %v2498
        %v4928 = vunpack.c.l.b16 %v2499
        %v4929 = vunpack.c.h.b16 %v2499
        %v4930 = vunpack.c.l.b16 %v2500
        %v4931 = vunpack.c.h.b16 %v2500
        %v4932 = vunpack.c.l.b16 %v2501
        %v4933 = vunpack.c.h.b16 %v2501
        %v4934 = vunpack.c.l.b16 %v2502
        %v4935 = vunpack.c.h.b16 %v2502
        %v4936 = vunpack.c.l.b16 %v2503
        %v4937 = vunpack.c.h.b16 %v2503
        %v4938 = vunpack.c.l.b16 %v2504
        %v4939 = vunpack.c.h.b16 %v2504
        %v4940 = vunpack.c.l.b16 %v2505
        %v4941 = vunpack.c.h.b16 %v2505
        %v4942 = vunpack.c.l.b16 %v2506
        %v4943 = vunpack.c.h.b16 %v2506
        %v4944 = vunpack.c.l.b16 %v2507
        %v4945 = vunpack.c.h.b16 %v2507
        %v4946 = vunpack.c.l.b16 %v2508
        %v4947 = vunpack.c.h.b16 %v2508
        %v4948 = vunpack.c.l.b16 %v2509
        %v4949 = vunpack.c.h.b16 %v2509
        %v4950 = vunpack.c.l.b16 %v2510
        %v4951 = vunpack.c.h.b16 %v2510
        %v4952 = vunpack.c.l.b16 %v2511
        %v4953 = vunpack.c.h.b16 %v2511
        %v4954 = vunpack.c.l.b16 %v2512
        %v4955 = vunpack.c.h.b16 %v2512
        %v4956 = vunpack.c.l.b16 %v2513
        %v4957 = vunpack.c.h.b16 %v2513
        %v4958 = vunpack.c.l.b16 %v2514
        %v4959 = vunpack.c.h.b16 %v2514
        %v4960 = vunpack.c.l.b16 %v2515
        %v4961 = vunpack.c.h.b16 %v2515
        %v4962 = vunpack.c.l.b16 %v2516
        %v4963 = vunpack.c.h.b16 %v2516
        %v4964 = vunpack.c.l.b16 %v2517
        %v4965 = vunpack.c.h.b16 %v2517
        %v4966 = vunpack.c.l.b16 %v2518
        %v4967 = vunpack.c.h.b16 %v2518
        %v4968 = vunpack.c.l.b16 %v2519
        %v4969 = vunpack.c.h.b16 %v2519
        %v4970 = vunpack.c.l.b16 %v2520
        %v4971 = vunpack.c.h.b16 %v2520
        %v4972 = vunpack.c.l.b16 %v2521
        %v4973 = vunpack.c.h.b16 %v2521
        %v4974 = vunpack.c.l.b16 %v2522
        %v4975 = vunpack.c.h.b16 %v2522
        %v4976 = vunpack.c.l.b16 %v2523
        %v4977 = vunpack.c.h.b16 %v2523
        %v4978 = vunpack.c.l.b16 %v2524
        %v4979 = vunpack.c.h.b16 %v2524
        %v4980 = vunpack.c.l.b16 %v2525
        %v4981 = vunpack.c.h.b16 %v2525
        %v4982 = vunpack.c.l.b16 %v2526
        %v4983 = vunpack.c.h.b16 %v2526
        %v4984 = vunpack.c.l.b16 %v2527
        %v4985 = vunpack.c.h.b16 %v2527
        %v4986 = vunpack.c.l.b16 %v2528
        %v4987 = vunpack.c.h.b16 %v2528
        %v4988 = vunpack.c.l.b16 %v2529
        %v4989 = vunpack.c.h.b16 %v2529
        %v4990 = vunpack.c.l.b16 %v2530
        %v4991 = vunpack.c.h.b16 %v2530
        %v4992 = vunpack.c.l.b16 %v2531
        %v4993 = vunpack.c.h.b16 %v2531
        %v4994 = vunpack.c.l.b16 %v2532
        %v4995 = vunpack.c.h.b16 %v2532
        %v4996 = vunpack.c.l.b16 %v2533
        %v4997 = vunpack.c.h.b16 %v2533
        %v4998 = vunpack.c.l.b16 %v2534
        %v4999 = vunpack.c.h.b16 %v2534
        %v5000 = vunpack.c.l.b16 %v2535
        %v5001 = vunpack.c.h.b16 %v2535
        %v5002 = vunpack.c.l.b16 %v2536
        %v5003 = vunpack.c.h.b16 %v2536
        %v5004 = vunpack.c.l.b16 %v2537
        %v5005 = vunpack.c.h.b16 %v2537
        %v5006 = vunpack.c.l.b16 %v2538
        %v5007 = vunpack.c.h.b16 %v2538
        %v5008 = vunpack.c.l.b16 %v2539
        %v5009 = vunpack.c.h.b16 %v2539
        %v5010 = vunpack.c.l.b16 %v2540
        %v5011 = vunpack.c.h.b16 %v2540
        %v5012 = vunpack.c.l.b16 %v2541
        %v5013 = vunpack.c.h.b16 %v2541
        %v5014 = vunpack.c.l.b16 %v2542
        %v5015 = vunpack.c.h.b16 %v2542
        %v5016 = vunpack.c.l.b16 %v2543
        %v5017 = vunpack.c.h.b16 %v2543
        %v5018 = vunpack.c.l.b16 %v2544
        %v5019 = vunpack.c.h.b16 %v2544
        %v5020 = vunpack.c.l.b16 %v2545
        %v5021 = vunpack.c.h.b16 %v2545
        %v5022 = vunpack.c.l.b16 %v2546
        %v5023 = vunpack.c.h.b16 %v2546
        %v5024 = vunpack.c.l.b16 %v2547
        %v5025 = vunpack.c.h.b16 %v2547
        %v5026 = vunpack.c.l.b16 %v2548
        %v5027 = vunpack.c.h.b16 %v2548
        %v5028 = vunpack.c.l.b16 %v2549
        %v5029 = vunpack.c.h.b16 %v2549
        %v5030 = vunpack.c.l.b16 %v2550
        %v5031 = vunpack.c.h.b16 %v2550
        %v5032 = vunpack.c.l.b16 %v2551
        %v5033 = vunpack.c.h.b16 %v2551
        %v5034 = vunpack.c.l.b16 %v2552
        %v5035 = vunpack.c.h.b16 %v2552
        %v5036 = vunpack.c.l.b16 %v2553
        %v5037 = vunpack.c.h.b16 %v2553
        %v5038 = vunpack.c.l.b16 %v2554
        %v5039 = vunpack.c.h.b16 %v2554
        %v5040 = vunpack.c.l.b16 %v2555
        %v5041 = vunpack.c.h.b16 %v2555
        %v5042 = vunpack.c.l.b16 %v2556
        %v5043 = vunpack.c.h.b16 %v2556
        %v5044 = vunpack.c.l.b16 %v2557
        %v5045 = vunpack.c.h.b16 %v2557
        %v5046 = vunpack.c.l.b16 %v2558
        %v5047 = vunpack.c.h.b16 %v2558
        %v5048 = vunpack.c.l.b16 %v2559
        %v5049 = vunpack.c.h.b16 %v2559
        %v5050 = vunpack.c.l.b16 %v2560
        %v5051 = vunpack.c.h.b16 %v2560
        %v5052 = vunpack.c.l.b16 %v2561
        %v5053 = vunpack.c.h.b16 %v2561
        %v5054 = vunpack.c.l.b16 %v2562
        %v5055 = vunpack.c.h.b16 %v2562
        %v5056 = vunpack.c.l.b16 %v2563
        %v5057 = vunpack.c.h.b16 %v2563
        %v5058 = vunpack.c.l.b16 %v2564
        %v5059 = vunpack.c.h.b16 %v2564
        %v5060 = vunpack.c.l.b16 %v2565
        %v5061 = vunpack.c.h.b16 %v2565
        %v5062 = vunpack.c.l.b16 %v2566
        %v5063 = vunpack.c.h.b16 %v2566
        %v5064 = vunpack.c.l.b16 %v2567
        %v5065 = vunpack.c.h.b16 %v2567
        %v5066 = vunpack.c.l.b16 %v2568
        %v5067 = vunpack.c.h.b16 %v2568
        %v5068 = vunpack.c.l.b16 %v2569
        %v5069 = vunpack.c.h.b16 %v2569
        %v5070 = vunpack.c.l.b16 %v2570
        %v5071 = vunpack.c.h.b16 %v2570
        %v5072 = vunpack.c.l.b16 %v2571
        %v5073 = vunpack.c.h.b16 %v2571
        %v5074 = vunpack.c.l.b16 %v2572
        %v5075 = vunpack.c.h.b16 %v2572
        %v5076 = vunpack.c.l.b16 %v2573
        %v5077 = vunpack.c.h.b16 %v2573
        %v5078 = vunpack.c.l.b16 %v2574
        %v5079 = vunpack.c.h.b16 %v2574
        %v5080 = vunpack.c.l.b16 %v2575
        %v5081 = vunpack.c.h.b16 %v2575
        %v5082 = vunpack.c.l.b16 %v2576
        %v5083 = vunpack.c.h.b16 %v2576
        %v5084 = vunpack.c.l.b16 %v2577
        %v5085 = vunpack.c.h.b16 %v2577
        %v5086 = vunpack.c.l.b16 %v2578
        %v5087 = vunpack.c.h.b16 %v2578
        %v5088 = vunpack.c.l.b16 %v2579
        %v5089 = vunpack.c.h.b16 %v2579
        %v5090 = vunpack.c.l.b16 %v2580
        %v5091 = vunpack.c.h.b16 %v2580
        %v5092 = vunpack.c.l.b16 %v2581
        %v5093 = vunpack.c.h.b16 %v2581
        %v5094 = vunpack.c.l.b16 %v2582
        %v5095 = vunpack.c.h.b16 %v2582
        %v5096 = vunpack.c.l.b16 %v2583
        %v5097 = vunpack.c.h.b16 %v2583
        %v5098 = vunpack.c.l.b16 %v2584
        %v5099 = vunpack.c.h.b16 %v2584
        %v5100 = vunpack.c.l.b16 %v2585
        %v5101 = vunpack.c.h.b16 %v2585
        %v5102 = vunpack.c.l.b16 %v2586
        %v5103 = vunpack.c.h.b16 %v2586
        %v5104 = vunpack.c.l.b16 %v2587
        %v5105 = vunpack.c.h.b16 %v2587
        %v5106 = vunpack.c.l.b16 %v2588
        %v5107 = vunpack.c.h.b16 %v2588
        %v5108 = vunpack.c.l.b16 %v2589
        %v5109 = vunpack.c.h.b16 %v2589
        %v5110 = vunpack.c.l.b16 %v2590
        %v5111 = vunpack.c.h.b16 %v2590
        %v5112 = vunpack.c.l.b16 %v2591
        %v5113 = vunpack.c.h.b16 %v2591
        %v5114 = vunpack.c.l.b16 %v2592
        %v5115 = vunpack.c.h.b16 %v2592
        %v5116 = vunpack.c.l.b16 %v2593
        %v5117 = vunpack.c.h.b16 %v2593
        %v5118 = vunpack.c.l.b16 %v2594
        %v5119 = vunpack.c.h.b16 %v2594
        %v5120 = vunpack.c.l.b16 %v2595
        %v5121 = vunpack.c.h.b16 %v2595
        %v5122 = vunpack.c.l.b16 %v2596
        %v5123 = vunpack.c.h.b16 %v2596
        %v5124 = vunpack.c.l.b16 %v2597
        %v5125 = vunpack.c.h.b16 %v2597
        %v5126 = vunpack.c.l.b16 %v2598
        %v5127 = vunpack.c.h.b16 %v2598
        %v5128 = vunpack.c.l.b16 %v2599
        %v5129 = vunpack.c.h.b16 %v2599
        %v5130 = vunpack.c.l.b16 %v2600
        %v5131 = vunpack.c.h.b16 %v2600
        %v5132 = vunpack.c.l.b16 %v2601
        %v5133 = vunpack.c.h.b16 %v2601
        %v5134 = vunpack.c.l.b16 %v2602
        %v5135 = vunpack.c.h.b16 %v2602
        %v5136 = vunpack.c.l.b16 %v2603
        %v5137 = vunpack.c.h.b16 %v2603
        %v5138 = vunpack.c.l.b16 %v2604
        %v5139 = vunpack.c.h.b16 %v2604
        %v5140 = vunpack.c.l.b16 %v2605
        %v5141 = vunpack.c.h.b16 %v2605
        %v5142 = vunpack.c.l.b16 %v2606
        %v5143 = vunpack.c.h.b16 %v2606
        %v5144 = vunpack.c.l.b16 %v2607
        %v5145 = vunpack.c.h.b16 %v2607
        %v5146 = vunpack.c.l.b16 %v2608
        %v5147 = vunpack.c.h.b16 %v2608
        %v5148 = vunpack.c.l.b16 %v2609
        %v5149 = vunpack.c.h.b16 %v2609
        %v5150 = vunpack.c.l.b16 %v2610
        %v5151 = vunpack.c.h.b16 %v2610
        %v5152 = vunpack.c.l.b16 %v2611
        %v5153 = vunpack.c.h.b16 %v2611
        %v5154 = vunpack.c.l.b16 %v2612
        %v5155 = vunpack.c.h.b16 %v2612
        %v5156 = vunpack.c.l.b16 %v2613
        %v5157 = vunpack.c.h.b16 %v2613
        %v5158 = vunpack.c.l.b16 %v2614
        %v5159 = vunpack.c.h.b16 %v2614
        %v5160 = vunpack.c.l.b16 %v2615
        %v5161 = vunpack.c.h.b16 %v2615
        %v5162 = vunpack.c.l.b16 %v2616
        %v5163 = vunpack.c.h.b16 %v2616
        %v5164 = vunpack.c.l.b16 %v2617
        %v5165 = vunpack.c.h.b16 %v2617
        %v5166 = vunpack.c.l.b16 %v2618
        %v5167 = vunpack.c.h.b16 %v2618
        %v5168 = vunpack.c.l.b16 %v2619
        %v5169 = vunpack.c.h.b16 %v2619
        %v5170 = vunpack.c.l.b16 %v2620
        %v5171 = vunpack.c.h.b16 %v2620
        %v5172 = vunpack.c.l.b16 %v2621
        %v5173 = vunpack.c.h.b16 %v2621
        %v5174 = vunpack.c.l.b16 %v2622
        %v5175 = vunpack.c.h.b16 %v2622
        %v5176 = vunpack.c.l.b16 %v2623
        %v5177 = vunpack.c.h.b16 %v2623
        %v5178 = vunpack.c.l.b16 %v2624
        %v5179 = vunpack.c.h.b16 %v2624
        %v5180 = vunpack.c.l.b16 %v2625
        %v5181 = vunpack.c.h.b16 %v2625
        %v5182 = vunpack.c.l.b16 %v2626
        %v5183 = vunpack.c.h.b16 %v2626
        %v5184 = vunpack.c.l.b16 %v2627
        %v5185 = vunpack.c.h.b16 %v2627
        %v5186 = vunpack.c.l.b16 %v2628
        %v5187 = vunpack.c.h.b16 %v2628
        %v5188 = vunpack.c.l.b16 %v2629
        %v5189 = vunpack.c.h.b16 %v2629
        %v5190 = vunpack.c.l.b16 %v2630
        %v5191 = vunpack.c.h.b16 %v2630
        %v5192 = vunpack.c.l.b16 %v2631
        %v5193 = vunpack.c.h.b16 %v2631
        %v5194 = vunpack.c.l.b16 %v2632
        %v5195 = vunpack.c.h.b16 %v2632
        %v5196 = vpack.c.b16 %v3632, %v3628
        %v5197 = vpack.c.b16 %v3633, %v3629
        %v5198 = vpack.c.b16 %v3634, %v3630
        %v5199 = vpack.c.b16 %v3635, %v3631
        %v5200 = vpack.c.b16 %v3640, %v3636
        %v5201 = vpack.c.b16 %v3641, %v3637
        %v5202 = vpack.c.b16 %v3642, %v3638
        %v5203 = vpack.c.b16 %v3643, %v3639
        %v5204 = vpack.c.b16 %v3648, %v3644
        %v5205 = vpack.c.b16 %v3649, %v3645
        %v5206 = vpack.c.b16 %v3650, %v3646
        %v5207 = vpack.c.b16 %v3651, %v3647
        %v5208 = vpack.c.b16 %v3656, %v3652
        %v5209 = vpack.c.b16 %v3657, %v3653
        %v5210 = vpack.c.b16 %v3658, %v3654
        %v5211 = vpack.c.b16 %v3659, %v3655
        %v5212 = vpack.c.b16 %v3664, %v3660
        %v5213 = vpack.c.b16 %v3665, %v3661
        %v5214 = vpack.c.b16 %v3666, %v3662
        %v5215 = vpack.c.b16 %v3667, %v3663
        %v5216 = vpack.c.b16 %v3672, %v3668
        %v5217 = vpack.c.b16 %v3673, %v3669
        %v5218 = vpack.c.b16 %v3674, %v3670
        %v5219 = vpack.c.b16 %v3675, %v3671
        %v5220 = vpack.c.b16 %v3680, %v3676
        %v5221 = vpack.c.b16 %v3681, %v3677
        %v5222 = vpack.c.b16 %v3682, %v3678
        %v5223 = vpack.c.b16 %v3683, %v3679
        %v5224 = vpack.c.b16 %v3688, %v3684
        %v5225 = vpack.c.b16 %v3689, %v3685
        %v5226 = vpack.c.b16 %v3690, %v3686
        %v5227 = vpack.c.b16 %v3691, %v3687
        %v5228 = vpack.c.b16 %v3696, %v3692
        %v5229 = vpack.c.b16 %v3697, %v3693
        %v5230 = vpack.c.b16 %v3698, %v3694
        %v5231 = vpack.c.b16 %v3699, %v3695
        %v5232 = vpack.c.b16 %v3704, %v3700
        %v5233 = vpack.c.b16 %v3705, %v3701
        %v5234 = vpack.c.b16 %v3706, %v3702
        %v5235 = vpack.c.b16 %v3707, %v3703
        %v5236 = vpack.c.b16 %v3712, %v3708
        %v5237 = vpack.c.b16 %v3713, %v3709
        %v5238 = vpack.c.b16 %v3714, %v3710
        %v5239 = vpack.c.b16 %v3715, %v3711
        %v5240 = vpack.c.b16 %v3720, %v3716
        %v5241 = vpack.c.b16 %v3721, %v3717
        %v5242 = vpack.c.b16 %v3722, %v3718
        %v5243 = vpack.c.b16 %v3723, %v3719
        %v5244 = vpack.c.b16 %v3728, %v3724
        %v5245 = vpack.c.b16 %v3729, %v3725
        %v5246 = vpack.c.b16 %v3730, %v3726
        %v5247 = vpack.c.b16 %v3731, %v3727
        %v5248 = vpack.c.b16 %v3736, %v3732
        %v5249 = vpack.c.b16 %v3737, %v3733
        %v5250 = vpack.c.b16 %v3738, %v3734
        %v5251 = vpack.c.b16 %v3739, %v3735
        %v5252 = vpack.c.b16 %v3744, %v3740
        %v5253 = vpack.c.b16 %v3745, %v3741
        %v5254 = vpack.c.b16 %v3746, %v3742
        %v5255 = vpack.c.b16 %v3747, %v3743
        %v5256 = vpack.c.b16 %v3752, %v3748
        %v5257 = vpack.c.b16 %v3753, %v3749
        %v5258 = vpack.c.b16 %v3754, %v3750
        %v5259 = vpack.c.b16 %v3755, %v3751
        %v5260 = vpack.c.b16 %v3760, %v3756
        %v5261 = vpack.c.b16 %v3761, %v3757
        %v5262 = vpack.c.b16 %v3762, %v3758
        %v5263 = vpack.c.b16 %v3763, %v3759
        %v5264 = vpack.c.b16 %v3768, %v3764
        %v5265 = vpack.c.b16 %v3769, %v3765
        %v5266 = vpack.c.b16 %v3770, %v3766
        %v5267 = vpack.c.b16 %v3771, %v3767
        %v5268 = vpack.c.b16 %v3776, %v3772
        %v5269 = vpack.c.b16 %v3777, %v3773
        %v5270 = vpack.c.b16 %v3778, %v3774
        %v5271 = vpack.c.b16 %v3779, %v3775
        %v5272 = vpack.c.b16 %v3784, %v3780
        %v5273 = vpack.c.b16 %v3785, %v3781
        %v5274 = vpack.c.b16 %v3786, %v3782
        %v5275 = vpack.c.b16 %v3787, %v3783
        %v5276 = vpack.c.b16 %v3792, %v3788
        %v5277 = vpack.c.b16 %v3793, %v3789
        %v5278 = vpack.c.b16 %v3794, %v3790
        %v5279 = vpack.c.b16 %v3795, %v3791
        %v5280 = vpack.c.b16 %v3800, %v3796
        %v5281 = vpack.c.b16 %v3801, %v3797
        %v5282 = vpack.c.b16 %v3802, %v3798
        %v5283 = vpack.c.b16 %v3803, %v3799
        %v5284 = vpack.c.b16 %v3808, %v3804
        %v5285 = vpack.c.b16 %v3809, %v3805
        %v5286 = vpack.c.b16 %v3810, %v3806
        %v5287 = vpack.c.b16 %v3811, %v3807
        %v5288 = vpack.c.b16 %v3816, %v3812
        %v5289 = vpack.c.b16 %v3817, %v3813
        %v5290 = vpack.c.b16 %v3818, %v3814
        %v5291 = vpack.c.b16 %v3819, %v3815
        %v5292 = vpack.c.b16 %v3824, %v3820
        %v5293 = vpack.c.b16 %v3825, %v3821
        %v5294 = vpack.c.b16 %v3826, %v3822
        %v5295 = vpack.c.b16 %v3827, %v3823
        %v5296 = vpack.c.b16 %v3832, %v3828
        %v5297 = vpack.c.b16 %v3833, %v3829
        %v5298 = vpack.c.b16 %v3834, %v3830
        %v5299 = vpack.c.b16 %v3835, %v3831
        %v5300 = vpack.c.b16 %v3840, %v3836
        %v5301 = vpack.c.b16 %v3841, %v3837
        %v5302 = vpack.c.b16 %v3842, %v3838
        %v5303 = vpack.c.b16 %v3843, %v3839
        %v5304 = vpack.c.b16 %v3848, %v3844
        %v5305 = vpack.c.b16 %v3849, %v3845
        %v5306 = vpack.c.b16 %v3850, %v3846
        %v5307 = vpack.c.b16 %v3851, %v3847
        %v5308 = vpack.c.b16 %v3856, %v3852
        %v5309 = vpack.c.b16 %v3857, %v3853
        %v5310 = vpack.c.b16 %v3858, %v3854
        %v5311 = vpack.c.b16 %v3859, %v3855
        %v5312 = vpack.c.b16 %v3864, %v3860
        %v5313 = vpack.c.b16 %v3865, %v3861
        %v5314 = vpack.c.b16 %v3866, %v3862
        %v5315 = vpack.c.b16 %v3867, %v3863
        %v5316 = vpack.c.b16 %v3872, %v3868
        %v5317 = vpack.c.b16 %v3873, %v3869
        %v5318 = vpack.c.b16 %v3874, %v3870
        %v5319 = vpack.c.b16 %v3875, %v3871
        %v5320 = vpack.c.b16 %v3880, %v3876
        %v5321 = vpack.c.b16 %v3881, %v3877
        %v5322 = vpack.c.b16 %v3882, %v3878
        %v5323 = vpack.c.b16 %v3883, %v3879
        %v5324 = vpack.c.b16 %v3888, %v3884
        %v5325 = vpack.c.b16 %v3889, %v3885
        %v5326 = vpack.c.b16 %v3890, %v3886
        %v5327 = vpack.c.b16 %v3891, %v3887
        %v5328 = vpack.c.b16 %v3896, %v3892
        %v5329 = vpack.c.b16 %v3897, %v3893
        %v5330 = vpack.c.b16 %v3898, %v3894
        %v5331 = vpack.c.b16 %v3899, %v3895
        %v5332 = vpack.c.b16 %v3904, %v3900
        %v5333 = vpack.c.b16 %v3905, %v3901
        %v5334 = vpack.c.b16 %v3906, %v3902
        %v5335 = vpack.c.b16 %v3907, %v3903
        %v5336 = vpack.c.b16 %v3912, %v3908
        %v5337 = vpack.c.b16 %v3913, %v3909
        %v5338 = vpack.c.b16 %v3914, %v3910
        %v5339 = vpack.c.b16 %v3915, %v3911
        %v5340 = vpack.c.b16 %v3920, %v3916
        %v5341 = vpack.c.b16 %v3921, %v3917
        %v5342 = vpack.c.b16 %v3922, %v3918
        %v5343 = vpack.c.b16 %v3923, %v3919
        %v5344 = vpack.c.b16 %v3928, %v3924
        %v5345 = vpack.c.b16 %v3929, %v3925
        %v5346 = vpack.c.b16 %v3930, %v3926
        %v5347 = vpack.c.b16 %v3931, %v3927
        %v5348 = vpack.c.b16 %v3936, %v3932
        %v5349 = vpack.c.b16 %v3937, %v3933
        %v5350 = vpack.c.b16 %v3938, %v3934
        %v5351 = vpack.c.b16 %v3939, %v3935
        %v5352 = vpack.c.b16 %v3944, %v3940
        %v5353 = vpack.c.b16 %v3945, %v3941
        %v5354 = vpack.c.b16 %v3946, %v3942
        %v5355 = vpack.c.b16 %v3947, %v3943
        %v5356 = vpack.c.b16 %v3952, %v3948
        %v5357 = vpack.c.b16 %v3953, %v3949
        %v5358 = vpack.c.b16 %v3954, %v3950
        %v5359 = vpack.c.b16 %v3955, %v3951
        %v5360 = vpack.c.b16 %v3960, %v3956
        %v5361 = vpack.c.b16 %v3961, %v3957
        %v5362 = vpack.c.b16 %v3962, %v3958
        %v5363 = vpack.c.b16 %v3963, %v3959
        %v5364 = vpack.c.b16 %v3968, %v3964
        %v5365 = vpack.c.b16 %v3969, %v3965
        %v5366 = vpack.c.b16 %v3970, %v3966
        %v5367 = vpack.c.b16 %v3971, %v3967
        %v5368 = vpack.c.b16 %v3976, %v3972
        %v5369 = vpack.c.b16 %v3977, %v3973
        %v5370 = vpack.c.b16 %v3978, %v3974
        %v5371 = vpack.c.b16 %v3979, %v3975
        %v5372 = vpack.c.b16 %v3984, %v3980
        %v5373 = vpack.c.b16 %v3985, %v3981
        %v5374 = vpack.c.b16 %v3986, %v3982
        %v5375 = vpack.c.b16 %v3987, %v3983
        %v5376 = vpack.c.b16 %v3992, %v3988
        %v5377 = vpack.c.b16 %v3993, %v3989
        %v5378 = vpack.c.b16 %v3994, %v3990
        %v5379 = vpack.c.b16 %v3995, %v3991
        %v5380 = vpack.c.b16 %v4000, %v3996
        %v5381 = vpack.c.b16 %v4001, %v3997
        %v5382 = vpack.c.b16 %v4002, %v3998
        %v5383 = vpack.c.b16 %v4003, %v3999
        %v5384 = vpack.c.b16 %v4008, %v4004
        %v5385 = vpack.c.b16 %v4009, %v4005
        %v5386 = vpack.c.b16 %v4010, %v4006
        %v5387 = vpack.c.b16 %v4011, %v4007
        %v5388 = vpack.c.b16 %v4016, %v4012
        %v5389 = vpack.c.b16 %v4017, %v4013
        %v5390 = vpack.c.b16 %v4018, %v4014
        %v5391 = vpack.c.b16 %v4019, %v4015
        %v5392 = vpack.c.b16 %v4024, %v4020
        %v5393 = vpack.c.b16 %v4025, %v4021
        %v5394 = vpack.c.b16 %v4026, %v4022
        %v5395 = vpack.c.b16 %v4027, %v4023
        %v5396 = vpack.c.b16 %v4032, %v4028
        %v5397 = vpack.c.b16 %v4033, %v4029
        %v5398 = vpack.c.b16 %v4034, %v4030
        %v5399 = vpack.c.b16 %v4035, %v4031
        %v5400 = vpack.c.b16 %v4040, %v4036
        %v5401 = vpack.c.b16 %v4041, %v4037
        %v5402 = vpack.c.b16 %v4042, %v4038
        %v5403 = vpack.c.b16 %v4043, %v4039
        %v5404 = vpack.c.b16 %v4048, %v4044
        %v5405 = vpack.c.b16 %v4049, %v4045
        %v5406 = vpack.c.b16 %v4050, %v4046
        %v5407 = vpack.c.b16 %v4051, %v4047
        %v5408 = vpack.c.b16 %v4056, %v4052
        %v5409 = vpack.c.b16 %v4057, %v4053
        %v5410 = vpack.c.b16 %v4058, %v4054
        %v5411 = vpack.c.b16 %v4059, %v4055
        %v5412 = vpack.c.b16 %v4064, %v4060
        %v5413 = vpack.c.b16 %v4065, %v4061
        %v5414 = vpack.c.b16 %v4066, %v4062
        %v5415 = vpack.c.b16 %v4067, %v4063
        %v5416 = vpack.c.b16 %v4072, %v4068
        %v5417 = vpack.c.b16 %v4073, %v4069
        %v5418 = vpack.c.b16 %v4074, %v4070
        %v5419 = vpack.c.b16 %v4075, %v4071
        %v5420 = vpack.c.b16 %v4080, %v4076
        %v5421 = vpack.c.b16 %v4081, %v4077
        %v5422 = vpack.c.b16 %v4082, %v4078
        %v5423 = vpack.c.b16 %v4083, %v4079
        %v5424 = vpack.c.b16 %v4088, %v4084
        %v5425 = vpack.c.b16 %v4089, %v4085
        %v5426 = vpack.c.b16 %v4090, %v4086
        %v5427 = vpack.c.b16 %v4091, %v4087
        %v5428 = vpack.c.b16 %v4096, %v4092
        %v5429 = vpack.c.b16 %v4097, %v4093
        %v5430 = vpack.c.b16 %v4098, %v4094
        %v5431 = vpack.c.b16 %v4099, %v4095
        %v5432 = vpack.c.b16 %v4104, %v4100
        %v5433 = vpack.c.b16 %v4105, %v4101
        %v5434 = vpack.c.b16 %v4106, %v4102
        %v5435 = vpack.c.b16 %v4107, %v4103
        %v5436 = vpack.c.b16 %v4112, %v4108
        %v5437 = vpack.c.b16 %v4113, %v4109
        %v5438 = vpack.c.b16 %v4114, %v4110
        %v5439 = vpack.c.b16 %v4115, %v4111
        %v5440 = vpack.c.b16 %v4120, %v4116
        %v5441 = vpack.c.b16 %v4121, %v4117
        %v5442 = vpack.c.b16 %v4122, %v4118
        %v5443 = vpack.c.b16 %v4123, %v4119
        %v5444 = vpack.c.b16 %v4128, %v4124
        %v5445 = vpack.c.b16 %v4129, %v4125
        %v5446 = vpack.c.b16 %v4130, %v4126
        %v5447 = vpack.c.b16 %v4131, %v4127
        %v5448 = vpack.c.b16 %v4136, %v4132
        %v5449 = vpack.c.b16 %v4137, %v4133
        %v5450 = vpack.c.b16 %v4138, %v4134
        %v5451 = vpack.c.b16 %v4139, %v4135
        %v5452 = vpack.c.b16 %v4144, %v4140
        %v5453 = vpack.c.b16 %v4145, %v4141
        %v5454 = vpack.c.b16 %v4146, %v4142
        %v5455 = vpack.c.b16 %v4147, %v4143
        %v5456 = vpack.c.b16 %v4152, %v4148
        %v5457 = vpack.c.b16 %v4153, %v4149
        %v5458 = vpack.c.b16 %v4154, %v4150
        %v5459 = vpack.c.b16 %v4155, %v4151
        %v5460 = vpack.c.b16 %v4160, %v4156
        %v5461 = vpack.c.b16 %v4161, %v4157
        %v5462 = vpack.c.b16 %v4162, %v4158
        %v5463 = vpack.c.b16 %v4163, %v4159
        %v5464 = vpack.c.b16 %v4168, %v4164
        %v5465 = vpack.c.b16 %v4169, %v4165
        %v5466 = vpack.c.b16 %v4170, %v4166
        %v5467 = vpack.c.b16 %v4171, %v4167
        %v5468 = vpack.c.b16 %v4176, %v4172
        %v5469 = vpack.c.b16 %v4177, %v4173
        %v5470 = vpack.c.b16 %v4178, %v4174
        %v5471 = vpack.c.b16 %v4179, %v4175
        %v5472 = vpack.c.b16 %v4184, %v4180
        %v5473 = vpack.c.b16 %v4185, %v4181
        %v5474 = vpack.c.b16 %v4186, %v4182
        %v5475 = vpack.c.b16 %v4187, %v4183
        %v5476 = vpack.c.b16 %v4192, %v4188
        %v5477 = vpack.c.b16 %v4193, %v4189
        %v5478 = vpack.c.b16 %v4194, %v4190
        %v5479 = vpack.c.b16 %v4195, %v4191
        %v5480 = vpack.c.b16 %v4200, %v4196
        %v5481 = vpack.c.b16 %v4201, %v4197
        %v5482 = vpack.c.b16 %v4202, %v4198
        %v5483 = vpack.c.b16 %v4203, %v4199
        %v5484 = vpack.c.b16 %v4208, %v4204
        %v5485 = vpack.c.b16 %v4209, %v4205
        %v5486 = vpack.c.b16 %v4210, %v4206
        %v5487 = vpack.c.b16 %v4211, %v4207
        %v5488 = vpack.c.b16 %v4216, %v4212
        %v5489 = vpack.c.b16 %v4217, %v4213
        %v5490 = vpack.c.b16 %v4218, %v4214
        %v5491 = vpack.c.b16 %v4219, %v4215
        %v5492 = vpack.c.b16 %v4224, %v4220
        %v5493 = vpack.c.b16 %v4225, %v4221
        %v5494 = vpack.c.b16 %v4226, %v4222
        %v5495 = vpack.c.b16 %v4227, %v4223
        %v5496 = vpack.c.b16 %v4232, %v4228
        %v5497 = vpack.c.b16 %v4233, %v4229
        %v5498 = vpack.c.b16 %v4234, %v4230
        %v5499 = vpack.c.b16 %v4235, %v4231
        %v5500 = vpack.c.b16 %v4240, %v4236
        %v5501 = vpack.c.b16 %v4241, %v4237
        %v5502 = vpack.c.b16 %v4242, %v4238
        %v5503 = vpack.c.b16 %v4243, %v4239
        %v5504 = vpack.c.b16 %v4248, %v4244
        %v5505 = vpack.c.b16 %v4249, %v4245
        %v5506 = vpack.c.b16 %v4250, %v4246
        %v5507 = vpack.c.b16 %v4251, %v4247
        %v5508 = vpack.c.b16 %v4256, %v4252
        %v5509 = vpack.c.b16 %v4257, %v4253
        %v5510 = vpack.c.b16 %v4258, %v4254
        %v5511 = vpack.c.b16 %v4259, %v4255
        %v5512 = vpack.c.b16 %v4264, %v4260
        %v5513 = vpack.c.b16 %v4265, %v4261
        %v5514 = vpack.c.b16 %v4266, %v4262
        %v5515 = vpack.c.b16 %v4267, %v4263
        %v5516 = vpack.c.b16 %v4272, %v4268
        %v5517 = vpack.c.b16 %v4273, %v4269
        %v5518 = vpack.c.b16 %v4274, %v4270
        %v5519 = vpack.c.b16 %v4275, %v4271
        %v5520 = vpack.c.b16 %v4280, %v4276
        %v5521 = vpack.c.b16 %v4281, %v4277
        %v5522 = vpack.c.b16 %v4282, %v4278
        %v5523 = vpack.c.b16 %v4283, %v4279
        %v5524 = vpack.c.b16 %v4288, %v4284
        %v5525 = vpack.c.b16 %v4289, %v4285
        %v5526 = vpack.c.b16 %v4290, %v4286
        %v5527 = vpack.c.b16 %v4291, %v4287
        %v5528 = vpack.c.b16 %v4296, %v4292
        %v5529 = vpack.c.b16 %v4297, %v4293
        %v5530 = vpack.c.b16 %v4298, %v4294
        %v5531 = vpack.c.b16 %v4299, %v4295
        %v5532 = vpack.c.b16 %v4304, %v4300
        %v5533 = vpack.c.b16 %v4305, %v4301
        %v5534 = vpack.c.b16 %v4306, %v4302
        %v5535 = vpack.c.b16 %v4307, %v4303
        %v5536 = vpack.c.b16 %v4312, %v4308
        %v5537 = vpack.c.b16 %v4313, %v4309
        %v5538 = vpack.c.b16 %v4314, %v4310
        %v5539 = vpack.c.b16 %v4315, %v4311
        %v5540 = vpack.c.b16 %v4320, %v4316
        %v5541 = vpack.c.b16 %v4321, %v4317
        %v5542 = vpack.c.b16 %v4322, %v4318
        %v5543 = vpack.c.b16 %v4323, %v4319
        %v5544 = vpack.c.b16 %v4328, %v4324
        %v5545 = vpack.c.b16 %v4329, %v4325
        %v5546 = vpack.c.b16 %v4330, %v4326
        %v5547 = vpack.c.b16 %v4331, %v4327
        %v5548 = vpack.c.b16 %v4336, %v4332
        %v5549 = vpack.c.b16 %v4337, %v4333
        %v5550 = vpack.c.b16 %v4338, %v4334
        %v5551 = vpack.c.b16 %v4339, %v4335
        %v5552 = vpack.c.b16 %v4344, %v4340
        %v5553 = vpack.c.b16 %v4345, %v4341
        %v5554 = vpack.c.b16 %v4346, %v4342
        %v5555 = vpack.c.b16 %v4347, %v4343
        %v5556 = vpack.c.b16 %v4352, %v4348
        %v5557 = vpack.c.b16 %v4353, %v4349
        %v5558 = vpack.c.b16 %v4354, %v4350
        %v5559 = vpack.c.b16 %v4355, %v4351
        %v5560 = vpack.c.b16 %v4360, %v4356
        %v5561 = vpack.c.b16 %v4361, %v4357
        %v5562 = vpack.c.b16 %v4362, %v4358
        %v5563 = vpack.c.b16 %v4363, %v4359
        %v5564 = vpack.c.b16 %v4368, %v4364
        %v5565 = vpack.c.b16 %v4369, %v4365
        %v5566 = vpack.c.b16 %v4370, %v4366
        %v5567 = vpack.c.b16 %v4371, %v4367
        %v5568 = vpack.c.b16 %v4376, %v4372
        %v5569 = vpack.c.b16 %v4377, %v4373
        %v5570 = vpack.c.b16 %v4378, %v4374
        %v5571 = vpack.c.b16 %v4379, %v4375
        %v5572 = vpack.c.b16 %v4384, %v4380
        %v5573 = vpack.c.b16 %v4385, %v4381
        %v5574 = vpack.c.b16 %v4386, %v4382
        %v5575 = vpack.c.b16 %v4387, %v4383
        %v5576 = vpack.c.b16 %v4392, %v4388
        %v5577 = vpack.c.b16 %v4393, %v4389
        %v5578 = vpack.c.b16 %v4394, %v4390
        %v5579 = vpack.c.b16 %v4395, %v4391
        %v5580 = vpack.c.b16 %v4400, %v4396
        %v5581 = vpack.c.b16 %v4401, %v4397
        %v5582 = vpack.c.b16 %v4402, %v4398
        %v5583 = vpack.c.b16 %v4403, %v4399
        %v5584 = vpack.c.b16 %v4408, %v4404
        %v5585 = vpack.c.b16 %v4409, %v4405
        %v5586 = vpack.c.b16 %v4410, %v4406
        %v5587 = vpack.c.b16 %v4411, %v4407
        %v5588 = vpack.c.b16 %v4416, %v4412
        %v5589 = vpack.c.b16 %v4417, %v4413
        %v5590 = vpack.c.b16 %v4418, %v4414
        %v5591 = vpack.c.b16 %v4419, %v4415
        %v5592 = vpack.c.b16 %v4424, %v4420
        %v5593 = vpack.c.b16 %v4425, %v4421
        %v5594 = vpack.c.b16 %v4426, %v4422
        %v5595 = vpack.c.b16 %v4427, %v4423
        %v5596 = vpack.c.b16 %v4432, %v4428
        %v5597 = vpack.c.b16 %v4433, %v4429
        %v5598 = vpack.c.b16 %v4434, %v4430
        %v5599 = vpack.c.b16 %v4435, %v4431
        %v5600 = vpack.c.b16 %v4440, %v4436
        %v5601 = vpack.c.b16 %v4441, %v4437
        %v5602 = vpack.c.b16 %v4442, %v4438
        %v5603 = vpack.c.b16 %v4443, %v4439
        %v5604 = vpack.c.b16 %v4448, %v4444
        %v5605 = vpack.c.b16 %v4449, %v4445
        %v5606 = vpack.c.b16 %v4450, %v4446
        %v5607 = vpack.c.b16 %v4451, %v4447
        %v5608 = vpack.c.b16 %v4456, %v4452
        %v5609 = vpack.c.b16 %v4457, %v4453
        %v5610 = vpack.c.b16 %v4458, %v4454
        %v5611 = vpack.c.b16 %v4459, %v4455
        %v5612 = vpack.c.b16 %v4464, %v4460
        %v5613 = vpack.c.b16 %v4465, %v4461
        %v5614 = vpack.c.b16 %v4466, %v4462
        %v5615 = vpack.c.b16 %v4467, %v4463
        %v5616 = vpack.c.b16 %v4472, %v4468
        %v5617 = vpack.c.b16 %v4473, %v4469
        %v5618 = vpack.c.b16 %v4474, %v4470
        %v5619 = vpack.c.b16 %v4475, %v4471
        %v5620 = vpack.c.b16 %v4480, %v4476
        %v5621 = vpack.c.b16 %v4481, %v4477
        %v5622 = vpack.c.b16 %v4482, %v4478
        %v5623 = vpack.c.b16 %v4483, %v4479
        %v5624 = vpack.c.b16 %v4488, %v4484
        %v5625 = vpack.c.b16 %v4489, %v4485
        %v5626 = vpack.c.b16 %v4490, %v4486
        %v5627 = vpack.c.b16 %v4491, %v4487
        %v5628 = vpack.c.b16 %v4496, %v4492
        %v5629 = vpack.c.b16 %v4497, %v4493
        %v5630 = vpack.c.b16 %v4498, %v4494
        %v5631 = vpack.c.b16 %v4499, %v4495
        %v5632 = vpack.c.b16 %v4504, %v4500
        %v5633 = vpack.c.b16 %v4505, %v4501
        %v5634 = vpack.c.b16 %v4506, %v4502
        %v5635 = vpack.c.b16 %v4507, %v4503
        %v5636 = vpack.c.b16 %v4512, %v4508
        %v5637 = vpack.c.b16 %v4513, %v4509
        %v5638 = vpack.c.b16 %v4514, %v4510
        %v5639 = vpack.c.b16 %v4515, %v4511
        %v5640 = vpack.c.b16 %v4520, %v4516
        %v5641 = vpack.c.b16 %v4521, %v4517
        %v5642 = vpack.c.b16 %v4522, %v4518
        %v5643 = vpack.c.b16 %v4523, %v4519
        %v5644 = vpack.c.b16 %v4528, %v4524
        %v5645 = vpack.c.b16 %v4529, %v4525
        %v5646 = vpack.c.b16 %v4530, %v4526
        %v5647 = vpack.c.b16 %v4531, %v4527
        %v5648 = vpack.c.b16 %v4536, %v4532
        %v5649 = vpack.c.b16 %v4537, %v4533
        %v5650 = vpack.c.b16 %v4538, %v4534
        %v5651 = vpack.c.b16 %v4539, %v4535
        %v5652 = vpack.c.b16 %v4544, %v4540
        %v5653 = vpack.c.b16 %v4545, %v4541
        %v5654 = vpack.c.b16 %v4546, %v4542
        %v5655 = vpack.c.b16 %v4547, %v4543
        %v5656 = vpack.c.b16 %v4552, %v4548
        %v5657 = vpack.c.b16 %v4553, %v4549
        %v5658 = vpack.c.b16 %v4554, %v4550
        %v5659 = vpack.c.b16 %v4555, %v4551
        %v5660 = vpack.c.b16 %v4560, %v4556
        %v5661 = vpack.c.b16 %v4561, %v4557
        %v5662 = vpack.c.b16 %v4562, %v4558
        %v5663 = vpack.c.b16 %v4563, %v4559
        %v5664 = vpack.c.b16 %v4568, %v4564
        %v5665 = vpack.c.b16 %v4569, %v4565
        %v5666 = vpack.c.b16 %v4570, %v4566
        %v5667 = vpack.c.b16 %v4571, %v4567
        %v5668 = vpack.c.b16 %v4576, %v4572
        %v5669 = vpack.c.b16 %v4577, %v4573
        %v5670 = vpack.c.b16 %v4578, %v4574
        %v5671 = vpack.c.b16 %v4579, %v4575
        %v5672 = vpack.c.b16 %v4584, %v4580
        %v5673 = vpack.c.b16 %v4585, %v4581
        %v5674 = vpack.c.b16 %v4586, %v4582
        %v5675 = vpack.c.b16 %v4587, %v4583
        %v5676 = vpack.c.b16 %v4592, %v4588
        %v5677 = vpack.c.b16 %v4593, %v4589
        %v5678 = vpack.c.b16 %v4594, %v4590
        %v5679 = vpack.c.b16 %v4595, %v4591
        %v5680 = vpack.c.b16 %v4600, %v4596
        %v5681 = vpack.c.b16 %v4601, %v4597
        %v5682 = vpack.c.b16 %v4602, %v4598
        %v5683 = vpack.c.b16 %v4603, %v4599
        %v5684 = vpack.c.b16 %v4608, %v4604
        %v5685 = vpack.c.b16 %v4609, %v4605
        %v5686 = vpack.c.b16 %v4610, %v4606
        %v5687 = vpack.c.b16 %v4611, %v4607
        %v5688 = vpack.c.b16 %v4616, %v4612
        %v5689 = vpack.c.b16 %v4617, %v4613
        %v5690 = vpack.c.b16 %v4618, %v4614
        %v5691 = vpack.c.b16 %v4619, %v4615
        %v5692 = vpack.c.b16 %v4624, %v4620
        %v5693 = vpack.c.b16 %v4625, %v4621
        %v5694 = vpack.c.b16 %v4626, %v4622
        %v5695 = vpack.c.b16 %v4627, %v4623
        %v5696 = vpack.c.b16 %v4632, %v4628
        %v5697 = vpack.c.b16 %v4633, %v4629
        %v5698 = vpack.c.b16 %v4634, %v4630
        %v5699 = vpack.c.b16 %v4635, %v4631
        %v5700 = vpack.c.b16 %v4640, %v4636
        %v5701 = vpack.c.b16 %v4641, %v4637
        %v5702 = vpack.c.b16 %v4642, %v4638
        %v5703 = vpack.c.b16 %v4643, %v4639
        %v5704 = vpack.c.b16 %v4648, %v4644
        %v5705 = vpack.c.b16 %v4649, %v4645
        %v5706 = vpack.c.b16 %v4650, %v4646
        %v5707 = vpack.c.b16 %v4651, %v4647
        %v5708 = vpack.c.b16 %v4656, %v4652
        %v5709 = vpack.c.b16 %v4657, %v4653
        %v5710 = vpack.c.b16 %v4658, %v4654
        %v5711 = vpack.c.b16 %v4659, %v4655
        %v5712 = vpack.c.b16 %v4664, %v4660
        %v5713 = vpack.c.b16 %v4665, %v4661
        %v5714 = vpack.c.b16 %v4666, %v4662
        %v5715 = vpack.c.b16 %v4667, %v4663
        %v5716 = vpack.c.b16 %v4672, %v4668
        %v5717 = vpack.c.b16 %v4673, %v4669
        %v5718 = vpack.c.b16 %v4674, %v4670
        %v5719 = vpack.c.b16 %v4675, %v4671
        %v5720 = vpack.c.b16 %v4680, %v4676
        %v5721 = vpack.c.b16 %v4681, %v4677
        %v5722 = vpack.c.b16 %v4682, %v4678
        %v5723 = vpack.c.b16 %v4683, %v4679
        %v5724 = vpack.c.b16 %v4688, %v4684
        %v5725 = vpack.c.b16 %v4689, %v4685
        %v5726 = vpack.c.b16 %v4690, %v4686
        %v5727 = vpack.c.b16 %v4691, %v4687
        %v5728 = vpack.c.b16 %v4696, %v4692
        %v5729 = vpack.c.b16 %v4697, %v4693
        %v5730 = vpack.c.b16 %v4698, %v4694
        %v5731 = vpack.c.b16 %v4699, %v4695
        %v5732 = vpack.c.b16 %v4704, %v4700
        %v5733 = vpack.c.b16 %v4705, %v4701
        %v5734 = vpack.c.b16 %v4706, %v4702
        %v5735 = vpack.c.b16 %v4707, %v4703
        %v5736 = vpack.c.b16 %v4712, %v4708
        %v5737 = vpack.c.b16 %v4713, %v4709
        %v5738 = vpack.c.b16 %v4714, %v4710
        %v5739 = vpack.c.b16 %v4715, %v4711
        %v5740 = vpack.c.b16 %v4720, %v4716
        %v5741 = vpack.c.b16 %v4721, %v4717
        %v5742 = vpack.c.b16 %v4722, %v4718
        %v5743 = vpack.c.b16 %v4723, %v4719
        %v5744 = vpack.c.b16 %v4728, %v4724
        %v5745 = vpack.c.b16 %v4729, %v4725
        %v5746 = vpack.c.b16 %v4730, %v4726
        %v5747 = vpack.c.b16 %v4731, %v4727
        %v5748 = vpack.c.b16 %v4736, %v4732
        %v5749 = vpack.c.b16 %v4737, %v4733
        %v5750 = vpack.c.b16 %v4738, %v4734
        %v5751 = vpack.c.b16 %v4739, %v4735
        %v5752 = vpack.c.b16 %v4744, %v4740
        %v5753 = vpack.c.b16 %v4745, %v4741
        %v5754 = vpack.c.b16 %v4746, %v4742
        %v5755 = vpack.c.b16 %v4747, %v4743
        %v5756 = vpack.c.b16 %v4752, %v4748
        %v5757 = vpack.c.b16 %v4753, %v4749
        %v5758 = vpack.c.b16 %v4754, %v4750
        %v5759 = vpack.c.b16 %v4755, %v4751
        %v5760 = vpack.c.b16 %v4760, %v4756
        %v5761 = vpack.c.b16 %v4761, %v4757
        %v5762 = vpack.c.b16 %v4762, %v4758
        %v5763 = vpack.c.b16 %v4763, %v4759
        %v5764 = vpack.c.b16 %v4768, %v4764
        %v5765 = vpack.c.b16 %v4769, %v4765
        %v5766 = vpack.c.b16 %v4770, %v4766
        %v5767 = vpack.c.b16 %v4771, %v4767
        %v5768 = vpack.c.b16 %v4776, %v4772
        %v5769 = vpack.c.b16 %v4777, %v4773
        %v5770 = vpack.c.b16 %v4778, %v4774
        %v5771 = vpack.c.b16 %v4779, %v4775
        %v5772 = vpack.c.b16 %v4784, %v4780
        %v5773 = vpack.c.b16 %v4785, %v4781
        %v5774 = vpack.c.b16 %v4786, %v4782
        %v5775 = vpack.c.b16 %v4787, %v4783
        %v5776 = vpack.c.b16 %v4792, %v4788
        %v5777 = vpack.c.b16 %v4793, %v4789
        %v5778 = vpack.c.b16 %v4794, %v4790
        %v5779 = vpack.c.b16 %v4795, %v4791
        %v5780 = vpack.c.b16 %v4800, %v4796
        %v5781 = vpack.c.b16 %v4801, %v4797
        %v5782 = vpack.c.b16 %v4802, %v4798
        %v5783 = vpack.c.b16 %v4803, %v4799
        %v5784 = vpack.c.b16 %v4808, %v4804
        %v5785 = vpack.c.b16 %v4809, %v4805
        %v5786 = vpack.c.b16 %v4810, %v4806
        %v5787 = vpack.c.b16 %v4811, %v4807
        %v5788 = vpack.c.b16 %v4816, %v4812
        %v5789 = vpack.c.b16 %v4817, %v4813
        %v5790 = vpack.c.b16 %v4818, %v4814
        %v5791 = vpack.c.b16 %v4819, %v4815
        %v5792 = vpack.c.b16 %v4824, %v4820
        %v5793 = vpack.c.b16 %v4825, %v4821
        %v5794 = vpack.c.b16 %v4826, %v4822
        %v5795 = vpack.c.b16 %v4827, %v4823
        %v5796 = vpack.c.b16 %v4832, %v4828
        %v5797 = vpack.c.b16 %v4833, %v4829
        %v5798 = vpack.c.b16 %v4834, %v4830
        %v5799 = vpack.c.b16 %v4835, %v4831
        %v5800 = vpack.c.b16 %v4840, %v4836
        %v5801 = vpack.c.b16 %v4841, %v4837
        %v5802 = vpack.c.b16 %v4842, %v4838
        %v5803 = vpack.c.b16 %v4843, %v4839
        %v5804 = vpack.c.b16 %v4848, %v4844
        %v5805 = vpack.c.b16 %v4849, %v4845
        %v5806 = vpack.c.b16 %v4850, %v4846
        %v5807 = vpack.c.b16 %v4851, %v4847
        %v5808 = vpack.c.b16 %v4856, %v4852
        %v5809 = vpack.c.b16 %v4857, %v4853
        %v5810 = vpack.c.b16 %v4858, %v4854
        %v5811 = vpack.c.b16 %v4859, %v4855
        %v5812 = vpack.c.b16 %v4864, %v4860
        %v5813 = vpack.c.b16 %v4865, %v4861
        %v5814 = vpack.c.b16 %v4866, %v4862
        %v5815 = vpack.c.b16 %v4867, %v4863
        %v5816 = vpack.c.b16 %v4872, %v4868
        %v5817 = vpack.c.b16 %v4873, %v4869
        %v5818 = vpack.c.b16 %v4874, %v4870
        %v5819 = vpack.c.b16 %v4875, %v4871
        %v5820 = vpack.c.b16 %v4880, %v4876
        %v5821 = vpack.c.b16 %v4881, %v4877
        %v5822 = vpack.c.b16 %v4882, %v4878
        %v5823 = vpack.c.b16 %v4883, %v4879
        %v5824 = vpack.c.b16 %v4888, %v4884
        %v5825 = vpack.c.b16 %v4889, %v4885
        %v5826 = vpack.c.b16 %v4890, %v4886
        %v5827 = vpack.c.b16 %v4891, %v4887
        %v5828 = vpack.c.b16 %v4896, %v4892
        %v5829 = vpack.c.b16 %v4897, %v4893
        %v5830 = vpack.c.b16 %v4898, %v4894
        %v5831 = vpack.c.b16 %v4899, %v4895
        %v5832 = vpack.c.b16 %v4904, %v4900
        %v5833 = vpack.c.b16 %v4905, %v4901
        %v5834 = vpack.c.b16 %v4906, %v4902
        %v5835 = vpack.c.b16 %v4907, %v4903
        %v5836 = vpack.c.b16 %v4912, %v4908
        %v5837 = vpack.c.b16 %v4913, %v4909
        %v5838 = vpack.c.b16 %v4914, %v4910
        %v5839 = vpack.c.b16 %v4915, %v4911
        %v5840 = vpack.c.b16 %v4920, %v4916
        %v5841 = vpack.c.b16 %v4921, %v4917
        %v5842 = vpack.c.b16 %v4922, %v4918
        %v5843 = vpack.c.b16 %v4923, %v4919
        %v5844 = vpack.c.b16 %v4928, %v4924
        %v5845 = vpack.c.b16 %v4929, %v4925
        %v5846 = vpack.c.b16 %v4930, %v4926
        %v5847 = vpack.c.b16 %v4931, %v4927
        %v5848 = vpack.c.b16 %v4936, %v4932
        %v5849 = vpack.c.b16 %v4937, %v4933
        %v5850 = vpack.c.b16 %v4938, %v4934
        %v5851 = vpack.c.b16 %v4939, %v4935
        %v5852 = vpack.c.b16 %v4944, %v4940
        %v5853 = vpack.c.b16 %v4945, %v4941
        %v5854 = vpack.c.b16 %v4946, %v4942
        %v5855 = vpack.c.b16 %v4947, %v4943
        %v5856 = vpack.c.b16 %v4952, %v4948
        %v5857 = vpack.c.b16 %v4953, %v4949
        %v5858 = vpack.c.b16 %v4954, %v4950
        %v5859 = vpack.c.b16 %v4955, %v4951
        %v5860 = vpack.c.b16 %v4960, %v4956
        %v5861 = vpack.c.b16 %v4961, %v4957
        %v5862 = vpack.c.b16 %v4962, %v4958
        %v5863 = vpack.c.b16 %v4963, %v4959
        %v5864 = vpack.c.b16 %v4968, %v4964
        %v5865 = vpack.c.b16 %v4969, %v4965
        %v5866 = vpack.c.b16 %v4970, %v4966
        %v5867 = vpack.c.b16 %v4971, %v4967
        %v5868 = vpack.c.b16 %v4976, %v4972
        %v5869 = vpack.c.b16 %v4977, %v4973
        %v5870 = vpack.c.b16 %v4978, %v4974
        %v5871 = vpack.c.b16 %v4979, %v4975
        %v5872 = vpack.c.b16 %v4984, %v4980
        %v5873 = vpack.c.b16 %v4985, %v4981
        %v5874 = vpack.c.b16 %v4986, %v4982
        %v5875 = vpack.c.b16 %v4987, %v4983
        %v5876 = vpack.c.b16 %v4992, %v4988
        %v5877 = vpack.c.b16 %v4993, %v4989
        %v5878 = vpack.c.b16 %v4994, %v4990
        %v5879 = vpack.c.b16 %v4995, %v4991
        %v5880 = vpack.c.b16 %v5000, %v4996
        %v5881 = vpack.c.b16 %v5001, %v4997
        %v5882 = vpack.c.b16 %v5002, %v4998
        %v5883 = vpack.c.b16 %v5003, %v4999
        %v5884 = vpack.c.b16 %v5008, %v5004
        %v5885 = vpack.c.b16 %v5009, %v5005
        %v5886 = vpack.c.b16 %v5010, %v5006
        %v5887 = vpack.c.b16 %v5011, %v5007
        %v5888 = vpack.c.b16 %v5016, %v5012
        %v5889 = vpack.c.b16 %v5017, %v5013
        %v5890 = vpack.c.b16 %v5018, %v5014
        %v5891 = vpack.c.b16 %v5019, %v5015
        %v5892 = vpack.c.b16 %v5024, %v5020
        %v5893 = vpack.c.b16 %v5025, %v5021
        %v5894 = vpack.c.b16 %v5026, %v5022
        %v5895 = vpack.c.b16 %v5027, %v5023
        %v5896 = vpack.c.b16 %v5032, %v5028
        %v5897 = vpack.c.b16 %v5033, %v5029
        %v5898 = vpack.c.b16 %v5034, %v5030
        %v5899 = vpack.c.b16 %v5035, %v5031
        %v5900 = vpack.c.b16 %v5040, %v5036
        %v5901 = vpack.c.b16 %v5041, %v5037
        %v5902 = vpack.c.b16 %v5042, %v5038
        %v5903 = vpack.c.b16 %v5043, %v5039
        %v5904 = vpack.c.b16 %v5048, %v5044
        %v5905 = vpack.c.b16 %v5049, %v5045
        %v5906 = vpack.c.b16 %v5050, %v5046
        %v5907 = vpack.c.b16 %v5051, %v5047
        %v5908 = vpack.c.b16 %v5056, %v5052
        %v5909 = vpack.c.b16 %v5057, %v5053
        %v5910 = vpack.c.b16 %v5058, %v5054
        %v5911 = vpack.c.b16 %v5059, %v5055
        %v5912 = vpack.c.b16 %v5064, %v5060
        %v5913 = vpack.c.b16 %v5065, %v5061
        %v5914 = vpack.c.b16 %v5066, %v5062
        %v5915 = vpack.c.b16 %v5067, %v5063
        %v5916 = vpack.c.b16 %v5072, %v5068
        %v5917 = vpack.c.b16 %v5073, %v5069
        %v5918 = vpack.c.b16 %v5074, %v5070
        %v5919 = vpack.c.b16 %v5075, %v5071
        %v5920 = vpack.c.b16 %v5080, %v5076
        %v5921 = vpack.c.b16 %v5081, %v5077
        %v5922 = vpack.c.b16 %v5082, %v5078
        %v5923 = vpack.c.b16 %v5083, %v5079
        %v5924 = vpack.c.b16 %v5088, %v5084
        %v5925 = vpack.c.b16 %v5089, %v5085
        %v5926 = vpack.c.b16 %v5090, %v5086
        %v5927 = vpack.c.b16 %v5091, %v5087
        %v5928 = vpack.c.b16 %v5096, %v5092
        %v5929 = vpack.c.b16 %v5097, %v5093
        %v5930 = vpack.c.b16 %v5098, %v5094
        %v5931 = vpack.c.b16 %v5099, %v5095
        %v5932 = vpack.c.b16 %v5104, %v5100
        %v5933 = vpack.c.b16 %v5105, %v5101
        %v5934 = vpack.c.b16 %v5106, %v5102
        %v5935 = vpack.c.b16 %v5107, %v5103
        %v5936 = vpack.c.b16 %v5112, %v5108
        %v5937 = vpack.c.b16 %v5113, %v5109
        %v5938 = vpack.c.b16 %v5114, %v5110
        %v5939 = vpack.c.b16 %v5115, %v5111
        %v5940 = vpack.c.b16 %v5120, %v5116
        %v5941 = vpack.c.b16 %v5121, %v5117
        %v5942 = vpack.c.b16 %v5122, %v5118
        %v5943 = vpack.c.b16 %v5123, %v5119
        %v5944 = vpack.c.b16 %v5128, %v5124
        %v5945 = vpack.c.b16 %v5129, %v5125
        %v5946 = vpack.c.b16 %v5130, %v5126
        %v5947 = vpack.c.b16 %v5131, %v5127
        %v5948 = vpack.c.b16 %v5136, %v5132
        %v5949 = vpack.c.b16 %v5137, %v5133
        %v5950 = vpack.c.b16 %v5138, %v5134
        %v5951 = vpack.c.b16 %v5139, %v5135
        %v5952 = vpack.c.b16 %v5144, %v5140
        %v5953 = vpack.c.b16 %v5145, %v5141
        %v5954 = vpack.c.b16 %v5146, %v5142
        %v5955 = vpack.c.b16 %v5147, %v5143
        %v5956 = vpack.c.b16 %v5152, %v5148
        %v5957 = vpack.c.b16 %v5153, %v5149
        %v5958 = vpack.c.b16 %v5154, %v5150
        %v5959 = vpack.c.b16 %v5155, %v5151
        %v5960 = vpack.c.b16 %v5160, %v5156
        %v5961 = vpack.c.b16 %v5161, %v5157
        %v5962 = vpack.c.b16 %v5162, %v5158
        %v5963 = vpack.c.b16 %v5163, %v5159
        %v5964 = vpack.c.b16 %v5168, %v5164
        %v5965 = vpack.c.b16 %v5169, %v5165
        %v5966 = vpack.c.b16 %v5170, %v5166
        %v5967 = vpack.c.b16 %v5171, %v5167
        %v5968 = vpack.c.b16 %v5176, %v5172
        %v5969 = vpack.c.b16 %v5177, %v5173
        %v5970 = vpack.c.b16 %v5178, %v5174
        %v5971 = vpack.c.b16 %v5179, %v5175
        %v5972 = vpack.c.b16 %v5184, %v5180
        %v5973 = vpack.c.b16 %v5185, %v5181
        %v5974 = vpack.c.b16 %v5186, %v5182
        %v5975 = vpack.c.b16 %v5187, %v5183
        %v5976 = vpack.c.b16 %v5192, %v5188
        %v5977 = vpack.c.b16 %v5193, %v5189
        %v5978 = vpack.c.b16 %v5194, %v5190
        %v5979 = vpack.c.b16 %v5195, %v5191
        %vm6764 = vcmask 523264
        %v6766 = vsel %vm6764, %v2819, 0
        %6768 = vmatprep.subr.bf16.mxu0 %v5225
        %6769 = vmatpush1.bf16.msra.mxu0 %v5224
        %6770 = vmatprep.subr.bf16.mxu0 %v5221
        %6771 = vmatpush1.bf16.msra.mxu0 %v5220
        %6772 = vmatprep.subr.bf16.mxu0 %v5217
        %6773 = vmatpush1.bf16.msra.mxu0 %v5216
        %6774 = vmatprep.subr.bf16.mxu0 %v5213
        %6775 = vmatpush1.bf16.msra.mxu0 %v5212
        %6776 = vmatprep.subr.bf16.mxu0 %v5209
        %6777 = vmatpush1.bf16.msra.mxu0 %v5208
        %6778 = vmatprep.subr.bf16.mxu0 %v5205
        %6779 = vmatpush1.bf16.msra.mxu0 %v5204
        %6780 = vmatprep.subr.bf16.mxu0 %v5201
        %6781 = vmatpush1.bf16.msra.mxu0 %v5200
        %6782 = vmatprep.subr.bf16.mxu0 %v5197
        %6783 = vmatpush1.bf16.msra.mxu0 %v5196
        %6784 = vmatprep.subr.bf16.mxu0 %v5257
        %6785 = vmatpush2.bf16.msra.mxu0 %v5256
        %6786 = vmatprep.subr.bf16.mxu0 %v5253
        %6787 = vmatpush2.bf16.msra.mxu0 %v5252
        %6788 = vmatprep.subr.bf16.mxu0 %v5249
        %6789 = vmatpush2.bf16.msra.mxu0 %v5248
        %6790 = vmatprep.subr.bf16.mxu0 %v5245
        %6791 = vmatpush2.bf16.msra.mxu0 %v5244
        %6792 = vmatprep.subr.bf16.mxu0 %v5241
        %6793 = vmatpush2.bf16.msra.mxu0 %v5240
        %6794 = vmatprep.subr.bf16.mxu0 %v5237
        %6795 = vmatpush2.bf16.msra.mxu0 %v5236
        %6796 = vmatprep.subr.bf16.mxu0 %v5233
        %6797 = vmatpush2.bf16.msra.mxu0 %v5232
        %6798 = vmatprep.subr.bf16.mxu0 %v5229
        %6799 = vmatpush2.bf16.msra.mxu0 %v5228
        %6800 = vmatprep.mubr.bf16.mxu0 %v2696
        %6801 = vmatmul.mubr.bf16.gmra.mxu0 %v2682
        %v6802 = vpop.f32.mrf.mxu0
        %v6803 = vadd.f32 %v2638, %v6802
        %v6804 = vpop.f32.mrf.mxu0
        %v6805 = vadd.f32 %v2642, %v6804
        %v6806 = vpop.f32.mrf.mxu0
        %v6807 = vpop.f32.mrf.mxu0
        %6808 = vdwg.mxu0
        %6809 = vmatprep.subr.bf16.mxu0 %v5289
        %6810 = vmatpush1.bf16.msra.mxu0 %v5288
        %6811 = vmatprep.subr.bf16.mxu0 %v5285
        %6812 = vmatpush1.bf16.msra.mxu0 %v5284
        %6813 = vmatprep.subr.bf16.mxu0 %v5281
        %6814 = vmatpush1.bf16.msra.mxu0 %v5280
        %6815 = vmatprep.subr.bf16.mxu0 %v5277
        %6816 = vmatpush1.bf16.msra.mxu0 %v5276
        %6817 = vmatprep.subr.bf16.mxu0 %v5273
        %6818 = vmatpush1.bf16.msra.mxu0 %v5272
        %6819 = vmatprep.subr.bf16.mxu0 %v5269
        %6820 = vmatpush1.bf16.msra.mxu0 %v5268
        %6821 = vmatprep.subr.bf16.mxu0 %v5265
        %6822 = vmatpush1.bf16.msra.mxu0 %v5264
        %6823 = vmatprep.subr.bf16.mxu0 %v5261
        %6824 = vmatpush1.bf16.msra.mxu0 %v5260
        %6825 = vmatprep.subr.bf16.mxu0 %v5321
        %6826 = vmatpush2.bf16.msra.mxu0 %v5320
        %6827 = vmatprep.subr.bf16.mxu0 %v5317
        %6828 = vmatpush2.bf16.msra.mxu0 %v5316
        %6829 = vmatprep.subr.bf16.mxu0 %v5313
        %6830 = vmatpush2.bf16.msra.mxu0 %v5312
        %6831 = vmatprep.subr.bf16.mxu0 %v5309
        %6832 = vmatpush2.bf16.msra.mxu0 %v5308
        %6833 = vmatprep.subr.bf16.mxu0 %v5305
        %6834 = vmatpush2.bf16.msra.mxu0 %v5304
        %6835 = vmatprep.subr.bf16.mxu0 %v5301
        %6836 = vmatpush2.bf16.msra.mxu0 %v5300
        %6837 = vmatprep.subr.bf16.mxu0 %v5297
        %6838 = vmatpush2.bf16.msra.mxu0 %v5296
        %6839 = vmatprep.subr.bf16.mxu0 %v5293
        %6840 = vmatpush2.bf16.msra.mxu0 %v5292
        %6841 = vmatprep.mubr.bf16.mxu0 %v2706
        %6842 = vmatmul.mubr.bf16.gmra.mxu0 %v2704
        %v6843 = vpop.f32.mrf.mxu0
        %v6844 = vadd.f32 %v6803, %v6843
        %v6845 = vpop.f32.mrf.mxu0
        %v6846 = vadd.f32 %v6805, %v6845
        %v6847 = vpop.f32.mrf.mxu0
        %v6848 = vpop.f32.mrf.mxu0
        %6849 = vdwg.mxu0
        %6850 = vmatprep.subr.bf16.mxu0 %v5353
        %6851 = vmatpush1.bf16.msra.mxu0 %v5352
        %6852 = vmatprep.subr.bf16.mxu0 %v5349
        %6853 = vmatpush1.bf16.msra.mxu0 %v5348
        %6854 = vmatprep.subr.bf16.mxu0 %v5345
        %6855 = vmatpush1.bf16.msra.mxu0 %v5344
        %6856 = vmatprep.subr.bf16.mxu0 %v5341
        %6857 = vmatpush1.bf16.msra.mxu0 %v5340
        %6858 = vmatprep.subr.bf16.mxu0 %v5337
        %6859 = vmatpush1.bf16.msra.mxu0 %v5336
        %6860 = vmatprep.subr.bf16.mxu0 %v5333
        %6861 = vmatpush1.bf16.msra.mxu0 %v5332
        %6862 = vmatprep.subr.bf16.mxu0 %v5329
        %6863 = vmatpush1.bf16.msra.mxu0 %v5328
        %6864 = vmatprep.subr.bf16.mxu0 %v5325
        %6865 = vmatpush1.bf16.msra.mxu0 %v5324
        %6866 = vmatprep.subr.bf16.mxu0 %v5385
        %6867 = vmatpush2.bf16.msra.mxu0 %v5384
        %6868 = vmatprep.subr.bf16.mxu0 %v5381
        %6869 = vmatpush2.bf16.msra.mxu0 %v5380
        %6870 = vmatprep.subr.bf16.mxu0 %v5377
        %6871 = vmatpush2.bf16.msra.mxu0 %v5376
        %6872 = vmatprep.subr.bf16.mxu0 %v5373
        %6873 = vmatpush2.bf16.msra.mxu0 %v5372
        %6874 = vmatprep.subr.bf16.mxu0 %v5369
        %6875 = vmatpush2.bf16.msra.mxu0 %v5368
        %6876 = vmatprep.subr.bf16.mxu0 %v5365
        %6877 = vmatpush2.bf16.msra.mxu0 %v5364
        %6878 = vmatprep.subr.bf16.mxu0 %v5361
        %6879 = vmatpush2.bf16.msra.mxu0 %v5360
        %6880 = vmatprep.subr.bf16.mxu0 %v5357
        %6881 = vmatpush2.bf16.msra.mxu0 %v5356
        %6882 = vmatprep.mubr.bf16.mxu0 %v2703
        %6883 = vmatmul.mubr.bf16.gmra.mxu0 %v2689
        %v6884 = vpop.f32.mrf.mxu0
        %v6885 = vadd.f32 %v6844, %v6884
        %v6886 = vpop.f32.mrf.mxu0
        %v6887 = vadd.f32 %v6846, %v6886
        %v6888 = vpop.f32.mrf.mxu0
        %v6889 = vpop.f32.mrf.mxu0
        %6890 = vdwg.mxu0
        %6891 = vmatprep.subr.bf16.mxu0 %v5417
        %6892 = vmatpush1.bf16.msra.mxu0 %v5416
        %6893 = vmatprep.subr.bf16.mxu0 %v5413
        %6894 = vmatpush1.bf16.msra.mxu0 %v5412
        %6895 = vmatprep.subr.bf16.mxu0 %v5409
        %6896 = vmatpush1.bf16.msra.mxu0 %v5408
        %6897 = vmatprep.subr.bf16.mxu0 %v5405
        %6898 = vmatpush1.bf16.msra.mxu0 %v5404
        %6899 = vmatprep.subr.bf16.mxu0 %v5401
        %6900 = vmatpush1.bf16.msra.mxu0 %v5400
        %6901 = vmatprep.subr.bf16.mxu0 %v5397
        %6902 = vmatpush1.bf16.msra.mxu0 %v5396
        %6903 = vmatprep.subr.bf16.mxu0 %v5393
        %6904 = vmatpush1.bf16.msra.mxu0 %v5392
        %6905 = vmatprep.subr.bf16.mxu0 %v5389
        %6906 = vmatpush1.bf16.msra.mxu0 %v5388
        %6907 = vmatprep.subr.bf16.mxu0 %v5449
        %6908 = vmatpush2.bf16.msra.mxu0 %v5448
        %6909 = vmatprep.subr.bf16.mxu0 %v5445
        %6910 = vmatpush2.bf16.msra.mxu0 %v5444
        %6911 = vmatprep.subr.bf16.mxu0 %v5441
        %6912 = vmatpush2.bf16.msra.mxu0 %v5440
        %6913 = vmatprep.subr.bf16.mxu0 %v5437
        %6914 = vmatpush2.bf16.msra.mxu0 %v5436
        %6915 = vmatprep.subr.bf16.mxu0 %v5433
        %6916 = vmatpush2.bf16.msra.mxu0 %v5432
        %6917 = vmatprep.subr.bf16.mxu0 %v5429
        %6918 = vmatpush2.bf16.msra.mxu0 %v5428
        %6919 = vmatprep.subr.bf16.mxu0 %v5425
        %6920 = vmatpush2.bf16.msra.mxu0 %v5424
        %6921 = vmatprep.subr.bf16.mxu0 %v5421
        %6922 = vmatpush2.bf16.msra.mxu0 %v5420
        %6923 = vmatprep.mubr.bf16.mxu0 %v2707
        %6924 = vmatmul.mubr.bf16.gmra.mxu0 %v2705
        %v6925 = vpop.f32.mrf.mxu0
        %v6926 = vadd.f32 %v6885, %v6925
        %v6927 = vpop.f32.mrf.mxu0
        %v6928 = vadd.f32 %v6887, %v6927
        %v6929 = vpop.f32.mrf.mxu0
        %v6930 = vpop.f32.mrf.mxu0
        %6931 = vdwg.mxu0
        %6932 = vmatprep.subr.bf16.mxu0 %v5481
        %6933 = vmatpush1.bf16.msra.mxu0 %v5480
        %6934 = vmatprep.subr.bf16.mxu0 %v5477
        %6935 = vmatpush1.bf16.msra.mxu0 %v5476
        %6936 = vmatprep.subr.bf16.mxu0 %v5473
        %6937 = vmatpush1.bf16.msra.mxu0 %v5472
        %6938 = vmatprep.subr.bf16.mxu0 %v5469
        %6939 = vmatpush1.bf16.msra.mxu0 %v5468
        %6940 = vmatprep.subr.bf16.mxu0 %v5465
        %6941 = vmatpush1.bf16.msra.mxu0 %v5464
        %6942 = vmatprep.subr.bf16.mxu0 %v5461
        %6943 = vmatpush1.bf16.msra.mxu0 %v5460
        %6944 = vmatprep.subr.bf16.mxu0 %v5457
        %6945 = vmatpush1.bf16.msra.mxu0 %v5456
        %6946 = vmatprep.subr.bf16.mxu0 %v5453
        %6947 = vmatpush1.bf16.msra.mxu0 %v5452
        %6948 = vmatprep.subr.bf16.mxu0 %v5513
        %6949 = vmatpush2.bf16.msra.mxu0 %v5512
        %6950 = vmatprep.subr.bf16.mxu0 %v5509
        %6951 = vmatpush2.bf16.msra.mxu0 %v5508
        %6952 = vmatprep.subr.bf16.mxu0 %v5505
        %6953 = vmatpush2.bf16.msra.mxu0 %v5504
        %6954 = vmatprep.subr.bf16.mxu0 %v5501
        %6955 = vmatpush2.bf16.msra.mxu0 %v5500
        %6956 = vmatprep.subr.bf16.mxu0 %v5497
        %6957 = vmatpush2.bf16.msra.mxu0 %v5496
        %6958 = vmatprep.subr.bf16.mxu0 %v5493
        %6959 = vmatpush2.bf16.msra.mxu0 %v5492
        %6960 = vmatprep.subr.bf16.mxu0 %v5489
        %6961 = vmatpush2.bf16.msra.mxu0 %v5488
        %6962 = vmatprep.subr.bf16.mxu0 %v5485
        %6963 = vmatpush2.bf16.msra.mxu0 %v5484
        %6964 = vmatprep.mubr.bf16.mxu0 %v2745
        %6965 = vmatmul.mubr.bf16.gmra.mxu0 %v2731
        %v6966 = vpop.f32.mrf.mxu0
        %v6967 = vadd.f32 %v6926, %v6966
        %v6968 = vpop.f32.mrf.mxu0
        %v6969 = vadd.f32 %v6928, %v6968
        %v6970 = vpop.f32.mrf.mxu0
        %v6971 = vpop.f32.mrf.mxu0
        %6972 = vdwg.mxu0
        %6973 = vmatprep.subr.bf16.mxu0 %v5545
        %6974 = vmatpush1.bf16.msra.mxu0 %v5544
        %6975 = vmatprep.subr.bf16.mxu0 %v5541
        %6976 = vmatpush1.bf16.msra.mxu0 %v5540
        %6977 = vmatprep.subr.bf16.mxu0 %v5537
        %6978 = vmatpush1.bf16.msra.mxu0 %v5536
        %6979 = vmatprep.subr.bf16.mxu0 %v5533
        %6980 = vmatpush1.bf16.msra.mxu0 %v5532
        %6981 = vmatprep.subr.bf16.mxu0 %v5529
        %6982 = vmatpush1.bf16.msra.mxu0 %v5528
        %6983 = vmatprep.subr.bf16.mxu0 %v5525
        %6984 = vmatpush1.bf16.msra.mxu0 %v5524
        %6985 = vmatprep.subr.bf16.mxu0 %v5521
        %6986 = vmatpush1.bf16.msra.mxu0 %v5520
        %6987 = vmatprep.subr.bf16.mxu0 %v5517
        %6988 = vmatpush1.bf16.msra.mxu0 %v5516
        %6989 = vmatprep.subr.bf16.mxu0 %v5577
        %6990 = vmatpush2.bf16.msra.mxu0 %v5576
        %6991 = vmatprep.subr.bf16.mxu0 %v5573
        %6992 = vmatpush2.bf16.msra.mxu0 %v5572
        %6993 = vmatprep.subr.bf16.mxu0 %v5569
        %6994 = vmatpush2.bf16.msra.mxu0 %v5568
        %6995 = vmatprep.subr.bf16.mxu0 %v5565
        %6996 = vmatpush2.bf16.msra.mxu0 %v5564
        %6997 = vmatprep.subr.bf16.mxu0 %v5561
        %6998 = vmatpush2.bf16.msra.mxu0 %v5560
        %6999 = vmatprep.subr.bf16.mxu0 %v5557
        %7000 = vmatpush2.bf16.msra.mxu0 %v5556
        %7001 = vmatprep.subr.bf16.mxu0 %v5553
        %7002 = vmatpush2.bf16.msra.mxu0 %v5552
        %7003 = vmatprep.subr.bf16.mxu0 %v5549
        %7004 = vmatpush2.bf16.msra.mxu0 %v5548
        %7005 = vmatprep.mubr.bf16.mxu0 %v2755
        %7006 = vmatmul.mubr.bf16.gmra.mxu0 %v2753
        %v7007 = vpop.f32.mrf.mxu0
        %v7008 = vadd.f32 %v6967, %v7007
        %v7009 = vpop.f32.mrf.mxu0
        %v7010 = vadd.f32 %v6969, %v7009
        %v7011 = vpop.f32.mrf.mxu0
        %v7012 = vpop.f32.mrf.mxu0
        %7013 = vdwg.mxu0
        %7014 = vmatprep.subr.bf16.mxu0 %v5609
        %7015 = vmatpush1.bf16.msra.mxu0 %v5608
        %7016 = vmatprep.subr.bf16.mxu0 %v5605
        %7017 = vmatpush1.bf16.msra.mxu0 %v5604
        %7018 = vmatprep.subr.bf16.mxu0 %v5601
        %7019 = vmatpush1.bf16.msra.mxu0 %v5600
        %7020 = vmatprep.subr.bf16.mxu0 %v5597
        %7021 = vmatpush1.bf16.msra.mxu0 %v5596
        %7022 = vmatprep.subr.bf16.mxu0 %v5593
        %7023 = vmatpush1.bf16.msra.mxu0 %v5592
        %7024 = vmatprep.subr.bf16.mxu0 %v5589
        %7025 = vmatpush1.bf16.msra.mxu0 %v5588
        %7026 = vmatprep.subr.bf16.mxu0 %v5585
        %7027 = vmatpush1.bf16.msra.mxu0 %v5584
        %7028 = vmatprep.subr.bf16.mxu0 %v5581
        %7029 = vmatpush1.bf16.msra.mxu0 %v5580
        %7030 = vmatprep.subr.bf16.mxu0 %v5641
        %7031 = vmatpush2.bf16.msra.mxu0 %v5640
        %7032 = vmatprep.subr.bf16.mxu0 %v5637
        %7033 = vmatpush2.bf16.msra.mxu0 %v5636
        %7034 = vmatprep.subr.bf16.mxu0 %v5633
        %7035 = vmatpush2.bf16.msra.mxu0 %v5632
        %7036 = vmatprep.subr.bf16.mxu0 %v5629
        %7037 = vmatpush2.bf16.msra.mxu0 %v5628
        %7038 = vmatprep.subr.bf16.mxu0 %v5625
        %7039 = vmatpush2.bf16.msra.mxu0 %v5624
        %7040 = vmatprep.subr.bf16.mxu0 %v5621
        %7041 = vmatpush2.bf16.msra.mxu0 %v5620
        %7042 = vmatprep.subr.bf16.mxu0 %v5617
        %7043 = vmatpush2.bf16.msra.mxu0 %v5616
        %7044 = vmatprep.subr.bf16.mxu0 %v5613
        %7045 = vmatpush2.bf16.msra.mxu0 %v5612
        %7046 = vmatprep.mubr.bf16.mxu0 %v2752
        %7047 = vmatmul.mubr.bf16.gmra.mxu0 %v2738
        %v7048 = vpop.f32.mrf.mxu0
        %v7049 = vadd.f32 %v7008, %v7048
        %v7050 = vpop.f32.mrf.mxu0
        %v7051 = vadd.f32 %v7010, %v7050
        %v7052 = vpop.f32.mrf.mxu0
        %v7053 = vpop.f32.mrf.mxu0
        %7054 = vdwg.mxu0
        %7055 = vmatprep.subr.bf16.mxu0 %v5673
        %7056 = vmatpush1.bf16.msra.mxu0 %v5672
        %7057 = vmatprep.subr.bf16.mxu0 %v5669
        %7058 = vmatpush1.bf16.msra.mxu0 %v5668
        %7059 = vmatprep.subr.bf16.mxu0 %v5665
        %7060 = vmatpush1.bf16.msra.mxu0 %v5664
        %7061 = vmatprep.subr.bf16.mxu0 %v5661
        %7062 = vmatpush1.bf16.msra.mxu0 %v5660
        %7063 = vmatprep.subr.bf16.mxu0 %v5657
        %7064 = vmatpush1.bf16.msra.mxu0 %v5656
        %7065 = vmatprep.subr.bf16.mxu0 %v5653
        %7066 = vmatpush1.bf16.msra.mxu0 %v5652
        %7067 = vmatprep.subr.bf16.mxu0 %v5649
        %7068 = vmatpush1.bf16.msra.mxu0 %v5648
        %7069 = vmatprep.subr.bf16.mxu0 %v5645
        %7070 = vmatpush1.bf16.msra.mxu0 %v5644
        %7071 = vmatprep.subr.bf16.mxu0 %v5705
        %7072 = vmatpush2.bf16.msra.mxu0 %v5704
        %7073 = vmatprep.subr.bf16.mxu0 %v5701
        %7074 = vmatpush2.bf16.msra.mxu0 %v5700
        %7075 = vmatprep.subr.bf16.mxu0 %v5697
        %7076 = vmatpush2.bf16.msra.mxu0 %v5696
        %7077 = vmatprep.subr.bf16.mxu0 %v5693
        %7078 = vmatpush2.bf16.msra.mxu0 %v5692
        %7079 = vmatprep.subr.bf16.mxu0 %v5689
        %7080 = vmatpush2.bf16.msra.mxu0 %v5688
        %7081 = vmatprep.subr.bf16.mxu0 %v5685
        %7082 = vmatpush2.bf16.msra.mxu0 %v5684
        %7083 = vmatprep.subr.bf16.mxu0 %v5681
        %7084 = vmatpush2.bf16.msra.mxu0 %v5680
        %7085 = vmatprep.subr.bf16.mxu0 %v5677
        %7086 = vmatpush2.bf16.msra.mxu0 %v5676
        %7087 = vmatprep.mubr.bf16.mxu0 %v2756
        %7088 = vmatmul.mubr.bf16.gmra.mxu0 %v2754
        %v7089 = vpop.f32.mrf.mxu0
        %v7090 = vadd.f32 %v7049, %v7089
        %v7091 = vpop.f32.mrf.mxu0
        %v7092 = vadd.f32 %v7051, %v7091
        %v7093 = vpop.f32.mrf.mxu0
        %v7094 = vpop.f32.mrf.mxu0
        %7095 = vdwg.mxu0
        %7096 = vmatprep.subr.bf16.mxu0 %v5737
        %7097 = vmatpush1.bf16.msra.mxu0 %v5736
        %7098 = vmatprep.subr.bf16.mxu0 %v5733
        %7099 = vmatpush1.bf16.msra.mxu0 %v5732
        %7100 = vmatprep.subr.bf16.mxu0 %v5729
        %7101 = vmatpush1.bf16.msra.mxu0 %v5728
        %7102 = vmatprep.subr.bf16.mxu0 %v5725
        %7103 = vmatpush1.bf16.msra.mxu0 %v5724
        %7104 = vmatprep.subr.bf16.mxu0 %v5721
        %7105 = vmatpush1.bf16.msra.mxu0 %v5720
        %7106 = vmatprep.subr.bf16.mxu0 %v5717
        %7107 = vmatpush1.bf16.msra.mxu0 %v5716
        %7108 = vmatprep.subr.bf16.mxu0 %v5713
        %7109 = vmatpush1.bf16.msra.mxu0 %v5712
        %7110 = vmatprep.subr.bf16.mxu0 %v5709
        %7111 = vmatpush1.bf16.msra.mxu0 %v5708
        %7112 = vmatprep.subr.bf16.mxu0 %v5769
        %7113 = vmatpush2.bf16.msra.mxu0 %v5768
        %7114 = vmatprep.subr.bf16.mxu0 %v5765
        %7115 = vmatpush2.bf16.msra.mxu0 %v5764
        %7116 = vmatprep.subr.bf16.mxu0 %v5761
        %7117 = vmatpush2.bf16.msra.mxu0 %v5760
        %7118 = vmatprep.subr.bf16.mxu0 %v5757
        %7119 = vmatpush2.bf16.msra.mxu0 %v5756
        %7120 = vmatprep.subr.bf16.mxu0 %v5753
        %7121 = vmatpush2.bf16.msra.mxu0 %v5752
        %7122 = vmatprep.subr.bf16.mxu0 %v5749
        %7123 = vmatpush2.bf16.msra.mxu0 %v5748
        %7124 = vmatprep.subr.bf16.mxu0 %v5745
        %7125 = vmatpush2.bf16.msra.mxu0 %v5744
        %7126 = vmatprep.subr.bf16.mxu0 %v5741
        %7127 = vmatpush2.bf16.msra.mxu0 %v5740
        %7128 = vmatprep.mubr.bf16.mxu0 %v2794
        %7129 = vmatmul.mubr.bf16.gmra.mxu0 %v2780
        %v7130 = vpop.f32.mrf.mxu0
        %v7131 = vadd.f32 %v7090, %v7130
        %v7132 = vpop.f32.mrf.mxu0
        %v7133 = vadd.f32 %v7092, %v7132
        %v7134 = vpop.f32.mrf.mxu0
        %v7135 = vpop.f32.mrf.mxu0
        %7136 = vdwg.mxu0
        %7137 = vmatprep.subr.bf16.mxu0 %v5801
        %7138 = vmatpush1.bf16.msra.mxu0 %v5800
        %7139 = vmatprep.subr.bf16.mxu0 %v5797
        %7140 = vmatpush1.bf16.msra.mxu0 %v5796
        %7141 = vmatprep.subr.bf16.mxu0 %v5793
        %7142 = vmatpush1.bf16.msra.mxu0 %v5792
        %7143 = vmatprep.subr.bf16.mxu0 %v5789
        %7144 = vmatpush1.bf16.msra.mxu0 %v5788
        %7145 = vmatprep.subr.bf16.mxu0 %v5785
        %7146 = vmatpush1.bf16.msra.mxu0 %v5784
        %7147 = vmatprep.subr.bf16.mxu0 %v5781
        %7148 = vmatpush1.bf16.msra.mxu0 %v5780
        %7149 = vmatprep.subr.bf16.mxu0 %v5777
        %7150 = vmatpush1.bf16.msra.mxu0 %v5776
        %7151 = vmatprep.subr.bf16.mxu0 %v5773
        %7152 = vmatpush1.bf16.msra.mxu0 %v5772
        %7153 = vmatprep.subr.bf16.mxu0 %v5833
        %7154 = vmatpush2.bf16.msra.mxu0 %v5832
        %7155 = vmatprep.subr.bf16.mxu0 %v5829
        %7156 = vmatpush2.bf16.msra.mxu0 %v5828
        %7157 = vmatprep.subr.bf16.mxu0 %v5825
        %7158 = vmatpush2.bf16.msra.mxu0 %v5824
        %7159 = vmatprep.subr.bf16.mxu0 %v5821
        %7160 = vmatpush2.bf16.msra.mxu0 %v5820
        %7161 = vmatprep.subr.bf16.mxu0 %v5817
        %7162 = vmatpush2.bf16.msra.mxu0 %v5816
        %7163 = vmatprep.subr.bf16.mxu0 %v5813
        %7164 = vmatpush2.bf16.msra.mxu0 %v5812
        %7165 = vmatprep.subr.bf16.mxu0 %v5809
        %7166 = vmatpush2.bf16.msra.mxu0 %v5808
        %7167 = vmatprep.subr.bf16.mxu0 %v5805
        %7168 = vmatpush2.bf16.msra.mxu0 %v5804
        %7169 = vmatprep.mubr.bf16.mxu0 %v2804
        %7170 = vmatmul.mubr.bf16.gmra.mxu0 %v2802
        %v7171 = vpop.f32.mrf.mxu0
        %v7172 = vadd.f32 %v7131, %v7171
        %v7173 = vpop.f32.mrf.mxu0
        %v7174 = vadd.f32 %v7133, %v7173
        %v7175 = vpop.f32.mrf.mxu0
        %v7176 = vpop.f32.mrf.mxu0
        %7177 = vdwg.mxu0
        %7178 = vmatprep.subr.bf16.mxu0 %v5865
        %7179 = vmatpush1.bf16.msra.mxu0 %v5864
        %7180 = vmatprep.subr.bf16.mxu0 %v5861
        %7181 = vmatpush1.bf16.msra.mxu0 %v5860
        %7182 = vmatprep.subr.bf16.mxu0 %v5857
        %7183 = vmatpush1.bf16.msra.mxu0 %v5856
        %7184 = vmatprep.subr.bf16.mxu0 %v5853
        %7185 = vmatpush1.bf16.msra.mxu0 %v5852
        %7186 = vmatprep.subr.bf16.mxu0 %v5849
        %7187 = vmatpush1.bf16.msra.mxu0 %v5848
        %7188 = vmatprep.subr.bf16.mxu0 %v5845
        %7189 = vmatpush1.bf16.msra.mxu0 %v5844
        %7190 = vmatprep.subr.bf16.mxu0 %v5841
        %7191 = vmatpush1.bf16.msra.mxu0 %v5840
        %7192 = vmatprep.subr.bf16.mxu0 %v5837
        %7193 = vmatpush1.bf16.msra.mxu0 %v5836
        %7194 = vmatprep.subr.bf16.mxu0 %v5897
        %7195 = vmatpush2.bf16.msra.mxu0 %v5896
        %7196 = vmatprep.subr.bf16.mxu0 %v5893
        %7197 = vmatpush2.bf16.msra.mxu0 %v5892
        %7198 = vmatprep.subr.bf16.mxu0 %v5889
        %7199 = vmatpush2.bf16.msra.mxu0 %v5888
        %7200 = vmatprep.subr.bf16.mxu0 %v5885
        %7201 = vmatpush2.bf16.msra.mxu0 %v5884
        %7202 = vmatprep.subr.bf16.mxu0 %v5881
        %7203 = vmatpush2.bf16.msra.mxu0 %v5880
        %7204 = vmatprep.subr.bf16.mxu0 %v5877
        %7205 = vmatpush2.bf16.msra.mxu0 %v5876
        %7206 = vmatprep.subr.bf16.mxu0 %v5873
        %7207 = vmatpush2.bf16.msra.mxu0 %v5872
        %7208 = vmatprep.subr.bf16.mxu0 %v5869
        %7209 = vmatpush2.bf16.msra.mxu0 %v5868
        %7210 = vmatprep.mubr.bf16.mxu0 %v2801
        %7211 = vmatmul.mubr.bf16.gmra.mxu0 %v2787
        %v7212 = vpop.f32.mrf.mxu0
        %v7213 = vadd.f32 %v7172, %v7212
        %v7214 = vpop.f32.mrf.mxu0
        %v7215 = vadd.f32 %v7174, %v7214
        %v7216 = vpop.f32.mrf.mxu0
        %v7217 = vpop.f32.mrf.mxu0
        %7218 = vdwg.mxu0
        %7219 = vmatprep.subr.bf16.mxu0 %v5929
        %7220 = vmatpush1.bf16.msra.mxu0 %v5928
        %7221 = vmatprep.subr.bf16.mxu0 %v5925
        %7222 = vmatpush1.bf16.msra.mxu0 %v5924
        %7223 = vmatprep.subr.bf16.mxu0 %v5921
        %7224 = vmatpush1.bf16.msra.mxu0 %v5920
        %7225 = vmatprep.subr.bf16.mxu0 %v5917
        %7226 = vmatpush1.bf16.msra.mxu0 %v5916
        %7227 = vmatprep.subr.bf16.mxu0 %v5913
        %7228 = vmatpush1.bf16.msra.mxu0 %v5912
        %7229 = vmatprep.subr.bf16.mxu0 %v5909
        %7230 = vmatpush1.bf16.msra.mxu0 %v5908
        %7231 = vmatprep.subr.bf16.mxu0 %v5905
        %7232 = vmatpush1.bf16.msra.mxu0 %v5904
        %7233 = vmatprep.subr.bf16.mxu0 %v5901
        %7234 = vmatpush1.bf16.msra.mxu0 %v5900
        %7235 = vmatprep.subr.bf16.mxu0 %v5961
        %7236 = vmatpush2.bf16.msra.mxu0 %v5960
        %7237 = vmatprep.subr.bf16.mxu0 %v5957
        %7238 = vmatpush2.bf16.msra.mxu0 %v5956
        %7239 = vmatprep.subr.bf16.mxu0 %v5953
        %7240 = vmatpush2.bf16.msra.mxu0 %v5952
        %7241 = vmatprep.subr.bf16.mxu0 %v5949
        %7242 = vmatpush2.bf16.msra.mxu0 %v5948
        %7243 = vmatprep.subr.bf16.mxu0 %v5945
        %7244 = vmatpush2.bf16.msra.mxu0 %v5944
        %7245 = vmatprep.subr.bf16.mxu0 %v5941
        %7246 = vmatpush2.bf16.msra.mxu0 %v5940
        %7247 = vmatprep.subr.bf16.mxu0 %v5937
        %7248 = vmatpush2.bf16.msra.mxu0 %v5936
        %7249 = vmatprep.subr.bf16.mxu0 %v5933
        %7250 = vmatpush2.bf16.msra.mxu0 %v5932
        %7251 = vmatprep.mubr.bf16.mxu0 %v2805
        %7252 = vmatmul.mubr.bf16.gmra.mxu0 %v2803
        %v7253 = vpop.f32.mrf.mxu0
        %v7254 = vadd.f32 %v7213, %v7253
        %v7255 = vpop.f32.mrf.mxu0
        %v7256 = vadd.f32 %v7215, %v7255
        %v7257 = vpop.f32.mrf.mxu0
        %v7258 = vpop.f32.mrf.mxu0
        %7259 = vdwg.mxu0
        %7260 = vmatprep.subr.bf16.mxu0 0
        %7261 = vmatpush1.bf16.msra.mxu0 0
        %7262 = vmatprep.subr.bf16.mxu0 0
        %7263 = vmatpush1.bf16.msra.mxu0 0
        %7264 = vmatprep.subr.bf16.mxu0 0
        %7265 = vmatpush1.bf16.msra.mxu0 0
        %7266 = vmatprep.subr.bf16.mxu0 0
        %7267 = vmatpush1.bf16.msra.mxu0 0
        %7268 = vmatprep.subr.bf16.mxu0 %v5977
        %7269 = vmatpush1.bf16.msra.mxu0 %v5976
        %7270 = vmatprep.subr.bf16.mxu0 %v5973
        %7271 = vmatpush1.bf16.msra.mxu0 %v5972
        %7272 = vmatprep.subr.bf16.mxu0 %v5969
        %7273 = vmatpush1.bf16.msra.mxu0 %v5968
        %7274 = vmatprep.subr.bf16.mxu0 %v5965
        %7275 = vmatpush1.bf16.msra.mxu0 %v5964
        %7276 = vmatprep.subr.bf16.mxu0 0
        %7277 = vmatpush2.bf16.msra.mxu0 0
        %7278 = vmatprep.subr.bf16.mxu0 0
        %7279 = vmatpush2.bf16.msra.mxu0 0
        %7280 = vmatprep.subr.bf16.mxu0 0
        %7281 = vmatpush2.bf16.msra.mxu0 0
        %7282 = vmatprep.subr.bf16.mxu0 0
        %7283 = vmatpush2.bf16.msra.mxu0 0
        %7284 = vmatprep.subr.bf16.mxu0 0
        %7285 = vmatpush2.bf16.msra.mxu0 0
        %7286 = vmatprep.subr.bf16.mxu0 0
        %7287 = vmatpush2.bf16.msra.mxu0 0
        %7288 = vmatprep.subr.bf16.mxu0 0
        %7289 = vmatpush2.bf16.msra.mxu0 0
        %7290 = vmatprep.subr.bf16.mxu0 0
        %7291 = vmatpush2.bf16.msra.mxu0 0
        %7292 = vmatprep.mubr.bf16.mxu0 0
        %7293 = vmatmul.mubr.bf16.gmra.mxu0 %v6766
        %v7294 = vpop.f32.mrf.mxu0
        %v7295 = vadd.f32 %v7254, %v7294
        %v7296 = vpop.f32.mrf.mxu0
        %v7297 = vadd.f32 %v7256, %v7296
        %v7298 = vpop.f32.mrf.mxu0
        %v7299 = vpop.f32.mrf.mxu0
        %7300 = vdwg.mxu0
        %7301 = vmatprep.subr.bf16.mxu0 %v5227
        %7302 = vmatpush1.bf16.msra.mxu0 %v5226
        %7303 = vmatprep.subr.bf16.mxu0 %v5223
        %7304 = vmatpush1.bf16.msra.mxu0 %v5222
        %7305 = vmatprep.subr.bf16.mxu0 %v5219
        %7306 = vmatpush1.bf16.msra.mxu0 %v5218
        %7307 = vmatprep.subr.bf16.mxu0 %v5215
        %7308 = vmatpush1.bf16.msra.mxu0 %v5214
        %7309 = vmatprep.subr.bf16.mxu0 %v5211
        %7310 = vmatpush1.bf16.msra.mxu0 %v5210
        %7311 = vmatprep.subr.bf16.mxu0 %v5207
        %7312 = vmatpush1.bf16.msra.mxu0 %v5206
        %7313 = vmatprep.subr.bf16.mxu0 %v5203
        %7314 = vmatpush1.bf16.msra.mxu0 %v5202
        %7315 = vmatprep.subr.bf16.mxu0 %v5199
        %7316 = vmatpush1.bf16.msra.mxu0 %v5198
        %7317 = vmatprep.subr.bf16.mxu0 %v5259
        %7318 = vmatpush2.bf16.msra.mxu0 %v5258
        %7319 = vmatprep.subr.bf16.mxu0 %v5255
        %7320 = vmatpush2.bf16.msra.mxu0 %v5254
        %7321 = vmatprep.subr.bf16.mxu0 %v5251
        %7322 = vmatpush2.bf16.msra.mxu0 %v5250
        %7323 = vmatprep.subr.bf16.mxu0 %v5247
        %7324 = vmatpush2.bf16.msra.mxu0 %v5246
        %7325 = vmatprep.subr.bf16.mxu0 %v5243
        %7326 = vmatpush2.bf16.msra.mxu0 %v5242
        %7327 = vmatprep.subr.bf16.mxu0 %v5239
        %7328 = vmatpush2.bf16.msra.mxu0 %v5238
        %7329 = vmatprep.subr.bf16.mxu0 %v5235
        %7330 = vmatpush2.bf16.msra.mxu0 %v5234
        %7331 = vmatprep.subr.bf16.mxu0 %v5231
        %7332 = vmatpush2.bf16.msra.mxu0 %v5230
        %7333 = vmatprep.mubr.bf16.mxu0 %v2696
        %7334 = vmatmul.mubr.bf16.gmra.mxu0 %v2682
        %v7335 = vpop.f32.mrf.mxu0
        %v7336 = vadd.f32 %v2646, %v7335
        %v7337 = vpop.f32.mrf.mxu0
        %v7338 = vadd.f32 %v2650, %v7337
        %v7339 = vpop.f32.mrf.mxu0
        %v7340 = vpop.f32.mrf.mxu0
        %7341 = vdwg.mxu0
        %7342 = vmatprep.subr.bf16.mxu0 %v5291
        %7343 = vmatpush1.bf16.msra.mxu0 %v5290
        %7344 = vmatprep.subr.bf16.mxu0 %v5287
        %7345 = vmatpush1.bf16.msra.mxu0 %v5286
        %7346 = vmatprep.subr.bf16.mxu0 %v5283
        %7347 = vmatpush1.bf16.msra.mxu0 %v5282
        %7348 = vmatprep.subr.bf16.mxu0 %v5279
        %7349 = vmatpush1.bf16.msra.mxu0 %v5278
        %7350 = vmatprep.subr.bf16.mxu0 %v5275
        %7351 = vmatpush1.bf16.msra.mxu0 %v5274
        %7352 = vmatprep.subr.bf16.mxu0 %v5271
        %7353 = vmatpush1.bf16.msra.mxu0 %v5270
        %7354 = vmatprep.subr.bf16.mxu0 %v5267
        %7355 = vmatpush1.bf16.msra.mxu0 %v5266
        %7356 = vmatprep.subr.bf16.mxu0 %v5263
        %7357 = vmatpush1.bf16.msra.mxu0 %v5262
        %7358 = vmatprep.subr.bf16.mxu0 %v5323
        %7359 = vmatpush2.bf16.msra.mxu0 %v5322
        %7360 = vmatprep.subr.bf16.mxu0 %v5319
        %7361 = vmatpush2.bf16.msra.mxu0 %v5318
        %7362 = vmatprep.subr.bf16.mxu0 %v5315
        %7363 = vmatpush2.bf16.msra.mxu0 %v5314
        %7364 = vmatprep.subr.bf16.mxu0 %v5311
        %7365 = vmatpush2.bf16.msra.mxu0 %v5310
        %7366 = vmatprep.subr.bf16.mxu0 %v5307
        %7367 = vmatpush2.bf16.msra.mxu0 %v5306
        %7368 = vmatprep.subr.bf16.mxu0 %v5303
        %7369 = vmatpush2.bf16.msra.mxu0 %v5302
        %7370 = vmatprep.subr.bf16.mxu0 %v5299
        %7371 = vmatpush2.bf16.msra.mxu0 %v5298
        %7372 = vmatprep.subr.bf16.mxu0 %v5295
        %7373 = vmatpush2.bf16.msra.mxu0 %v5294
        %7374 = vmatprep.mubr.bf16.mxu0 %v2706
        %7375 = vmatmul.mubr.bf16.gmra.mxu0 %v2704
        %v7376 = vpop.f32.mrf.mxu0
        %v7377 = vadd.f32 %v7336, %v7376
        %v7378 = vpop.f32.mrf.mxu0
        %v7379 = vadd.f32 %v7338, %v7378
        %v7380 = vpop.f32.mrf.mxu0
        %v7381 = vpop.f32.mrf.mxu0
        %7382 = vdwg.mxu0
        %7383 = vmatprep.subr.bf16.mxu0 %v5355
        %7384 = vmatpush1.bf16.msra.mxu0 %v5354
        %7385 = vmatprep.subr.bf16.mxu0 %v5351
        %7386 = vmatpush1.bf16.msra.mxu0 %v5350
        %7387 = vmatprep.subr.bf16.mxu0 %v5347
        %7388 = vmatpush1.bf16.msra.mxu0 %v5346
        %7389 = vmatprep.subr.bf16.mxu0 %v5343
        %7390 = vmatpush1.bf16.msra.mxu0 %v5342
        %7391 = vmatprep.subr.bf16.mxu0 %v5339
        %7392 = vmatpush1.bf16.msra.mxu0 %v5338
        %7393 = vmatprep.subr.bf16.mxu0 %v5335
        %7394 = vmatpush1.bf16.msra.mxu0 %v5334
        %7395 = vmatprep.subr.bf16.mxu0 %v5331
        %7396 = vmatpush1.bf16.msra.mxu0 %v5330
        %7397 = vmatprep.subr.bf16.mxu0 %v5327
        %7398 = vmatpush1.bf16.msra.mxu0 %v5326
        %7399 = vmatprep.subr.bf16.mxu0 %v5387
        %7400 = vmatpush2.bf16.msra.mxu0 %v5386
        %7401 = vmatprep.subr.bf16.mxu0 %v5383
        %7402 = vmatpush2.bf16.msra.mxu0 %v5382
        %7403 = vmatprep.subr.bf16.mxu0 %v5379
        %7404 = vmatpush2.bf16.msra.mxu0 %v5378
        %7405 = vmatprep.subr.bf16.mxu0 %v5375
        %7406 = vmatpush2.bf16.msra.mxu0 %v5374
        %7407 = vmatprep.subr.bf16.mxu0 %v5371
        %7408 = vmatpush2.bf16.msra.mxu0 %v5370
        %7409 = vmatprep.subr.bf16.mxu0 %v5367
        %7410 = vmatpush2.bf16.msra.mxu0 %v5366
        %7411 = vmatprep.subr.bf16.mxu0 %v5363
        %7412 = vmatpush2.bf16.msra.mxu0 %v5362
        %7413 = vmatprep.subr.bf16.mxu0 %v5359
        %7414 = vmatpush2.bf16.msra.mxu0 %v5358
        %7415 = vmatprep.mubr.bf16.mxu0 %v2703
        %7416 = vmatmul.mubr.bf16.gmra.mxu0 %v2689
        %v7417 = vpop.f32.mrf.mxu0
        %v7418 = vadd.f32 %v7377, %v7417
        %v7419 = vpop.f32.mrf.mxu0
        %v7420 = vadd.f32 %v7379, %v7419
        %v7421 = vpop.f32.mrf.mxu0
        %v7422 = vpop.f32.mrf.mxu0
        %7423 = vdwg.mxu0
        %7424 = vmatprep.subr.bf16.mxu0 %v5419
        %7425 = vmatpush1.bf16.msra.mxu0 %v5418
        %7426 = vmatprep.subr.bf16.mxu0 %v5415
        %7427 = vmatpush1.bf16.msra.mxu0 %v5414
        %7428 = vmatprep.subr.bf16.mxu0 %v5411
        %7429 = vmatpush1.bf16.msra.mxu0 %v5410
        %7430 = vmatprep.subr.bf16.mxu0 %v5407
        %7431 = vmatpush1.bf16.msra.mxu0 %v5406
        %7432 = vmatprep.subr.bf16.mxu0 %v5403
        %7433 = vmatpush1.bf16.msra.mxu0 %v5402
        %7434 = vmatprep.subr.bf16.mxu0 %v5399
        %7435 = vmatpush1.bf16.msra.mxu0 %v5398
        %7436 = vmatprep.subr.bf16.mxu0 %v5395
        %7437 = vmatpush1.bf16.msra.mxu0 %v5394
        %7438 = vmatprep.subr.bf16.mxu0 %v5391
        %7439 = vmatpush1.bf16.msra.mxu0 %v5390
        %7440 = vmatprep.subr.bf16.mxu0 %v5451
        %7441 = vmatpush2.bf16.msra.mxu0 %v5450
        %7442 = vmatprep.subr.bf16.mxu0 %v5447
        %7443 = vmatpush2.bf16.msra.mxu0 %v5446
        %7444 = vmatprep.subr.bf16.mxu0 %v5443
        %7445 = vmatpush2.bf16.msra.mxu0 %v5442
        %7446 = vmatprep.subr.bf16.mxu0 %v5439
        %7447 = vmatpush2.bf16.msra.mxu0 %v5438
        %7448 = vmatprep.subr.bf16.mxu0 %v5435
        %7449 = vmatpush2.bf16.msra.mxu0 %v5434
        %7450 = vmatprep.subr.bf16.mxu0 %v5431
        %7451 = vmatpush2.bf16.msra.mxu0 %v5430
        %7452 = vmatprep.subr.bf16.mxu0 %v5427
        %7453 = vmatpush2.bf16.msra.mxu0 %v5426
        %7454 = vmatprep.subr.bf16.mxu0 %v5423
        %7455 = vmatpush2.bf16.msra.mxu0 %v5422
        %7456 = vmatprep.mubr.bf16.mxu0 %v2707
        %7457 = vmatmul.mubr.bf16.gmra.mxu0 %v2705
        %v7458 = vpop.f32.mrf.mxu0
        %v7459 = vadd.f32 %v7418, %v7458
        %v7460 = vpop.f32.mrf.mxu0
        %v7461 = vadd.f32 %v7420, %v7460
        %v7462 = vpop.f32.mrf.mxu0
        %v7463 = vpop.f32.mrf.mxu0
        %7464 = vdwg.mxu0
        %7465 = vmatprep.subr.bf16.mxu0 %v5483
        %7466 = vmatpush1.bf16.msra.mxu0 %v5482
        %7467 = vmatprep.subr.bf16.mxu0 %v5479
        %7468 = vmatpush1.bf16.msra.mxu0 %v5478
        %7469 = vmatprep.subr.bf16.mxu0 %v5475
        %7470 = vmatpush1.bf16.msra.mxu0 %v5474
        %7471 = vmatprep.subr.bf16.mxu0 %v5471
        %7472 = vmatpush1.bf16.msra.mxu0 %v5470
        %7473 = vmatprep.subr.bf16.mxu0 %v5467
        %7474 = vmatpush1.bf16.msra.mxu0 %v5466
        %7475 = vmatprep.subr.bf16.mxu0 %v5463
        %7476 = vmatpush1.bf16.msra.mxu0 %v5462
        %7477 = vmatprep.subr.bf16.mxu0 %v5459
        %7478 = vmatpush1.bf16.msra.mxu0 %v5458
        %7479 = vmatprep.subr.bf16.mxu0 %v5455
        %7480 = vmatpush1.bf16.msra.mxu0 %v5454
        %7481 = vmatprep.subr.bf16.mxu0 %v5515
        %7482 = vmatpush2.bf16.msra.mxu0 %v5514
        %7483 = vmatprep.subr.bf16.mxu0 %v5511
        %7484 = vmatpush2.bf16.msra.mxu0 %v5510
        %7485 = vmatprep.subr.bf16.mxu0 %v5507
        %7486 = vmatpush2.bf16.msra.mxu0 %v5506
        %7487 = vmatprep.subr.bf16.mxu0 %v5503
        %7488 = vmatpush2.bf16.msra.mxu0 %v5502
        %7489 = vmatprep.subr.bf16.mxu0 %v5499
        %7490 = vmatpush2.bf16.msra.mxu0 %v5498
        %7491 = vmatprep.subr.bf16.mxu0 %v5495
        %7492 = vmatpush2.bf16.msra.mxu0 %v5494
        %7493 = vmatprep.subr.bf16.mxu0 %v5491
        %7494 = vmatpush2.bf16.msra.mxu0 %v5490
        %7495 = vmatprep.subr.bf16.mxu0 %v5487
        %7496 = vmatpush2.bf16.msra.mxu0 %v5486
        %7497 = vmatprep.mubr.bf16.mxu0 %v2745
        %7498 = vmatmul.mubr.bf16.gmra.mxu0 %v2731
        %v7499 = vpop.f32.mrf.mxu0
        %v7500 = vadd.f32 %v7459, %v7499
        %v7501 = vpop.f32.mrf.mxu0
        %v7502 = vadd.f32 %v7461, %v7501
        %v7503 = vpop.f32.mrf.mxu0
        %v7504 = vpop.f32.mrf.mxu0
        %7505 = vdwg.mxu0
        %7506 = vmatprep.subr.bf16.mxu0 %v5547
        %7507 = vmatpush1.bf16.msra.mxu0 %v5546
        %7508 = vmatprep.subr.bf16.mxu0 %v5543
        %7509 = vmatpush1.bf16.msra.mxu0 %v5542
        %7510 = vmatprep.subr.bf16.mxu0 %v5539
        %7511 = vmatpush1.bf16.msra.mxu0 %v5538
        %7512 = vmatprep.subr.bf16.mxu0 %v5535
        %7513 = vmatpush1.bf16.msra.mxu0 %v5534
        %7514 = vmatprep.subr.bf16.mxu0 %v5531
        %7515 = vmatpush1.bf16.msra.mxu0 %v5530
        %7516 = vmatprep.subr.bf16.mxu0 %v5527
        %7517 = vmatpush1.bf16.msra.mxu0 %v5526
        %7518 = vmatprep.subr.bf16.mxu0 %v5523
        %7519 = vmatpush1.bf16.msra.mxu0 %v5522
        %7520 = vmatprep.subr.bf16.mxu0 %v5519
        %7521 = vmatpush1.bf16.msra.mxu0 %v5518
        %7522 = vmatprep.subr.bf16.mxu0 %v5579
        %7523 = vmatpush2.bf16.msra.mxu0 %v5578
        %7524 = vmatprep.subr.bf16.mxu0 %v5575
        %7525 = vmatpush2.bf16.msra.mxu0 %v5574
        %7526 = vmatprep.subr.bf16.mxu0 %v5571
        %7527 = vmatpush2.bf16.msra.mxu0 %v5570
        %7528 = vmatprep.subr.bf16.mxu0 %v5567
        %7529 = vmatpush2.bf16.msra.mxu0 %v5566
        %7530 = vmatprep.subr.bf16.mxu0 %v5563
        %7531 = vmatpush2.bf16.msra.mxu0 %v5562
        %7532 = vmatprep.subr.bf16.mxu0 %v5559
        %7533 = vmatpush2.bf16.msra.mxu0 %v5558
        %7534 = vmatprep.subr.bf16.mxu0 %v5555
        %7535 = vmatpush2.bf16.msra.mxu0 %v5554
        %7536 = vmatprep.subr.bf16.mxu0 %v5551
        %7537 = vmatpush2.bf16.msra.mxu0 %v5550
        %7538 = vmatprep.mubr.bf16.mxu0 %v2755
        %7539 = vmatmul.mubr.bf16.gmra.mxu0 %v2753
        %v7540 = vpop.f32.mrf.mxu0
        %v7541 = vadd.f32 %v7500, %v7540
        %v7542 = vpop.f32.mrf.mxu0
        %v7543 = vadd.f32 %v7502, %v7542
        %v7544 = vpop.f32.mrf.mxu0
        %v7545 = vpop.f32.mrf.mxu0
        %7546 = vdwg.mxu0
        %7547 = vmatprep.subr.bf16.mxu0 %v5611
        %7548 = vmatpush1.bf16.msra.mxu0 %v5610
        %7549 = vmatprep.subr.bf16.mxu0 %v5607
        %7550 = vmatpush1.bf16.msra.mxu0 %v5606
        %7551 = vmatprep.subr.bf16.mxu0 %v5603
        %7552 = vmatpush1.bf16.msra.mxu0 %v5602
        %7553 = vmatprep.subr.bf16.mxu0 %v5599
        %7554 = vmatpush1.bf16.msra.mxu0 %v5598
        %7555 = vmatprep.subr.bf16.mxu0 %v5595
        %7556 = vmatpush1.bf16.msra.mxu0 %v5594
        %7557 = vmatprep.subr.bf16.mxu0 %v5591
        %7558 = vmatpush1.bf16.msra.mxu0 %v5590
        %7559 = vmatprep.subr.bf16.mxu0 %v5587
        %7560 = vmatpush1.bf16.msra.mxu0 %v5586
        %7561 = vmatprep.subr.bf16.mxu0 %v5583
        %7562 = vmatpush1.bf16.msra.mxu0 %v5582
        %7563 = vmatprep.subr.bf16.mxu0 %v5643
        %7564 = vmatpush2.bf16.msra.mxu0 %v5642
        %7565 = vmatprep.subr.bf16.mxu0 %v5639
        %7566 = vmatpush2.bf16.msra.mxu0 %v5638
        %7567 = vmatprep.subr.bf16.mxu0 %v5635
        %7568 = vmatpush2.bf16.msra.mxu0 %v5634
        %7569 = vmatprep.subr.bf16.mxu0 %v5631
        %7570 = vmatpush2.bf16.msra.mxu0 %v5630
        %7571 = vmatprep.subr.bf16.mxu0 %v5627
        %7572 = vmatpush2.bf16.msra.mxu0 %v5626
        %7573 = vmatprep.subr.bf16.mxu0 %v5623
        %7574 = vmatpush2.bf16.msra.mxu0 %v5622
        %7575 = vmatprep.subr.bf16.mxu0 %v5619
        %7576 = vmatpush2.bf16.msra.mxu0 %v5618
        %7577 = vmatprep.subr.bf16.mxu0 %v5615
        %7578 = vmatpush2.bf16.msra.mxu0 %v5614
        %7579 = vmatprep.mubr.bf16.mxu0 %v2752
        %7580 = vmatmul.mubr.bf16.gmra.mxu0 %v2738
        %v7581 = vpop.f32.mrf.mxu0
        %v7582 = vadd.f32 %v7541, %v7581
        %v7583 = vpop.f32.mrf.mxu0
        %v7584 = vadd.f32 %v7543, %v7583
        %v7585 = vpop.f32.mrf.mxu0
        %v7586 = vpop.f32.mrf.mxu0
        %7587 = vdwg.mxu0
        %7588 = vmatprep.subr.bf16.mxu0 %v5675
        %7589 = vmatpush1.bf16.msra.mxu0 %v5674
        %7590 = vmatprep.subr.bf16.mxu0 %v5671
        %7591 = vmatpush1.bf16.msra.mxu0 %v5670
        %7592 = vmatprep.subr.bf16.mxu0 %v5667
        %7593 = vmatpush1.bf16.msra.mxu0 %v5666
        %7594 = vmatprep.subr.bf16.mxu0 %v5663
        %7595 = vmatpush1.bf16.msra.mxu0 %v5662
        %7596 = vmatprep.subr.bf16.mxu0 %v5659
        %7597 = vmatpush1.bf16.msra.mxu0 %v5658
        %7598 = vmatprep.subr.bf16.mxu0 %v5655
        %7599 = vmatpush1.bf16.msra.mxu0 %v5654
        %7600 = vmatprep.subr.bf16.mxu0 %v5651
        %7601 = vmatpush1.bf16.msra.mxu0 %v5650
        %7602 = vmatprep.subr.bf16.mxu0 %v5647
        %7603 = vmatpush1.bf16.msra.mxu0 %v5646
        %7604 = vmatprep.subr.bf16.mxu0 %v5707
        %7605 = vmatpush2.bf16.msra.mxu0 %v5706
        %7606 = vmatprep.subr.bf16.mxu0 %v5703
        %7607 = vmatpush2.bf16.msra.mxu0 %v5702
        %7608 = vmatprep.subr.bf16.mxu0 %v5699
        %7609 = vmatpush2.bf16.msra.mxu0 %v5698
        %7610 = vmatprep.subr.bf16.mxu0 %v5695
        %7611 = vmatpush2.bf16.msra.mxu0 %v5694
        %7612 = vmatprep.subr.bf16.mxu0 %v5691
        %7613 = vmatpush2.bf16.msra.mxu0 %v5690
        %7614 = vmatprep.subr.bf16.mxu0 %v5687
        %7615 = vmatpush2.bf16.msra.mxu0 %v5686
        %7616 = vmatprep.subr.bf16.mxu0 %v5683
        %7617 = vmatpush2.bf16.msra.mxu0 %v5682
        %7618 = vmatprep.subr.bf16.mxu0 %v5679
        %7619 = vmatpush2.bf16.msra.mxu0 %v5678
        %7620 = vmatprep.mubr.bf16.mxu0 %v2756
        %7621 = vmatmul.mubr.bf16.gmra.mxu0 %v2754
        %v7622 = vpop.f32.mrf.mxu0
        %v7623 = vadd.f32 %v7582, %v7622
        %v7624 = vpop.f32.mrf.mxu0
        %v7625 = vadd.f32 %v7584, %v7624
        %v7626 = vpop.f32.mrf.mxu0
        %v7627 = vpop.f32.mrf.mxu0
        %7628 = vdwg.mxu0
        %7629 = vmatprep.subr.bf16.mxu0 %v5739
        %7630 = vmatpush1.bf16.msra.mxu0 %v5738
        %7631 = vmatprep.subr.bf16.mxu0 %v5735
        %7632 = vmatpush1.bf16.msra.mxu0 %v5734
        %7633 = vmatprep.subr.bf16.mxu0 %v5731
        %7634 = vmatpush1.bf16.msra.mxu0 %v5730
        %7635 = vmatprep.subr.bf16.mxu0 %v5727
        %7636 = vmatpush1.bf16.msra.mxu0 %v5726
        %7637 = vmatprep.subr.bf16.mxu0 %v5723
        %7638 = vmatpush1.bf16.msra.mxu0 %v5722
        %7639 = vmatprep.subr.bf16.mxu0 %v5719
        %7640 = vmatpush1.bf16.msra.mxu0 %v5718
        %7641 = vmatprep.subr.bf16.mxu0 %v5715
        %7642 = vmatpush1.bf16.msra.mxu0 %v5714
        %7643 = vmatprep.subr.bf16.mxu0 %v5711
        %7644 = vmatpush1.bf16.msra.mxu0 %v5710
        %7645 = vmatprep.subr.bf16.mxu0 %v5771
        %7646 = vmatpush2.bf16.msra.mxu0 %v5770
        %7647 = vmatprep.subr.bf16.mxu0 %v5767
        %7648 = vmatpush2.bf16.msra.mxu0 %v5766
        %7649 = vmatprep.subr.bf16.mxu0 %v5763
        %7650 = vmatpush2.bf16.msra.mxu0 %v5762
        %7651 = vmatprep.subr.bf16.mxu0 %v5759
        %7652 = vmatpush2.bf16.msra.mxu0 %v5758
        %7653 = vmatprep.subr.bf16.mxu0 %v5755
        %7654 = vmatpush2.bf16.msra.mxu0 %v5754
        %7655 = vmatprep.subr.bf16.mxu0 %v5751
        %7656 = vmatpush2.bf16.msra.mxu0 %v5750
        %7657 = vmatprep.subr.bf16.mxu0 %v5747
        %7658 = vmatpush2.bf16.msra.mxu0 %v5746
        %7659 = vmatprep.subr.bf16.mxu0 %v5743
        %7660 = vmatpush2.bf16.msra.mxu0 %v5742
        %7661 = vmatprep.mubr.bf16.mxu0 %v2794
        %7662 = vmatmul.mubr.bf16.gmra.mxu0 %v2780
        %v7663 = vpop.f32.mrf.mxu0
        %v7664 = vadd.f32 %v7623, %v7663
        %v7665 = vpop.f32.mrf.mxu0
        %v7666 = vadd.f32 %v7625, %v7665
        %v7667 = vpop.f32.mrf.mxu0
        %v7668 = vpop.f32.mrf.mxu0
        %7669 = vdwg.mxu0
        %7670 = vmatprep.subr.bf16.mxu0 %v5803
        %7671 = vmatpush1.bf16.msra.mxu0 %v5802
        %7672 = vmatprep.subr.bf16.mxu0 %v5799
        %7673 = vmatpush1.bf16.msra.mxu0 %v5798
        %7674 = vmatprep.subr.bf16.mxu0 %v5795
        %7675 = vmatpush1.bf16.msra.mxu0 %v5794
        %7676 = vmatprep.subr.bf16.mxu0 %v5791
        %7677 = vmatpush1.bf16.msra.mxu0 %v5790
        %7678 = vmatprep.subr.bf16.mxu0 %v5787
        %7679 = vmatpush1.bf16.msra.mxu0 %v5786
        %7680 = vmatprep.subr.bf16.mxu0 %v5783
        %7681 = vmatpush1.bf16.msra.mxu0 %v5782
        %7682 = vmatprep.subr.bf16.mxu0 %v5779
        %7683 = vmatpush1.bf16.msra.mxu0 %v5778
        %7684 = vmatprep.subr.bf16.mxu0 %v5775
        %7685 = vmatpush1.bf16.msra.mxu0 %v5774
        %7686 = vmatprep.subr.bf16.mxu0 %v5835
        %7687 = vmatpush2.bf16.msra.mxu0 %v5834
        %7688 = vmatprep.subr.bf16.mxu0 %v5831
        %7689 = vmatpush2.bf16.msra.mxu0 %v5830
        %7690 = vmatprep.subr.bf16.mxu0 %v5827
        %7691 = vmatpush2.bf16.msra.mxu0 %v5826
        %7692 = vmatprep.subr.bf16.mxu0 %v5823
        %7693 = vmatpush2.bf16.msra.mxu0 %v5822
        %7694 = vmatprep.subr.bf16.mxu0 %v5819
        %7695 = vmatpush2.bf16.msra.mxu0 %v5818
        %7696 = vmatprep.subr.bf16.mxu0 %v5815
        %7697 = vmatpush2.bf16.msra.mxu0 %v5814
        %7698 = vmatprep.subr.bf16.mxu0 %v5811
        %7699 = vmatpush2.bf16.msra.mxu0 %v5810
        %7700 = vmatprep.subr.bf16.mxu0 %v5807
        %7701 = vmatpush2.bf16.msra.mxu0 %v5806
        %7702 = vmatprep.mubr.bf16.mxu0 %v2804
        %7703 = vmatmul.mubr.bf16.gmra.mxu0 %v2802
        %v7704 = vpop.f32.mrf.mxu0
        %v7705 = vadd.f32 %v7664, %v7704
        %v7706 = vpop.f32.mrf.mxu0
        %v7707 = vadd.f32 %v7666, %v7706
        %v7708 = vpop.f32.mrf.mxu0
        %v7709 = vpop.f32.mrf.mxu0
        %7710 = vdwg.mxu0
        %7711 = vmatprep.subr.bf16.mxu0 %v5867
        %7712 = vmatpush1.bf16.msra.mxu0 %v5866
        %7713 = vmatprep.subr.bf16.mxu0 %v5863
        %7714 = vmatpush1.bf16.msra.mxu0 %v5862
        %7715 = vmatprep.subr.bf16.mxu0 %v5859
        %7716 = vmatpush1.bf16.msra.mxu0 %v5858
        %7717 = vmatprep.subr.bf16.mxu0 %v5855
        %7718 = vmatpush1.bf16.msra.mxu0 %v5854
        %7719 = vmatprep.subr.bf16.mxu0 %v5851
        %7720 = vmatpush1.bf16.msra.mxu0 %v5850
        %7721 = vmatprep.subr.bf16.mxu0 %v5847
        %7722 = vmatpush1.bf16.msra.mxu0 %v5846
        %7723 = vmatprep.subr.bf16.mxu0 %v5843
        %7724 = vmatpush1.bf16.msra.mxu0 %v5842
        %7725 = vmatprep.subr.bf16.mxu0 %v5839
        %7726 = vmatpush1.bf16.msra.mxu0 %v5838
        %7727 = vmatprep.subr.bf16.mxu0 %v5899
        %7728 = vmatpush2.bf16.msra.mxu0 %v5898
        %7729 = vmatprep.subr.bf16.mxu0 %v5895
        %7730 = vmatpush2.bf16.msra.mxu0 %v5894
        %7731 = vmatprep.subr.bf16.mxu0 %v5891
        %7732 = vmatpush2.bf16.msra.mxu0 %v5890
        %7733 = vmatprep.subr.bf16.mxu0 %v5887
        %7734 = vmatpush2.bf16.msra.mxu0 %v5886
        %7735 = vmatprep.subr.bf16.mxu0 %v5883
        %7736 = vmatpush2.bf16.msra.mxu0 %v5882
        %7737 = vmatprep.subr.bf16.mxu0 %v5879
        %7738 = vmatpush2.bf16.msra.mxu0 %v5878
        %7739 = vmatprep.subr.bf16.mxu0 %v5875
        %7740 = vmatpush2.bf16.msra.mxu0 %v5874
        %7741 = vmatprep.subr.bf16.mxu0 %v5871
        %7742 = vmatpush2.bf16.msra.mxu0 %v5870
        %7743 = vmatprep.mubr.bf16.mxu0 %v2801
        %7744 = vmatmul.mubr.bf16.gmra.mxu0 %v2787
        %v7745 = vpop.f32.mrf.mxu0
        %v7746 = vadd.f32 %v7705, %v7745
        %v7747 = vpop.f32.mrf.mxu0
        %v7748 = vadd.f32 %v7707, %v7747
        %v7749 = vpop.f32.mrf.mxu0
        %v7750 = vpop.f32.mrf.mxu0
        %7751 = vdwg.mxu0
        %7752 = vmatprep.subr.bf16.mxu0 %v5931
        %7753 = vmatpush1.bf16.msra.mxu0 %v5930
        %7754 = vmatprep.subr.bf16.mxu0 %v5927
        %7755 = vmatpush1.bf16.msra.mxu0 %v5926
        %7756 = vmatprep.subr.bf16.mxu0 %v5923
        %7757 = vmatpush1.bf16.msra.mxu0 %v5922
        %7758 = vmatprep.subr.bf16.mxu0 %v5919
        %7759 = vmatpush1.bf16.msra.mxu0 %v5918
        %7760 = vmatprep.subr.bf16.mxu0 %v5915
        %7761 = vmatpush1.bf16.msra.mxu0 %v5914
        %7762 = vmatprep.subr.bf16.mxu0 %v5911
        %7763 = vmatpush1.bf16.msra.mxu0 %v5910
        %7764 = vmatprep.subr.bf16.mxu0 %v5907
        %7765 = vmatpush1.bf16.msra.mxu0 %v5906
        %7766 = vmatprep.subr.bf16.mxu0 %v5903
        %7767 = vmatpush1.bf16.msra.mxu0 %v5902
        %7768 = vmatprep.subr.bf16.mxu0 %v5963
        %7769 = vmatpush2.bf16.msra.mxu0 %v5962
        %7770 = vmatprep.subr.bf16.mxu0 %v5959
        %7771 = vmatpush2.bf16.msra.mxu0 %v5958
        %7772 = vmatprep.subr.bf16.mxu0 %v5955
        %7773 = vmatpush2.bf16.msra.mxu0 %v5954
        %7774 = vmatprep.subr.bf16.mxu0 %v5951
        %7775 = vmatpush2.bf16.msra.mxu0 %v5950
        %7776 = vmatprep.subr.bf16.mxu0 %v5947
        %7777 = vmatpush2.bf16.msra.mxu0 %v5946
        %7778 = vmatprep.subr.bf16.mxu0 %v5943
        %7779 = vmatpush2.bf16.msra.mxu0 %v5942
        %7780 = vmatprep.subr.bf16.mxu0 %v5939
        %7781 = vmatpush2.bf16.msra.mxu0 %v5938
        %7782 = vmatprep.subr.bf16.mxu0 %v5935
        %7783 = vmatpush2.bf16.msra.mxu0 %v5934
        %7784 = vmatprep.mubr.bf16.mxu0 %v2805
        %7785 = vmatmul.mubr.bf16.gmra.mxu0 %v2803
        %v7786 = vpop.f32.mrf.mxu0
        %v7787 = vadd.f32 %v7746, %v7786
        %v7788 = vpop.f32.mrf.mxu0
        %v7789 = vadd.f32 %v7748, %v7788
        %v7790 = vpop.f32.mrf.mxu0
        %v7791 = vpop.f32.mrf.mxu0
        %7792 = vdwg.mxu0
        %7793 = vmatprep.subr.bf16.mxu0 0
        %7794 = vmatpush1.bf16.msra.mxu0 0
        %7795 = vmatprep.subr.bf16.mxu0 0
        %7796 = vmatpush1.bf16.msra.mxu0 0
        %7797 = vmatprep.subr.bf16.mxu0 0
        %7798 = vmatpush1.bf16.msra.mxu0 0
        %7799 = vmatprep.subr.bf16.mxu0 0
        %7800 = vmatpush1.bf16.msra.mxu0 0
        %7801 = vmatprep.subr.bf16.mxu0 %v5979
        %7802 = vmatpush1.bf16.msra.mxu0 %v5978
        %7803 = vmatprep.subr.bf16.mxu0 %v5975
        %7804 = vmatpush1.bf16.msra.mxu0 %v5974
        %7805 = vmatprep.subr.bf16.mxu0 %v5971
        %7806 = vmatpush1.bf16.msra.mxu0 %v5970
        %7807 = vmatprep.subr.bf16.mxu0 %v5967
        %7808 = vmatpush1.bf16.msra.mxu0 %v5966
        %7809 = vmatprep.subr.bf16.mxu0 0
        %7810 = vmatpush2.bf16.msra.mxu0 0
        %7811 = vmatprep.subr.bf16.mxu0 0
        %7812 = vmatpush2.bf16.msra.mxu0 0
        %7813 = vmatprep.subr.bf16.mxu0 0
        %7814 = vmatpush2.bf16.msra.mxu0 0
        %7815 = vmatprep.subr.bf16.mxu0 0
        %7816 = vmatpush2.bf16.msra.mxu0 0
        %7817 = vmatprep.subr.bf16.mxu0 0
        %7818 = vmatpush2.bf16.msra.mxu0 0
        %7819 = vmatprep.subr.bf16.mxu0 0
        %7820 = vmatpush2.bf16.msra.mxu0 0
        %7821 = vmatprep.subr.bf16.mxu0 0
        %7822 = vmatpush2.bf16.msra.mxu0 0
        %7823 = vmatprep.subr.bf16.mxu0 0
        %7824 = vmatpush2.bf16.msra.mxu0 0
        %7825 = vmatprep.mubr.bf16.mxu0 0
        %7826 = vmatmul.mubr.bf16.gmra.mxu0 %v6766
        %v7827 = vpop.f32.mrf.mxu0
        %v7828 = vadd.f32 %v7787, %v7827
        %v7829 = vpop.f32.mrf.mxu0
        %v7830 = vadd.f32 %v7789, %v7829
        %v7831 = vpop.f32.mrf.mxu0
        %v7832 = vpop.f32.mrf.mxu0
        %7833 = vdwg.mxu0
        %v7834 = vld [vmem:[#allocation3] sm:$0x3]
        %v7835 = vpack.c.bf16 %v7295, %v7295
        %v7836 = vpack.c.bf16 %v7297, %v7297
        %v7837 = vpack.c.bf16 %v7828, %v7828
        %v7838 = vpack.c.bf16 %v7830, %v7830
        %v7839 = vld [vmem:[%s1837] sm:$0xf]
        %v7840 = vld [vmem:[%s1837 + $0x4] sm:$0xf]
        %v7841 = vld [vmem:[%s1837 + $0x8] sm:$0xf]
        %v7842 = vld [vmem:[%s1837 + $0xc] sm:$0xf]
        %v7843 = vld [vmem:[%s1837 + $0x10] sm:$0xf]
        %v7844 = vld [vmem:[%s1837 + $0x14] sm:$0xf]
        %v7845 = vld [vmem:[%s1837 + $0x18] sm:$0xf]
        %v7846 = vld [vmem:[%s1837 + $0x1c] sm:$0xf]
        %v7847 = vld [vmem:[%s1837 + $0x20] sm:$0xf]
        %v7848 = vld [vmem:[%s1837 + $0x24] sm:$0xf]
        %v7849 = vld [vmem:[%s1837 + $0x28] sm:$0xf]
        %v7850 = vld [vmem:[%s1837 + $0x2c] sm:$0xf]
        %v7851 = vld [vmem:[%s1837 + $0x30] sm:$0xf]
        %v7852 = vld [vmem:[%s1837 + $0x34] sm:$0xf]
        %v7853 = vld [vmem:[%s1837 + $0x38] sm:$0xf]
        %v7854 = vld [vmem:[%s1837 + $0x3c] sm:$0xf]
        %v7855 = vld [vmem:[%s1837 + $0x40] sm:$0xf]
        %v7856 = vld [vmem:[%s1837 + $0x44] sm:$0xf]
        %v7857 = vld [vmem:[%s1837 + $0x48] sm:$0xf]
        %v7858 = vld [vmem:[%s1837 + $0x4c] sm:$0xf]
        %v7859 = vld [vmem:[%s1837 + $0x50] sm:$0xf]
        %v7860 = vld [vmem:[%s1837 + $0x54] sm:$0xf]
        %v7861 = vld [vmem:[%s1837 + $0x58] sm:$0xf]
        %v7862 = vld [vmem:[%s1837 + $0x5c] sm:$0xf]
        %v7863 = vld [vmem:[%s1837 + $0x60] sm:$0xf]
        %v7864 = vld [vmem:[%s1837 + $0x64] sm:$0xf]
        %v7865 = vld [vmem:[%s1837 + $0x68] sm:$0xf]
        %v7866 = vld [vmem:[%s1837 + $0x6c] sm:$0xf]
        %v7867 = vld [vmem:[%s1837 + $0x70] sm:$0xf]
        %v7868 = vld [vmem:[%s1837 + $0x74] sm:$0xf]
        %v7869 = vld [vmem:[%s1837 + $0x78] sm:$0xf]
        %v7870 = vld [vmem:[%s1837 + $0x7c] sm:$0xf]
        %v7871 = vld [vmem:[%s1837 + $0x80] sm:$0xf]
        %v7872 = vld [vmem:[%s1837 + $0x84] sm:$0xf]
        %v7873 = vld [vmem:[%s1837 + $0x88] sm:$0xf]
        %v7874 = vld [vmem:[%s1837 + $0x8c] sm:$0xf]
        %v7875 = vld [vmem:[%s1837 + $0x90] sm:$0xf]
        %v7876 = vld [vmem:[%s1837 + $0x94] sm:$0xf]
        %v7877 = vld [vmem:[%s1837 + $0x98] sm:$0xf]
        %v7878 = vld [vmem:[%s1837 + $0x9c] sm:$0xf]
        %v7879 = vld [vmem:[%s1837 + $0xa0] sm:$0xf]
        %v7880 = vld [vmem:[%s1837 + $0xa4] sm:$0xf]
        %v7881 = vld [vmem:[%s1837 + $0xa8] sm:$0xf]
        %v7882 = vld [vmem:[%s1837 + $0xac] sm:$0xf]
        %v7883 = vld [vmem:[%s1837 + $0xb0] sm:$0xf]
        %v7884 = vld [vmem:[%s1837 + $0xb4] sm:$0xf]
        %v7885 = vld [vmem:[%s1837 + $0xb8] sm:$0xf]
        %v7886 = vld [vmem:[%s1837 + $0xbc] sm:$0xf]
        %v7887 = vld [vmem:[%s1837 + $0xc0] sm:$0xf]
        %v7888 = vld [vmem:[%s1837 + $0xc4] sm:$0xf]
        %v7889 = vld [vmem:[%s1837 + $0xc8] sm:$0xf]
        %v7890 = vld [vmem:[%s1837 + $0xcc] sm:$0xf]
        %v7891 = vld [vmem:[%s1837 + $0xd0] sm:$0xf]
        %v7892 = vld [vmem:[%s1837 + $0xd4] sm:$0xf]
        %v7893 = vld [vmem:[%s1837 + $0xd8] sm:$0xf]
        %v7894 = vld [vmem:[%s1837 + $0xdc] sm:$0xf]
        %v7895 = vld [vmem:[%s1837 + $0xe0] sm:$0xf]
        %v7896 = vld [vmem:[%s1837 + $0xe4] sm:$0xf]
        %v7897 = vld [vmem:[%s1837 + $0xe8] sm:$0xf]
        %v7898 = vld [vmem:[%s1837 + $0xec] sm:$0xf]
        %v7899 = vld [vmem:[%s1837 + $0xf0] sm:$0xf]
        %v7900 = vld [vmem:[%s1837 + $0xf4] sm:$0xf]
        %v7901 = vld [vmem:[%s1837 + $0xf8] sm:$0xf]
        %v7902 = vld [vmem:[%s1837 + $0xfc] sm:$0xf]
        %v7967 = vunpack.c.l.b16 %v7839
        %v7968 = vunpack.c.l.b16 %v7840
        %v7969 = vunpack.c.l.b16 %v7841
        %v7970 = vunpack.c.l.b16 %v7842
        %v7971 = vunpack.c.l.b16 %v7843
        %v7972 = vunpack.c.l.b16 %v7844
        %v7973 = vunpack.c.l.b16 %v7845
        %v7974 = vunpack.c.l.b16 %v7846
        %v7975 = vunpack.c.l.b16 %v7847
        %v7976 = vunpack.c.l.b16 %v7848
        %v7977 = vunpack.c.l.b16 %v7849
        %v7978 = vunpack.c.l.b16 %v7850
        %v7979 = vunpack.c.l.b16 %v7851
        %v7980 = vunpack.c.l.b16 %v7852
        %v7981 = vunpack.c.l.b16 %v7853
        %v7982 = vunpack.c.l.b16 %v7854
        %v7983 = vunpack.c.l.b16 %v7855
        %v7984 = vunpack.c.l.b16 %v7856
        %v7985 = vunpack.c.l.b16 %v7857
        %v7986 = vunpack.c.l.b16 %v7858
        %v7987 = vunpack.c.l.b16 %v7859
        %v7988 = vunpack.c.l.b16 %v7860
        %v7989 = vunpack.c.l.b16 %v7861
        %v7990 = vunpack.c.l.b16 %v7862
        %v7991 = vunpack.c.l.b16 %v7863
        %v7992 = vunpack.c.l.b16 %v7864
        %v7993 = vunpack.c.l.b16 %v7865
        %v7994 = vunpack.c.l.b16 %v7866
        %v7995 = vunpack.c.l.b16 %v7867
        %v7996 = vunpack.c.l.b16 %v7868
        %v7997 = vunpack.c.l.b16 %v7869
        %v7998 = vunpack.c.l.b16 %v7870
        %v7999 = vunpack.c.l.b16 %v7871
        %v8000 = vunpack.c.l.b16 %v7872
        %v8001 = vunpack.c.l.b16 %v7873
        %v8002 = vunpack.c.l.b16 %v7874
        %v8003 = vunpack.c.l.b16 %v7875
        %v8004 = vunpack.c.l.b16 %v7876
        %v8005 = vunpack.c.l.b16 %v7877
        %v8006 = vunpack.c.l.b16 %v7878
        %v8007 = vunpack.c.l.b16 %v7879
        %v8008 = vunpack.c.l.b16 %v7880
        %v8009 = vunpack.c.l.b16 %v7881
        %v8010 = vunpack.c.l.b16 %v7882
        %v8011 = vunpack.c.l.b16 %v7883
        %v8012 = vunpack.c.l.b16 %v7884
        %v8013 = vunpack.c.l.b16 %v7885
        %v8014 = vunpack.c.l.b16 %v7886
        %v8015 = vunpack.c.l.b16 %v7887
        %v8016 = vunpack.c.l.b16 %v7888
        %v8017 = vunpack.c.l.b16 %v7889
        %v8018 = vunpack.c.l.b16 %v7890
        %v8019 = vunpack.c.l.b16 %v7891
        %v8020 = vunpack.c.l.b16 %v7892
        %v8021 = vunpack.c.l.b16 %v7893
        %v8022 = vunpack.c.l.b16 %v7894
        %v8023 = vunpack.c.l.b16 %v7895
        %v8024 = vunpack.c.l.b16 %v7896
        %v8025 = vunpack.c.l.b16 %v7897
        %v8026 = vunpack.c.l.b16 %v7898
        %v8027 = vunpack.c.l.b16 %v7899
        %v8028 = vunpack.c.l.b16 %v7900
        %v8029 = vunpack.c.l.b16 %v7901
        %v8030 = vunpack.c.l.b16 %v7902
        %v8031 = vpack.c.b16 %v7968, %v7967
        %v8032 = vpack.c.b16 %v7970, %v7969
        %v8033 = vpack.c.b16 %v7972, %v7971
        %v8034 = vpack.c.b16 %v7974, %v7973
        %v8035 = vpack.c.b16 %v7976, %v7975
        %v8036 = vpack.c.b16 %v7978, %v7977
        %v8037 = vpack.c.b16 %v7980, %v7979
        %v8038 = vpack.c.b16 %v7982, %v7981
        %v8039 = vpack.c.b16 %v7984, %v7983
        %v8040 = vpack.c.b16 %v7986, %v7985
        %v8041 = vpack.c.b16 %v7988, %v7987
        %v8042 = vpack.c.b16 %v7990, %v7989
        %v8043 = vpack.c.b16 %v7992, %v7991
        %v8044 = vpack.c.b16 %v7994, %v7993
        %v8045 = vpack.c.b16 %v7996, %v7995
        %v8046 = vpack.c.b16 %v7998, %v7997
        %v8047 = vpack.c.b16 %v8000, %v7999
        %v8048 = vpack.c.b16 %v8002, %v8001
        %v8049 = vpack.c.b16 %v8004, %v8003
        %v8050 = vpack.c.b16 %v8006, %v8005
        %v8051 = vpack.c.b16 %v8008, %v8007
        %v8052 = vpack.c.b16 %v8010, %v8009
        %v8053 = vpack.c.b16 %v8012, %v8011
        %v8054 = vpack.c.b16 %v8014, %v8013
        %v8055 = vpack.c.b16 %v8016, %v8015
        %v8056 = vpack.c.b16 %v8018, %v8017
        %v8057 = vpack.c.b16 %v8020, %v8019
        %v8058 = vpack.c.b16 %v8022, %v8021
        %v8059 = vpack.c.b16 %v8024, %v8023
        %v8060 = vpack.c.b16 %v8026, %v8025
        %v8061 = vpack.c.b16 %v8028, %v8027
        %v8062 = vpack.c.b16 %v8030, %v8029
        %8095 = vmatprep.subr.bf16.mxu0 0
        %8096 = vmatpush1.bf16.msra.mxu0 %v8038
        %8097 = vmatprep.subr.bf16.mxu0 0
        %8098 = vmatpush1.bf16.msra.mxu0 %v8037
        %8099 = vmatprep.subr.bf16.mxu0 0
        %8100 = vmatpush1.bf16.msra.mxu0 %v8036
        %8101 = vmatprep.subr.bf16.mxu0 0
        %8102 = vmatpush1.bf16.msra.mxu0 %v8035
        %8103 = vmatprep.subr.bf16.mxu0 0
        %8104 = vmatpush1.bf16.msra.mxu0 %v8034
        %8105 = vmatprep.subr.bf16.mxu0 0
        %8106 = vmatpush1.bf16.msra.mxu0 %v8033
        %8107 = vmatprep.subr.bf16.mxu0 0
        %8108 = vmatpush1.bf16.msra.mxu0 %v8032
        %8109 = vmatprep.subr.bf16.mxu0 0
        %8110 = vmatpush1.bf16.msra.mxu0 %v8031
        %8111 = vmatprep.subr.bf16.mxu0 0
        %8112 = vmatpush2.bf16.msra.mxu0 %v8046
        %8113 = vmatprep.subr.bf16.mxu0 0
        %8114 = vmatpush2.bf16.msra.mxu0 %v8045
        %8115 = vmatprep.subr.bf16.mxu0 0
        %8116 = vmatpush2.bf16.msra.mxu0 %v8044
        %8117 = vmatprep.subr.bf16.mxu0 0
        %8118 = vmatpush2.bf16.msra.mxu0 %v8043
        %8119 = vmatprep.subr.bf16.mxu0 0
        %8120 = vmatpush2.bf16.msra.mxu0 %v8042
        %8121 = vmatprep.subr.bf16.mxu0 0
        %8122 = vmatpush2.bf16.msra.mxu0 %v8041
        %8123 = vmatprep.subr.bf16.mxu0 0
        %8124 = vmatpush2.bf16.msra.mxu0 %v8040
        %8125 = vmatprep.subr.bf16.mxu0 0
        %8126 = vmatpush2.bf16.msra.mxu0 %v8039
        %8127 = vmatprep.mubr.bf16.mxu0 %v7836
        %8128 = vmatmul.mubr.bf16.gmra.mxu0 %v7835
        %v8129 = vpop.f32.mrf.mxu0
        %v8130 = vadd.f32 0.0, %v8129
        %v8131 = vpop.f32.mrf.mxu0
        %v8132 = vpop.f32.mrf.mxu0
        %v8133 = vpop.f32.mrf.mxu0
        %8134 = vdwg.mxu0
        %8135 = vmatprep.subr.bf16.mxu0 0
        %8136 = vmatpush1.bf16.msra.mxu0 %v8054
        %8137 = vmatprep.subr.bf16.mxu0 0
        %8138 = vmatpush1.bf16.msra.mxu0 %v8053
        %8139 = vmatprep.subr.bf16.mxu0 0
        %8140 = vmatpush1.bf16.msra.mxu0 %v8052
        %8141 = vmatprep.subr.bf16.mxu0 0
        %8142 = vmatpush1.bf16.msra.mxu0 %v8051
        %8143 = vmatprep.subr.bf16.mxu0 0
        %8144 = vmatpush1.bf16.msra.mxu0 %v8050
        %8145 = vmatprep.subr.bf16.mxu0 0
        %8146 = vmatpush1.bf16.msra.mxu0 %v8049
        %8147 = vmatprep.subr.bf16.mxu0 0
        %8148 = vmatpush1.bf16.msra.mxu0 %v8048
        %8149 = vmatprep.subr.bf16.mxu0 0
        %8150 = vmatpush1.bf16.msra.mxu0 %v8047
        %8151 = vmatprep.subr.bf16.mxu0 0
        %8152 = vmatpush2.bf16.msra.mxu0 %v8062
        %8153 = vmatprep.subr.bf16.mxu0 0
        %8154 = vmatpush2.bf16.msra.mxu0 %v8061
        %8155 = vmatprep.subr.bf16.mxu0 0
        %8156 = vmatpush2.bf16.msra.mxu0 %v8060
        %8157 = vmatprep.subr.bf16.mxu0 0
        %8158 = vmatpush2.bf16.msra.mxu0 %v8059
        %8159 = vmatprep.subr.bf16.mxu0 0
        %8160 = vmatpush2.bf16.msra.mxu0 %v8058
        %8161 = vmatprep.subr.bf16.mxu0 0
        %8162 = vmatpush2.bf16.msra.mxu0 %v8057
        %8163 = vmatprep.subr.bf16.mxu0 0
        %8164 = vmatpush2.bf16.msra.mxu0 %v8056
        %8165 = vmatprep.subr.bf16.mxu0 0
        %8166 = vmatpush2.bf16.msra.mxu0 %v8055
        %8167 = vmatprep.mubr.bf16.mxu0 %v7838
        %8168 = vmatmul.mubr.bf16.gmra.mxu0 %v7837
        %v8169 = vpop.f32.mrf.mxu0
        %v8170 = vadd.f32 %v8130, %v8169
        %v8171 = vpop.f32.mrf.mxu0
        %v8172 = vpop.f32.mrf.mxu0
        %v8173 = vpop.f32.mrf.mxu0
        %8174 = vdwg.mxu0
        %v8175 = vadd.f32 %v7834, %v8170
        %8176 = vst [vmem:[#allocation3] sm:$0x3] %v8175
        %p8177 = scmp.eq.s32.totalorder %s17, 1
        // Predicated region
        $region68: #{convnet_forward.5} parent=58 // pred_check
          %p8178 = pneg %p8177
        $region69: #{convnet_forward.5} parent=58 // pred_check_branch
          %8180 = sbr.rel (%p8178) target = $region71
        $region70: #{convnet_forward.5} parent=58 // pred_region
          %v8181 = vld [vmem:[#allocation3] sm:$0x3]
          %v8182 = vld [vmem:[%s4] sm:$0x1]
          %v8184 = vlaneseq
          %v8185 = vshrl.u32 %v8184, 7
          %v8186 = vsub.s32 0, %v8185
          %v8187 = vrot.slane %v8182, %v8186
          %v8189 = vadd.f32 %v8181, %v8187
          %8190 = vst [vmem:[#allocation3] sm:$0x3] %v8189
        $region71: #{convnet_forward.5} parent=58 // pred_fallthru
          _
        // Predicated region
        $region72: #{convnet_forward.5} parent=58 // pred_check
          %p8191 = pneg %p150
        $region73: #{convnet_forward.5} parent=58 // pred_check_branch
          %8193 = sbr.rel (%p8191) target = $region75
        $region74: #{convnet_forward.5} parent=58 // pred_region
          %s8195 = ssub.s32 32, 32
          %8196 = vsyncadd [#allocation4], %s8195
          %s8198 = sshll.u32 [#allocation3], 4
          %s8199 = int_to_ptr.vmem [resolvable:$true] %s8198
          %8201 = dma.vmem_to_hbm [thread:$0]  %s8199, 32, %s5, [#allocation4]
        $region75: #{convnet_forward.5} parent=58 // pred_fallthru
          _
        // Predicated region
        $region76: #{convnet_forward.5} parent=58 // pred_check
          %p8202 = pneg %p150
        $region77: #{convnet_forward.5} parent=58 // pred_check_branch
          %8204 = sbr.rel (%p8202) target = $region79
        $region78: #{convnet_forward.5} parent=58 // pred_region
          %8205 = dma.done [#allocation4], 32
        $region79: #{convnet_forward.5} parent=58 // pred_fallthru
          _
      $region59: #{convnet_forward.5} parent=5 // pred_fallthru
        _
      %p8206 = scmp.le.s32.totalorder 2, %s12
      // Predicated region
      $region80: #{convnet_forward.5} parent=5 // pred_check
        %p8207 = pneg %p8206
      $region81: #{convnet_forward.5} parent=5 // pred_check_branch
        %8209 = sbr.rel (%p8207) target = $region83
      $region82: #{convnet_forward.5} parent=5 // pred_region
        %s8210 = ssub.s32 %s12, 2
      $region83: #{convnet_forward.5} parent=5 // pred_fallthru
        _
    $region6: #{convnet_forward.5} parent=1 // loop_footer
      %s16 = sadd.s32 1, %s12
    $region7: #{convnet_forward.5} parent=1 // loop_footer_branch
      %11 = sbr.rel target = $region3
    $region8: #{convnet_forward.5} parent=1 // loop_exit
      _
    %8211 = vsyncpa [#allocation4], 1
    %s8212 = scalar_lea.sflag [#allocation4], 1
    %8213 = vsyncpa %s8212, 1

</llo_original>
